<compile_context>
chip_gen: v7x
topology: tpu7x:2x2x1
jax: 0.10.0
libtpu: 0.0.40
codegen_flags: <defaults>
</compile_context>

<pallas_src>
import functools
import re

import jax
import jax.numpy as jnp
import numpy as np
from jax.experimental import pallas as pl
from jax.experimental.pallas import tpu as pltpu

_MIB = 1 << 20


# ---------------------------------------------------------------------------
# Kernels
# ---------------------------------------------------------------------------

def eca_pool_kernel(x_ref, avg_ref):
    """Row means of a (TM, L) tile -> (TM, 1), accumulated in f32."""
    x = x_ref[...].astype(jnp.float32)
    avg_ref[...] = jnp.sum(x, axis=-1, keepdims=True) * (1.0 / x.shape[-1])


def eca_mul_kernel(x_ref, s_ref, o_ref):
    """out = x * scale; scale is a (1, L) lane slab broadcast over rows.

    The compute dtype follows the scale slab's dtype (f32 everywhere except
    bf16 inputs on bf16-native VALUs, where the wrapper pre-casts scale).
    """
    o_ref[...] = (x_ref[...].astype(s_ref.dtype) * s_ref[...]).astype(o_ref.dtype)


def eca_fused_kernel(x_ref, w_ref, b_ref, o_ref, avgp_ref):
    """Pool + depthwise conv + sigmoid + multiply with x fully VMEM resident.

    x_ref/o_ref: (B, C, H, W);  w_ref: (B, K) f32;  b_ref: (B, 1) f32;
    avgp_ref:    (B, C + 2*pad) f32 scratch for the zero-padded pooled tensor.
    Cuts HBM traffic to one read + one write of x (tiled path: two reads).
    """
    B, C, H, W = x_ref.shape
    K = w_ref.shape[1]
    pad = K // 2

    x = x_ref[...]
    # Global average pool over (H, W): two minor-dim reductions, f32 accumulate.
    s = jnp.sum(x.astype(jnp.float32), axis=-1)            # (B, C, H)
    avg = jnp.sum(s, axis=-1) * (1.0 / (H * W))             # (B, C)

    # Zero-pad along C inside a small scratch (ref-slice store, no reshape).
    avgp_ref[...] = jnp.zeros_like(avgp_ref)
    avgp_ref[:, pad:pad + C] = avg
    avgp = avgp_ref[...]                                    # (B, C + 2*pad)

    # Depthwise 1-D conv (K = 7, unrolled) + bias + sigmoid.
    conv = jnp.zeros((B, C), dtype=jnp.float32)
    for k in range(K):
        conv = conv + w_ref[:, k:k + 1] * avgp[:, k:k + C]
    scale = jax.nn.sigmoid(conv + b_ref[...])               # (B, C) == (H, W)

    # expand_as: scale's dims align with x's trailing (H, W) dims.
    o_ref[...] = (x.astype(jnp.float32) * scale[None, None, :, :]).astype(o_ref.dtype)


# ---------------------------------------------------------------------------
# Generation-aware sizing helpers
# ---------------------------------------------------------------------------

def _round_up(x, m):
    return (x + m - 1) // m * m


def _tpu_generation():
    """Best-effort TPU generation (5, 6, 7, ...); defaults to 6."""
    try:
        kind = jax.devices()[0].device_kind
        m = re.search(r"(\d+)", kind)
        if m:
            return int(m.group(1))
    except Exception:
        pass
    return 6


def _vmem_budgets():
    """Returns (vmem_limit_bytes, per-block byte budget for streaming tiles)."""
    try:
        cap = int(pltpu.get_tpu_info().vmem_capacity_bytes)
    except Exception:
        cap = (64 * _MIB) if _tpu_generation() >= 7 else (128 * _MIB)
    # v5e/v6e (128 MiB physical) -> 64 MiB scoped; v7x (64 MiB) -> 32 MiB.
    vmem_limit = int(min(64 * _MIB, max(16 * _MIB, cap // 2)))
    # Pass-3 live footprint ~ 4x a tile (x and out each double-buffered)
    # plus the tiny scale slab; keep slack.  ~8 MiB on v5e/v6e, ~5 MiB on v7x.
    tile_budget = int(min(8 * _MIB, vmem_limit // 6))
    return vmem_limit, tile_budget


def _pick_row_tile(n_rows, n_cols, itemsize, budget_bytes, min_steps=8):
    """Largest row tile that (a) is a multiple of 8, (b) divides n_rows,
    (c) keeps one (tile, n_cols) block within budget_bytes, and (d) leaves at
    least `min_steps` grid steps when n_rows allows, so each v7x TensorCore
    gets >= 4 pipeline steps and the DMAs are actually hidden."""
    cap = max(8, budget_bytes // max(1, n_cols * itemsize))
    if n_rows >= 8 * min_steps:
        cap = min(cap, n_rows // min_steps)
    best = None
    t = 8
    while t <= min(cap, n_rows):
        if n_rows % t == 0:
            best = t
        t += 8
    return best if best is not None else n_rows


def _fused_fits(shape, itemsize, vmem_limit):
    """Can x (+ output) sit fully in VMEM using its padded 4-D layout?"""
    B, C, H, W = shape
    sub = {4: 8, 2: 16, 1: 32}.get(itemsize, 8)
    padded = B * C * _round_up(H, sub) * _round_up(W, 128) * itemsize
    return 2 * padded + 4 * _MIB <= int(0.8 * vmem_limit)


def _conv_sigmoid(avg, weight, bias):
    """Tiny depthwise 1-D conv along C + sigmoid in plain jnp (one XLA fusion)."""
    C = avg.shape[1]
    K = weight.shape[-1]
    pad = K // 2
    avg_p = jnp.pad(avg.astype(jnp.float32), ((0, 0), (pad, pad)))
    w2 = weight.reshape(C, K).astype(jnp.float32)
    conv = sum(w2[:, k:k + 1] * avg_p[:, k:k + C] for k in range(K))
    return jax.nn.sigmoid(conv + bias.reshape(C, 1).astype(jnp.float32))


# ---------------------------------------------------------------------------
# Forward wrapper
# ---------------------------------------------------------------------------

def eca_forward(x, weight, bias, *, force_tiled=False):
    """x: (B, C, H, W); weight: (C, 1, K); bias: (C,).  Requires B==C==H==W."""
    B, C, H, W = x.shape
    if not (B == C == H == W):
        raise ValueError(
            "ECAModule as written (unbatched Conv1d on the pooled tensor + "
            f"expand_as) requires B == C == H == W, got {x.shape}.")
    K = weight.shape[-1]
    pad = K // 2
    R, L = B * C, H * W
    itemsize = jnp.dtype(x.dtype).itemsize

    vmem_limit, tile_budget = _vmem_budgets()
    w2 = weight.reshape(C, K).astype(jnp.float32)
    b2 = bias.reshape(C, 1).astype(jnp.float32)

    # ---- Fused single-kernel path: one HBM read + one write of x ----------
    if not force_tiled and _fused_fits(x.shape, itemsize, vmem_limit):
        return pl.pallas_call(
            eca_fused_kernel,
            out_shape=jax.ShapeDtypeStruct(x.shape, x.dtype),
            in_specs=[
                pl.BlockSpec(memory_space=pltpu.MemorySpace.VMEM),
                pl.BlockSpec(memory_space=pltpu.MemorySpace.VMEM),
                pl.BlockSpec(memory_space=pltpu.MemorySpace.VMEM),
            ],
            out_specs=pl.BlockSpec(memory_space=pltpu.MemorySpace.VMEM),
            scratch_shapes=[pltpu.VMEM((B, C + 2 * pad), jnp.float32)],
            compiler_params=pltpu.CompilerParams(vmem_limit_bytes=vmem_limit),
        )(x, w2, b2)

    # ---- Tiled streaming path (large x) ------------------------------------
    x_flat = x.reshape(R, L)                       # lane-dense layout
    tm = _pick_row_tile(R, L, itemsize, tile_budget)

    # Pass 1: tiled global average pool (row means), f32 accumulate.
    avg_flat = pl.pallas_call(
        eca_pool_kernel,
        out_shape=jax.ShapeDtypeStruct((R, 1), jnp.float32),
        grid_spec=pltpu.PrefetchScalarGridSpec(
            num_scalar_prefetch=0,
            grid=(R // tm,),
            in_specs=[pl.BlockSpec((tm, L), lambda i: (i, 0))],
            out_specs=pl.BlockSpec((tm, 1), lambda i: (i, 0)),
        ),
        compiler_params=pltpu.CompilerParams(
            dimension_semantics=("parallel",),
            vmem_limit_bytes=vmem_limit),
    )(x_flat)

    # Pass 2 (tiny, plain jnp): depthwise conv along C + sigmoid.
    scale = _conv_sigmoid(avg_flat.reshape(B, C), weight, bias)

    # expand_as aligns scale's (B, C) with x's (H, W): a (1, H*W) lane slab.
    # bf16 stays bf16 through the multiply on bf16-native VALUs (v6e / v7x);
    # v5e (no bf16 VALU) keeps the f32 upcast.
    if x.dtype == jnp.bfloat16 and _tpu_generation() >= 6:
        mul_dtype = jnp.bfloat16
    else:
        mul_dtype = jnp.float32
    scale_row = scale.reshape(1, L).astype(mul_dtype)

    # Pass 3: tiled, auto-pipelined elementwise multiply.
    out_flat = pl.pallas_call(
        eca_mul_kernel,
        out_shape=jax.ShapeDtypeStruct((R, L), x.dtype),
        grid_spec=pltpu.PrefetchScalarGridSpec(
            num_scalar_prefetch=0,
            grid=(R // tm,),
            in_specs=[
                pl.BlockSpec((tm, L), lambda i: (i, 0)),
                pl.BlockSpec((1, L), lambda i: (0, 0)),    # resident scale slab
            ],
            out_specs=pl.BlockSpec((tm, L), lambda i: (i, 0)),
        ),
        compiler_params=pltpu.CompilerParams(
            dimension_semantics=("parallel",),
            vmem_limit_bytes=vmem_limit),
    )(x_flat, scale_row)

    return out_flat.reshape(B, C, H, W)


def eca_reference(x, weight, bias):
    """Pure-JAX reference mirroring the PyTorch forward, for validation."""
    B, C, H, W = x.shape
    K = weight.shape[-1]
    pad = K // 2
    avg = jnp.mean(x, axis=(-1, -2))                         # (B, C)
    avg_p = jnp.pad(avg, ((0, 0), (pad, pad)))
    w2 = weight.reshape(C, K)
    conv = sum(w2[:, k:k + 1] * avg_p[:, k:k + C] for k in range(K))
    scale = jax.nn.sigmoid(conv + bias[:, None])             # (B, C)
    return x * scale[None, None, :, :]


if __name__ == "__main__":
    # Module only runs when B == C == H == W; 16 keeps it small while making
    # the flattened lane dimension (H*W = 256) a multiple of 128.
    N = 16
    K = 7

    key = jax.random.PRNGKey(0)
    kx, kw, kb = jax.random.split(key, 3)
    x = jax.random.normal(kx, (N, N, N, N), dtype=jnp.float32)
    # Conv1d depthwise parameters: (C, 1, K) weight + (C,) bias.
    weight = jax.random.normal(kw, (N, 1, K), dtype=jnp.float32) * 0.1
    bias = jax.random.normal(kb, (N,), dtype=jnp.float32) * 0.1

    ref = np.asarray(eca_reference(x, weight, bias))

    # Fused single-kernel path (chosen automatically for this shape).
    fused_fn = jax.jit(functools.partial(eca_forward, force_tiled=False))
    out_fused = jax.block_until_ready(fused_fn(x, weight, bias))
    np.testing.assert_allclose(np.asarray(out_fused), ref, rtol=1e-5, atol=1e-5)

    # Tiled streaming fallback path (used for shapes that don't fit VMEM).
    tiled_fn = jax.jit(functools.partial(eca_forward, force_tiled=True))
    out_tiled = jax.block_until_ready(tiled_fn(x, weight, bias))
    np.testing.assert_allclose(np.asarray(out_tiled), ref, rtol=1e-5, atol=1e-5)

    print("KERNEL_OK")
</pallas_src>

<mosaic_0001>
module attributes {stable_mosaic.version = 11 : i64} {
  func.func @eca_fused_kernel(%arg0: memref<16x16x16x16xf32, #tpu.memory_space<vmem>>, %arg1: memref<16x7xf32, #tpu.memory_space<vmem>>, %arg2: memref<16x1xf32, #tpu.memory_space<vmem>>, %arg3: memref<16x16x16x16xf32, #tpu.memory_space<vmem>>, %arg4: memref<16x22xf32, #tpu.memory_space<vmem>>) attributes {dimension_semantics = [], scalar_prefetch = 0 : i64, scratch_operands = 1 : i64, tpu.core_type = #tpu.core_type<tc>} {
    %c0 = arith.constant 0 : index
    %c0_0 = arith.constant 0 : index
    %c0_1 = arith.constant 0 : index
    %c0_2 = arith.constant 0 : index
    %0 = vector.load %arg0[%c0, %c0_0, %c0_1, %c0_2] : memref<16x16x16x16xf32, #tpu.memory_space<vmem>>, vector<16x16x16x16xf32>
    %cst = arith.constant dense<0.000000e+00> : vector<16x16x16xf32>
    %1 = vector.multi_reduction <add>, %0, %cst [3] : vector<16x16x16x16xf32> to vector<16x16x16xf32>
    %cst_3 = arith.constant dense<0.000000e+00> : vector<16x16xf32>
    %2 = vector.multi_reduction <add>, %1, %cst_3 [2] : vector<16x16x16xf32> to vector<16x16xf32>
    %cst_4 = arith.constant 3.906250e-03 : f32
    %3 = vector.broadcast %cst_4 : f32 to vector<16x16xf32>
    %4 = arith.mulf %2, %3 : vector<16x16xf32>
    %cst_5 = arith.constant 0.000000e+00 : f32
    %5 = vector.broadcast %cst_5 : f32 to vector<16x22xf32>
    %c0_6 = arith.constant 0 : index
    %c0_7 = arith.constant 0 : index
    %6 = vector.load %arg4[%c0_6, %c0_7] : memref<16x22xf32, #tpu.memory_space<vmem>>, vector<16x22xf32>
    tpu.vector_store %arg4[%c0_6, %c0_7], %5 {strides = array<i32>} : memref<16x22xf32, #tpu.memory_space<vmem>>, vector<16x22xf32>,
    %c0_8 = arith.constant 0 : index
    %c3 = arith.constant 3 : index
    %7 = vector.load %arg4[%c0_8, %c3] : memref<16x22xf32, #tpu.memory_space<vmem>>, vector<16x16xf32>
    tpu.vector_store %arg4[%c0_8, %c3], %4 {strides = array<i32>} : memref<16x22xf32, #tpu.memory_space<vmem>>, vector<16x16xf32>,
    %c0_9 = arith.constant 0 : index
    %c0_10 = arith.constant 0 : index
    %8 = vector.load %arg4[%c0_9, %c0_10] : memref<16x22xf32, #tpu.memory_space<vmem>>, vector<16x22xf32>
    %cst_11 = arith.constant 0.000000e+00 : f32
    %9 = vector.broadcast %cst_11 : f32 to vector<16x16xf32>
    %c0_12 = arith.constant 0 : index
    %c0_13 = arith.constant 0 : index
    %10 = vector.load %arg1[%c0_12, %c0_13] : memref<16x7xf32, #tpu.memory_space<vmem>>, vector<16x1xf32>
    %11 = vector.extract_strided_slice %8 {offsets = [0, 0], sizes = [16, 16], strides = [1, 1]} : vector<16x22xf32> to vector<16x16xf32>
    %12 = vector.broadcast %10 : vector<16x1xf32> to vector<16x16xf32>
    %13 = arith.mulf %12, %11 : vector<16x16xf32>
    %14 = arith.addf %9, %13 : vector<16x16xf32>
    %c0_14 = arith.constant 0 : index
    %c1 = arith.constant 1 : index
    %15 = vector.load %arg1[%c0_14, %c1] : memref<16x7xf32, #tpu.memory_space<vmem>>, vector<16x1xf32>
    %16 = vector.extract_strided_slice %8 {offsets = [0, 1], sizes = [16, 16], strides = [1, 1]} : vector<16x22xf32> to vector<16x16xf32>
    %17 = vector.broadcast %15 : vector<16x1xf32> to vector<16x16xf32>
    %18 = arith.mulf %17, %16 : vector<16x16xf32>
    %19 = arith.addf %14, %18 : vector<16x16xf32>
    %c0_15 = arith.constant 0 : index
    %c2 = arith.constant 2 : index
    %20 = vector.load %arg1[%c0_15, %c2] : memref<16x7xf32, #tpu.memory_space<vmem>>, vector<16x1xf32>
    %21 = vector.extract_strided_slice %8 {offsets = [0, 2], sizes = [16, 16], strides = [1, 1]} : vector<16x22xf32> to vector<16x16xf32>
    %22 = vector.broadcast %20 : vector<16x1xf32> to vector<16x16xf32>
    %23 = arith.mulf %22, %21 : vector<16x16xf32>
    %24 = arith.addf %19, %23 : vector<16x16xf32>
    %c0_16 = arith.constant 0 : index
    %c3_17 = arith.constant 3 : index
    %25 = vector.load %arg1[%c0_16, %c3_17] : memref<16x7xf32, #tpu.memory_space<vmem>>, vector<16x1xf32>
    %26 = vector.extract_strided_slice %8 {offsets = [0, 3], sizes = [16, 16], strides = [1, 1]} : vector<16x22xf32> to vector<16x16xf32>
    %27 = vector.broadcast %25 : vector<16x1xf32> to vector<16x16xf32>
    %28 = arith.mulf %27, %26 : vector<16x16xf32>
    %29 = arith.addf %24, %28 : vector<16x16xf32>
    %c0_18 = arith.constant 0 : index
    %c4 = arith.constant 4 : index
    %30 = vector.load %arg1[%c0_18, %c4] : memref<16x7xf32, #tpu.memory_space<vmem>>, vector<16x1xf32>
    %31 = vector.extract_strided_slice %8 {offsets = [0, 4], sizes = [16, 16], strides = [1, 1]} : vector<16x22xf32> to vector<16x16xf32>
    %32 = vector.broadcast %30 : vector<16x1xf32> to vector<16x16xf32>
    %33 = arith.mulf %32, %31 : vector<16x16xf32>
    %34 = arith.addf %29, %33 : vector<16x16xf32>
    %c0_19 = arith.constant 0 : index
    %c5 = arith.constant 5 : index
    %35 = vector.load %arg1[%c0_19, %c5] : memref<16x7xf32, #tpu.memory_space<vmem>>, vector<16x1xf32>
    %36 = vector.extract_strided_slice %8 {offsets = [0, 5], sizes = [16, 16], strides = [1, 1]} : vector<16x22xf32> to vector<16x16xf32>
    %37 = vector.broadcast %35 : vector<16x1xf32> to vector<16x16xf32>
    %38 = arith.mulf %37, %36 : vector<16x16xf32>
    %39 = arith.addf %34, %38 : vector<16x16xf32>
    %c0_20 = arith.constant 0 : index
    %c6 = arith.constant 6 : index
    %40 = vector.load %arg1[%c0_20, %c6] : memref<16x7xf32, #tpu.memory_space<vmem>>, vector<16x1xf32>
    %41 = vector.extract_strided_slice %8 {offsets = [0, 6], sizes = [16, 16], strides = [1, 1]} : vector<16x22xf32> to vector<16x16xf32>
    %42 = vector.broadcast %40 : vector<16x1xf32> to vector<16x16xf32>
    %43 = arith.mulf %42, %41 : vector<16x16xf32>
    %44 = arith.addf %39, %43 : vector<16x16xf32>
    %c0_21 = arith.constant 0 : index
    %c0_22 = arith.constant 0 : index
    %45 = vector.load %arg2[%c0_21, %c0_22] : memref<16x1xf32, #tpu.memory_space<vmem>>, vector<16x1xf32>
    %46 = vector.broadcast %45 : vector<16x1xf32> to vector<16x16xf32>
    %47 = arith.addf %44, %46 : vector<16x16xf32>
    %48 = arith.negf %47 : vector<16x16xf32>
    %49 = math.exp %48 : vector<16x16xf32>
    %cst_23 = arith.constant 1.000000e+00 : f32
    %50 = vector.broadcast %cst_23 : f32 to vector<16x16xf32>
    %51 = arith.addf %50, %49 : vector<16x16xf32>
    %52 = arith.divf %50, %51 : vector<16x16xf32>
    %53 = vector.shape_cast %52 : vector<16x16xf32> to vector<1x1x16x16xf32>
    %54 = vector.broadcast %53 : vector<1x1x16x16xf32> to vector<16x16x16x16xf32>
    %55 = arith.mulf %0, %54 : vector<16x16x16x16xf32>
    %c0_24 = arith.constant 0 : index
    %c0_25 = arith.constant 0 : index
    %c0_26 = arith.constant 0 : index
    %c0_27 = arith.constant 0 : index
    %56 = vector.load %arg3[%c0_24, %c0_25, %c0_26, %c0_27] : memref<16x16x16x16xf32, #tpu.memory_space<vmem>>, vector<16x16x16x16xf32>
    tpu.vector_store %arg3[%c0_24, %c0_25, %c0_26, %c0_27], %55 {strides = array<i32>} : memref<16x16x16x16xf32, #tpu.memory_space<vmem>>, vector<16x16x16x16xf32>,
    return
  }
}

</mosaic_0001>

<llo_original>
// kernel: eca_forward.1
$region0: #{eca_forward.1}
  #allocation0 [shape = 'u32[]', space=smem, size = 0x4, offset = 0x4, fixed_abs, tag = 'smem constant byte address 0x4 - core index']
  #allocation1 [shape = 'u32[144,128]{1,0:T(1,128)}', space=vmem, size = 0x12000, scoped, tag = 'internal scratch']
  #allocation2 [shape = 'f32[16,22]{1,0:T(8,128)}', space=vmem, size = 0x2000, scoped, tag = 'scratch operand']
  %s0 = inlined_call_operand.hbm [shape: f32[16,16,16,16], index: 0, kind: input, shape index: {}]
  %s1 = inlined_call_operand.hbm [shape: f32[16,7], index: 1, kind: input, shape index: {}]
  %s2 = inlined_call_operand.hbm [shape: f32[16,1], index: 2, kind: input, shape index: {}]
  %s3 = inlined_call_operand.hbm [shape: f32[16,16,16,16], index: 3, kind: output, shape index: {}]
  %s4 = sld [smem:[#allocation0]]
  $region34: #{eca_forward.1} parent=0
    _
  %s6 = ssub.s32 1, %s4
  %s7 = scalar_select 0, %s6, %s4
  $region1: #{eca_forward.1} parent=0
    #allocation3 [shape = 'u8[2097152]{0}', space=vmem, size = 0x200000, scoped, tag = 'input window, operand 0, single buffered']
    #allocation4 [shape = 's32[1]{0}', space=sflag, size = 0x4, scoped, tag = 'scoped memory for eca_forward.1']
    #allocation5 [shape = 's32[1]{0}', space=sflag, size = 0x4, scoped, tag = 'scoped memory for eca_forward.1']
    #allocation6 [shape = 'u8[8192]{0}', space=vmem, size = 0x2000, scoped, tag = 'input window, operand 1, single buffered']
    #allocation7 [shape = 's32[1]{0}', space=sflag, size = 0x4, scoped, tag = 'scoped memory for eca_forward.1']
    #allocation8 [shape = 'u8[8192]{0}', space=vmem, size = 0x2000, scoped, tag = 'input window, operand 2, single buffered']
    #allocation9 [shape = 'u8[2097152]{0}', space=vmem, size = 0x200000, scoped, tag = 'output window, operand 0, single buffered']
    %8 = vsyncpa [#allocation4], 0
    %9 = vsyncpa [#allocation7], 0
    %10 = vsyncpa [#allocation5], 0
    // Predicated region
    $region2: #{eca_forward.1} parent=1 // pred_check
      _
    $region3: #{eca_forward.1} parent=1 // pred_check_branch
      %12 = sbr.rel (0) target = $region5
    $region4: #{eca_forward.1} parent=1 // pred_region
      %s14 = ssub.s32 65536, 65536
      %15 = vsyncadd [#allocation4], %s14
      %s16 = sshll.u32 [#allocation3], 4
      %s17 = int_to_ptr.vmem [resolvable:$true] %s16
      %22 = dma.hbm_to_vmem [thread:$0]  %s0, 65536, %s17, [#allocation4], 128, 128, 8
    $region5: #{eca_forward.1} parent=1 // pred_fallthru
      _
    // Predicated region
    $region6: #{eca_forward.1} parent=1 // pred_check
      _
    $region7: #{eca_forward.1} parent=1 // pred_check_branch
      %24 = sbr.rel (0) target = $region9
    $region8: #{eca_forward.1} parent=1 // pred_region
      %s26 = ssub.s32 256, 256
      %27 = vsyncadd [#allocation7], %s26
      %s28 = sshll.u32 [#allocation6], 4
      %s29 = int_to_ptr.vmem [resolvable:$true] %s28
      %34 = dma.hbm_to_vmem [thread:$0]  %s1, 256, %s29, [#allocation7], 128, 128, 8
    $region9: #{eca_forward.1} parent=1 // pred_fallthru
      _
    // Predicated region
    $region10: #{eca_forward.1} parent=1 // pred_check
      _
    $region11: #{eca_forward.1} parent=1 // pred_check_branch
      %36 = sbr.rel (0) target = $region13
    $region12: #{eca_forward.1} parent=1 // pred_region
      %s38 = ssub.s32 256, 256
      %39 = vsyncadd [#allocation7], %s38
      %s40 = sshll.u32 [#allocation8], 4
      %s41 = int_to_ptr.vmem [resolvable:$true] %s40
      %46 = dma.hbm_to_vmem [thread:$0]  %s2, 256, %s41, [#allocation7], 128, 128, 8
    $region13: #{eca_forward.1} parent=1 // pred_fallthru
      _
    // Predicated region
    $region14: #{eca_forward.1} parent=1 // pred_check
      _
    $region15: #{eca_forward.1} parent=1 // pred_check_branch
      %48 = sbr.rel (0) target = $region17
    $region16: #{eca_forward.1} parent=1 // pred_region
      %49 = dma.done [#allocation4], 65536
    $region17: #{eca_forward.1} parent=1 // pred_fallthru
      _
    // Predicated region
    $region18: #{eca_forward.1} parent=1 // pred_check
      _
    $region19: #{eca_forward.1} parent=1 // pred_check_branch
      %51 = sbr.rel (0) target = $region21
    $region20: #{eca_forward.1} parent=1 // pred_region
      %52 = dma.done [#allocation7], 256
    $region21: #{eca_forward.1} parent=1 // pred_fallthru
      _
    // Predicated region
    $region22: #{eca_forward.1} parent=1 // pred_check
      _
    $region23: #{eca_forward.1} parent=1 // pred_check_branch
      %54 = sbr.rel (0) target = $region25
    $region24: #{eca_forward.1} parent=1 // pred_region
      %55 = dma.done [#allocation7], 256
    $region25: #{eca_forward.1} parent=1 // pred_fallthru
      _
    %v56 = vld [vmem:[#allocation3] sm:$0xff]
    %v57 = vld [vmem:[#allocation3 + $0x8] sm:$0xff]
    %v58 = vld [vmem:[#allocation3 + $0x10] sm:$0xff]
    %v59 = vld [vmem:[#allocation3 + $0x18] sm:$0xff]
    %v60 = vld [vmem:[#allocation3 + $0x20] sm:$0xff]
    %v61 = vld [vmem:[#allocation3 + $0x28] sm:$0xff]
    %v62 = vld [vmem:[#allocation3 + $0x30] sm:$0xff]
    %v63 = vld [vmem:[#allocation3 + $0x38] sm:$0xff]
    %v64 = vld [vmem:[#allocation3 + $0x40] sm:$0xff]
    %v65 = vld [vmem:[#allocation3 + $0x48] sm:$0xff]
    %v66 = vld [vmem:[#allocation3 + $0x50] sm:$0xff]
    %v67 = vld [vmem:[#allocation3 + $0x58] sm:$0xff]
    %v68 = vld [vmem:[#allocation3 + $0x60] sm:$0xff]
    %v69 = vld [vmem:[#allocation3 + $0x68] sm:$0xff]
    %v70 = vld [vmem:[#allocation3 + $0x70] sm:$0xff]
    %v71 = vld [vmem:[#allocation3 + $0x78] sm:$0xff]
    %v72 = vld [vmem:[#allocation3 + $0x80] sm:$0xff]
    %v73 = vld [vmem:[#allocation3 + $0x88] sm:$0xff]
    %v74 = vld [vmem:[#allocation3 + $0x90] sm:$0xff]
    %v75 = vld [vmem:[#allocation3 + $0x98] sm:$0xff]
    %v76 = vld [vmem:[#allocation3 + $0xa0] sm:$0xff]
    %v77 = vld [vmem:[#allocation3 + $0xa8] sm:$0xff]
    %v78 = vld [vmem:[#allocation3 + $0xb0] sm:$0xff]
    %v79 = vld [vmem:[#allocation3 + $0xb8] sm:$0xff]
    %v80 = vld [vmem:[#allocation3 + $0xc0] sm:$0xff]
    %v81 = vld [vmem:[#allocation3 + $0xc8] sm:$0xff]
    %v82 = vld [vmem:[#allocation3 + $0xd0] sm:$0xff]
    %v83 = vld [vmem:[#allocation3 + $0xd8] sm:$0xff]
    %v84 = vld [vmem:[#allocation3 + $0xe0] sm:$0xff]
    %v85 = vld [vmem:[#allocation3 + $0xe8] sm:$0xff]
    %v86 = vld [vmem:[#allocation3 + $0xf0] sm:$0xff]
    %v87 = vld [vmem:[#allocation3 + $0xf8] sm:$0xff]
    %v88 = vld [vmem:[#allocation3 + $0x100] sm:$0xff]
    %v89 = vld [vmem:[#allocation3 + $0x108] sm:$0xff]
    %v90 = vld [vmem:[#allocation3 + $0x110] sm:$0xff]
    %v91 = vld [vmem:[#allocation3 + $0x118] sm:$0xff]
    %v92 = vld [vmem:[#allocation3 + $0x120] sm:$0xff]
    %v93 = vld [vmem:[#allocation3 + $0x128] sm:$0xff]
    %v94 = vld [vmem:[#allocation3 + $0x130] sm:$0xff]
    %v95 = vld [vmem:[#allocation3 + $0x138] sm:$0xff]
    %v96 = vld [vmem:[#allocation3 + $0x140] sm:$0xff]
    %v97 = vld [vmem:[#allocation3 + $0x148] sm:$0xff]
    %v98 = vld [vmem:[#allocation3 + $0x150] sm:$0xff]
    %v99 = vld [vmem:[#allocation3 + $0x158] sm:$0xff]
    %v100 = vld [vmem:[#allocation3 + $0x160] sm:$0xff]
    %v101 = vld [vmem:[#allocation3 + $0x168] sm:$0xff]
    %v102 = vld [vmem:[#allocation3 + $0x170] sm:$0xff]
    %v103 = vld [vmem:[#allocation3 + $0x178] sm:$0xff]
    %v104 = vld [vmem:[#allocation3 + $0x180] sm:$0xff]
    %v105 = vld [vmem:[#allocation3 + $0x188] sm:$0xff]
    %v106 = vld [vmem:[#allocation3 + $0x190] sm:$0xff]
    %v107 = vld [vmem:[#allocation3 + $0x198] sm:$0xff]
    %v108 = vld [vmem:[#allocation3 + $0x1a0] sm:$0xff]
    %v109 = vld [vmem:[#allocation3 + $0x1a8] sm:$0xff]
    %v110 = vld [vmem:[#allocation3 + $0x1b0] sm:$0xff]
    %v111 = vld [vmem:[#allocation3 + $0x1b8] sm:$0xff]
    %v112 = vld [vmem:[#allocation3 + $0x1c0] sm:$0xff]
    %v113 = vld [vmem:[#allocation3 + $0x1c8] sm:$0xff]
    %v114 = vld [vmem:[#allocation3 + $0x1d0] sm:$0xff]
    %v115 = vld [vmem:[#allocation3 + $0x1d8] sm:$0xff]
    %v116 = vld [vmem:[#allocation3 + $0x1e0] sm:$0xff]
    %v117 = vld [vmem:[#allocation3 + $0x1e8] sm:$0xff]
    %v118 = vld [vmem:[#allocation3 + $0x1f0] sm:$0xff]
    %v119 = vld [vmem:[#allocation3 + $0x1f8] sm:$0xff]
    %v120 = vld [vmem:[#allocation3 + $0x200] sm:$0xff]
    %v121 = vld [vmem:[#allocation3 + $0x208] sm:$0xff]
    %v122 = vld [vmem:[#allocation3 + $0x210] sm:$0xff]
    %v123 = vld [vmem:[#allocation3 + $0x218] sm:$0xff]
    %v124 = vld [vmem:[#allocation3 + $0x220] sm:$0xff]
    %v125 = vld [vmem:[#allocation3 + $0x228] sm:$0xff]
    %v126 = vld [vmem:[#allocation3 + $0x230] sm:$0xff]
    %v127 = vld [vmem:[#allocation3 + $0x238] sm:$0xff]
    %v128 = vld [vmem:[#allocation3 + $0x240] sm:$0xff]
    %v129 = vld [vmem:[#allocation3 + $0x248] sm:$0xff]
    %v130 = vld [vmem:[#allocation3 + $0x250] sm:$0xff]
    %v131 = vld [vmem:[#allocation3 + $0x258] sm:$0xff]
    %v132 = vld [vmem:[#allocation3 + $0x260] sm:$0xff]
    %v133 = vld [vmem:[#allocation3 + $0x268] sm:$0xff]
    %v134 = vld [vmem:[#allocation3 + $0x270] sm:$0xff]
    %v135 = vld [vmem:[#allocation3 + $0x278] sm:$0xff]
    %v136 = vld [vmem:[#allocation3 + $0x280] sm:$0xff]
    %v137 = vld [vmem:[#allocation3 + $0x288] sm:$0xff]
    %v138 = vld [vmem:[#allocation3 + $0x290] sm:$0xff]
    %v139 = vld [vmem:[#allocation3 + $0x298] sm:$0xff]
    %v140 = vld [vmem:[#allocation3 + $0x2a0] sm:$0xff]
    %v141 = vld [vmem:[#allocation3 + $0x2a8] sm:$0xff]
    %v142 = vld [vmem:[#allocation3 + $0x2b0] sm:$0xff]
    %v143 = vld [vmem:[#allocation3 + $0x2b8] sm:$0xff]
    %v144 = vld [vmem:[#allocation3 + $0x2c0] sm:$0xff]
    %v145 = vld [vmem:[#allocation3 + $0x2c8] sm:$0xff]
    %v146 = vld [vmem:[#allocation3 + $0x2d0] sm:$0xff]
    %v147 = vld [vmem:[#allocation3 + $0x2d8] sm:$0xff]
    %v148 = vld [vmem:[#allocation3 + $0x2e0] sm:$0xff]
    %v149 = vld [vmem:[#allocation3 + $0x2e8] sm:$0xff]
    %v150 = vld [vmem:[#allocation3 + $0x2f0] sm:$0xff]
    %v151 = vld [vmem:[#allocation3 + $0x2f8] sm:$0xff]
    %v152 = vld [vmem:[#allocation3 + $0x300] sm:$0xff]
    %v153 = vld [vmem:[#allocation3 + $0x308] sm:$0xff]
    %v154 = vld [vmem:[#allocation3 + $0x310] sm:$0xff]
    %v155 = vld [vmem:[#allocation3 + $0x318] sm:$0xff]
    %v156 = vld [vmem:[#allocation3 + $0x320] sm:$0xff]
    %v157 = vld [vmem:[#allocation3 + $0x328] sm:$0xff]
    %v158 = vld [vmem:[#allocation3 + $0x330] sm:$0xff]
    %v159 = vld [vmem:[#allocation3 + $0x338] sm:$0xff]
    %v160 = vld [vmem:[#allocation3 + $0x340] sm:$0xff]
    %v161 = vld [vmem:[#allocation3 + $0x348] sm:$0xff]
    %v162 = vld [vmem:[#allocation3 + $0x350] sm:$0xff]
    %v163 = vld [vmem:[#allocation3 + $0x358] sm:$0xff]
    %v164 = vld [vmem:[#allocation3 + $0x360] sm:$0xff]
    %v165 = vld [vmem:[#allocation3 + $0x368] sm:$0xff]
    %v166 = vld [vmem:[#allocation3 + $0x370] sm:$0xff]
    %v167 = vld [vmem:[#allocation3 + $0x378] sm:$0xff]
    %v168 = vld [vmem:[#allocation3 + $0x380] sm:$0xff]
    %v169 = vld [vmem:[#allocation3 + $0x388] sm:$0xff]
    %v170 = vld [vmem:[#allocation3 + $0x390] sm:$0xff]
    %v171 = vld [vmem:[#allocation3 + $0x398] sm:$0xff]
    %v172 = vld [vmem:[#allocation3 + $0x3a0] sm:$0xff]
    %v173 = vld [vmem:[#allocation3 + $0x3a8] sm:$0xff]
    %v174 = vld [vmem:[#allocation3 + $0x3b0] sm:$0xff]
    %v175 = vld [vmem:[#allocation3 + $0x3b8] sm:$0xff]
    %v176 = vld [vmem:[#allocation3 + $0x3c0] sm:$0xff]
    %v177 = vld [vmem:[#allocation3 + $0x3c8] sm:$0xff]
    %v178 = vld [vmem:[#allocation3 + $0x3d0] sm:$0xff]
    %v179 = vld [vmem:[#allocation3 + $0x3d8] sm:$0xff]
    %v180 = vld [vmem:[#allocation3 + $0x3e0] sm:$0xff]
    %v181 = vld [vmem:[#allocation3 + $0x3e8] sm:$0xff]
    %v182 = vld [vmem:[#allocation3 + $0x3f0] sm:$0xff]
    %v183 = vld [vmem:[#allocation3 + $0x3f8] sm:$0xff]
    %v184 = vld [vmem:[#allocation3 + $0x400] sm:$0xff]
    %v185 = vld [vmem:[#allocation3 + $0x408] sm:$0xff]
    %v186 = vld [vmem:[#allocation3 + $0x410] sm:$0xff]
    %v187 = vld [vmem:[#allocation3 + $0x418] sm:$0xff]
    %v188 = vld [vmem:[#allocation3 + $0x420] sm:$0xff]
    %v189 = vld [vmem:[#allocation3 + $0x428] sm:$0xff]
    %v190 = vld [vmem:[#allocation3 + $0x430] sm:$0xff]
    %v191 = vld [vmem:[#allocation3 + $0x438] sm:$0xff]
    %v192 = vld [vmem:[#allocation3 + $0x440] sm:$0xff]
    %v193 = vld [vmem:[#allocation3 + $0x448] sm:$0xff]
    %v194 = vld [vmem:[#allocation3 + $0x450] sm:$0xff]
    %v195 = vld [vmem:[#allocation3 + $0x458] sm:$0xff]
    %v196 = vld [vmem:[#allocation3 + $0x460] sm:$0xff]
    %v197 = vld [vmem:[#allocation3 + $0x468] sm:$0xff]
    %v198 = vld [vmem:[#allocation3 + $0x470] sm:$0xff]
    %v199 = vld [vmem:[#allocation3 + $0x478] sm:$0xff]
    %v200 = vld [vmem:[#allocation3 + $0x480] sm:$0xff]
    %v201 = vld [vmem:[#allocation3 + $0x488] sm:$0xff]
    %v202 = vld [vmem:[#allocation3 + $0x490] sm:$0xff]
    %v203 = vld [vmem:[#allocation3 + $0x498] sm:$0xff]
    %v204 = vld [vmem:[#allocation3 + $0x4a0] sm:$0xff]
    %v205 = vld [vmem:[#allocation3 + $0x4a8] sm:$0xff]
    %v206 = vld [vmem:[#allocation3 + $0x4b0] sm:$0xff]
    %v207 = vld [vmem:[#allocation3 + $0x4b8] sm:$0xff]
    %v208 = vld [vmem:[#allocation3 + $0x4c0] sm:$0xff]
    %v209 = vld [vmem:[#allocation3 + $0x4c8] sm:$0xff]
    %v210 = vld [vmem:[#allocation3 + $0x4d0] sm:$0xff]
    %v211 = vld [vmem:[#allocation3 + $0x4d8] sm:$0xff]
    %v212 = vld [vmem:[#allocation3 + $0x4e0] sm:$0xff]
    %v213 = vld [vmem:[#allocation3 + $0x4e8] sm:$0xff]
    %v214 = vld [vmem:[#allocation3 + $0x4f0] sm:$0xff]
    %v215 = vld [vmem:[#allocation3 + $0x4f8] sm:$0xff]
    %v216 = vld [vmem:[#allocation3 + $0x500] sm:$0xff]
    %v217 = vld [vmem:[#allocation3 + $0x508] sm:$0xff]
    %v218 = vld [vmem:[#allocation3 + $0x510] sm:$0xff]
    %v219 = vld [vmem:[#allocation3 + $0x518] sm:$0xff]
    %v220 = vld [vmem:[#allocation3 + $0x520] sm:$0xff]
    %v221 = vld [vmem:[#allocation3 + $0x528] sm:$0xff]
    %v222 = vld [vmem:[#allocation3 + $0x530] sm:$0xff]
    %v223 = vld [vmem:[#allocation3 + $0x538] sm:$0xff]
    %v224 = vld [vmem:[#allocation3 + $0x540] sm:$0xff]
    %v225 = vld [vmem:[#allocation3 + $0x548] sm:$0xff]
    %v226 = vld [vmem:[#allocation3 + $0x550] sm:$0xff]
    %v227 = vld [vmem:[#allocation3 + $0x558] sm:$0xff]
    %v228 = vld [vmem:[#allocation3 + $0x560] sm:$0xff]
    %v229 = vld [vmem:[#allocation3 + $0x568] sm:$0xff]
    %v230 = vld [vmem:[#allocation3 + $0x570] sm:$0xff]
    %v231 = vld [vmem:[#allocation3 + $0x578] sm:$0xff]
    %v232 = vld [vmem:[#allocation3 + $0x580] sm:$0xff]
    %v233 = vld [vmem:[#allocation3 + $0x588] sm:$0xff]
    %v234 = vld [vmem:[#allocation3 + $0x590] sm:$0xff]
    %v235 = vld [vmem:[#allocation3 + $0x598] sm:$0xff]
    %v236 = vld [vmem:[#allocation3 + $0x5a0] sm:$0xff]
    %v237 = vld [vmem:[#allocation3 + $0x5a8] sm:$0xff]
    %v238 = vld [vmem:[#allocation3 + $0x5b0] sm:$0xff]
    %v239 = vld [vmem:[#allocation3 + $0x5b8] sm:$0xff]
    %v240 = vld [vmem:[#allocation3 + $0x5c0] sm:$0xff]
    %v241 = vld [vmem:[#allocation3 + $0x5c8] sm:$0xff]
    %v242 = vld [vmem:[#allocation3 + $0x5d0] sm:$0xff]
    %v243 = vld [vmem:[#allocation3 + $0x5d8] sm:$0xff]
    %v244 = vld [vmem:[#allocation3 + $0x5e0] sm:$0xff]
    %v245 = vld [vmem:[#allocation3 + $0x5e8] sm:$0xff]
    %v246 = vld [vmem:[#allocation3 + $0x5f0] sm:$0xff]
    %v247 = vld [vmem:[#allocation3 + $0x5f8] sm:$0xff]
    %v248 = vld [vmem:[#allocation3 + $0x600] sm:$0xff]
    %v249 = vld [vmem:[#allocation3 + $0x608] sm:$0xff]
    %v250 = vld [vmem:[#allocation3 + $0x610] sm:$0xff]
    %v251 = vld [vmem:[#allocation3 + $0x618] sm:$0xff]
    %v252 = vld [vmem:[#allocation3 + $0x620] sm:$0xff]
    %v253 = vld [vmem:[#allocation3 + $0x628] sm:$0xff]
    %v254 = vld [vmem:[#allocation3 + $0x630] sm:$0xff]
    %v255 = vld [vmem:[#allocation3 + $0x638] sm:$0xff]
    %v256 = vld [vmem:[#allocation3 + $0x640] sm:$0xff]
    %v257 = vld [vmem:[#allocation3 + $0x648] sm:$0xff]
    %v258 = vld [vmem:[#allocation3 + $0x650] sm:$0xff]
    %v259 = vld [vmem:[#allocation3 + $0x658] sm:$0xff]
    %v260 = vld [vmem:[#allocation3 + $0x660] sm:$0xff]
    %v261 = vld [vmem:[#allocation3 + $0x668] sm:$0xff]
    %v262 = vld [vmem:[#allocation3 + $0x670] sm:$0xff]
    %v263 = vld [vmem:[#allocation3 + $0x678] sm:$0xff]
    %v264 = vld [vmem:[#allocation3 + $0x680] sm:$0xff]
    %v265 = vld [vmem:[#allocation3 + $0x688] sm:$0xff]
    %v266 = vld [vmem:[#allocation3 + $0x690] sm:$0xff]
    %v267 = vld [vmem:[#allocation3 + $0x698] sm:$0xff]
    %v268 = vld [vmem:[#allocation3 + $0x6a0] sm:$0xff]
    %v269 = vld [vmem:[#allocation3 + $0x6a8] sm:$0xff]
    %v270 = vld [vmem:[#allocation3 + $0x6b0] sm:$0xff]
    %v271 = vld [vmem:[#allocation3 + $0x6b8] sm:$0xff]
    %v272 = vld [vmem:[#allocation3 + $0x6c0] sm:$0xff]
    %v273 = vld [vmem:[#allocation3 + $0x6c8] sm:$0xff]
    %v274 = vld [vmem:[#allocation3 + $0x6d0] sm:$0xff]
    %v275 = vld [vmem:[#allocation3 + $0x6d8] sm:$0xff]
    %v276 = vld [vmem:[#allocation3 + $0x6e0] sm:$0xff]
    %v277 = vld [vmem:[#allocation3 + $0x6e8] sm:$0xff]
    %v278 = vld [vmem:[#allocation3 + $0x6f0] sm:$0xff]
    %v279 = vld [vmem:[#allocation3 + $0x6f8] sm:$0xff]
    %v280 = vld [vmem:[#allocation3 + $0x700] sm:$0xff]
    %v281 = vld [vmem:[#allocation3 + $0x708] sm:$0xff]
    %v282 = vld [vmem:[#allocation3 + $0x710] sm:$0xff]
    %v283 = vld [vmem:[#allocation3 + $0x718] sm:$0xff]
    %v284 = vld [vmem:[#allocation3 + $0x720] sm:$0xff]
    %v285 = vld [vmem:[#allocation3 + $0x728] sm:$0xff]
    %v286 = vld [vmem:[#allocation3 + $0x730] sm:$0xff]
    %v287 = vld [vmem:[#allocation3 + $0x738] sm:$0xff]
    %v288 = vld [vmem:[#allocation3 + $0x740] sm:$0xff]
    %v289 = vld [vmem:[#allocation3 + $0x748] sm:$0xff]
    %v290 = vld [vmem:[#allocation3 + $0x750] sm:$0xff]
    %v291 = vld [vmem:[#allocation3 + $0x758] sm:$0xff]
    %v292 = vld [vmem:[#allocation3 + $0x760] sm:$0xff]
    %v293 = vld [vmem:[#allocation3 + $0x768] sm:$0xff]
    %v294 = vld [vmem:[#allocation3 + $0x770] sm:$0xff]
    %v295 = vld [vmem:[#allocation3 + $0x778] sm:$0xff]
    %v296 = vld [vmem:[#allocation3 + $0x780] sm:$0xff]
    %v297 = vld [vmem:[#allocation3 + $0x788] sm:$0xff]
    %v298 = vld [vmem:[#allocation3 + $0x790] sm:$0xff]
    %v299 = vld [vmem:[#allocation3 + $0x798] sm:$0xff]
    %v300 = vld [vmem:[#allocation3 + $0x7a0] sm:$0xff]
    %v301 = vld [vmem:[#allocation3 + $0x7a8] sm:$0xff]
    %v302 = vld [vmem:[#allocation3 + $0x7b0] sm:$0xff]
    %v303 = vld [vmem:[#allocation3 + $0x7b8] sm:$0xff]
    %v304 = vld [vmem:[#allocation3 + $0x7c0] sm:$0xff]
    %v305 = vld [vmem:[#allocation3 + $0x7c8] sm:$0xff]
    %v306 = vld [vmem:[#allocation3 + $0x7d0] sm:$0xff]
    %v307 = vld [vmem:[#allocation3 + $0x7d8] sm:$0xff]
    %v308 = vld [vmem:[#allocation3 + $0x7e0] sm:$0xff]
    %v309 = vld [vmem:[#allocation3 + $0x7e8] sm:$0xff]
    %v310 = vld [vmem:[#allocation3 + $0x7f0] sm:$0xff]
    %v311 = vld [vmem:[#allocation3 + $0x7f8] sm:$0xff]
    %v312 = vld [vmem:[#allocation3 + $0x800] sm:$0xff]
    %v313 = vld [vmem:[#allocation3 + $0x808] sm:$0xff]
    %v314 = vld [vmem:[#allocation3 + $0x810] sm:$0xff]
    %v315 = vld [vmem:[#allocation3 + $0x818] sm:$0xff]
    %v316 = vld [vmem:[#allocation3 + $0x820] sm:$0xff]
    %v317 = vld [vmem:[#allocation3 + $0x828] sm:$0xff]
    %v318 = vld [vmem:[#allocation3 + $0x830] sm:$0xff]
    %v319 = vld [vmem:[#allocation3 + $0x838] sm:$0xff]
    %v320 = vld [vmem:[#allocation3 + $0x840] sm:$0xff]
    %v321 = vld [vmem:[#allocation3 + $0x848] sm:$0xff]
    %v322 = vld [vmem:[#allocation3 + $0x850] sm:$0xff]
    %v323 = vld [vmem:[#allocation3 + $0x858] sm:$0xff]
    %v324 = vld [vmem:[#allocation3 + $0x860] sm:$0xff]
    %v325 = vld [vmem:[#allocation3 + $0x868] sm:$0xff]
    %v326 = vld [vmem:[#allocation3 + $0x870] sm:$0xff]
    %v327 = vld [vmem:[#allocation3 + $0x878] sm:$0xff]
    %v328 = vld [vmem:[#allocation3 + $0x880] sm:$0xff]
    %v329 = vld [vmem:[#allocation3 + $0x888] sm:$0xff]
    %v330 = vld [vmem:[#allocation3 + $0x890] sm:$0xff]
    %v331 = vld [vmem:[#allocation3 + $0x898] sm:$0xff]
    %v332 = vld [vmem:[#allocation3 + $0x8a0] sm:$0xff]
    %v333 = vld [vmem:[#allocation3 + $0x8a8] sm:$0xff]
    %v334 = vld [vmem:[#allocation3 + $0x8b0] sm:$0xff]
    %v335 = vld [vmem:[#allocation3 + $0x8b8] sm:$0xff]
    %v336 = vld [vmem:[#allocation3 + $0x8c0] sm:$0xff]
    %v337 = vld [vmem:[#allocation3 + $0x8c8] sm:$0xff]
    %v338 = vld [vmem:[#allocation3 + $0x8d0] sm:$0xff]
    %v339 = vld [vmem:[#allocation3 + $0x8d8] sm:$0xff]
    %v340 = vld [vmem:[#allocation3 + $0x8e0] sm:$0xff]
    %v341 = vld [vmem:[#allocation3 + $0x8e8] sm:$0xff]
    %v342 = vld [vmem:[#allocation3 + $0x8f0] sm:$0xff]
    %v343 = vld [vmem:[#allocation3 + $0x8f8] sm:$0xff]
    %v344 = vld [vmem:[#allocation3 + $0x900] sm:$0xff]
    %v345 = vld [vmem:[#allocation3 + $0x908] sm:$0xff]
    %v346 = vld [vmem:[#allocation3 + $0x910] sm:$0xff]
    %v347 = vld [vmem:[#allocation3 + $0x918] sm:$0xff]
    %v348 = vld [vmem:[#allocation3 + $0x920] sm:$0xff]
    %v349 = vld [vmem:[#allocation3 + $0x928] sm:$0xff]
    %v350 = vld [vmem:[#allocation3 + $0x930] sm:$0xff]
    %v351 = vld [vmem:[#allocation3 + $0x938] sm:$0xff]
    %v352 = vld [vmem:[#allocation3 + $0x940] sm:$0xff]
    %v353 = vld [vmem:[#allocation3 + $0x948] sm:$0xff]
    %v354 = vld [vmem:[#allocation3 + $0x950] sm:$0xff]
    %v355 = vld [vmem:[#allocation3 + $0x958] sm:$0xff]
    %v356 = vld [vmem:[#allocation3 + $0x960] sm:$0xff]
    %v357 = vld [vmem:[#allocation3 + $0x968] sm:$0xff]
    %v358 = vld [vmem:[#allocation3 + $0x970] sm:$0xff]
    %v359 = vld [vmem:[#allocation3 + $0x978] sm:$0xff]
    %v360 = vld [vmem:[#allocation3 + $0x980] sm:$0xff]
    %v361 = vld [vmem:[#allocation3 + $0x988] sm:$0xff]
    %v362 = vld [vmem:[#allocation3 + $0x990] sm:$0xff]
    %v363 = vld [vmem:[#allocation3 + $0x998] sm:$0xff]
    %v364 = vld [vmem:[#allocation3 + $0x9a0] sm:$0xff]
    %v365 = vld [vmem:[#allocation3 + $0x9a8] sm:$0xff]
    %v366 = vld [vmem:[#allocation3 + $0x9b0] sm:$0xff]
    %v367 = vld [vmem:[#allocation3 + $0x9b8] sm:$0xff]
    %v368 = vld [vmem:[#allocation3 + $0x9c0] sm:$0xff]
    %v369 = vld [vmem:[#allocation3 + $0x9c8] sm:$0xff]
    %v370 = vld [vmem:[#allocation3 + $0x9d0] sm:$0xff]
    %v371 = vld [vmem:[#allocation3 + $0x9d8] sm:$0xff]
    %v372 = vld [vmem:[#allocation3 + $0x9e0] sm:$0xff]
    %v373 = vld [vmem:[#allocation3 + $0x9e8] sm:$0xff]
    %v374 = vld [vmem:[#allocation3 + $0x9f0] sm:$0xff]
    %v375 = vld [vmem:[#allocation3 + $0x9f8] sm:$0xff]
    %v376 = vld [vmem:[#allocation3 + $0xa00] sm:$0xff]
    %v377 = vld [vmem:[#allocation3 + $0xa08] sm:$0xff]
    %v378 = vld [vmem:[#allocation3 + $0xa10] sm:$0xff]
    %v379 = vld [vmem:[#allocation3 + $0xa18] sm:$0xff]
    %v380 = vld [vmem:[#allocation3 + $0xa20] sm:$0xff]
    %v381 = vld [vmem:[#allocation3 + $0xa28] sm:$0xff]
    %v382 = vld [vmem:[#allocation3 + $0xa30] sm:$0xff]
    %v383 = vld [vmem:[#allocation3 + $0xa38] sm:$0xff]
    %v384 = vld [vmem:[#allocation3 + $0xa40] sm:$0xff]
    %v385 = vld [vmem:[#allocation3 + $0xa48] sm:$0xff]
    %v386 = vld [vmem:[#allocation3 + $0xa50] sm:$0xff]
    %v387 = vld [vmem:[#allocation3 + $0xa58] sm:$0xff]
    %v388 = vld [vmem:[#allocation3 + $0xa60] sm:$0xff]
    %v389 = vld [vmem:[#allocation3 + $0xa68] sm:$0xff]
    %v390 = vld [vmem:[#allocation3 + $0xa70] sm:$0xff]
    %v391 = vld [vmem:[#allocation3 + $0xa78] sm:$0xff]
    %v392 = vld [vmem:[#allocation3 + $0xa80] sm:$0xff]
    %v393 = vld [vmem:[#allocation3 + $0xa88] sm:$0xff]
    %v394 = vld [vmem:[#allocation3 + $0xa90] sm:$0xff]
    %v395 = vld [vmem:[#allocation3 + $0xa98] sm:$0xff]
    %v396 = vld [vmem:[#allocation3 + $0xaa0] sm:$0xff]
    %v397 = vld [vmem:[#allocation3 + $0xaa8] sm:$0xff]
    %v398 = vld [vmem:[#allocation3 + $0xab0] sm:$0xff]
    %v399 = vld [vmem:[#allocation3 + $0xab8] sm:$0xff]
    %v400 = vld [vmem:[#allocation3 + $0xac0] sm:$0xff]
    %v401 = vld [vmem:[#allocation3 + $0xac8] sm:$0xff]
    %v402 = vld [vmem:[#allocation3 + $0xad0] sm:$0xff]
    %v403 = vld [vmem:[#allocation3 + $0xad8] sm:$0xff]
    %v404 = vld [vmem:[#allocation3 + $0xae0] sm:$0xff]
    %v405 = vld [vmem:[#allocation3 + $0xae8] sm:$0xff]
    %v406 = vld [vmem:[#allocation3 + $0xaf0] sm:$0xff]
    %v407 = vld [vmem:[#allocation3 + $0xaf8] sm:$0xff]
    %v408 = vld [vmem:[#allocation3 + $0xb00] sm:$0xff]
    %v409 = vld [vmem:[#allocation3 + $0xb08] sm:$0xff]
    %v410 = vld [vmem:[#allocation3 + $0xb10] sm:$0xff]
    %v411 = vld [vmem:[#allocation3 + $0xb18] sm:$0xff]
    %v412 = vld [vmem:[#allocation3 + $0xb20] sm:$0xff]
    %v413 = vld [vmem:[#allocation3 + $0xb28] sm:$0xff]
    %v414 = vld [vmem:[#allocation3 + $0xb30] sm:$0xff]
    %v415 = vld [vmem:[#allocation3 + $0xb38] sm:$0xff]
    %v416 = vld [vmem:[#allocation3 + $0xb40] sm:$0xff]
    %v417 = vld [vmem:[#allocation3 + $0xb48] sm:$0xff]
    %v418 = vld [vmem:[#allocation3 + $0xb50] sm:$0xff]
    %v419 = vld [vmem:[#allocation3 + $0xb58] sm:$0xff]
    %v420 = vld [vmem:[#allocation3 + $0xb60] sm:$0xff]
    %v421 = vld [vmem:[#allocation3 + $0xb68] sm:$0xff]
    %v422 = vld [vmem:[#allocation3 + $0xb70] sm:$0xff]
    %v423 = vld [vmem:[#allocation3 + $0xb78] sm:$0xff]
    %v424 = vld [vmem:[#allocation3 + $0xb80] sm:$0xff]
    %v425 = vld [vmem:[#allocation3 + $0xb88] sm:$0xff]
    %v426 = vld [vmem:[#allocation3 + $0xb90] sm:$0xff]
    %v427 = vld [vmem:[#allocation3 + $0xb98] sm:$0xff]
    %v428 = vld [vmem:[#allocation3 + $0xba0] sm:$0xff]
    %v429 = vld [vmem:[#allocation3 + $0xba8] sm:$0xff]
    %v430 = vld [vmem:[#allocation3 + $0xbb0] sm:$0xff]
    %v431 = vld [vmem:[#allocation3 + $0xbb8] sm:$0xff]
    %v432 = vld [vmem:[#allocation3 + $0xbc0] sm:$0xff]
    %v433 = vld [vmem:[#allocation3 + $0xbc8] sm:$0xff]
    %v434 = vld [vmem:[#allocation3 + $0xbd0] sm:$0xff]
    %v435 = vld [vmem:[#allocation3 + $0xbd8] sm:$0xff]
    %v436 = vld [vmem:[#allocation3 + $0xbe0] sm:$0xff]
    %v437 = vld [vmem:[#allocation3 + $0xbe8] sm:$0xff]
    %v438 = vld [vmem:[#allocation3 + $0xbf0] sm:$0xff]
    %v439 = vld [vmem:[#allocation3 + $0xbf8] sm:$0xff]
    %v440 = vld [vmem:[#allocation3 + $0xc00] sm:$0xff]
    %v441 = vld [vmem:[#allocation3 + $0xc08] sm:$0xff]
    %v442 = vld [vmem:[#allocation3 + $0xc10] sm:$0xff]
    %v443 = vld [vmem:[#allocation3 + $0xc18] sm:$0xff]
    %v444 = vld [vmem:[#allocation3 + $0xc20] sm:$0xff]
    %v445 = vld [vmem:[#allocation3 + $0xc28] sm:$0xff]
    %v446 = vld [vmem:[#allocation3 + $0xc30] sm:$0xff]
    %v447 = vld [vmem:[#allocation3 + $0xc38] sm:$0xff]
    %v448 = vld [vmem:[#allocation3 + $0xc40] sm:$0xff]
    %v449 = vld [vmem:[#allocation3 + $0xc48] sm:$0xff]
    %v450 = vld [vmem:[#allocation3 + $0xc50] sm:$0xff]
    %v451 = vld [vmem:[#allocation3 + $0xc58] sm:$0xff]
    %v452 = vld [vmem:[#allocation3 + $0xc60] sm:$0xff]
    %v453 = vld [vmem:[#allocation3 + $0xc68] sm:$0xff]
    %v454 = vld [vmem:[#allocation3 + $0xc70] sm:$0xff]
    %v455 = vld [vmem:[#allocation3 + $0xc78] sm:$0xff]
    %v456 = vld [vmem:[#allocation3 + $0xc80] sm:$0xff]
    %v457 = vld [vmem:[#allocation3 + $0xc88] sm:$0xff]
    %v458 = vld [vmem:[#allocation3 + $0xc90] sm:$0xff]
    %v459 = vld [vmem:[#allocation3 + $0xc98] sm:$0xff]
    %v460 = vld [vmem:[#allocation3 + $0xca0] sm:$0xff]
    %v461 = vld [vmem:[#allocation3 + $0xca8] sm:$0xff]
    %v462 = vld [vmem:[#allocation3 + $0xcb0] sm:$0xff]
    %v463 = vld [vmem:[#allocation3 + $0xcb8] sm:$0xff]
    %v464 = vld [vmem:[#allocation3 + $0xcc0] sm:$0xff]
    %v465 = vld [vmem:[#allocation3 + $0xcc8] sm:$0xff]
    %v466 = vld [vmem:[#allocation3 + $0xcd0] sm:$0xff]
    %v467 = vld [vmem:[#allocation3 + $0xcd8] sm:$0xff]
    %v468 = vld [vmem:[#allocation3 + $0xce0] sm:$0xff]
    %v469 = vld [vmem:[#allocation3 + $0xce8] sm:$0xff]
    %v470 = vld [vmem:[#allocation3 + $0xcf0] sm:$0xff]
    %v471 = vld [vmem:[#allocation3 + $0xcf8] sm:$0xff]
    %v472 = vld [vmem:[#allocation3 + $0xd00] sm:$0xff]
    %v473 = vld [vmem:[#allocation3 + $0xd08] sm:$0xff]
    %v474 = vld [vmem:[#allocation3 + $0xd10] sm:$0xff]
    %v475 = vld [vmem:[#allocation3 + $0xd18] sm:$0xff]
    %v476 = vld [vmem:[#allocation3 + $0xd20] sm:$0xff]
    %v477 = vld [vmem:[#allocation3 + $0xd28] sm:$0xff]
    %v478 = vld [vmem:[#allocation3 + $0xd30] sm:$0xff]
    %v479 = vld [vmem:[#allocation3 + $0xd38] sm:$0xff]
    %v480 = vld [vmem:[#allocation3 + $0xd40] sm:$0xff]
    %v481 = vld [vmem:[#allocation3 + $0xd48] sm:$0xff]
    %v482 = vld [vmem:[#allocation3 + $0xd50] sm:$0xff]
    %v483 = vld [vmem:[#allocation3 + $0xd58] sm:$0xff]
    %v484 = vld [vmem:[#allocation3 + $0xd60] sm:$0xff]
    %v485 = vld [vmem:[#allocation3 + $0xd68] sm:$0xff]
    %v486 = vld [vmem:[#allocation3 + $0xd70] sm:$0xff]
    %v487 = vld [vmem:[#allocation3 + $0xd78] sm:$0xff]
    %v488 = vld [vmem:[#allocation3 + $0xd80] sm:$0xff]
    %v489 = vld [vmem:[#allocation3 + $0xd88] sm:$0xff]
    %v490 = vld [vmem:[#allocation3 + $0xd90] sm:$0xff]
    %v491 = vld [vmem:[#allocation3 + $0xd98] sm:$0xff]
    %v492 = vld [vmem:[#allocation3 + $0xda0] sm:$0xff]
    %v493 = vld [vmem:[#allocation3 + $0xda8] sm:$0xff]
    %v494 = vld [vmem:[#allocation3 + $0xdb0] sm:$0xff]
    %v495 = vld [vmem:[#allocation3 + $0xdb8] sm:$0xff]
    %v496 = vld [vmem:[#allocation3 + $0xdc0] sm:$0xff]
    %v497 = vld [vmem:[#allocation3 + $0xdc8] sm:$0xff]
    %v498 = vld [vmem:[#allocation3 + $0xdd0] sm:$0xff]
    %v499 = vld [vmem:[#allocation3 + $0xdd8] sm:$0xff]
    %v500 = vld [vmem:[#allocation3 + $0xde0] sm:$0xff]
    %v501 = vld [vmem:[#allocation3 + $0xde8] sm:$0xff]
    %v502 = vld [vmem:[#allocation3 + $0xdf0] sm:$0xff]
    %v503 = vld [vmem:[#allocation3 + $0xdf8] sm:$0xff]
    %v504 = vld [vmem:[#allocation3 + $0xe00] sm:$0xff]
    %v505 = vld [vmem:[#allocation3 + $0xe08] sm:$0xff]
    %v506 = vld [vmem:[#allocation3 + $0xe10] sm:$0xff]
    %v507 = vld [vmem:[#allocation3 + $0xe18] sm:$0xff]
    %v508 = vld [vmem:[#allocation3 + $0xe20] sm:$0xff]
    %v509 = vld [vmem:[#allocation3 + $0xe28] sm:$0xff]
    %v510 = vld [vmem:[#allocation3 + $0xe30] sm:$0xff]
    %v511 = vld [vmem:[#allocation3 + $0xe38] sm:$0xff]
    %v512 = vld [vmem:[#allocation3 + $0xe40] sm:$0xff]
    %v513 = vld [vmem:[#allocation3 + $0xe48] sm:$0xff]
    %v514 = vld [vmem:[#allocation3 + $0xe50] sm:$0xff]
    %v515 = vld [vmem:[#allocation3 + $0xe58] sm:$0xff]
    %v516 = vld [vmem:[#allocation3 + $0xe60] sm:$0xff]
    %v517 = vld [vmem:[#allocation3 + $0xe68] sm:$0xff]
    %v518 = vld [vmem:[#allocation3 + $0xe70] sm:$0xff]
    %v519 = vld [vmem:[#allocation3 + $0xe78] sm:$0xff]
    %v520 = vld [vmem:[#allocation3 + $0xe80] sm:$0xff]
    %v521 = vld [vmem:[#allocation3 + $0xe88] sm:$0xff]
    %v522 = vld [vmem:[#allocation3 + $0xe90] sm:$0xff]
    %v523 = vld [vmem:[#allocation3 + $0xe98] sm:$0xff]
    %v524 = vld [vmem:[#allocation3 + $0xea0] sm:$0xff]
    %v525 = vld [vmem:[#allocation3 + $0xea8] sm:$0xff]
    %v526 = vld [vmem:[#allocation3 + $0xeb0] sm:$0xff]
    %v527 = vld [vmem:[#allocation3 + $0xeb8] sm:$0xff]
    %v528 = vld [vmem:[#allocation3 + $0xec0] sm:$0xff]
    %v529 = vld [vmem:[#allocation3 + $0xec8] sm:$0xff]
    %v530 = vld [vmem:[#allocation3 + $0xed0] sm:$0xff]
    %v531 = vld [vmem:[#allocation3 + $0xed8] sm:$0xff]
    %v532 = vld [vmem:[#allocation3 + $0xee0] sm:$0xff]
    %v533 = vld [vmem:[#allocation3 + $0xee8] sm:$0xff]
    %v534 = vld [vmem:[#allocation3 + $0xef0] sm:$0xff]
    %v535 = vld [vmem:[#allocation3 + $0xef8] sm:$0xff]
    %v536 = vld [vmem:[#allocation3 + $0xf00] sm:$0xff]
    %v537 = vld [vmem:[#allocation3 + $0xf08] sm:$0xff]
    %v538 = vld [vmem:[#allocation3 + $0xf10] sm:$0xff]
    %v539 = vld [vmem:[#allocation3 + $0xf18] sm:$0xff]
    %v540 = vld [vmem:[#allocation3 + $0xf20] sm:$0xff]
    %v541 = vld [vmem:[#allocation3 + $0xf28] sm:$0xff]
    %v542 = vld [vmem:[#allocation3 + $0xf30] sm:$0xff]
    %v543 = vld [vmem:[#allocation3 + $0xf38] sm:$0xff]
    %v544 = vld [vmem:[#allocation3 + $0xf40] sm:$0xff]
    %v545 = vld [vmem:[#allocation3 + $0xf48] sm:$0xff]
    %v546 = vld [vmem:[#allocation3 + $0xf50] sm:$0xff]
    %v547 = vld [vmem:[#allocation3 + $0xf58] sm:$0xff]
    %v548 = vld [vmem:[#allocation3 + $0xf60] sm:$0xff]
    %v549 = vld [vmem:[#allocation3 + $0xf68] sm:$0xff]
    %v550 = vld [vmem:[#allocation3 + $0xf70] sm:$0xff]
    %v551 = vld [vmem:[#allocation3 + $0xf78] sm:$0xff]
    %v552 = vld [vmem:[#allocation3 + $0xf80] sm:$0xff]
    %v553 = vld [vmem:[#allocation3 + $0xf88] sm:$0xff]
    %v554 = vld [vmem:[#allocation3 + $0xf90] sm:$0xff]
    %v555 = vld [vmem:[#allocation3 + $0xf98] sm:$0xff]
    %v556 = vld [vmem:[#allocation3 + $0xfa0] sm:$0xff]
    %v557 = vld [vmem:[#allocation3 + $0xfa8] sm:$0xff]
    %v558 = vld [vmem:[#allocation3 + $0xfb0] sm:$0xff]
    %v559 = vld [vmem:[#allocation3 + $0xfb8] sm:$0xff]
    %v560 = vld [vmem:[#allocation3 + $0xfc0] sm:$0xff]
    %v561 = vld [vmem:[#allocation3 + $0xfc8] sm:$0xff]
    %v562 = vld [vmem:[#allocation3 + $0xfd0] sm:$0xff]
    %v563 = vld [vmem:[#allocation3 + $0xfd8] sm:$0xff]
    %v564 = vld [vmem:[#allocation3 + $0xfe0] sm:$0xff]
    %v565 = vld [vmem:[#allocation3 + $0xfe8] sm:$0xff]
    %v566 = vld [vmem:[#allocation3 + $0xff0] sm:$0xff]
    %v567 = vld [vmem:[#allocation3 + $0xff8] sm:$0xff]
    %vm568 = vcmask 130048
    %v569 = vsel %vm568, %v56, 0.0
    %570 = vadd.xlane.f32.xlu0 %v569
    %v571 = vpop.xlane.xlu0 %570
    %v572 = vsel %vm568, %v57, 0.0
    %573 = vadd.xlane.f32.xlu0 %v572
    %v574 = vpop.xlane.xlu0 %573
    %v575 = vsel %vm568, %v58, 0.0
    %576 = vadd.xlane.f32.xlu0 %v575
    %v577 = vpop.xlane.xlu0 %576
    %v578 = vsel %vm568, %v59, 0.0
    %579 = vadd.xlane.f32.xlu0 %v578
    %v580 = vpop.xlane.xlu0 %579
    %v581 = vsel %vm568, %v60, 0.0
    %582 = vadd.xlane.f32.xlu0 %v581
    %v583 = vpop.xlane.xlu0 %582
    %v584 = vsel %vm568, %v61, 0.0
    %585 = vadd.xlane.f32.xlu0 %v584
    %v586 = vpop.xlane.xlu0 %585
    %v587 = vsel %vm568, %v62, 0.0
    %588 = vadd.xlane.f32.xlu0 %v587
    %v589 = vpop.xlane.xlu0 %588
    %v590 = vsel %vm568, %v63, 0.0
    %591 = vadd.xlane.f32.xlu0 %v590
    %v592 = vpop.xlane.xlu0 %591
    %v593 = vsel %vm568, %v64, 0.0
    %594 = vadd.xlane.f32.xlu0 %v593
    %v595 = vpop.xlane.xlu0 %594
    %v596 = vsel %vm568, %v65, 0.0
    %597 = vadd.xlane.f32.xlu0 %v596
    %v598 = vpop.xlane.xlu0 %597
    %v599 = vsel %vm568, %v66, 0.0
    %600 = vadd.xlane.f32.xlu0 %v599
    %v601 = vpop.xlane.xlu0 %600
    %v602 = vsel %vm568, %v67, 0.0
    %603 = vadd.xlane.f32.xlu0 %v602
    %v604 = vpop.xlane.xlu0 %603
    %v605 = vsel %vm568, %v68, 0.0
    %606 = vadd.xlane.f32.xlu0 %v605
    %v607 = vpop.xlane.xlu0 %606
    %v608 = vsel %vm568, %v69, 0.0
    %609 = vadd.xlane.f32.xlu0 %v608
    %v610 = vpop.xlane.xlu0 %609
    %v611 = vsel %vm568, %v70, 0.0
    %612 = vadd.xlane.f32.xlu0 %v611
    %v613 = vpop.xlane.xlu0 %612
    %v614 = vsel %vm568, %v71, 0.0
    %615 = vadd.xlane.f32.xlu0 %v614
    %v616 = vpop.xlane.xlu0 %615
    %v617 = vsel %vm568, %v72, 0.0
    %618 = vadd.xlane.f32.xlu0 %v617
    %v619 = vpop.xlane.xlu0 %618
    %v620 = vsel %vm568, %v73, 0.0
    %621 = vadd.xlane.f32.xlu0 %v620
    %v622 = vpop.xlane.xlu0 %621
    %v623 = vsel %vm568, %v74, 0.0
    %624 = vadd.xlane.f32.xlu0 %v623
    %v625 = vpop.xlane.xlu0 %624
    %v626 = vsel %vm568, %v75, 0.0
    %627 = vadd.xlane.f32.xlu0 %v626
    %v628 = vpop.xlane.xlu0 %627
    %v629 = vsel %vm568, %v76, 0.0
    %630 = vadd.xlane.f32.xlu0 %v629
    %v631 = vpop.xlane.xlu0 %630
    %v632 = vsel %vm568, %v77, 0.0
    %633 = vadd.xlane.f32.xlu0 %v632
    %v634 = vpop.xlane.xlu0 %633
    %v635 = vsel %vm568, %v78, 0.0
    %636 = vadd.xlane.f32.xlu0 %v635
    %v637 = vpop.xlane.xlu0 %636
    %v638 = vsel %vm568, %v79, 0.0
    %639 = vadd.xlane.f32.xlu0 %v638
    %v640 = vpop.xlane.xlu0 %639
    %v641 = vsel %vm568, %v80, 0.0
    %642 = vadd.xlane.f32.xlu0 %v641
    %v643 = vpop.xlane.xlu0 %642
    %v644 = vsel %vm568, %v81, 0.0
    %645 = vadd.xlane.f32.xlu0 %v644
    %v646 = vpop.xlane.xlu0 %645
    %v647 = vsel %vm568, %v82, 0.0
    %648 = vadd.xlane.f32.xlu0 %v647
    %v649 = vpop.xlane.xlu0 %648
    %v650 = vsel %vm568, %v83, 0.0
    %651 = vadd.xlane.f32.xlu0 %v650
    %v652 = vpop.xlane.xlu0 %651
    %v653 = vsel %vm568, %v84, 0.0
    %654 = vadd.xlane.f32.xlu0 %v653
    %v655 = vpop.xlane.xlu0 %654
    %v656 = vsel %vm568, %v85, 0.0
    %657 = vadd.xlane.f32.xlu0 %v656
    %v658 = vpop.xlane.xlu0 %657
    %v659 = vsel %vm568, %v86, 0.0
    %660 = vadd.xlane.f32.xlu0 %v659
    %v661 = vpop.xlane.xlu0 %660
    %v662 = vsel %vm568, %v87, 0.0
    %663 = vadd.xlane.f32.xlu0 %v662
    %v664 = vpop.xlane.xlu0 %663
    %v665 = vsel %vm568, %v88, 0.0
    %666 = vadd.xlane.f32.xlu0 %v665
    %v667 = vpop.xlane.xlu0 %666
    %v668 = vsel %vm568, %v89, 0.0
    %669 = vadd.xlane.f32.xlu0 %v668
    %v670 = vpop.xlane.xlu0 %669
    %v671 = vsel %vm568, %v90, 0.0
    %672 = vadd.xlane.f32.xlu0 %v671
    %v673 = vpop.xlane.xlu0 %672
    %v674 = vsel %vm568, %v91, 0.0
    %675 = vadd.xlane.f32.xlu0 %v674
    %v676 = vpop.xlane.xlu0 %675
    %v677 = vsel %vm568, %v92, 0.0
    %678 = vadd.xlane.f32.xlu0 %v677
    %v679 = vpop.xlane.xlu0 %678
    %v680 = vsel %vm568, %v93, 0.0
    %681 = vadd.xlane.f32.xlu0 %v680
    %v682 = vpop.xlane.xlu0 %681
    %v683 = vsel %vm568, %v94, 0.0
    %684 = vadd.xlane.f32.xlu0 %v683
    %v685 = vpop.xlane.xlu0 %684
    %v686 = vsel %vm568, %v95, 0.0
    %687 = vadd.xlane.f32.xlu0 %v686
    %v688 = vpop.xlane.xlu0 %687
    %v689 = vsel %vm568, %v96, 0.0
    %690 = vadd.xlane.f32.xlu0 %v689
    %v691 = vpop.xlane.xlu0 %690
    %v692 = vsel %vm568, %v97, 0.0
    %693 = vadd.xlane.f32.xlu0 %v692
    %v694 = vpop.xlane.xlu0 %693
    %v695 = vsel %vm568, %v98, 0.0
    %696 = vadd.xlane.f32.xlu0 %v695
    %v697 = vpop.xlane.xlu0 %696
    %v698 = vsel %vm568, %v99, 0.0
    %699 = vadd.xlane.f32.xlu0 %v698
    %v700 = vpop.xlane.xlu0 %699
    %v701 = vsel %vm568, %v100, 0.0
    %702 = vadd.xlane.f32.xlu0 %v701
    %v703 = vpop.xlane.xlu0 %702
    %v704 = vsel %vm568, %v101, 0.0
    %705 = vadd.xlane.f32.xlu0 %v704
    %v706 = vpop.xlane.xlu0 %705
    %v707 = vsel %vm568, %v102, 0.0
    %708 = vadd.xlane.f32.xlu0 %v707
    %v709 = vpop.xlane.xlu0 %708
    %v710 = vsel %vm568, %v103, 0.0
    %711 = vadd.xlane.f32.xlu0 %v710
    %v712 = vpop.xlane.xlu0 %711
    %v713 = vsel %vm568, %v104, 0.0
    %714 = vadd.xlane.f32.xlu0 %v713
    %v715 = vpop.xlane.xlu0 %714
    %v716 = vsel %vm568, %v105, 0.0
    %717 = vadd.xlane.f32.xlu0 %v716
    %v718 = vpop.xlane.xlu0 %717
    %v719 = vsel %vm568, %v106, 0.0
    %720 = vadd.xlane.f32.xlu0 %v719
    %v721 = vpop.xlane.xlu0 %720
    %v722 = vsel %vm568, %v107, 0.0
    %723 = vadd.xlane.f32.xlu0 %v722
    %v724 = vpop.xlane.xlu0 %723
    %v725 = vsel %vm568, %v108, 0.0
    %726 = vadd.xlane.f32.xlu0 %v725
    %v727 = vpop.xlane.xlu0 %726
    %v728 = vsel %vm568, %v109, 0.0
    %729 = vadd.xlane.f32.xlu0 %v728
    %v730 = vpop.xlane.xlu0 %729
    %v731 = vsel %vm568, %v110, 0.0
    %732 = vadd.xlane.f32.xlu0 %v731
    %v733 = vpop.xlane.xlu0 %732
    %v734 = vsel %vm568, %v111, 0.0
    %735 = vadd.xlane.f32.xlu0 %v734
    %v736 = vpop.xlane.xlu0 %735
    %v737 = vsel %vm568, %v112, 0.0
    %738 = vadd.xlane.f32.xlu0 %v737
    %v739 = vpop.xlane.xlu0 %738
    %v740 = vsel %vm568, %v113, 0.0
    %741 = vadd.xlane.f32.xlu0 %v740
    %v742 = vpop.xlane.xlu0 %741
    %v743 = vsel %vm568, %v114, 0.0
    %744 = vadd.xlane.f32.xlu0 %v743
    %v745 = vpop.xlane.xlu0 %744
    %v746 = vsel %vm568, %v115, 0.0
    %747 = vadd.xlane.f32.xlu0 %v746
    %v748 = vpop.xlane.xlu0 %747
    %v749 = vsel %vm568, %v116, 0.0
    %750 = vadd.xlane.f32.xlu0 %v749
    %v751 = vpop.xlane.xlu0 %750
    %v752 = vsel %vm568, %v117, 0.0
    %753 = vadd.xlane.f32.xlu0 %v752
    %v754 = vpop.xlane.xlu0 %753
    %v755 = vsel %vm568, %v118, 0.0
    %756 = vadd.xlane.f32.xlu0 %v755
    %v757 = vpop.xlane.xlu0 %756
    %v758 = vsel %vm568, %v119, 0.0
    %759 = vadd.xlane.f32.xlu0 %v758
    %v760 = vpop.xlane.xlu0 %759
    %v761 = vsel %vm568, %v120, 0.0
    %762 = vadd.xlane.f32.xlu0 %v761
    %v763 = vpop.xlane.xlu0 %762
    %v764 = vsel %vm568, %v121, 0.0
    %765 = vadd.xlane.f32.xlu0 %v764
    %v766 = vpop.xlane.xlu0 %765
    %v767 = vsel %vm568, %v122, 0.0
    %768 = vadd.xlane.f32.xlu0 %v767
    %v769 = vpop.xlane.xlu0 %768
    %v770 = vsel %vm568, %v123, 0.0
    %771 = vadd.xlane.f32.xlu0 %v770
    %v772 = vpop.xlane.xlu0 %771
    %v773 = vsel %vm568, %v124, 0.0
    %774 = vadd.xlane.f32.xlu0 %v773
    %v775 = vpop.xlane.xlu0 %774
    %v776 = vsel %vm568, %v125, 0.0
    %777 = vadd.xlane.f32.xlu0 %v776
    %v778 = vpop.xlane.xlu0 %777
    %v779 = vsel %vm568, %v126, 0.0
    %780 = vadd.xlane.f32.xlu0 %v779
    %v781 = vpop.xlane.xlu0 %780
    %v782 = vsel %vm568, %v127, 0.0
    %783 = vadd.xlane.f32.xlu0 %v782
    %v784 = vpop.xlane.xlu0 %783
    %v785 = vsel %vm568, %v128, 0.0
    %786 = vadd.xlane.f32.xlu0 %v785
    %v787 = vpop.xlane.xlu0 %786
    %v788 = vsel %vm568, %v129, 0.0
    %789 = vadd.xlane.f32.xlu0 %v788
    %v790 = vpop.xlane.xlu0 %789
    %v791 = vsel %vm568, %v130, 0.0
    %792 = vadd.xlane.f32.xlu0 %v791
    %v793 = vpop.xlane.xlu0 %792
    %v794 = vsel %vm568, %v131, 0.0
    %795 = vadd.xlane.f32.xlu0 %v794
    %v796 = vpop.xlane.xlu0 %795
    %v797 = vsel %vm568, %v132, 0.0
    %798 = vadd.xlane.f32.xlu0 %v797
    %v799 = vpop.xlane.xlu0 %798
    %v800 = vsel %vm568, %v133, 0.0
    %801 = vadd.xlane.f32.xlu0 %v800
    %v802 = vpop.xlane.xlu0 %801
    %v803 = vsel %vm568, %v134, 0.0
    %804 = vadd.xlane.f32.xlu0 %v803
    %v805 = vpop.xlane.xlu0 %804
    %v806 = vsel %vm568, %v135, 0.0
    %807 = vadd.xlane.f32.xlu0 %v806
    %v808 = vpop.xlane.xlu0 %807
    %v809 = vsel %vm568, %v136, 0.0
    %810 = vadd.xlane.f32.xlu0 %v809
    %v811 = vpop.xlane.xlu0 %810
    %v812 = vsel %vm568, %v137, 0.0
    %813 = vadd.xlane.f32.xlu0 %v812
    %v814 = vpop.xlane.xlu0 %813
    %v815 = vsel %vm568, %v138, 0.0
    %816 = vadd.xlane.f32.xlu0 %v815
    %v817 = vpop.xlane.xlu0 %816
    %v818 = vsel %vm568, %v139, 0.0
    %819 = vadd.xlane.f32.xlu0 %v818
    %v820 = vpop.xlane.xlu0 %819
    %v821 = vsel %vm568, %v140, 0.0
    %822 = vadd.xlane.f32.xlu0 %v821
    %v823 = vpop.xlane.xlu0 %822
    %v824 = vsel %vm568, %v141, 0.0
    %825 = vadd.xlane.f32.xlu0 %v824
    %v826 = vpop.xlane.xlu0 %825
    %v827 = vsel %vm568, %v142, 0.0
    %828 = vadd.xlane.f32.xlu0 %v827
    %v829 = vpop.xlane.xlu0 %828
    %v830 = vsel %vm568, %v143, 0.0
    %831 = vadd.xlane.f32.xlu0 %v830
    %v832 = vpop.xlane.xlu0 %831
    %v833 = vsel %vm568, %v144, 0.0
    %834 = vadd.xlane.f32.xlu0 %v833
    %v835 = vpop.xlane.xlu0 %834
    %v836 = vsel %vm568, %v145, 0.0
    %837 = vadd.xlane.f32.xlu0 %v836
    %v838 = vpop.xlane.xlu0 %837
    %v839 = vsel %vm568, %v146, 0.0
    %840 = vadd.xlane.f32.xlu0 %v839
    %v841 = vpop.xlane.xlu0 %840
    %v842 = vsel %vm568, %v147, 0.0
    %843 = vadd.xlane.f32.xlu0 %v842
    %v844 = vpop.xlane.xlu0 %843
    %v845 = vsel %vm568, %v148, 0.0
    %846 = vadd.xlane.f32.xlu0 %v845
    %v847 = vpop.xlane.xlu0 %846
    %v848 = vsel %vm568, %v149, 0.0
    %849 = vadd.xlane.f32.xlu0 %v848
    %v850 = vpop.xlane.xlu0 %849
    %v851 = vsel %vm568, %v150, 0.0
    %852 = vadd.xlane.f32.xlu0 %v851
    %v853 = vpop.xlane.xlu0 %852
    %v854 = vsel %vm568, %v151, 0.0
    %855 = vadd.xlane.f32.xlu0 %v854
    %v856 = vpop.xlane.xlu0 %855
    %v857 = vsel %vm568, %v152, 0.0
    %858 = vadd.xlane.f32.xlu0 %v857
    %v859 = vpop.xlane.xlu0 %858
    %v860 = vsel %vm568, %v153, 0.0
    %861 = vadd.xlane.f32.xlu0 %v860
    %v862 = vpop.xlane.xlu0 %861
    %v863 = vsel %vm568, %v154, 0.0
    %864 = vadd.xlane.f32.xlu0 %v863
    %v865 = vpop.xlane.xlu0 %864
    %v866 = vsel %vm568, %v155, 0.0
    %867 = vadd.xlane.f32.xlu0 %v866
    %v868 = vpop.xlane.xlu0 %867
    %v869 = vsel %vm568, %v156, 0.0
    %870 = vadd.xlane.f32.xlu0 %v869
    %v871 = vpop.xlane.xlu0 %870
    %v872 = vsel %vm568, %v157, 0.0
    %873 = vadd.xlane.f32.xlu0 %v872
    %v874 = vpop.xlane.xlu0 %873
    %v875 = vsel %vm568, %v158, 0.0
    %876 = vadd.xlane.f32.xlu0 %v875
    %v877 = vpop.xlane.xlu0 %876
    %v878 = vsel %vm568, %v159, 0.0
    %879 = vadd.xlane.f32.xlu0 %v878
    %v880 = vpop.xlane.xlu0 %879
    %v881 = vsel %vm568, %v160, 0.0
    %882 = vadd.xlane.f32.xlu0 %v881
    %v883 = vpop.xlane.xlu0 %882
    %v884 = vsel %vm568, %v161, 0.0
    %885 = vadd.xlane.f32.xlu0 %v884
    %v886 = vpop.xlane.xlu0 %885
    %v887 = vsel %vm568, %v162, 0.0
    %888 = vadd.xlane.f32.xlu0 %v887
    %v889 = vpop.xlane.xlu0 %888
    %v890 = vsel %vm568, %v163, 0.0
    %891 = vadd.xlane.f32.xlu0 %v890
    %v892 = vpop.xlane.xlu0 %891
    %v893 = vsel %vm568, %v164, 0.0
    %894 = vadd.xlane.f32.xlu0 %v893
    %v895 = vpop.xlane.xlu0 %894
    %v896 = vsel %vm568, %v165, 0.0
    %897 = vadd.xlane.f32.xlu0 %v896
    %v898 = vpop.xlane.xlu0 %897
    %v899 = vsel %vm568, %v166, 0.0
    %900 = vadd.xlane.f32.xlu0 %v899
    %v901 = vpop.xlane.xlu0 %900
    %v902 = vsel %vm568, %v167, 0.0
    %903 = vadd.xlane.f32.xlu0 %v902
    %v904 = vpop.xlane.xlu0 %903
    %v905 = vsel %vm568, %v168, 0.0
    %906 = vadd.xlane.f32.xlu0 %v905
    %v907 = vpop.xlane.xlu0 %906
    %v908 = vsel %vm568, %v169, 0.0
    %909 = vadd.xlane.f32.xlu0 %v908
    %v910 = vpop.xlane.xlu0 %909
    %v911 = vsel %vm568, %v170, 0.0
    %912 = vadd.xlane.f32.xlu0 %v911
    %v913 = vpop.xlane.xlu0 %912
    %v914 = vsel %vm568, %v171, 0.0
    %915 = vadd.xlane.f32.xlu0 %v914
    %v916 = vpop.xlane.xlu0 %915
    %v917 = vsel %vm568, %v172, 0.0
    %918 = vadd.xlane.f32.xlu0 %v917
    %v919 = vpop.xlane.xlu0 %918
    %v920 = vsel %vm568, %v173, 0.0
    %921 = vadd.xlane.f32.xlu0 %v920
    %v922 = vpop.xlane.xlu0 %921
    %v923 = vsel %vm568, %v174, 0.0
    %924 = vadd.xlane.f32.xlu0 %v923
    %v925 = vpop.xlane.xlu0 %924
    %v926 = vsel %vm568, %v175, 0.0
    %927 = vadd.xlane.f32.xlu0 %v926
    %v928 = vpop.xlane.xlu0 %927
    %v929 = vsel %vm568, %v176, 0.0
    %930 = vadd.xlane.f32.xlu0 %v929
    %v931 = vpop.xlane.xlu0 %930
    %v932 = vsel %vm568, %v177, 0.0
    %933 = vadd.xlane.f32.xlu0 %v932
    %v934 = vpop.xlane.xlu0 %933
    %v935 = vsel %vm568, %v178, 0.0
    %936 = vadd.xlane.f32.xlu0 %v935
    %v937 = vpop.xlane.xlu0 %936
    %v938 = vsel %vm568, %v179, 0.0
    %939 = vadd.xlane.f32.xlu0 %v938
    %v940 = vpop.xlane.xlu0 %939
    %v941 = vsel %vm568, %v180, 0.0
    %942 = vadd.xlane.f32.xlu0 %v941
    %v943 = vpop.xlane.xlu0 %942
    %v944 = vsel %vm568, %v181, 0.0
    %945 = vadd.xlane.f32.xlu0 %v944
    %v946 = vpop.xlane.xlu0 %945
    %v947 = vsel %vm568, %v182, 0.0
    %948 = vadd.xlane.f32.xlu0 %v947
    %v949 = vpop.xlane.xlu0 %948
    %v950 = vsel %vm568, %v183, 0.0
    %951 = vadd.xlane.f32.xlu0 %v950
    %v952 = vpop.xlane.xlu0 %951
    %v953 = vsel %vm568, %v184, 0.0
    %954 = vadd.xlane.f32.xlu0 %v953
    %v955 = vpop.xlane.xlu0 %954
    %v956 = vsel %vm568, %v185, 0.0
    %957 = vadd.xlane.f32.xlu0 %v956
    %v958 = vpop.xlane.xlu0 %957
    %v959 = vsel %vm568, %v186, 0.0
    %960 = vadd.xlane.f32.xlu0 %v959
    %v961 = vpop.xlane.xlu0 %960
    %v962 = vsel %vm568, %v187, 0.0
    %963 = vadd.xlane.f32.xlu0 %v962
    %v964 = vpop.xlane.xlu0 %963
    %v965 = vsel %vm568, %v188, 0.0
    %966 = vadd.xlane.f32.xlu0 %v965
    %v967 = vpop.xlane.xlu0 %966
    %v968 = vsel %vm568, %v189, 0.0
    %969 = vadd.xlane.f32.xlu0 %v968
    %v970 = vpop.xlane.xlu0 %969
    %v971 = vsel %vm568, %v190, 0.0
    %972 = vadd.xlane.f32.xlu0 %v971
    %v973 = vpop.xlane.xlu0 %972
    %v974 = vsel %vm568, %v191, 0.0
    %975 = vadd.xlane.f32.xlu0 %v974
    %v976 = vpop.xlane.xlu0 %975
    %v977 = vsel %vm568, %v192, 0.0
    %978 = vadd.xlane.f32.xlu0 %v977
    %v979 = vpop.xlane.xlu0 %978
    %v980 = vsel %vm568, %v193, 0.0
    %981 = vadd.xlane.f32.xlu0 %v980
    %v982 = vpop.xlane.xlu0 %981
    %v983 = vsel %vm568, %v194, 0.0
    %984 = vadd.xlane.f32.xlu0 %v983
    %v985 = vpop.xlane.xlu0 %984
    %v986 = vsel %vm568, %v195, 0.0
    %987 = vadd.xlane.f32.xlu0 %v986
    %v988 = vpop.xlane.xlu0 %987
    %v989 = vsel %vm568, %v196, 0.0
    %990 = vadd.xlane.f32.xlu0 %v989
    %v991 = vpop.xlane.xlu0 %990
    %v992 = vsel %vm568, %v197, 0.0
    %993 = vadd.xlane.f32.xlu0 %v992
    %v994 = vpop.xlane.xlu0 %993
    %v995 = vsel %vm568, %v198, 0.0
    %996 = vadd.xlane.f32.xlu0 %v995
    %v997 = vpop.xlane.xlu0 %996
    %v998 = vsel %vm568, %v199, 0.0
    %999 = vadd.xlane.f32.xlu0 %v998
    %v1000 = vpop.xlane.xlu0 %999
    %v1001 = vsel %vm568, %v200, 0.0
    %1002 = vadd.xlane.f32.xlu0 %v1001
    %v1003 = vpop.xlane.xlu0 %1002
    %v1004 = vsel %vm568, %v201, 0.0
    %1005 = vadd.xlane.f32.xlu0 %v1004
    %v1006 = vpop.xlane.xlu0 %1005
    %v1007 = vsel %vm568, %v202, 0.0
    %1008 = vadd.xlane.f32.xlu0 %v1007
    %v1009 = vpop.xlane.xlu0 %1008
    %v1010 = vsel %vm568, %v203, 0.0
    %1011 = vadd.xlane.f32.xlu0 %v1010
    %v1012 = vpop.xlane.xlu0 %1011
    %v1013 = vsel %vm568, %v204, 0.0
    %1014 = vadd.xlane.f32.xlu0 %v1013
    %v1015 = vpop.xlane.xlu0 %1014
    %v1016 = vsel %vm568, %v205, 0.0
    %1017 = vadd.xlane.f32.xlu0 %v1016
    %v1018 = vpop.xlane.xlu0 %1017
    %v1019 = vsel %vm568, %v206, 0.0
    %1020 = vadd.xlane.f32.xlu0 %v1019
    %v1021 = vpop.xlane.xlu0 %1020
    %v1022 = vsel %vm568, %v207, 0.0
    %1023 = vadd.xlane.f32.xlu0 %v1022
    %v1024 = vpop.xlane.xlu0 %1023
    %v1025 = vsel %vm568, %v208, 0.0
    %1026 = vadd.xlane.f32.xlu0 %v1025
    %v1027 = vpop.xlane.xlu0 %1026
    %v1028 = vsel %vm568, %v209, 0.0
    %1029 = vadd.xlane.f32.xlu0 %v1028
    %v1030 = vpop.xlane.xlu0 %1029
    %v1031 = vsel %vm568, %v210, 0.0
    %1032 = vadd.xlane.f32.xlu0 %v1031
    %v1033 = vpop.xlane.xlu0 %1032
    %v1034 = vsel %vm568, %v211, 0.0
    %1035 = vadd.xlane.f32.xlu0 %v1034
    %v1036 = vpop.xlane.xlu0 %1035
    %v1037 = vsel %vm568, %v212, 0.0
    %1038 = vadd.xlane.f32.xlu0 %v1037
    %v1039 = vpop.xlane.xlu0 %1038
    %v1040 = vsel %vm568, %v213, 0.0
    %1041 = vadd.xlane.f32.xlu0 %v1040
    %v1042 = vpop.xlane.xlu0 %1041
    %v1043 = vsel %vm568, %v214, 0.0
    %1044 = vadd.xlane.f32.xlu0 %v1043
    %v1045 = vpop.xlane.xlu0 %1044
    %v1046 = vsel %vm568, %v215, 0.0
    %1047 = vadd.xlane.f32.xlu0 %v1046
    %v1048 = vpop.xlane.xlu0 %1047
    %v1049 = vsel %vm568, %v216, 0.0
    %1050 = vadd.xlane.f32.xlu0 %v1049
    %v1051 = vpop.xlane.xlu0 %1050
    %v1052 = vsel %vm568, %v217, 0.0
    %1053 = vadd.xlane.f32.xlu0 %v1052
    %v1054 = vpop.xlane.xlu0 %1053
    %v1055 = vsel %vm568, %v218, 0.0
    %1056 = vadd.xlane.f32.xlu0 %v1055
    %v1057 = vpop.xlane.xlu0 %1056
    %v1058 = vsel %vm568, %v219, 0.0
    %1059 = vadd.xlane.f32.xlu0 %v1058
    %v1060 = vpop.xlane.xlu0 %1059
    %v1061 = vsel %vm568, %v220, 0.0
    %1062 = vadd.xlane.f32.xlu0 %v1061
    %v1063 = vpop.xlane.xlu0 %1062
    %v1064 = vsel %vm568, %v221, 0.0
    %1065 = vadd.xlane.f32.xlu0 %v1064
    %v1066 = vpop.xlane.xlu0 %1065
    %v1067 = vsel %vm568, %v222, 0.0
    %1068 = vadd.xlane.f32.xlu0 %v1067
    %v1069 = vpop.xlane.xlu0 %1068
    %v1070 = vsel %vm568, %v223, 0.0
    %1071 = vadd.xlane.f32.xlu0 %v1070
    %v1072 = vpop.xlane.xlu0 %1071
    %v1073 = vsel %vm568, %v224, 0.0
    %1074 = vadd.xlane.f32.xlu0 %v1073
    %v1075 = vpop.xlane.xlu0 %1074
    %v1076 = vsel %vm568, %v225, 0.0
    %1077 = vadd.xlane.f32.xlu0 %v1076
    %v1078 = vpop.xlane.xlu0 %1077
    %v1079 = vsel %vm568, %v226, 0.0
    %1080 = vadd.xlane.f32.xlu0 %v1079
    %v1081 = vpop.xlane.xlu0 %1080
    %v1082 = vsel %vm568, %v227, 0.0
    %1083 = vadd.xlane.f32.xlu0 %v1082
    %v1084 = vpop.xlane.xlu0 %1083
    %v1085 = vsel %vm568, %v228, 0.0
    %1086 = vadd.xlane.f32.xlu0 %v1085
    %v1087 = vpop.xlane.xlu0 %1086
    %v1088 = vsel %vm568, %v229, 0.0
    %1089 = vadd.xlane.f32.xlu0 %v1088
    %v1090 = vpop.xlane.xlu0 %1089
    %v1091 = vsel %vm568, %v230, 0.0
    %1092 = vadd.xlane.f32.xlu0 %v1091
    %v1093 = vpop.xlane.xlu0 %1092
    %v1094 = vsel %vm568, %v231, 0.0
    %1095 = vadd.xlane.f32.xlu0 %v1094
    %v1096 = vpop.xlane.xlu0 %1095
    %v1097 = vsel %vm568, %v232, 0.0
    %1098 = vadd.xlane.f32.xlu0 %v1097
    %v1099 = vpop.xlane.xlu0 %1098
    %v1100 = vsel %vm568, %v233, 0.0
    %1101 = vadd.xlane.f32.xlu0 %v1100
    %v1102 = vpop.xlane.xlu0 %1101
    %v1103 = vsel %vm568, %v234, 0.0
    %1104 = vadd.xlane.f32.xlu0 %v1103
    %v1105 = vpop.xlane.xlu0 %1104
    %v1106 = vsel %vm568, %v235, 0.0
    %1107 = vadd.xlane.f32.xlu0 %v1106
    %v1108 = vpop.xlane.xlu0 %1107
    %v1109 = vsel %vm568, %v236, 0.0
    %1110 = vadd.xlane.f32.xlu0 %v1109
    %v1111 = vpop.xlane.xlu0 %1110
    %v1112 = vsel %vm568, %v237, 0.0
    %1113 = vadd.xlane.f32.xlu0 %v1112
    %v1114 = vpop.xlane.xlu0 %1113
    %v1115 = vsel %vm568, %v238, 0.0
    %1116 = vadd.xlane.f32.xlu0 %v1115
    %v1117 = vpop.xlane.xlu0 %1116
    %v1118 = vsel %vm568, %v239, 0.0
    %1119 = vadd.xlane.f32.xlu0 %v1118
    %v1120 = vpop.xlane.xlu0 %1119
    %v1121 = vsel %vm568, %v240, 0.0
    %1122 = vadd.xlane.f32.xlu0 %v1121
    %v1123 = vpop.xlane.xlu0 %1122
    %v1124 = vsel %vm568, %v241, 0.0
    %1125 = vadd.xlane.f32.xlu0 %v1124
    %v1126 = vpop.xlane.xlu0 %1125
    %v1127 = vsel %vm568, %v242, 0.0
    %1128 = vadd.xlane.f32.xlu0 %v1127
    %v1129 = vpop.xlane.xlu0 %1128
    %v1130 = vsel %vm568, %v243, 0.0
    %1131 = vadd.xlane.f32.xlu0 %v1130
    %v1132 = vpop.xlane.xlu0 %1131
    %v1133 = vsel %vm568, %v244, 0.0
    %1134 = vadd.xlane.f32.xlu0 %v1133
    %v1135 = vpop.xlane.xlu0 %1134
    %v1136 = vsel %vm568, %v245, 0.0
    %1137 = vadd.xlane.f32.xlu0 %v1136
    %v1138 = vpop.xlane.xlu0 %1137
    %v1139 = vsel %vm568, %v246, 0.0
    %1140 = vadd.xlane.f32.xlu0 %v1139
    %v1141 = vpop.xlane.xlu0 %1140
    %v1142 = vsel %vm568, %v247, 0.0
    %1143 = vadd.xlane.f32.xlu0 %v1142
    %v1144 = vpop.xlane.xlu0 %1143
    %v1145 = vsel %vm568, %v248, 0.0
    %1146 = vadd.xlane.f32.xlu0 %v1145
    %v1147 = vpop.xlane.xlu0 %1146
    %v1148 = vsel %vm568, %v249, 0.0
    %1149 = vadd.xlane.f32.xlu0 %v1148
    %v1150 = vpop.xlane.xlu0 %1149
    %v1151 = vsel %vm568, %v250, 0.0
    %1152 = vadd.xlane.f32.xlu0 %v1151
    %v1153 = vpop.xlane.xlu0 %1152
    %v1154 = vsel %vm568, %v251, 0.0
    %1155 = vadd.xlane.f32.xlu0 %v1154
    %v1156 = vpop.xlane.xlu0 %1155
    %v1157 = vsel %vm568, %v252, 0.0
    %1158 = vadd.xlane.f32.xlu0 %v1157
    %v1159 = vpop.xlane.xlu0 %1158
    %v1160 = vsel %vm568, %v253, 0.0
    %1161 = vadd.xlane.f32.xlu0 %v1160
    %v1162 = vpop.xlane.xlu0 %1161
    %v1163 = vsel %vm568, %v254, 0.0
    %1164 = vadd.xlane.f32.xlu0 %v1163
    %v1165 = vpop.xlane.xlu0 %1164
    %v1166 = vsel %vm568, %v255, 0.0
    %1167 = vadd.xlane.f32.xlu0 %v1166
    %v1168 = vpop.xlane.xlu0 %1167
    %v1169 = vsel %vm568, %v256, 0.0
    %1170 = vadd.xlane.f32.xlu0 %v1169
    %v1171 = vpop.xlane.xlu0 %1170
    %v1172 = vsel %vm568, %v257, 0.0
    %1173 = vadd.xlane.f32.xlu0 %v1172
    %v1174 = vpop.xlane.xlu0 %1173
    %v1175 = vsel %vm568, %v258, 0.0
    %1176 = vadd.xlane.f32.xlu0 %v1175
    %v1177 = vpop.xlane.xlu0 %1176
    %v1178 = vsel %vm568, %v259, 0.0
    %1179 = vadd.xlane.f32.xlu0 %v1178
    %v1180 = vpop.xlane.xlu0 %1179
    %v1181 = vsel %vm568, %v260, 0.0
    %1182 = vadd.xlane.f32.xlu0 %v1181
    %v1183 = vpop.xlane.xlu0 %1182
    %v1184 = vsel %vm568, %v261, 0.0
    %1185 = vadd.xlane.f32.xlu0 %v1184
    %v1186 = vpop.xlane.xlu0 %1185
    %v1187 = vsel %vm568, %v262, 0.0
    %1188 = vadd.xlane.f32.xlu0 %v1187
    %v1189 = vpop.xlane.xlu0 %1188
    %v1190 = vsel %vm568, %v263, 0.0
    %1191 = vadd.xlane.f32.xlu0 %v1190
    %v1192 = vpop.xlane.xlu0 %1191
    %v1193 = vsel %vm568, %v264, 0.0
    %1194 = vadd.xlane.f32.xlu0 %v1193
    %v1195 = vpop.xlane.xlu0 %1194
    %v1196 = vsel %vm568, %v265, 0.0
    %1197 = vadd.xlane.f32.xlu0 %v1196
    %v1198 = vpop.xlane.xlu0 %1197
    %v1199 = vsel %vm568, %v266, 0.0
    %1200 = vadd.xlane.f32.xlu0 %v1199
    %v1201 = vpop.xlane.xlu0 %1200
    %v1202 = vsel %vm568, %v267, 0.0
    %1203 = vadd.xlane.f32.xlu0 %v1202
    %v1204 = vpop.xlane.xlu0 %1203
    %v1205 = vsel %vm568, %v268, 0.0
    %1206 = vadd.xlane.f32.xlu0 %v1205
    %v1207 = vpop.xlane.xlu0 %1206
    %v1208 = vsel %vm568, %v269, 0.0
    %1209 = vadd.xlane.f32.xlu0 %v1208
    %v1210 = vpop.xlane.xlu0 %1209
    %v1211 = vsel %vm568, %v270, 0.0
    %1212 = vadd.xlane.f32.xlu0 %v1211
    %v1213 = vpop.xlane.xlu0 %1212
    %v1214 = vsel %vm568, %v271, 0.0
    %1215 = vadd.xlane.f32.xlu0 %v1214
    %v1216 = vpop.xlane.xlu0 %1215
    %v1217 = vsel %vm568, %v272, 0.0
    %1218 = vadd.xlane.f32.xlu0 %v1217
    %v1219 = vpop.xlane.xlu0 %1218
    %v1220 = vsel %vm568, %v273, 0.0
    %1221 = vadd.xlane.f32.xlu0 %v1220
    %v1222 = vpop.xlane.xlu0 %1221
    %v1223 = vsel %vm568, %v274, 0.0
    %1224 = vadd.xlane.f32.xlu0 %v1223
    %v1225 = vpop.xlane.xlu0 %1224
    %v1226 = vsel %vm568, %v275, 0.0
    %1227 = vadd.xlane.f32.xlu0 %v1226
    %v1228 = vpop.xlane.xlu0 %1227
    %v1229 = vsel %vm568, %v276, 0.0
    %1230 = vadd.xlane.f32.xlu0 %v1229
    %v1231 = vpop.xlane.xlu0 %1230
    %v1232 = vsel %vm568, %v277, 0.0
    %1233 = vadd.xlane.f32.xlu0 %v1232
    %v1234 = vpop.xlane.xlu0 %1233
    %v1235 = vsel %vm568, %v278, 0.0
    %1236 = vadd.xlane.f32.xlu0 %v1235
    %v1237 = vpop.xlane.xlu0 %1236
    %v1238 = vsel %vm568, %v279, 0.0
    %1239 = vadd.xlane.f32.xlu0 %v1238
    %v1240 = vpop.xlane.xlu0 %1239
    %v1241 = vsel %vm568, %v280, 0.0
    %1242 = vadd.xlane.f32.xlu0 %v1241
    %v1243 = vpop.xlane.xlu0 %1242
    %v1244 = vsel %vm568, %v281, 0.0
    %1245 = vadd.xlane.f32.xlu0 %v1244
    %v1246 = vpop.xlane.xlu0 %1245
    %v1247 = vsel %vm568, %v282, 0.0
    %1248 = vadd.xlane.f32.xlu0 %v1247
    %v1249 = vpop.xlane.xlu0 %1248
    %v1250 = vsel %vm568, %v283, 0.0
    %1251 = vadd.xlane.f32.xlu0 %v1250
    %v1252 = vpop.xlane.xlu0 %1251
    %v1253 = vsel %vm568, %v284, 0.0
    %1254 = vadd.xlane.f32.xlu0 %v1253
    %v1255 = vpop.xlane.xlu0 %1254
    %v1256 = vsel %vm568, %v285, 0.0
    %1257 = vadd.xlane.f32.xlu0 %v1256
    %v1258 = vpop.xlane.xlu0 %1257
    %v1259 = vsel %vm568, %v286, 0.0
    %1260 = vadd.xlane.f32.xlu0 %v1259
    %v1261 = vpop.xlane.xlu0 %1260
    %v1262 = vsel %vm568, %v287, 0.0
    %1263 = vadd.xlane.f32.xlu0 %v1262
    %v1264 = vpop.xlane.xlu0 %1263
    %v1265 = vsel %vm568, %v288, 0.0
    %1266 = vadd.xlane.f32.xlu0 %v1265
    %v1267 = vpop.xlane.xlu0 %1266
    %v1268 = vsel %vm568, %v289, 0.0
    %1269 = vadd.xlane.f32.xlu0 %v1268
    %v1270 = vpop.xlane.xlu0 %1269
    %v1271 = vsel %vm568, %v290, 0.0
    %1272 = vadd.xlane.f32.xlu0 %v1271
    %v1273 = vpop.xlane.xlu0 %1272
    %v1274 = vsel %vm568, %v291, 0.0
    %1275 = vadd.xlane.f32.xlu0 %v1274
    %v1276 = vpop.xlane.xlu0 %1275
    %v1277 = vsel %vm568, %v292, 0.0
    %1278 = vadd.xlane.f32.xlu0 %v1277
    %v1279 = vpop.xlane.xlu0 %1278
    %v1280 = vsel %vm568, %v293, 0.0
    %1281 = vadd.xlane.f32.xlu0 %v1280
    %v1282 = vpop.xlane.xlu0 %1281
    %v1283 = vsel %vm568, %v294, 0.0
    %1284 = vadd.xlane.f32.xlu0 %v1283
    %v1285 = vpop.xlane.xlu0 %1284
    %v1286 = vsel %vm568, %v295, 0.0
    %1287 = vadd.xlane.f32.xlu0 %v1286
    %v1288 = vpop.xlane.xlu0 %1287
    %v1289 = vsel %vm568, %v296, 0.0
    %1290 = vadd.xlane.f32.xlu0 %v1289
    %v1291 = vpop.xlane.xlu0 %1290
    %v1292 = vsel %vm568, %v297, 0.0
    %1293 = vadd.xlane.f32.xlu0 %v1292
    %v1294 = vpop.xlane.xlu0 %1293
    %v1295 = vsel %vm568, %v298, 0.0
    %1296 = vadd.xlane.f32.xlu0 %v1295
    %v1297 = vpop.xlane.xlu0 %1296
    %v1298 = vsel %vm568, %v299, 0.0
    %1299 = vadd.xlane.f32.xlu0 %v1298
    %v1300 = vpop.xlane.xlu0 %1299
    %v1301 = vsel %vm568, %v300, 0.0
    %1302 = vadd.xlane.f32.xlu0 %v1301
    %v1303 = vpop.xlane.xlu0 %1302
    %v1304 = vsel %vm568, %v301, 0.0
    %1305 = vadd.xlane.f32.xlu0 %v1304
    %v1306 = vpop.xlane.xlu0 %1305
    %v1307 = vsel %vm568, %v302, 0.0
    %1308 = vadd.xlane.f32.xlu0 %v1307
    %v1309 = vpop.xlane.xlu0 %1308
    %v1310 = vsel %vm568, %v303, 0.0
    %1311 = vadd.xlane.f32.xlu0 %v1310
    %v1312 = vpop.xlane.xlu0 %1311
    %v1313 = vsel %vm568, %v304, 0.0
    %1314 = vadd.xlane.f32.xlu0 %v1313
    %v1315 = vpop.xlane.xlu0 %1314
    %v1316 = vsel %vm568, %v305, 0.0
    %1317 = vadd.xlane.f32.xlu0 %v1316
    %v1318 = vpop.xlane.xlu0 %1317
    %v1319 = vsel %vm568, %v306, 0.0
    %1320 = vadd.xlane.f32.xlu0 %v1319
    %v1321 = vpop.xlane.xlu0 %1320
    %v1322 = vsel %vm568, %v307, 0.0
    %1323 = vadd.xlane.f32.xlu0 %v1322
    %v1324 = vpop.xlane.xlu0 %1323
    %v1325 = vsel %vm568, %v308, 0.0
    %1326 = vadd.xlane.f32.xlu0 %v1325
    %v1327 = vpop.xlane.xlu0 %1326
    %v1328 = vsel %vm568, %v309, 0.0
    %1329 = vadd.xlane.f32.xlu0 %v1328
    %v1330 = vpop.xlane.xlu0 %1329
    %v1331 = vsel %vm568, %v310, 0.0
    %1332 = vadd.xlane.f32.xlu0 %v1331
    %v1333 = vpop.xlane.xlu0 %1332
    %v1334 = vsel %vm568, %v311, 0.0
    %1335 = vadd.xlane.f32.xlu0 %v1334
    %v1336 = vpop.xlane.xlu0 %1335
    %v1337 = vsel %vm568, %v312, 0.0
    %1338 = vadd.xlane.f32.xlu0 %v1337
    %v1339 = vpop.xlane.xlu0 %1338
    %v1340 = vsel %vm568, %v313, 0.0
    %1341 = vadd.xlane.f32.xlu0 %v1340
    %v1342 = vpop.xlane.xlu0 %1341
    %v1343 = vsel %vm568, %v314, 0.0
    %1344 = vadd.xlane.f32.xlu0 %v1343
    %v1345 = vpop.xlane.xlu0 %1344
    %v1346 = vsel %vm568, %v315, 0.0
    %1347 = vadd.xlane.f32.xlu0 %v1346
    %v1348 = vpop.xlane.xlu0 %1347
    %v1349 = vsel %vm568, %v316, 0.0
    %1350 = vadd.xlane.f32.xlu0 %v1349
    %v1351 = vpop.xlane.xlu0 %1350
    %v1352 = vsel %vm568, %v317, 0.0
    %1353 = vadd.xlane.f32.xlu0 %v1352
    %v1354 = vpop.xlane.xlu0 %1353
    %v1355 = vsel %vm568, %v318, 0.0
    %1356 = vadd.xlane.f32.xlu0 %v1355
    %v1357 = vpop.xlane.xlu0 %1356
    %v1358 = vsel %vm568, %v319, 0.0
    %1359 = vadd.xlane.f32.xlu0 %v1358
    %v1360 = vpop.xlane.xlu0 %1359
    %v1361 = vsel %vm568, %v320, 0.0
    %1362 = vadd.xlane.f32.xlu0 %v1361
    %v1363 = vpop.xlane.xlu0 %1362
    %v1364 = vsel %vm568, %v321, 0.0
    %1365 = vadd.xlane.f32.xlu0 %v1364
    %v1366 = vpop.xlane.xlu0 %1365
    %v1367 = vsel %vm568, %v322, 0.0
    %1368 = vadd.xlane.f32.xlu0 %v1367
    %v1369 = vpop.xlane.xlu0 %1368
    %v1370 = vsel %vm568, %v323, 0.0
    %1371 = vadd.xlane.f32.xlu0 %v1370
    %v1372 = vpop.xlane.xlu0 %1371
    %v1373 = vsel %vm568, %v324, 0.0
    %1374 = vadd.xlane.f32.xlu0 %v1373
    %v1375 = vpop.xlane.xlu0 %1374
    %v1376 = vsel %vm568, %v325, 0.0
    %1377 = vadd.xlane.f32.xlu0 %v1376
    %v1378 = vpop.xlane.xlu0 %1377
    %v1379 = vsel %vm568, %v326, 0.0
    %1380 = vadd.xlane.f32.xlu0 %v1379
    %v1381 = vpop.xlane.xlu0 %1380
    %v1382 = vsel %vm568, %v327, 0.0
    %1383 = vadd.xlane.f32.xlu0 %v1382
    %v1384 = vpop.xlane.xlu0 %1383
    %v1385 = vsel %vm568, %v328, 0.0
    %1386 = vadd.xlane.f32.xlu0 %v1385
    %v1387 = vpop.xlane.xlu0 %1386
    %v1388 = vsel %vm568, %v329, 0.0
    %1389 = vadd.xlane.f32.xlu0 %v1388
    %v1390 = vpop.xlane.xlu0 %1389
    %v1391 = vsel %vm568, %v330, 0.0
    %1392 = vadd.xlane.f32.xlu0 %v1391
    %v1393 = vpop.xlane.xlu0 %1392
    %v1394 = vsel %vm568, %v331, 0.0
    %1395 = vadd.xlane.f32.xlu0 %v1394
    %v1396 = vpop.xlane.xlu0 %1395
    %v1397 = vsel %vm568, %v332, 0.0
    %1398 = vadd.xlane.f32.xlu0 %v1397
    %v1399 = vpop.xlane.xlu0 %1398
    %v1400 = vsel %vm568, %v333, 0.0
    %1401 = vadd.xlane.f32.xlu0 %v1400
    %v1402 = vpop.xlane.xlu0 %1401
    %v1403 = vsel %vm568, %v334, 0.0
    %1404 = vadd.xlane.f32.xlu0 %v1403
    %v1405 = vpop.xlane.xlu0 %1404
    %v1406 = vsel %vm568, %v335, 0.0
    %1407 = vadd.xlane.f32.xlu0 %v1406
    %v1408 = vpop.xlane.xlu0 %1407
    %v1409 = vsel %vm568, %v336, 0.0
    %1410 = vadd.xlane.f32.xlu0 %v1409
    %v1411 = vpop.xlane.xlu0 %1410
    %v1412 = vsel %vm568, %v337, 0.0
    %1413 = vadd.xlane.f32.xlu0 %v1412
    %v1414 = vpop.xlane.xlu0 %1413
    %v1415 = vsel %vm568, %v338, 0.0
    %1416 = vadd.xlane.f32.xlu0 %v1415
    %v1417 = vpop.xlane.xlu0 %1416
    %v1418 = vsel %vm568, %v339, 0.0
    %1419 = vadd.xlane.f32.xlu0 %v1418
    %v1420 = vpop.xlane.xlu0 %1419
    %v1421 = vsel %vm568, %v340, 0.0
    %1422 = vadd.xlane.f32.xlu0 %v1421
    %v1423 = vpop.xlane.xlu0 %1422
    %v1424 = vsel %vm568, %v341, 0.0
    %1425 = vadd.xlane.f32.xlu0 %v1424
    %v1426 = vpop.xlane.xlu0 %1425
    %v1427 = vsel %vm568, %v342, 0.0
    %1428 = vadd.xlane.f32.xlu0 %v1427
    %v1429 = vpop.xlane.xlu0 %1428
    %v1430 = vsel %vm568, %v343, 0.0
    %1431 = vadd.xlane.f32.xlu0 %v1430
    %v1432 = vpop.xlane.xlu0 %1431
    %v1433 = vsel %vm568, %v344, 0.0
    %1434 = vadd.xlane.f32.xlu0 %v1433
    %v1435 = vpop.xlane.xlu0 %1434
    %v1436 = vsel %vm568, %v345, 0.0
    %1437 = vadd.xlane.f32.xlu0 %v1436
    %v1438 = vpop.xlane.xlu0 %1437
    %v1439 = vsel %vm568, %v346, 0.0
    %1440 = vadd.xlane.f32.xlu0 %v1439
    %v1441 = vpop.xlane.xlu0 %1440
    %v1442 = vsel %vm568, %v347, 0.0
    %1443 = vadd.xlane.f32.xlu0 %v1442
    %v1444 = vpop.xlane.xlu0 %1443
    %v1445 = vsel %vm568, %v348, 0.0
    %1446 = vadd.xlane.f32.xlu0 %v1445
    %v1447 = vpop.xlane.xlu0 %1446
    %v1448 = vsel %vm568, %v349, 0.0
    %1449 = vadd.xlane.f32.xlu0 %v1448
    %v1450 = vpop.xlane.xlu0 %1449
    %v1451 = vsel %vm568, %v350, 0.0
    %1452 = vadd.xlane.f32.xlu0 %v1451
    %v1453 = vpop.xlane.xlu0 %1452
    %v1454 = vsel %vm568, %v351, 0.0
    %1455 = vadd.xlane.f32.xlu0 %v1454
    %v1456 = vpop.xlane.xlu0 %1455
    %v1457 = vsel %vm568, %v352, 0.0
    %1458 = vadd.xlane.f32.xlu0 %v1457
    %v1459 = vpop.xlane.xlu0 %1458
    %v1460 = vsel %vm568, %v353, 0.0
    %1461 = vadd.xlane.f32.xlu0 %v1460
    %v1462 = vpop.xlane.xlu0 %1461
    %v1463 = vsel %vm568, %v354, 0.0
    %1464 = vadd.xlane.f32.xlu0 %v1463
    %v1465 = vpop.xlane.xlu0 %1464
    %v1466 = vsel %vm568, %v355, 0.0
    %1467 = vadd.xlane.f32.xlu0 %v1466
    %v1468 = vpop.xlane.xlu0 %1467
    %v1469 = vsel %vm568, %v356, 0.0
    %1470 = vadd.xlane.f32.xlu0 %v1469
    %v1471 = vpop.xlane.xlu0 %1470
    %v1472 = vsel %vm568, %v357, 0.0
    %1473 = vadd.xlane.f32.xlu0 %v1472
    %v1474 = vpop.xlane.xlu0 %1473
    %v1475 = vsel %vm568, %v358, 0.0
    %1476 = vadd.xlane.f32.xlu0 %v1475
    %v1477 = vpop.xlane.xlu0 %1476
    %v1478 = vsel %vm568, %v359, 0.0
    %1479 = vadd.xlane.f32.xlu0 %v1478
    %v1480 = vpop.xlane.xlu0 %1479
    %v1481 = vsel %vm568, %v360, 0.0
    %1482 = vadd.xlane.f32.xlu0 %v1481
    %v1483 = vpop.xlane.xlu0 %1482
    %v1484 = vsel %vm568, %v361, 0.0
    %1485 = vadd.xlane.f32.xlu0 %v1484
    %v1486 = vpop.xlane.xlu0 %1485
    %v1487 = vsel %vm568, %v362, 0.0
    %1488 = vadd.xlane.f32.xlu0 %v1487
    %v1489 = vpop.xlane.xlu0 %1488
    %v1490 = vsel %vm568, %v363, 0.0
    %1491 = vadd.xlane.f32.xlu0 %v1490
    %v1492 = vpop.xlane.xlu0 %1491
    %v1493 = vsel %vm568, %v364, 0.0
    %1494 = vadd.xlane.f32.xlu0 %v1493
    %v1495 = vpop.xlane.xlu0 %1494
    %v1496 = vsel %vm568, %v365, 0.0
    %1497 = vadd.xlane.f32.xlu0 %v1496
    %v1498 = vpop.xlane.xlu0 %1497
    %v1499 = vsel %vm568, %v366, 0.0
    %1500 = vadd.xlane.f32.xlu0 %v1499
    %v1501 = vpop.xlane.xlu0 %1500
    %v1502 = vsel %vm568, %v367, 0.0
    %1503 = vadd.xlane.f32.xlu0 %v1502
    %v1504 = vpop.xlane.xlu0 %1503
    %v1505 = vsel %vm568, %v368, 0.0
    %1506 = vadd.xlane.f32.xlu0 %v1505
    %v1507 = vpop.xlane.xlu0 %1506
    %v1508 = vsel %vm568, %v369, 0.0
    %1509 = vadd.xlane.f32.xlu0 %v1508
    %v1510 = vpop.xlane.xlu0 %1509
    %v1511 = vsel %vm568, %v370, 0.0
    %1512 = vadd.xlane.f32.xlu0 %v1511
    %v1513 = vpop.xlane.xlu0 %1512
    %v1514 = vsel %vm568, %v371, 0.0
    %1515 = vadd.xlane.f32.xlu0 %v1514
    %v1516 = vpop.xlane.xlu0 %1515
    %v1517 = vsel %vm568, %v372, 0.0
    %1518 = vadd.xlane.f32.xlu0 %v1517
    %v1519 = vpop.xlane.xlu0 %1518
    %v1520 = vsel %vm568, %v373, 0.0
    %1521 = vadd.xlane.f32.xlu0 %v1520
    %v1522 = vpop.xlane.xlu0 %1521
    %v1523 = vsel %vm568, %v374, 0.0
    %1524 = vadd.xlane.f32.xlu0 %v1523
    %v1525 = vpop.xlane.xlu0 %1524
    %v1526 = vsel %vm568, %v375, 0.0
    %1527 = vadd.xlane.f32.xlu0 %v1526
    %v1528 = vpop.xlane.xlu0 %1527
    %v1529 = vsel %vm568, %v376, 0.0
    %1530 = vadd.xlane.f32.xlu0 %v1529
    %v1531 = vpop.xlane.xlu0 %1530
    %v1532 = vsel %vm568, %v377, 0.0
    %1533 = vadd.xlane.f32.xlu0 %v1532
    %v1534 = vpop.xlane.xlu0 %1533
    %v1535 = vsel %vm568, %v378, 0.0
    %1536 = vadd.xlane.f32.xlu0 %v1535
    %v1537 = vpop.xlane.xlu0 %1536
    %v1538 = vsel %vm568, %v379, 0.0
    %1539 = vadd.xlane.f32.xlu0 %v1538
    %v1540 = vpop.xlane.xlu0 %1539
    %v1541 = vsel %vm568, %v380, 0.0
    %1542 = vadd.xlane.f32.xlu0 %v1541
    %v1543 = vpop.xlane.xlu0 %1542
    %v1544 = vsel %vm568, %v381, 0.0
    %1545 = vadd.xlane.f32.xlu0 %v1544
    %v1546 = vpop.xlane.xlu0 %1545
    %v1547 = vsel %vm568, %v382, 0.0
    %1548 = vadd.xlane.f32.xlu0 %v1547
    %v1549 = vpop.xlane.xlu0 %1548
    %v1550 = vsel %vm568, %v383, 0.0
    %1551 = vadd.xlane.f32.xlu0 %v1550
    %v1552 = vpop.xlane.xlu0 %1551
    %v1553 = vsel %vm568, %v384, 0.0
    %1554 = vadd.xlane.f32.xlu0 %v1553
    %v1555 = vpop.xlane.xlu0 %1554
    %v1556 = vsel %vm568, %v385, 0.0
    %1557 = vadd.xlane.f32.xlu0 %v1556
    %v1558 = vpop.xlane.xlu0 %1557
    %v1559 = vsel %vm568, %v386, 0.0
    %1560 = vadd.xlane.f32.xlu0 %v1559
    %v1561 = vpop.xlane.xlu0 %1560
    %v1562 = vsel %vm568, %v387, 0.0
    %1563 = vadd.xlane.f32.xlu0 %v1562
    %v1564 = vpop.xlane.xlu0 %1563
    %v1565 = vsel %vm568, %v388, 0.0
    %1566 = vadd.xlane.f32.xlu0 %v1565
    %v1567 = vpop.xlane.xlu0 %1566
    %v1568 = vsel %vm568, %v389, 0.0
    %1569 = vadd.xlane.f32.xlu0 %v1568
    %v1570 = vpop.xlane.xlu0 %1569
    %v1571 = vsel %vm568, %v390, 0.0
    %1572 = vadd.xlane.f32.xlu0 %v1571
    %v1573 = vpop.xlane.xlu0 %1572
    %v1574 = vsel %vm568, %v391, 0.0
    %1575 = vadd.xlane.f32.xlu0 %v1574
    %v1576 = vpop.xlane.xlu0 %1575
    %v1577 = vsel %vm568, %v392, 0.0
    %1578 = vadd.xlane.f32.xlu0 %v1577
    %v1579 = vpop.xlane.xlu0 %1578
    %v1580 = vsel %vm568, %v393, 0.0
    %1581 = vadd.xlane.f32.xlu0 %v1580
    %v1582 = vpop.xlane.xlu0 %1581
    %v1583 = vsel %vm568, %v394, 0.0
    %1584 = vadd.xlane.f32.xlu0 %v1583
    %v1585 = vpop.xlane.xlu0 %1584
    %v1586 = vsel %vm568, %v395, 0.0
    %1587 = vadd.xlane.f32.xlu0 %v1586
    %v1588 = vpop.xlane.xlu0 %1587
    %v1589 = vsel %vm568, %v396, 0.0
    %1590 = vadd.xlane.f32.xlu0 %v1589
    %v1591 = vpop.xlane.xlu0 %1590
    %v1592 = vsel %vm568, %v397, 0.0
    %1593 = vadd.xlane.f32.xlu0 %v1592
    %v1594 = vpop.xlane.xlu0 %1593
    %v1595 = vsel %vm568, %v398, 0.0
    %1596 = vadd.xlane.f32.xlu0 %v1595
    %v1597 = vpop.xlane.xlu0 %1596
    %v1598 = vsel %vm568, %v399, 0.0
    %1599 = vadd.xlane.f32.xlu0 %v1598
    %v1600 = vpop.xlane.xlu0 %1599
    %v1601 = vsel %vm568, %v400, 0.0
    %1602 = vadd.xlane.f32.xlu0 %v1601
    %v1603 = vpop.xlane.xlu0 %1602
    %v1604 = vsel %vm568, %v401, 0.0
    %1605 = vadd.xlane.f32.xlu0 %v1604
    %v1606 = vpop.xlane.xlu0 %1605
    %v1607 = vsel %vm568, %v402, 0.0
    %1608 = vadd.xlane.f32.xlu0 %v1607
    %v1609 = vpop.xlane.xlu0 %1608
    %v1610 = vsel %vm568, %v403, 0.0
    %1611 = vadd.xlane.f32.xlu0 %v1610
    %v1612 = vpop.xlane.xlu0 %1611
    %v1613 = vsel %vm568, %v404, 0.0
    %1614 = vadd.xlane.f32.xlu0 %v1613
    %v1615 = vpop.xlane.xlu0 %1614
    %v1616 = vsel %vm568, %v405, 0.0
    %1617 = vadd.xlane.f32.xlu0 %v1616
    %v1618 = vpop.xlane.xlu0 %1617
    %v1619 = vsel %vm568, %v406, 0.0
    %1620 = vadd.xlane.f32.xlu0 %v1619
    %v1621 = vpop.xlane.xlu0 %1620
    %v1622 = vsel %vm568, %v407, 0.0
    %1623 = vadd.xlane.f32.xlu0 %v1622
    %v1624 = vpop.xlane.xlu0 %1623
    %v1625 = vsel %vm568, %v408, 0.0
    %1626 = vadd.xlane.f32.xlu0 %v1625
    %v1627 = vpop.xlane.xlu0 %1626
    %v1628 = vsel %vm568, %v409, 0.0
    %1629 = vadd.xlane.f32.xlu0 %v1628
    %v1630 = vpop.xlane.xlu0 %1629
    %v1631 = vsel %vm568, %v410, 0.0
    %1632 = vadd.xlane.f32.xlu0 %v1631
    %v1633 = vpop.xlane.xlu0 %1632
    %v1634 = vsel %vm568, %v411, 0.0
    %1635 = vadd.xlane.f32.xlu0 %v1634
    %v1636 = vpop.xlane.xlu0 %1635
    %v1637 = vsel %vm568, %v412, 0.0
    %1638 = vadd.xlane.f32.xlu0 %v1637
    %v1639 = vpop.xlane.xlu0 %1638
    %v1640 = vsel %vm568, %v413, 0.0
    %1641 = vadd.xlane.f32.xlu0 %v1640
    %v1642 = vpop.xlane.xlu0 %1641
    %v1643 = vsel %vm568, %v414, 0.0
    %1644 = vadd.xlane.f32.xlu0 %v1643
    %v1645 = vpop.xlane.xlu0 %1644
    %v1646 = vsel %vm568, %v415, 0.0
    %1647 = vadd.xlane.f32.xlu0 %v1646
    %v1648 = vpop.xlane.xlu0 %1647
    %v1649 = vsel %vm568, %v416, 0.0
    %1650 = vadd.xlane.f32.xlu0 %v1649
    %v1651 = vpop.xlane.xlu0 %1650
    %v1652 = vsel %vm568, %v417, 0.0
    %1653 = vadd.xlane.f32.xlu0 %v1652
    %v1654 = vpop.xlane.xlu0 %1653
    %v1655 = vsel %vm568, %v418, 0.0
    %1656 = vadd.xlane.f32.xlu0 %v1655
    %v1657 = vpop.xlane.xlu0 %1656
    %v1658 = vsel %vm568, %v419, 0.0
    %1659 = vadd.xlane.f32.xlu0 %v1658
    %v1660 = vpop.xlane.xlu0 %1659
    %v1661 = vsel %vm568, %v420, 0.0
    %1662 = vadd.xlane.f32.xlu0 %v1661
    %v1663 = vpop.xlane.xlu0 %1662
    %v1664 = vsel %vm568, %v421, 0.0
    %1665 = vadd.xlane.f32.xlu0 %v1664
    %v1666 = vpop.xlane.xlu0 %1665
    %v1667 = vsel %vm568, %v422, 0.0
    %1668 = vadd.xlane.f32.xlu0 %v1667
    %v1669 = vpop.xlane.xlu0 %1668
    %v1670 = vsel %vm568, %v423, 0.0
    %1671 = vadd.xlane.f32.xlu0 %v1670
    %v1672 = vpop.xlane.xlu0 %1671
    %v1673 = vsel %vm568, %v424, 0.0
    %1674 = vadd.xlane.f32.xlu0 %v1673
    %v1675 = vpop.xlane.xlu0 %1674
    %v1676 = vsel %vm568, %v425, 0.0
    %1677 = vadd.xlane.f32.xlu0 %v1676
    %v1678 = vpop.xlane.xlu0 %1677
    %v1679 = vsel %vm568, %v426, 0.0
    %1680 = vadd.xlane.f32.xlu0 %v1679
    %v1681 = vpop.xlane.xlu0 %1680
    %v1682 = vsel %vm568, %v427, 0.0
    %1683 = vadd.xlane.f32.xlu0 %v1682
    %v1684 = vpop.xlane.xlu0 %1683
    %v1685 = vsel %vm568, %v428, 0.0
    %1686 = vadd.xlane.f32.xlu0 %v1685
    %v1687 = vpop.xlane.xlu0 %1686
    %v1688 = vsel %vm568, %v429, 0.0
    %1689 = vadd.xlane.f32.xlu0 %v1688
    %v1690 = vpop.xlane.xlu0 %1689
    %v1691 = vsel %vm568, %v430, 0.0
    %1692 = vadd.xlane.f32.xlu0 %v1691
    %v1693 = vpop.xlane.xlu0 %1692
    %v1694 = vsel %vm568, %v431, 0.0
    %1695 = vadd.xlane.f32.xlu0 %v1694
    %v1696 = vpop.xlane.xlu0 %1695
    %v1697 = vsel %vm568, %v432, 0.0
    %1698 = vadd.xlane.f32.xlu0 %v1697
    %v1699 = vpop.xlane.xlu0 %1698
    %v1700 = vsel %vm568, %v433, 0.0
    %1701 = vadd.xlane.f32.xlu0 %v1700
    %v1702 = vpop.xlane.xlu0 %1701
    %v1703 = vsel %vm568, %v434, 0.0
    %1704 = vadd.xlane.f32.xlu0 %v1703
    %v1705 = vpop.xlane.xlu0 %1704
    %v1706 = vsel %vm568, %v435, 0.0
    %1707 = vadd.xlane.f32.xlu0 %v1706
    %v1708 = vpop.xlane.xlu0 %1707
    %v1709 = vsel %vm568, %v436, 0.0
    %1710 = vadd.xlane.f32.xlu0 %v1709
    %v1711 = vpop.xlane.xlu0 %1710
    %v1712 = vsel %vm568, %v437, 0.0
    %1713 = vadd.xlane.f32.xlu0 %v1712
    %v1714 = vpop.xlane.xlu0 %1713
    %v1715 = vsel %vm568, %v438, 0.0
    %1716 = vadd.xlane.f32.xlu0 %v1715
    %v1717 = vpop.xlane.xlu0 %1716
    %v1718 = vsel %vm568, %v439, 0.0
    %1719 = vadd.xlane.f32.xlu0 %v1718
    %v1720 = vpop.xlane.xlu0 %1719
    %v1721 = vsel %vm568, %v440, 0.0
    %1722 = vadd.xlane.f32.xlu0 %v1721
    %v1723 = vpop.xlane.xlu0 %1722
    %v1724 = vsel %vm568, %v441, 0.0
    %1725 = vadd.xlane.f32.xlu0 %v1724
    %v1726 = vpop.xlane.xlu0 %1725
    %v1727 = vsel %vm568, %v442, 0.0
    %1728 = vadd.xlane.f32.xlu0 %v1727
    %v1729 = vpop.xlane.xlu0 %1728
    %v1730 = vsel %vm568, %v443, 0.0
    %1731 = vadd.xlane.f32.xlu0 %v1730
    %v1732 = vpop.xlane.xlu0 %1731
    %v1733 = vsel %vm568, %v444, 0.0
    %1734 = vadd.xlane.f32.xlu0 %v1733
    %v1735 = vpop.xlane.xlu0 %1734
    %v1736 = vsel %vm568, %v445, 0.0
    %1737 = vadd.xlane.f32.xlu0 %v1736
    %v1738 = vpop.xlane.xlu0 %1737
    %v1739 = vsel %vm568, %v446, 0.0
    %1740 = vadd.xlane.f32.xlu0 %v1739
    %v1741 = vpop.xlane.xlu0 %1740
    %v1742 = vsel %vm568, %v447, 0.0
    %1743 = vadd.xlane.f32.xlu0 %v1742
    %v1744 = vpop.xlane.xlu0 %1743
    %v1745 = vsel %vm568, %v448, 0.0
    %1746 = vadd.xlane.f32.xlu0 %v1745
    %v1747 = vpop.xlane.xlu0 %1746
    %v1748 = vsel %vm568, %v449, 0.0
    %1749 = vadd.xlane.f32.xlu0 %v1748
    %v1750 = vpop.xlane.xlu0 %1749
    %v1751 = vsel %vm568, %v450, 0.0
    %1752 = vadd.xlane.f32.xlu0 %v1751
    %v1753 = vpop.xlane.xlu0 %1752
    %v1754 = vsel %vm568, %v451, 0.0
    %1755 = vadd.xlane.f32.xlu0 %v1754
    %v1756 = vpop.xlane.xlu0 %1755
    %v1757 = vsel %vm568, %v452, 0.0
    %1758 = vadd.xlane.f32.xlu0 %v1757
    %v1759 = vpop.xlane.xlu0 %1758
    %v1760 = vsel %vm568, %v453, 0.0
    %1761 = vadd.xlane.f32.xlu0 %v1760
    %v1762 = vpop.xlane.xlu0 %1761
    %v1763 = vsel %vm568, %v454, 0.0
    %1764 = vadd.xlane.f32.xlu0 %v1763
    %v1765 = vpop.xlane.xlu0 %1764
    %v1766 = vsel %vm568, %v455, 0.0
    %1767 = vadd.xlane.f32.xlu0 %v1766
    %v1768 = vpop.xlane.xlu0 %1767
    %v1769 = vsel %vm568, %v456, 0.0
    %1770 = vadd.xlane.f32.xlu0 %v1769
    %v1771 = vpop.xlane.xlu0 %1770
    %v1772 = vsel %vm568, %v457, 0.0
    %1773 = vadd.xlane.f32.xlu0 %v1772
    %v1774 = vpop.xlane.xlu0 %1773
    %v1775 = vsel %vm568, %v458, 0.0
    %1776 = vadd.xlane.f32.xlu0 %v1775
    %v1777 = vpop.xlane.xlu0 %1776
    %v1778 = vsel %vm568, %v459, 0.0
    %1779 = vadd.xlane.f32.xlu0 %v1778
    %v1780 = vpop.xlane.xlu0 %1779
    %v1781 = vsel %vm568, %v460, 0.0
    %1782 = vadd.xlane.f32.xlu0 %v1781
    %v1783 = vpop.xlane.xlu0 %1782
    %v1784 = vsel %vm568, %v461, 0.0
    %1785 = vadd.xlane.f32.xlu0 %v1784
    %v1786 = vpop.xlane.xlu0 %1785
    %v1787 = vsel %vm568, %v462, 0.0
    %1788 = vadd.xlane.f32.xlu0 %v1787
    %v1789 = vpop.xlane.xlu0 %1788
    %v1790 = vsel %vm568, %v463, 0.0
    %1791 = vadd.xlane.f32.xlu0 %v1790
    %v1792 = vpop.xlane.xlu0 %1791
    %v1793 = vsel %vm568, %v464, 0.0
    %1794 = vadd.xlane.f32.xlu0 %v1793
    %v1795 = vpop.xlane.xlu0 %1794
    %v1796 = vsel %vm568, %v465, 0.0
    %1797 = vadd.xlane.f32.xlu0 %v1796
    %v1798 = vpop.xlane.xlu0 %1797
    %v1799 = vsel %vm568, %v466, 0.0
    %1800 = vadd.xlane.f32.xlu0 %v1799
    %v1801 = vpop.xlane.xlu0 %1800
    %v1802 = vsel %vm568, %v467, 0.0
    %1803 = vadd.xlane.f32.xlu0 %v1802
    %v1804 = vpop.xlane.xlu0 %1803
    %v1805 = vsel %vm568, %v468, 0.0
    %1806 = vadd.xlane.f32.xlu0 %v1805
    %v1807 = vpop.xlane.xlu0 %1806
    %v1808 = vsel %vm568, %v469, 0.0
    %1809 = vadd.xlane.f32.xlu0 %v1808
    %v1810 = vpop.xlane.xlu0 %1809
    %v1811 = vsel %vm568, %v470, 0.0
    %1812 = vadd.xlane.f32.xlu0 %v1811
    %v1813 = vpop.xlane.xlu0 %1812
    %v1814 = vsel %vm568, %v471, 0.0
    %1815 = vadd.xlane.f32.xlu0 %v1814
    %v1816 = vpop.xlane.xlu0 %1815
    %v1817 = vsel %vm568, %v472, 0.0
    %1818 = vadd.xlane.f32.xlu0 %v1817
    %v1819 = vpop.xlane.xlu0 %1818
    %v1820 = vsel %vm568, %v473, 0.0
    %1821 = vadd.xlane.f32.xlu0 %v1820
    %v1822 = vpop.xlane.xlu0 %1821
    %v1823 = vsel %vm568, %v474, 0.0
    %1824 = vadd.xlane.f32.xlu0 %v1823
    %v1825 = vpop.xlane.xlu0 %1824
    %v1826 = vsel %vm568, %v475, 0.0
    %1827 = vadd.xlane.f32.xlu0 %v1826
    %v1828 = vpop.xlane.xlu0 %1827
    %v1829 = vsel %vm568, %v476, 0.0
    %1830 = vadd.xlane.f32.xlu0 %v1829
    %v1831 = vpop.xlane.xlu0 %1830
    %v1832 = vsel %vm568, %v477, 0.0
    %1833 = vadd.xlane.f32.xlu0 %v1832
    %v1834 = vpop.xlane.xlu0 %1833
    %v1835 = vsel %vm568, %v478, 0.0
    %1836 = vadd.xlane.f32.xlu0 %v1835
    %v1837 = vpop.xlane.xlu0 %1836
    %v1838 = vsel %vm568, %v479, 0.0
    %1839 = vadd.xlane.f32.xlu0 %v1838
    %v1840 = vpop.xlane.xlu0 %1839
    %v1841 = vsel %vm568, %v480, 0.0
    %1842 = vadd.xlane.f32.xlu0 %v1841
    %v1843 = vpop.xlane.xlu0 %1842
    %v1844 = vsel %vm568, %v481, 0.0
    %1845 = vadd.xlane.f32.xlu0 %v1844
    %v1846 = vpop.xlane.xlu0 %1845
    %v1847 = vsel %vm568, %v482, 0.0
    %1848 = vadd.xlane.f32.xlu0 %v1847
    %v1849 = vpop.xlane.xlu0 %1848
    %v1850 = vsel %vm568, %v483, 0.0
    %1851 = vadd.xlane.f32.xlu0 %v1850
    %v1852 = vpop.xlane.xlu0 %1851
    %v1853 = vsel %vm568, %v484, 0.0
    %1854 = vadd.xlane.f32.xlu0 %v1853
    %v1855 = vpop.xlane.xlu0 %1854
    %v1856 = vsel %vm568, %v485, 0.0
    %1857 = vadd.xlane.f32.xlu0 %v1856
    %v1858 = vpop.xlane.xlu0 %1857
    %v1859 = vsel %vm568, %v486, 0.0
    %1860 = vadd.xlane.f32.xlu0 %v1859
    %v1861 = vpop.xlane.xlu0 %1860
    %v1862 = vsel %vm568, %v487, 0.0
    %1863 = vadd.xlane.f32.xlu0 %v1862
    %v1864 = vpop.xlane.xlu0 %1863
    %v1865 = vsel %vm568, %v488, 0.0
    %1866 = vadd.xlane.f32.xlu0 %v1865
    %v1867 = vpop.xlane.xlu0 %1866
    %v1868 = vsel %vm568, %v489, 0.0
    %1869 = vadd.xlane.f32.xlu0 %v1868
    %v1870 = vpop.xlane.xlu0 %1869
    %v1871 = vsel %vm568, %v490, 0.0
    %1872 = vadd.xlane.f32.xlu0 %v1871
    %v1873 = vpop.xlane.xlu0 %1872
    %v1874 = vsel %vm568, %v491, 0.0
    %1875 = vadd.xlane.f32.xlu0 %v1874
    %v1876 = vpop.xlane.xlu0 %1875
    %v1877 = vsel %vm568, %v492, 0.0
    %1878 = vadd.xlane.f32.xlu0 %v1877
    %v1879 = vpop.xlane.xlu0 %1878
    %v1880 = vsel %vm568, %v493, 0.0
    %1881 = vadd.xlane.f32.xlu0 %v1880
    %v1882 = vpop.xlane.xlu0 %1881
    %v1883 = vsel %vm568, %v494, 0.0
    %1884 = vadd.xlane.f32.xlu0 %v1883
    %v1885 = vpop.xlane.xlu0 %1884
    %v1886 = vsel %vm568, %v495, 0.0
    %1887 = vadd.xlane.f32.xlu0 %v1886
    %v1888 = vpop.xlane.xlu0 %1887
    %v1889 = vsel %vm568, %v496, 0.0
    %1890 = vadd.xlane.f32.xlu0 %v1889
    %v1891 = vpop.xlane.xlu0 %1890
    %v1892 = vsel %vm568, %v497, 0.0
    %1893 = vadd.xlane.f32.xlu0 %v1892
    %v1894 = vpop.xlane.xlu0 %1893
    %v1895 = vsel %vm568, %v498, 0.0
    %1896 = vadd.xlane.f32.xlu0 %v1895
    %v1897 = vpop.xlane.xlu0 %1896
    %v1898 = vsel %vm568, %v499, 0.0
    %1899 = vadd.xlane.f32.xlu0 %v1898
    %v1900 = vpop.xlane.xlu0 %1899
    %v1901 = vsel %vm568, %v500, 0.0
    %1902 = vadd.xlane.f32.xlu0 %v1901
    %v1903 = vpop.xlane.xlu0 %1902
    %v1904 = vsel %vm568, %v501, 0.0
    %1905 = vadd.xlane.f32.xlu0 %v1904
    %v1906 = vpop.xlane.xlu0 %1905
    %v1907 = vsel %vm568, %v502, 0.0
    %1908 = vadd.xlane.f32.xlu0 %v1907
    %v1909 = vpop.xlane.xlu0 %1908
    %v1910 = vsel %vm568, %v503, 0.0
    %1911 = vadd.xlane.f32.xlu0 %v1910
    %v1912 = vpop.xlane.xlu0 %1911
    %v1913 = vsel %vm568, %v504, 0.0
    %1914 = vadd.xlane.f32.xlu0 %v1913
    %v1915 = vpop.xlane.xlu0 %1914
    %v1916 = vsel %vm568, %v505, 0.0
    %1917 = vadd.xlane.f32.xlu0 %v1916
    %v1918 = vpop.xlane.xlu0 %1917
    %v1919 = vsel %vm568, %v506, 0.0
    %1920 = vadd.xlane.f32.xlu0 %v1919
    %v1921 = vpop.xlane.xlu0 %1920
    %v1922 = vsel %vm568, %v507, 0.0
    %1923 = vadd.xlane.f32.xlu0 %v1922
    %v1924 = vpop.xlane.xlu0 %1923
    %v1925 = vsel %vm568, %v508, 0.0
    %1926 = vadd.xlane.f32.xlu0 %v1925
    %v1927 = vpop.xlane.xlu0 %1926
    %v1928 = vsel %vm568, %v509, 0.0
    %1929 = vadd.xlane.f32.xlu0 %v1928
    %v1930 = vpop.xlane.xlu0 %1929
    %v1931 = vsel %vm568, %v510, 0.0
    %1932 = vadd.xlane.f32.xlu0 %v1931
    %v1933 = vpop.xlane.xlu0 %1932
    %v1934 = vsel %vm568, %v511, 0.0
    %1935 = vadd.xlane.f32.xlu0 %v1934
    %v1936 = vpop.xlane.xlu0 %1935
    %v1937 = vsel %vm568, %v512, 0.0
    %1938 = vadd.xlane.f32.xlu0 %v1937
    %v1939 = vpop.xlane.xlu0 %1938
    %v1940 = vsel %vm568, %v513, 0.0
    %1941 = vadd.xlane.f32.xlu0 %v1940
    %v1942 = vpop.xlane.xlu0 %1941
    %v1943 = vsel %vm568, %v514, 0.0
    %1944 = vadd.xlane.f32.xlu0 %v1943
    %v1945 = vpop.xlane.xlu0 %1944
    %v1946 = vsel %vm568, %v515, 0.0
    %1947 = vadd.xlane.f32.xlu0 %v1946
    %v1948 = vpop.xlane.xlu0 %1947
    %v1949 = vsel %vm568, %v516, 0.0
    %1950 = vadd.xlane.f32.xlu0 %v1949
    %v1951 = vpop.xlane.xlu0 %1950
    %v1952 = vsel %vm568, %v517, 0.0
    %1953 = vadd.xlane.f32.xlu0 %v1952
    %v1954 = vpop.xlane.xlu0 %1953
    %v1955 = vsel %vm568, %v518, 0.0
    %1956 = vadd.xlane.f32.xlu0 %v1955
    %v1957 = vpop.xlane.xlu0 %1956
    %v1958 = vsel %vm568, %v519, 0.0
    %1959 = vadd.xlane.f32.xlu0 %v1958
    %v1960 = vpop.xlane.xlu0 %1959
    %v1961 = vsel %vm568, %v520, 0.0
    %1962 = vadd.xlane.f32.xlu0 %v1961
    %v1963 = vpop.xlane.xlu0 %1962
    %v1964 = vsel %vm568, %v521, 0.0
    %1965 = vadd.xlane.f32.xlu0 %v1964
    %v1966 = vpop.xlane.xlu0 %1965
    %v1967 = vsel %vm568, %v522, 0.0
    %1968 = vadd.xlane.f32.xlu0 %v1967
    %v1969 = vpop.xlane.xlu0 %1968
    %v1970 = vsel %vm568, %v523, 0.0
    %1971 = vadd.xlane.f32.xlu0 %v1970
    %v1972 = vpop.xlane.xlu0 %1971
    %v1973 = vsel %vm568, %v524, 0.0
    %1974 = vadd.xlane.f32.xlu0 %v1973
    %v1975 = vpop.xlane.xlu0 %1974
    %v1976 = vsel %vm568, %v525, 0.0
    %1977 = vadd.xlane.f32.xlu0 %v1976
    %v1978 = vpop.xlane.xlu0 %1977
    %v1979 = vsel %vm568, %v526, 0.0
    %1980 = vadd.xlane.f32.xlu0 %v1979
    %v1981 = vpop.xlane.xlu0 %1980
    %v1982 = vsel %vm568, %v527, 0.0
    %1983 = vadd.xlane.f32.xlu0 %v1982
    %v1984 = vpop.xlane.xlu0 %1983
    %v1985 = vsel %vm568, %v528, 0.0
    %1986 = vadd.xlane.f32.xlu0 %v1985
    %v1987 = vpop.xlane.xlu0 %1986
    %v1988 = vsel %vm568, %v529, 0.0
    %1989 = vadd.xlane.f32.xlu0 %v1988
    %v1990 = vpop.xlane.xlu0 %1989
    %v1991 = vsel %vm568, %v530, 0.0
    %1992 = vadd.xlane.f32.xlu0 %v1991
    %v1993 = vpop.xlane.xlu0 %1992
    %v1994 = vsel %vm568, %v531, 0.0
    %1995 = vadd.xlane.f32.xlu0 %v1994
    %v1996 = vpop.xlane.xlu0 %1995
    %v1997 = vsel %vm568, %v532, 0.0
    %1998 = vadd.xlane.f32.xlu0 %v1997
    %v1999 = vpop.xlane.xlu0 %1998
    %v2000 = vsel %vm568, %v533, 0.0
    %2001 = vadd.xlane.f32.xlu0 %v2000
    %v2002 = vpop.xlane.xlu0 %2001
    %v2003 = vsel %vm568, %v534, 0.0
    %2004 = vadd.xlane.f32.xlu0 %v2003
    %v2005 = vpop.xlane.xlu0 %2004
    %v2006 = vsel %vm568, %v535, 0.0
    %2007 = vadd.xlane.f32.xlu0 %v2006
    %v2008 = vpop.xlane.xlu0 %2007
    %v2009 = vsel %vm568, %v536, 0.0
    %2010 = vadd.xlane.f32.xlu0 %v2009
    %v2011 = vpop.xlane.xlu0 %2010
    %v2012 = vsel %vm568, %v537, 0.0
    %2013 = vadd.xlane.f32.xlu0 %v2012
    %v2014 = vpop.xlane.xlu0 %2013
    %v2015 = vsel %vm568, %v538, 0.0
    %2016 = vadd.xlane.f32.xlu0 %v2015
    %v2017 = vpop.xlane.xlu0 %2016
    %v2018 = vsel %vm568, %v539, 0.0
    %2019 = vadd.xlane.f32.xlu0 %v2018
    %v2020 = vpop.xlane.xlu0 %2019
    %v2021 = vsel %vm568, %v540, 0.0
    %2022 = vadd.xlane.f32.xlu0 %v2021
    %v2023 = vpop.xlane.xlu0 %2022
    %v2024 = vsel %vm568, %v541, 0.0
    %2025 = vadd.xlane.f32.xlu0 %v2024
    %v2026 = vpop.xlane.xlu0 %2025
    %v2027 = vsel %vm568, %v542, 0.0
    %2028 = vadd.xlane.f32.xlu0 %v2027
    %v2029 = vpop.xlane.xlu0 %2028
    %v2030 = vsel %vm568, %v543, 0.0
    %2031 = vadd.xlane.f32.xlu0 %v2030
    %v2032 = vpop.xlane.xlu0 %2031
    %v2033 = vsel %vm568, %v544, 0.0
    %2034 = vadd.xlane.f32.xlu0 %v2033
    %v2035 = vpop.xlane.xlu0 %2034
    %v2036 = vsel %vm568, %v545, 0.0
    %2037 = vadd.xlane.f32.xlu0 %v2036
    %v2038 = vpop.xlane.xlu0 %2037
    %v2039 = vsel %vm568, %v546, 0.0
    %2040 = vadd.xlane.f32.xlu0 %v2039
    %v2041 = vpop.xlane.xlu0 %2040
    %v2042 = vsel %vm568, %v547, 0.0
    %2043 = vadd.xlane.f32.xlu0 %v2042
    %v2044 = vpop.xlane.xlu0 %2043
    %v2045 = vsel %vm568, %v548, 0.0
    %2046 = vadd.xlane.f32.xlu0 %v2045
    %v2047 = vpop.xlane.xlu0 %2046
    %v2048 = vsel %vm568, %v549, 0.0
    %2049 = vadd.xlane.f32.xlu0 %v2048
    %v2050 = vpop.xlane.xlu0 %2049
    %v2051 = vsel %vm568, %v550, 0.0
    %2052 = vadd.xlane.f32.xlu0 %v2051
    %v2053 = vpop.xlane.xlu0 %2052
    %v2054 = vsel %vm568, %v551, 0.0
    %2055 = vadd.xlane.f32.xlu0 %v2054
    %v2056 = vpop.xlane.xlu0 %2055
    %v2057 = vsel %vm568, %v552, 0.0
    %2058 = vadd.xlane.f32.xlu0 %v2057
    %v2059 = vpop.xlane.xlu0 %2058
    %v2060 = vsel %vm568, %v553, 0.0
    %2061 = vadd.xlane.f32.xlu0 %v2060
    %v2062 = vpop.xlane.xlu0 %2061
    %v2063 = vsel %vm568, %v554, 0.0
    %2064 = vadd.xlane.f32.xlu0 %v2063
    %v2065 = vpop.xlane.xlu0 %2064
    %v2066 = vsel %vm568, %v555, 0.0
    %2067 = vadd.xlane.f32.xlu0 %v2066
    %v2068 = vpop.xlane.xlu0 %2067
    %v2069 = vsel %vm568, %v556, 0.0
    %2070 = vadd.xlane.f32.xlu0 %v2069
    %v2071 = vpop.xlane.xlu0 %2070
    %v2072 = vsel %vm568, %v557, 0.0
    %2073 = vadd.xlane.f32.xlu0 %v2072
    %v2074 = vpop.xlane.xlu0 %2073
    %v2075 = vsel %vm568, %v558, 0.0
    %2076 = vadd.xlane.f32.xlu0 %v2075
    %v2077 = vpop.xlane.xlu0 %2076
    %v2078 = vsel %vm568, %v559, 0.0
    %2079 = vadd.xlane.f32.xlu0 %v2078
    %v2080 = vpop.xlane.xlu0 %2079
    %v2081 = vsel %vm568, %v560, 0.0
    %2082 = vadd.xlane.f32.xlu0 %v2081
    %v2083 = vpop.xlane.xlu0 %2082
    %v2084 = vsel %vm568, %v561, 0.0
    %2085 = vadd.xlane.f32.xlu0 %v2084
    %v2086 = vpop.xlane.xlu0 %2085
    %v2087 = vsel %vm568, %v562, 0.0
    %2088 = vadd.xlane.f32.xlu0 %v2087
    %v2089 = vpop.xlane.xlu0 %2088
    %v2090 = vsel %vm568, %v563, 0.0
    %2091 = vadd.xlane.f32.xlu0 %v2090
    %v2092 = vpop.xlane.xlu0 %2091
    %v2093 = vsel %vm568, %v564, 0.0
    %2094 = vadd.xlane.f32.xlu0 %v2093
    %v2095 = vpop.xlane.xlu0 %2094
    %v2096 = vsel %vm568, %v565, 0.0
    %2097 = vadd.xlane.f32.xlu0 %v2096
    %v2098 = vpop.xlane.xlu0 %2097
    %v2099 = vsel %vm568, %v566, 0.0
    %2100 = vadd.xlane.f32.xlu0 %v2099
    %v2101 = vpop.xlane.xlu0 %2100
    %v2102 = vsel %vm568, %v567, 0.0
    %2103 = vadd.xlane.f32.xlu0 %v2102
    %v2104 = vpop.xlane.xlu0 %2103
    %v2617 = vlaneseq
    %v2618 = vand.u32 %v2617, 127
    %v2619 = vlaneseq
    %v2620 = vshrl.u32 %v2619, 7
    %v2621 = vsub.s32 %v2618, %v2620
    %v2622 = vrot.slane %v571, %v2621
    %v2623 = vadd.s32 %v2618, 4294967288
    %v2624 = vlaneseq
    %v2625 = vshrl.u32 %v2624, 7
    %v2626 = vsub.s32 %v2623, %v2625
    %v2627 = vrot.slane %v574, %v2626
    %vm2628 = vcmask 130112
    %v2629 = vsel %vm2628, %v2627, %v2622
    %v2630 = vlaneseq
    %v2631 = vshrl.u32 %v2630, 7
    %v2632 = vsub.s32 %v2618, %v2631
    %v2633 = vrot.slane %v577, %v2632
    %v2634 = vlaneseq
    %v2635 = vshrl.u32 %v2634, 7
    %v2636 = vsub.s32 %v2623, %v2635
    %v2637 = vrot.slane %v580, %v2636
    %v2638 = vsel %vm2628, %v2637, %v2633
    %v2639 = vlaneseq
    %v2640 = vshrl.u32 %v2639, 7
    %v2641 = vsub.s32 %v2618, %v2640
    %v2642 = vrot.slane %v583, %v2641
    %v2643 = vlaneseq
    %v2644 = vshrl.u32 %v2643, 7
    %v2645 = vsub.s32 %v2623, %v2644
    %v2646 = vrot.slane %v586, %v2645
    %v2647 = vsel %vm2628, %v2646, %v2642
    %v2648 = vlaneseq
    %v2649 = vshrl.u32 %v2648, 7
    %v2650 = vsub.s32 %v2618, %v2649
    %v2651 = vrot.slane %v589, %v2650
    %v2652 = vlaneseq
    %v2653 = vshrl.u32 %v2652, 7
    %v2654 = vsub.s32 %v2623, %v2653
    %v2655 = vrot.slane %v592, %v2654
    %v2656 = vsel %vm2628, %v2655, %v2651
    %v2657 = vlaneseq
    %v2658 = vshrl.u32 %v2657, 7
    %v2659 = vsub.s32 %v2618, %v2658
    %v2660 = vrot.slane %v595, %v2659
    %v2661 = vlaneseq
    %v2662 = vshrl.u32 %v2661, 7
    %v2663 = vsub.s32 %v2623, %v2662
    %v2664 = vrot.slane %v598, %v2663
    %v2665 = vsel %vm2628, %v2664, %v2660
    %v2666 = vlaneseq
    %v2667 = vshrl.u32 %v2666, 7
    %v2668 = vsub.s32 %v2618, %v2667
    %v2669 = vrot.slane %v601, %v2668
    %v2670 = vlaneseq
    %v2671 = vshrl.u32 %v2670, 7
    %v2672 = vsub.s32 %v2623, %v2671
    %v2673 = vrot.slane %v604, %v2672
    %v2674 = vsel %vm2628, %v2673, %v2669
    %v2675 = vlaneseq
    %v2676 = vshrl.u32 %v2675, 7
    %v2677 = vsub.s32 %v2618, %v2676
    %v2678 = vrot.slane %v607, %v2677
    %v2679 = vlaneseq
    %v2680 = vshrl.u32 %v2679, 7
    %v2681 = vsub.s32 %v2623, %v2680
    %v2682 = vrot.slane %v610, %v2681
    %v2683 = vsel %vm2628, %v2682, %v2678
    %v2684 = vlaneseq
    %v2685 = vshrl.u32 %v2684, 7
    %v2686 = vsub.s32 %v2618, %v2685
    %v2687 = vrot.slane %v613, %v2686
    %v2688 = vlaneseq
    %v2689 = vshrl.u32 %v2688, 7
    %v2690 = vsub.s32 %v2623, %v2689
    %v2691 = vrot.slane %v616, %v2690
    %v2692 = vsel %vm2628, %v2691, %v2687
    %v2693 = vlaneseq
    %v2694 = vshrl.u32 %v2693, 7
    %v2695 = vsub.s32 %v2618, %v2694
    %v2696 = vrot.slane %v619, %v2695
    %v2697 = vlaneseq
    %v2698 = vshrl.u32 %v2697, 7
    %v2699 = vsub.s32 %v2623, %v2698
    %v2700 = vrot.slane %v622, %v2699
    %v2701 = vsel %vm2628, %v2700, %v2696
    %v2702 = vlaneseq
    %v2703 = vshrl.u32 %v2702, 7
    %v2704 = vsub.s32 %v2618, %v2703
    %v2705 = vrot.slane %v625, %v2704
    %v2706 = vlaneseq
    %v2707 = vshrl.u32 %v2706, 7
    %v2708 = vsub.s32 %v2623, %v2707
    %v2709 = vrot.slane %v628, %v2708
    %v2710 = vsel %vm2628, %v2709, %v2705
    %v2711 = vlaneseq
    %v2712 = vshrl.u32 %v2711, 7
    %v2713 = vsub.s32 %v2618, %v2712
    %v2714 = vrot.slane %v631, %v2713
    %v2715 = vlaneseq
    %v2716 = vshrl.u32 %v2715, 7
    %v2717 = vsub.s32 %v2623, %v2716
    %v2718 = vrot.slane %v634, %v2717
    %v2719 = vsel %vm2628, %v2718, %v2714
    %v2720 = vlaneseq
    %v2721 = vshrl.u32 %v2720, 7
    %v2722 = vsub.s32 %v2618, %v2721
    %v2723 = vrot.slane %v637, %v2722
    %v2724 = vlaneseq
    %v2725 = vshrl.u32 %v2724, 7
    %v2726 = vsub.s32 %v2623, %v2725
    %v2727 = vrot.slane %v640, %v2726
    %v2728 = vsel %vm2628, %v2727, %v2723
    %v2729 = vlaneseq
    %v2730 = vshrl.u32 %v2729, 7
    %v2731 = vsub.s32 %v2618, %v2730
    %v2732 = vrot.slane %v643, %v2731
    %v2733 = vlaneseq
    %v2734 = vshrl.u32 %v2733, 7
    %v2735 = vsub.s32 %v2623, %v2734
    %v2736 = vrot.slane %v646, %v2735
    %v2737 = vsel %vm2628, %v2736, %v2732
    %v2738 = vlaneseq
    %v2739 = vshrl.u32 %v2738, 7
    %v2740 = vsub.s32 %v2618, %v2739
    %v2741 = vrot.slane %v649, %v2740
    %v2742 = vlaneseq
    %v2743 = vshrl.u32 %v2742, 7
    %v2744 = vsub.s32 %v2623, %v2743
    %v2745 = vrot.slane %v652, %v2744
    %v2746 = vsel %vm2628, %v2745, %v2741
    %v2747 = vlaneseq
    %v2748 = vshrl.u32 %v2747, 7
    %v2749 = vsub.s32 %v2618, %v2748
    %v2750 = vrot.slane %v655, %v2749
    %v2751 = vlaneseq
    %v2752 = vshrl.u32 %v2751, 7
    %v2753 = vsub.s32 %v2623, %v2752
    %v2754 = vrot.slane %v658, %v2753
    %v2755 = vsel %vm2628, %v2754, %v2750
    %v2756 = vlaneseq
    %v2757 = vshrl.u32 %v2756, 7
    %v2758 = vsub.s32 %v2618, %v2757
    %v2759 = vrot.slane %v661, %v2758
    %v2760 = vlaneseq
    %v2761 = vshrl.u32 %v2760, 7
    %v2762 = vsub.s32 %v2623, %v2761
    %v2763 = vrot.slane %v664, %v2762
    %v2764 = vsel %vm2628, %v2763, %v2759
    %v2765 = vlaneseq
    %v2766 = vshrl.u32 %v2765, 7
    %v2767 = vsub.s32 %v2618, %v2766
    %v2768 = vrot.slane %v667, %v2767
    %v2769 = vlaneseq
    %v2770 = vshrl.u32 %v2769, 7
    %v2771 = vsub.s32 %v2623, %v2770
    %v2772 = vrot.slane %v670, %v2771
    %v2773 = vsel %vm2628, %v2772, %v2768
    %v2774 = vlaneseq
    %v2775 = vshrl.u32 %v2774, 7
    %v2776 = vsub.s32 %v2618, %v2775
    %v2777 = vrot.slane %v673, %v2776
    %v2778 = vlaneseq
    %v2779 = vshrl.u32 %v2778, 7
    %v2780 = vsub.s32 %v2623, %v2779
    %v2781 = vrot.slane %v676, %v2780
    %v2782 = vsel %vm2628, %v2781, %v2777
    %v2783 = vlaneseq
    %v2784 = vshrl.u32 %v2783, 7
    %v2785 = vsub.s32 %v2618, %v2784
    %v2786 = vrot.slane %v679, %v2785
    %v2787 = vlaneseq
    %v2788 = vshrl.u32 %v2787, 7
    %v2789 = vsub.s32 %v2623, %v2788
    %v2790 = vrot.slane %v682, %v2789
    %v2791 = vsel %vm2628, %v2790, %v2786
    %v2792 = vlaneseq
    %v2793 = vshrl.u32 %v2792, 7
    %v2794 = vsub.s32 %v2618, %v2793
    %v2795 = vrot.slane %v685, %v2794
    %v2796 = vlaneseq
    %v2797 = vshrl.u32 %v2796, 7
    %v2798 = vsub.s32 %v2623, %v2797
    %v2799 = vrot.slane %v688, %v2798
    %v2800 = vsel %vm2628, %v2799, %v2795
    %v2801 = vlaneseq
    %v2802 = vshrl.u32 %v2801, 7
    %v2803 = vsub.s32 %v2618, %v2802
    %v2804 = vrot.slane %v691, %v2803
    %v2805 = vlaneseq
    %v2806 = vshrl.u32 %v2805, 7
    %v2807 = vsub.s32 %v2623, %v2806
    %v2808 = vrot.slane %v694, %v2807
    %v2809 = vsel %vm2628, %v2808, %v2804
    %v2810 = vlaneseq
    %v2811 = vshrl.u32 %v2810, 7
    %v2812 = vsub.s32 %v2618, %v2811
    %v2813 = vrot.slane %v697, %v2812
    %v2814 = vlaneseq
    %v2815 = vshrl.u32 %v2814, 7
    %v2816 = vsub.s32 %v2623, %v2815
    %v2817 = vrot.slane %v700, %v2816
    %v2818 = vsel %vm2628, %v2817, %v2813
    %v2819 = vlaneseq
    %v2820 = vshrl.u32 %v2819, 7
    %v2821 = vsub.s32 %v2618, %v2820
    %v2822 = vrot.slane %v703, %v2821
    %v2823 = vlaneseq
    %v2824 = vshrl.u32 %v2823, 7
    %v2825 = vsub.s32 %v2623, %v2824
    %v2826 = vrot.slane %v706, %v2825
    %v2827 = vsel %vm2628, %v2826, %v2822
    %v2828 = vlaneseq
    %v2829 = vshrl.u32 %v2828, 7
    %v2830 = vsub.s32 %v2618, %v2829
    %v2831 = vrot.slane %v709, %v2830
    %v2832 = vlaneseq
    %v2833 = vshrl.u32 %v2832, 7
    %v2834 = vsub.s32 %v2623, %v2833
    %v2835 = vrot.slane %v712, %v2834
    %v2836 = vsel %vm2628, %v2835, %v2831
    %v2837 = vlaneseq
    %v2838 = vshrl.u32 %v2837, 7
    %v2839 = vsub.s32 %v2618, %v2838
    %v2840 = vrot.slane %v715, %v2839
    %v2841 = vlaneseq
    %v2842 = vshrl.u32 %v2841, 7
    %v2843 = vsub.s32 %v2623, %v2842
    %v2844 = vrot.slane %v718, %v2843
    %v2845 = vsel %vm2628, %v2844, %v2840
    %v2846 = vlaneseq
    %v2847 = vshrl.u32 %v2846, 7
    %v2848 = vsub.s32 %v2618, %v2847
    %v2849 = vrot.slane %v721, %v2848
    %v2850 = vlaneseq
    %v2851 = vshrl.u32 %v2850, 7
    %v2852 = vsub.s32 %v2623, %v2851
    %v2853 = vrot.slane %v724, %v2852
    %v2854 = vsel %vm2628, %v2853, %v2849
    %v2855 = vlaneseq
    %v2856 = vshrl.u32 %v2855, 7
    %v2857 = vsub.s32 %v2618, %v2856
    %v2858 = vrot.slane %v727, %v2857
    %v2859 = vlaneseq
    %v2860 = vshrl.u32 %v2859, 7
    %v2861 = vsub.s32 %v2623, %v2860
    %v2862 = vrot.slane %v730, %v2861
    %v2863 = vsel %vm2628, %v2862, %v2858
    %v2864 = vlaneseq
    %v2865 = vshrl.u32 %v2864, 7
    %v2866 = vsub.s32 %v2618, %v2865
    %v2867 = vrot.slane %v733, %v2866
    %v2868 = vlaneseq
    %v2869 = vshrl.u32 %v2868, 7
    %v2870 = vsub.s32 %v2623, %v2869
    %v2871 = vrot.slane %v736, %v2870
    %v2872 = vsel %vm2628, %v2871, %v2867
    %v2873 = vlaneseq
    %v2874 = vshrl.u32 %v2873, 7
    %v2875 = vsub.s32 %v2618, %v2874
    %v2876 = vrot.slane %v739, %v2875
    %v2877 = vlaneseq
    %v2878 = vshrl.u32 %v2877, 7
    %v2879 = vsub.s32 %v2623, %v2878
    %v2880 = vrot.slane %v742, %v2879
    %v2881 = vsel %vm2628, %v2880, %v2876
    %v2882 = vlaneseq
    %v2883 = vshrl.u32 %v2882, 7
    %v2884 = vsub.s32 %v2618, %v2883
    %v2885 = vrot.slane %v745, %v2884
    %v2886 = vlaneseq
    %v2887 = vshrl.u32 %v2886, 7
    %v2888 = vsub.s32 %v2623, %v2887
    %v2889 = vrot.slane %v748, %v2888
    %v2890 = vsel %vm2628, %v2889, %v2885
    %v2891 = vlaneseq
    %v2892 = vshrl.u32 %v2891, 7
    %v2893 = vsub.s32 %v2618, %v2892
    %v2894 = vrot.slane %v751, %v2893
    %v2895 = vlaneseq
    %v2896 = vshrl.u32 %v2895, 7
    %v2897 = vsub.s32 %v2623, %v2896
    %v2898 = vrot.slane %v754, %v2897
    %v2899 = vsel %vm2628, %v2898, %v2894
    %v2900 = vlaneseq
    %v2901 = vshrl.u32 %v2900, 7
    %v2902 = vsub.s32 %v2618, %v2901
    %v2903 = vrot.slane %v757, %v2902
    %v2904 = vlaneseq
    %v2905 = vshrl.u32 %v2904, 7
    %v2906 = vsub.s32 %v2623, %v2905
    %v2907 = vrot.slane %v760, %v2906
    %v2908 = vsel %vm2628, %v2907, %v2903
    %v2909 = vlaneseq
    %v2910 = vshrl.u32 %v2909, 7
    %v2911 = vsub.s32 %v2618, %v2910
    %v2912 = vrot.slane %v763, %v2911
    %v2913 = vlaneseq
    %v2914 = vshrl.u32 %v2913, 7
    %v2915 = vsub.s32 %v2623, %v2914
    %v2916 = vrot.slane %v766, %v2915
    %v2917 = vsel %vm2628, %v2916, %v2912
    %v2918 = vlaneseq
    %v2919 = vshrl.u32 %v2918, 7
    %v2920 = vsub.s32 %v2618, %v2919
    %v2921 = vrot.slane %v769, %v2920
    %v2922 = vlaneseq
    %v2923 = vshrl.u32 %v2922, 7
    %v2924 = vsub.s32 %v2623, %v2923
    %v2925 = vrot.slane %v772, %v2924
    %v2926 = vsel %vm2628, %v2925, %v2921
    %v2927 = vlaneseq
    %v2928 = vshrl.u32 %v2927, 7
    %v2929 = vsub.s32 %v2618, %v2928
    %v2930 = vrot.slane %v775, %v2929
    %v2931 = vlaneseq
    %v2932 = vshrl.u32 %v2931, 7
    %v2933 = vsub.s32 %v2623, %v2932
    %v2934 = vrot.slane %v778, %v2933
    %v2935 = vsel %vm2628, %v2934, %v2930
    %v2936 = vlaneseq
    %v2937 = vshrl.u32 %v2936, 7
    %v2938 = vsub.s32 %v2618, %v2937
    %v2939 = vrot.slane %v781, %v2938
    %v2940 = vlaneseq
    %v2941 = vshrl.u32 %v2940, 7
    %v2942 = vsub.s32 %v2623, %v2941
    %v2943 = vrot.slane %v784, %v2942
    %v2944 = vsel %vm2628, %v2943, %v2939
    %v2945 = vlaneseq
    %v2946 = vshrl.u32 %v2945, 7
    %v2947 = vsub.s32 %v2618, %v2946
    %v2948 = vrot.slane %v787, %v2947
    %v2949 = vlaneseq
    %v2950 = vshrl.u32 %v2949, 7
    %v2951 = vsub.s32 %v2623, %v2950
    %v2952 = vrot.slane %v790, %v2951
    %v2953 = vsel %vm2628, %v2952, %v2948
    %v2954 = vlaneseq
    %v2955 = vshrl.u32 %v2954, 7
    %v2956 = vsub.s32 %v2618, %v2955
    %v2957 = vrot.slane %v793, %v2956
    %v2958 = vlaneseq
    %v2959 = vshrl.u32 %v2958, 7
    %v2960 = vsub.s32 %v2623, %v2959
    %v2961 = vrot.slane %v796, %v2960
    %v2962 = vsel %vm2628, %v2961, %v2957
    %v2963 = vlaneseq
    %v2964 = vshrl.u32 %v2963, 7
    %v2965 = vsub.s32 %v2618, %v2964
    %v2966 = vrot.slane %v799, %v2965
    %v2967 = vlaneseq
    %v2968 = vshrl.u32 %v2967, 7
    %v2969 = vsub.s32 %v2623, %v2968
    %v2970 = vrot.slane %v802, %v2969
    %v2971 = vsel %vm2628, %v2970, %v2966
    %v2972 = vlaneseq
    %v2973 = vshrl.u32 %v2972, 7
    %v2974 = vsub.s32 %v2618, %v2973
    %v2975 = vrot.slane %v805, %v2974
    %v2976 = vlaneseq
    %v2977 = vshrl.u32 %v2976, 7
    %v2978 = vsub.s32 %v2623, %v2977
    %v2979 = vrot.slane %v808, %v2978
    %v2980 = vsel %vm2628, %v2979, %v2975
    %v2981 = vlaneseq
    %v2982 = vshrl.u32 %v2981, 7
    %v2983 = vsub.s32 %v2618, %v2982
    %v2984 = vrot.slane %v811, %v2983
    %v2985 = vlaneseq
    %v2986 = vshrl.u32 %v2985, 7
    %v2987 = vsub.s32 %v2623, %v2986
    %v2988 = vrot.slane %v814, %v2987
    %v2989 = vsel %vm2628, %v2988, %v2984
    %v2990 = vlaneseq
    %v2991 = vshrl.u32 %v2990, 7
    %v2992 = vsub.s32 %v2618, %v2991
    %v2993 = vrot.slane %v817, %v2992
    %v2994 = vlaneseq
    %v2995 = vshrl.u32 %v2994, 7
    %v2996 = vsub.s32 %v2623, %v2995
    %v2997 = vrot.slane %v820, %v2996
    %v2998 = vsel %vm2628, %v2997, %v2993
    %v2999 = vlaneseq
    %v3000 = vshrl.u32 %v2999, 7
    %v3001 = vsub.s32 %v2618, %v3000
    %v3002 = vrot.slane %v823, %v3001
    %v3003 = vlaneseq
    %v3004 = vshrl.u32 %v3003, 7
    %v3005 = vsub.s32 %v2623, %v3004
    %v3006 = vrot.slane %v826, %v3005
    %v3007 = vsel %vm2628, %v3006, %v3002
    %v3008 = vlaneseq
    %v3009 = vshrl.u32 %v3008, 7
    %v3010 = vsub.s32 %v2618, %v3009
    %v3011 = vrot.slane %v829, %v3010
    %v3012 = vlaneseq
    %v3013 = vshrl.u32 %v3012, 7
    %v3014 = vsub.s32 %v2623, %v3013
    %v3015 = vrot.slane %v832, %v3014
    %v3016 = vsel %vm2628, %v3015, %v3011
    %v3017 = vlaneseq
    %v3018 = vshrl.u32 %v3017, 7
    %v3019 = vsub.s32 %v2618, %v3018
    %v3020 = vrot.slane %v835, %v3019
    %v3021 = vlaneseq
    %v3022 = vshrl.u32 %v3021, 7
    %v3023 = vsub.s32 %v2623, %v3022
    %v3024 = vrot.slane %v838, %v3023
    %v3025 = vsel %vm2628, %v3024, %v3020
    %v3026 = vlaneseq
    %v3027 = vshrl.u32 %v3026, 7
    %v3028 = vsub.s32 %v2618, %v3027
    %v3029 = vrot.slane %v841, %v3028
    %v3030 = vlaneseq
    %v3031 = vshrl.u32 %v3030, 7
    %v3032 = vsub.s32 %v2623, %v3031
    %v3033 = vrot.slane %v844, %v3032
    %v3034 = vsel %vm2628, %v3033, %v3029
    %v3035 = vlaneseq
    %v3036 = vshrl.u32 %v3035, 7
    %v3037 = vsub.s32 %v2618, %v3036
    %v3038 = vrot.slane %v847, %v3037
    %v3039 = vlaneseq
    %v3040 = vshrl.u32 %v3039, 7
    %v3041 = vsub.s32 %v2623, %v3040
    %v3042 = vrot.slane %v850, %v3041
    %v3043 = vsel %vm2628, %v3042, %v3038
    %v3044 = vlaneseq
    %v3045 = vshrl.u32 %v3044, 7
    %v3046 = vsub.s32 %v2618, %v3045
    %v3047 = vrot.slane %v853, %v3046
    %v3048 = vlaneseq
    %v3049 = vshrl.u32 %v3048, 7
    %v3050 = vsub.s32 %v2623, %v3049
    %v3051 = vrot.slane %v856, %v3050
    %v3052 = vsel %vm2628, %v3051, %v3047
    %v3053 = vlaneseq
    %v3054 = vshrl.u32 %v3053, 7
    %v3055 = vsub.s32 %v2618, %v3054
    %v3056 = vrot.slane %v859, %v3055
    %v3057 = vlaneseq
    %v3058 = vshrl.u32 %v3057, 7
    %v3059 = vsub.s32 %v2623, %v3058
    %v3060 = vrot.slane %v862, %v3059
    %v3061 = vsel %vm2628, %v3060, %v3056
    %v3062 = vlaneseq
    %v3063 = vshrl.u32 %v3062, 7
    %v3064 = vsub.s32 %v2618, %v3063
    %v3065 = vrot.slane %v865, %v3064
    %v3066 = vlaneseq
    %v3067 = vshrl.u32 %v3066, 7
    %v3068 = vsub.s32 %v2623, %v3067
    %v3069 = vrot.slane %v868, %v3068
    %v3070 = vsel %vm2628, %v3069, %v3065
    %v3071 = vlaneseq
    %v3072 = vshrl.u32 %v3071, 7
    %v3073 = vsub.s32 %v2618, %v3072
    %v3074 = vrot.slane %v871, %v3073
    %v3075 = vlaneseq
    %v3076 = vshrl.u32 %v3075, 7
    %v3077 = vsub.s32 %v2623, %v3076
    %v3078 = vrot.slane %v874, %v3077
    %v3079 = vsel %vm2628, %v3078, %v3074
    %v3080 = vlaneseq
    %v3081 = vshrl.u32 %v3080, 7
    %v3082 = vsub.s32 %v2618, %v3081
    %v3083 = vrot.slane %v877, %v3082
    %v3084 = vlaneseq
    %v3085 = vshrl.u32 %v3084, 7
    %v3086 = vsub.s32 %v2623, %v3085
    %v3087 = vrot.slane %v880, %v3086
    %v3088 = vsel %vm2628, %v3087, %v3083
    %v3089 = vlaneseq
    %v3090 = vshrl.u32 %v3089, 7
    %v3091 = vsub.s32 %v2618, %v3090
    %v3092 = vrot.slane %v883, %v3091
    %v3093 = vlaneseq
    %v3094 = vshrl.u32 %v3093, 7
    %v3095 = vsub.s32 %v2623, %v3094
    %v3096 = vrot.slane %v886, %v3095
    %v3097 = vsel %vm2628, %v3096, %v3092
    %v3098 = vlaneseq
    %v3099 = vshrl.u32 %v3098, 7
    %v3100 = vsub.s32 %v2618, %v3099
    %v3101 = vrot.slane %v889, %v3100
    %v3102 = vlaneseq
    %v3103 = vshrl.u32 %v3102, 7
    %v3104 = vsub.s32 %v2623, %v3103
    %v3105 = vrot.slane %v892, %v3104
    %v3106 = vsel %vm2628, %v3105, %v3101
    %v3107 = vlaneseq
    %v3108 = vshrl.u32 %v3107, 7
    %v3109 = vsub.s32 %v2618, %v3108
    %v3110 = vrot.slane %v895, %v3109
    %v3111 = vlaneseq
    %v3112 = vshrl.u32 %v3111, 7
    %v3113 = vsub.s32 %v2623, %v3112
    %v3114 = vrot.slane %v898, %v3113
    %v3115 = vsel %vm2628, %v3114, %v3110
    %v3116 = vlaneseq
    %v3117 = vshrl.u32 %v3116, 7
    %v3118 = vsub.s32 %v2618, %v3117
    %v3119 = vrot.slane %v901, %v3118
    %v3120 = vlaneseq
    %v3121 = vshrl.u32 %v3120, 7
    %v3122 = vsub.s32 %v2623, %v3121
    %v3123 = vrot.slane %v904, %v3122
    %v3124 = vsel %vm2628, %v3123, %v3119
    %v3125 = vlaneseq
    %v3126 = vshrl.u32 %v3125, 7
    %v3127 = vsub.s32 %v2618, %v3126
    %v3128 = vrot.slane %v907, %v3127
    %v3129 = vlaneseq
    %v3130 = vshrl.u32 %v3129, 7
    %v3131 = vsub.s32 %v2623, %v3130
    %v3132 = vrot.slane %v910, %v3131
    %v3133 = vsel %vm2628, %v3132, %v3128
    %v3134 = vlaneseq
    %v3135 = vshrl.u32 %v3134, 7
    %v3136 = vsub.s32 %v2618, %v3135
    %v3137 = vrot.slane %v913, %v3136
    %v3138 = vlaneseq
    %v3139 = vshrl.u32 %v3138, 7
    %v3140 = vsub.s32 %v2623, %v3139
    %v3141 = vrot.slane %v916, %v3140
    %v3142 = vsel %vm2628, %v3141, %v3137
    %v3143 = vlaneseq
    %v3144 = vshrl.u32 %v3143, 7
    %v3145 = vsub.s32 %v2618, %v3144
    %v3146 = vrot.slane %v919, %v3145
    %v3147 = vlaneseq
    %v3148 = vshrl.u32 %v3147, 7
    %v3149 = vsub.s32 %v2623, %v3148
    %v3150 = vrot.slane %v922, %v3149
    %v3151 = vsel %vm2628, %v3150, %v3146
    %v3152 = vlaneseq
    %v3153 = vshrl.u32 %v3152, 7
    %v3154 = vsub.s32 %v2618, %v3153
    %v3155 = vrot.slane %v925, %v3154
    %v3156 = vlaneseq
    %v3157 = vshrl.u32 %v3156, 7
    %v3158 = vsub.s32 %v2623, %v3157
    %v3159 = vrot.slane %v928, %v3158
    %v3160 = vsel %vm2628, %v3159, %v3155
    %v3161 = vlaneseq
    %v3162 = vshrl.u32 %v3161, 7
    %v3163 = vsub.s32 %v2618, %v3162
    %v3164 = vrot.slane %v931, %v3163
    %v3165 = vlaneseq
    %v3166 = vshrl.u32 %v3165, 7
    %v3167 = vsub.s32 %v2623, %v3166
    %v3168 = vrot.slane %v934, %v3167
    %v3169 = vsel %vm2628, %v3168, %v3164
    %v3170 = vlaneseq
    %v3171 = vshrl.u32 %v3170, 7
    %v3172 = vsub.s32 %v2618, %v3171
    %v3173 = vrot.slane %v937, %v3172
    %v3174 = vlaneseq
    %v3175 = vshrl.u32 %v3174, 7
    %v3176 = vsub.s32 %v2623, %v3175
    %v3177 = vrot.slane %v940, %v3176
    %v3178 = vsel %vm2628, %v3177, %v3173
    %v3179 = vlaneseq
    %v3180 = vshrl.u32 %v3179, 7
    %v3181 = vsub.s32 %v2618, %v3180
    %v3182 = vrot.slane %v943, %v3181
    %v3183 = vlaneseq
    %v3184 = vshrl.u32 %v3183, 7
    %v3185 = vsub.s32 %v2623, %v3184
    %v3186 = vrot.slane %v946, %v3185
    %v3187 = vsel %vm2628, %v3186, %v3182
    %v3188 = vlaneseq
    %v3189 = vshrl.u32 %v3188, 7
    %v3190 = vsub.s32 %v2618, %v3189
    %v3191 = vrot.slane %v949, %v3190
    %v3192 = vlaneseq
    %v3193 = vshrl.u32 %v3192, 7
    %v3194 = vsub.s32 %v2623, %v3193
    %v3195 = vrot.slane %v952, %v3194
    %v3196 = vsel %vm2628, %v3195, %v3191
    %v3197 = vlaneseq
    %v3198 = vshrl.u32 %v3197, 7
    %v3199 = vsub.s32 %v2618, %v3198
    %v3200 = vrot.slane %v955, %v3199
    %v3201 = vlaneseq
    %v3202 = vshrl.u32 %v3201, 7
    %v3203 = vsub.s32 %v2623, %v3202
    %v3204 = vrot.slane %v958, %v3203
    %v3205 = vsel %vm2628, %v3204, %v3200
    %v3206 = vlaneseq
    %v3207 = vshrl.u32 %v3206, 7
    %v3208 = vsub.s32 %v2618, %v3207
    %v3209 = vrot.slane %v961, %v3208
    %v3210 = vlaneseq
    %v3211 = vshrl.u32 %v3210, 7
    %v3212 = vsub.s32 %v2623, %v3211
    %v3213 = vrot.slane %v964, %v3212
    %v3214 = vsel %vm2628, %v3213, %v3209
    %v3215 = vlaneseq
    %v3216 = vshrl.u32 %v3215, 7
    %v3217 = vsub.s32 %v2618, %v3216
    %v3218 = vrot.slane %v967, %v3217
    %v3219 = vlaneseq
    %v3220 = vshrl.u32 %v3219, 7
    %v3221 = vsub.s32 %v2623, %v3220
    %v3222 = vrot.slane %v970, %v3221
    %v3223 = vsel %vm2628, %v3222, %v3218
    %v3224 = vlaneseq
    %v3225 = vshrl.u32 %v3224, 7
    %v3226 = vsub.s32 %v2618, %v3225
    %v3227 = vrot.slane %v973, %v3226
    %v3228 = vlaneseq
    %v3229 = vshrl.u32 %v3228, 7
    %v3230 = vsub.s32 %v2623, %v3229
    %v3231 = vrot.slane %v976, %v3230
    %v3232 = vsel %vm2628, %v3231, %v3227
    %v3233 = vlaneseq
    %v3234 = vshrl.u32 %v3233, 7
    %v3235 = vsub.s32 %v2618, %v3234
    %v3236 = vrot.slane %v979, %v3235
    %v3237 = vlaneseq
    %v3238 = vshrl.u32 %v3237, 7
    %v3239 = vsub.s32 %v2623, %v3238
    %v3240 = vrot.slane %v982, %v3239
    %v3241 = vsel %vm2628, %v3240, %v3236
    %v3242 = vlaneseq
    %v3243 = vshrl.u32 %v3242, 7
    %v3244 = vsub.s32 %v2618, %v3243
    %v3245 = vrot.slane %v985, %v3244
    %v3246 = vlaneseq
    %v3247 = vshrl.u32 %v3246, 7
    %v3248 = vsub.s32 %v2623, %v3247
    %v3249 = vrot.slane %v988, %v3248
    %v3250 = vsel %vm2628, %v3249, %v3245
    %v3251 = vlaneseq
    %v3252 = vshrl.u32 %v3251, 7
    %v3253 = vsub.s32 %v2618, %v3252
    %v3254 = vrot.slane %v991, %v3253
    %v3255 = vlaneseq
    %v3256 = vshrl.u32 %v3255, 7
    %v3257 = vsub.s32 %v2623, %v3256
    %v3258 = vrot.slane %v994, %v3257
    %v3259 = vsel %vm2628, %v3258, %v3254
    %v3260 = vlaneseq
    %v3261 = vshrl.u32 %v3260, 7
    %v3262 = vsub.s32 %v2618, %v3261
    %v3263 = vrot.slane %v997, %v3262
    %v3264 = vlaneseq
    %v3265 = vshrl.u32 %v3264, 7
    %v3266 = vsub.s32 %v2623, %v3265
    %v3267 = vrot.slane %v1000, %v3266
    %v3268 = vsel %vm2628, %v3267, %v3263
    %v3269 = vlaneseq
    %v3270 = vshrl.u32 %v3269, 7
    %v3271 = vsub.s32 %v2618, %v3270
    %v3272 = vrot.slane %v1003, %v3271
    %v3273 = vlaneseq
    %v3274 = vshrl.u32 %v3273, 7
    %v3275 = vsub.s32 %v2623, %v3274
    %v3276 = vrot.slane %v1006, %v3275
    %v3277 = vsel %vm2628, %v3276, %v3272
    %v3278 = vlaneseq
    %v3279 = vshrl.u32 %v3278, 7
    %v3280 = vsub.s32 %v2618, %v3279
    %v3281 = vrot.slane %v1009, %v3280
    %v3282 = vlaneseq
    %v3283 = vshrl.u32 %v3282, 7
    %v3284 = vsub.s32 %v2623, %v3283
    %v3285 = vrot.slane %v1012, %v3284
    %v3286 = vsel %vm2628, %v3285, %v3281
    %v3287 = vlaneseq
    %v3288 = vshrl.u32 %v3287, 7
    %v3289 = vsub.s32 %v2618, %v3288
    %v3290 = vrot.slane %v1015, %v3289
    %v3291 = vlaneseq
    %v3292 = vshrl.u32 %v3291, 7
    %v3293 = vsub.s32 %v2623, %v3292
    %v3294 = vrot.slane %v1018, %v3293
    %v3295 = vsel %vm2628, %v3294, %v3290
    %v3296 = vlaneseq
    %v3297 = vshrl.u32 %v3296, 7
    %v3298 = vsub.s32 %v2618, %v3297
    %v3299 = vrot.slane %v1021, %v3298
    %v3300 = vlaneseq
    %v3301 = vshrl.u32 %v3300, 7
    %v3302 = vsub.s32 %v2623, %v3301
    %v3303 = vrot.slane %v1024, %v3302
    %v3304 = vsel %vm2628, %v3303, %v3299
    %v3305 = vlaneseq
    %v3306 = vshrl.u32 %v3305, 7
    %v3307 = vsub.s32 %v2618, %v3306
    %v3308 = vrot.slane %v1027, %v3307
    %v3309 = vlaneseq
    %v3310 = vshrl.u32 %v3309, 7
    %v3311 = vsub.s32 %v2623, %v3310
    %v3312 = vrot.slane %v1030, %v3311
    %v3313 = vsel %vm2628, %v3312, %v3308
    %v3314 = vlaneseq
    %v3315 = vshrl.u32 %v3314, 7
    %v3316 = vsub.s32 %v2618, %v3315
    %v3317 = vrot.slane %v1033, %v3316
    %v3318 = vlaneseq
    %v3319 = vshrl.u32 %v3318, 7
    %v3320 = vsub.s32 %v2623, %v3319
    %v3321 = vrot.slane %v1036, %v3320
    %v3322 = vsel %vm2628, %v3321, %v3317
    %v3323 = vlaneseq
    %v3324 = vshrl.u32 %v3323, 7
    %v3325 = vsub.s32 %v2618, %v3324
    %v3326 = vrot.slane %v1039, %v3325
    %v3327 = vlaneseq
    %v3328 = vshrl.u32 %v3327, 7
    %v3329 = vsub.s32 %v2623, %v3328
    %v3330 = vrot.slane %v1042, %v3329
    %v3331 = vsel %vm2628, %v3330, %v3326
    %v3332 = vlaneseq
    %v3333 = vshrl.u32 %v3332, 7
    %v3334 = vsub.s32 %v2618, %v3333
    %v3335 = vrot.slane %v1045, %v3334
    %v3336 = vlaneseq
    %v3337 = vshrl.u32 %v3336, 7
    %v3338 = vsub.s32 %v2623, %v3337
    %v3339 = vrot.slane %v1048, %v3338
    %v3340 = vsel %vm2628, %v3339, %v3335
    %v3341 = vlaneseq
    %v3342 = vshrl.u32 %v3341, 7
    %v3343 = vsub.s32 %v2618, %v3342
    %v3344 = vrot.slane %v1051, %v3343
    %v3345 = vlaneseq
    %v3346 = vshrl.u32 %v3345, 7
    %v3347 = vsub.s32 %v2623, %v3346
    %v3348 = vrot.slane %v1054, %v3347
    %v3349 = vsel %vm2628, %v3348, %v3344
    %v3350 = vlaneseq
    %v3351 = vshrl.u32 %v3350, 7
    %v3352 = vsub.s32 %v2618, %v3351
    %v3353 = vrot.slane %v1057, %v3352
    %v3354 = vlaneseq
    %v3355 = vshrl.u32 %v3354, 7
    %v3356 = vsub.s32 %v2623, %v3355
    %v3357 = vrot.slane %v1060, %v3356
    %v3358 = vsel %vm2628, %v3357, %v3353
    %v3359 = vlaneseq
    %v3360 = vshrl.u32 %v3359, 7
    %v3361 = vsub.s32 %v2618, %v3360
    %v3362 = vrot.slane %v1063, %v3361
    %v3363 = vlaneseq
    %v3364 = vshrl.u32 %v3363, 7
    %v3365 = vsub.s32 %v2623, %v3364
    %v3366 = vrot.slane %v1066, %v3365
    %v3367 = vsel %vm2628, %v3366, %v3362
    %v3368 = vlaneseq
    %v3369 = vshrl.u32 %v3368, 7
    %v3370 = vsub.s32 %v2618, %v3369
    %v3371 = vrot.slane %v1069, %v3370
    %v3372 = vlaneseq
    %v3373 = vshrl.u32 %v3372, 7
    %v3374 = vsub.s32 %v2623, %v3373
    %v3375 = vrot.slane %v1072, %v3374
    %v3376 = vsel %vm2628, %v3375, %v3371
    %v3377 = vlaneseq
    %v3378 = vshrl.u32 %v3377, 7
    %v3379 = vsub.s32 %v2618, %v3378
    %v3380 = vrot.slane %v1075, %v3379
    %v3381 = vlaneseq
    %v3382 = vshrl.u32 %v3381, 7
    %v3383 = vsub.s32 %v2623, %v3382
    %v3384 = vrot.slane %v1078, %v3383
    %v3385 = vsel %vm2628, %v3384, %v3380
    %v3386 = vlaneseq
    %v3387 = vshrl.u32 %v3386, 7
    %v3388 = vsub.s32 %v2618, %v3387
    %v3389 = vrot.slane %v1081, %v3388
    %v3390 = vlaneseq
    %v3391 = vshrl.u32 %v3390, 7
    %v3392 = vsub.s32 %v2623, %v3391
    %v3393 = vrot.slane %v1084, %v3392
    %v3394 = vsel %vm2628, %v3393, %v3389
    %v3395 = vlaneseq
    %v3396 = vshrl.u32 %v3395, 7
    %v3397 = vsub.s32 %v2618, %v3396
    %v3398 = vrot.slane %v1087, %v3397
    %v3399 = vlaneseq
    %v3400 = vshrl.u32 %v3399, 7
    %v3401 = vsub.s32 %v2623, %v3400
    %v3402 = vrot.slane %v1090, %v3401
    %v3403 = vsel %vm2628, %v3402, %v3398
    %v3404 = vlaneseq
    %v3405 = vshrl.u32 %v3404, 7
    %v3406 = vsub.s32 %v2618, %v3405
    %v3407 = vrot.slane %v1093, %v3406
    %v3408 = vlaneseq
    %v3409 = vshrl.u32 %v3408, 7
    %v3410 = vsub.s32 %v2623, %v3409
    %v3411 = vrot.slane %v1096, %v3410
    %v3412 = vsel %vm2628, %v3411, %v3407
    %v3413 = vlaneseq
    %v3414 = vshrl.u32 %v3413, 7
    %v3415 = vsub.s32 %v2618, %v3414
    %v3416 = vrot.slane %v1099, %v3415
    %v3417 = vlaneseq
    %v3418 = vshrl.u32 %v3417, 7
    %v3419 = vsub.s32 %v2623, %v3418
    %v3420 = vrot.slane %v1102, %v3419
    %v3421 = vsel %vm2628, %v3420, %v3416
    %v3422 = vlaneseq
    %v3423 = vshrl.u32 %v3422, 7
    %v3424 = vsub.s32 %v2618, %v3423
    %v3425 = vrot.slane %v1105, %v3424
    %v3426 = vlaneseq
    %v3427 = vshrl.u32 %v3426, 7
    %v3428 = vsub.s32 %v2623, %v3427
    %v3429 = vrot.slane %v1108, %v3428
    %v3430 = vsel %vm2628, %v3429, %v3425
    %v3431 = vlaneseq
    %v3432 = vshrl.u32 %v3431, 7
    %v3433 = vsub.s32 %v2618, %v3432
    %v3434 = vrot.slane %v1111, %v3433
    %v3435 = vlaneseq
    %v3436 = vshrl.u32 %v3435, 7
    %v3437 = vsub.s32 %v2623, %v3436
    %v3438 = vrot.slane %v1114, %v3437
    %v3439 = vsel %vm2628, %v3438, %v3434
    %v3440 = vlaneseq
    %v3441 = vshrl.u32 %v3440, 7
    %v3442 = vsub.s32 %v2618, %v3441
    %v3443 = vrot.slane %v1117, %v3442
    %v3444 = vlaneseq
    %v3445 = vshrl.u32 %v3444, 7
    %v3446 = vsub.s32 %v2623, %v3445
    %v3447 = vrot.slane %v1120, %v3446
    %v3448 = vsel %vm2628, %v3447, %v3443
    %v3449 = vlaneseq
    %v3450 = vshrl.u32 %v3449, 7
    %v3451 = vsub.s32 %v2618, %v3450
    %v3452 = vrot.slane %v1123, %v3451
    %v3453 = vlaneseq
    %v3454 = vshrl.u32 %v3453, 7
    %v3455 = vsub.s32 %v2623, %v3454
    %v3456 = vrot.slane %v1126, %v3455
    %v3457 = vsel %vm2628, %v3456, %v3452
    %v3458 = vlaneseq
    %v3459 = vshrl.u32 %v3458, 7
    %v3460 = vsub.s32 %v2618, %v3459
    %v3461 = vrot.slane %v1129, %v3460
    %v3462 = vlaneseq
    %v3463 = vshrl.u32 %v3462, 7
    %v3464 = vsub.s32 %v2623, %v3463
    %v3465 = vrot.slane %v1132, %v3464
    %v3466 = vsel %vm2628, %v3465, %v3461
    %v3467 = vlaneseq
    %v3468 = vshrl.u32 %v3467, 7
    %v3469 = vsub.s32 %v2618, %v3468
    %v3470 = vrot.slane %v1135, %v3469
    %v3471 = vlaneseq
    %v3472 = vshrl.u32 %v3471, 7
    %v3473 = vsub.s32 %v2623, %v3472
    %v3474 = vrot.slane %v1138, %v3473
    %v3475 = vsel %vm2628, %v3474, %v3470
    %v3476 = vlaneseq
    %v3477 = vshrl.u32 %v3476, 7
    %v3478 = vsub.s32 %v2618, %v3477
    %v3479 = vrot.slane %v1141, %v3478
    %v3480 = vlaneseq
    %v3481 = vshrl.u32 %v3480, 7
    %v3482 = vsub.s32 %v2623, %v3481
    %v3483 = vrot.slane %v1144, %v3482
    %v3484 = vsel %vm2628, %v3483, %v3479
    %v3485 = vlaneseq
    %v3486 = vshrl.u32 %v3485, 7
    %v3487 = vsub.s32 %v2618, %v3486
    %v3488 = vrot.slane %v1147, %v3487
    %v3489 = vlaneseq
    %v3490 = vshrl.u32 %v3489, 7
    %v3491 = vsub.s32 %v2623, %v3490
    %v3492 = vrot.slane %v1150, %v3491
    %v3493 = vsel %vm2628, %v3492, %v3488
    %v3494 = vlaneseq
    %v3495 = vshrl.u32 %v3494, 7
    %v3496 = vsub.s32 %v2618, %v3495
    %v3497 = vrot.slane %v1153, %v3496
    %v3498 = vlaneseq
    %v3499 = vshrl.u32 %v3498, 7
    %v3500 = vsub.s32 %v2623, %v3499
    %v3501 = vrot.slane %v1156, %v3500
    %v3502 = vsel %vm2628, %v3501, %v3497
    %v3503 = vlaneseq
    %v3504 = vshrl.u32 %v3503, 7
    %v3505 = vsub.s32 %v2618, %v3504
    %v3506 = vrot.slane %v1159, %v3505
    %v3507 = vlaneseq
    %v3508 = vshrl.u32 %v3507, 7
    %v3509 = vsub.s32 %v2623, %v3508
    %v3510 = vrot.slane %v1162, %v3509
    %v3511 = vsel %vm2628, %v3510, %v3506
    %v3512 = vlaneseq
    %v3513 = vshrl.u32 %v3512, 7
    %v3514 = vsub.s32 %v2618, %v3513
    %v3515 = vrot.slane %v1165, %v3514
    %v3516 = vlaneseq
    %v3517 = vshrl.u32 %v3516, 7
    %v3518 = vsub.s32 %v2623, %v3517
    %v3519 = vrot.slane %v1168, %v3518
    %v3520 = vsel %vm2628, %v3519, %v3515
    %v3521 = vlaneseq
    %v3522 = vshrl.u32 %v3521, 7
    %v3523 = vsub.s32 %v2618, %v3522
    %v3524 = vrot.slane %v1171, %v3523
    %v3525 = vlaneseq
    %v3526 = vshrl.u32 %v3525, 7
    %v3527 = vsub.s32 %v2623, %v3526
    %v3528 = vrot.slane %v1174, %v3527
    %v3529 = vsel %vm2628, %v3528, %v3524
    %v3530 = vlaneseq
    %v3531 = vshrl.u32 %v3530, 7
    %v3532 = vsub.s32 %v2618, %v3531
    %v3533 = vrot.slane %v1177, %v3532
    %v3534 = vlaneseq
    %v3535 = vshrl.u32 %v3534, 7
    %v3536 = vsub.s32 %v2623, %v3535
    %v3537 = vrot.slane %v1180, %v3536
    %v3538 = vsel %vm2628, %v3537, %v3533
    %v3539 = vlaneseq
    %v3540 = vshrl.u32 %v3539, 7
    %v3541 = vsub.s32 %v2618, %v3540
    %v3542 = vrot.slane %v1183, %v3541
    %v3543 = vlaneseq
    %v3544 = vshrl.u32 %v3543, 7
    %v3545 = vsub.s32 %v2623, %v3544
    %v3546 = vrot.slane %v1186, %v3545
    %v3547 = vsel %vm2628, %v3546, %v3542
    %v3548 = vlaneseq
    %v3549 = vshrl.u32 %v3548, 7
    %v3550 = vsub.s32 %v2618, %v3549
    %v3551 = vrot.slane %v1189, %v3550
    %v3552 = vlaneseq
    %v3553 = vshrl.u32 %v3552, 7
    %v3554 = vsub.s32 %v2623, %v3553
    %v3555 = vrot.slane %v1192, %v3554
    %v3556 = vsel %vm2628, %v3555, %v3551
    %v3557 = vlaneseq
    %v3558 = vshrl.u32 %v3557, 7
    %v3559 = vsub.s32 %v2618, %v3558
    %v3560 = vrot.slane %v1195, %v3559
    %v3561 = vlaneseq
    %v3562 = vshrl.u32 %v3561, 7
    %v3563 = vsub.s32 %v2623, %v3562
    %v3564 = vrot.slane %v1198, %v3563
    %v3565 = vsel %vm2628, %v3564, %v3560
    %v3566 = vlaneseq
    %v3567 = vshrl.u32 %v3566, 7
    %v3568 = vsub.s32 %v2618, %v3567
    %v3569 = vrot.slane %v1201, %v3568
    %v3570 = vlaneseq
    %v3571 = vshrl.u32 %v3570, 7
    %v3572 = vsub.s32 %v2623, %v3571
    %v3573 = vrot.slane %v1204, %v3572
    %v3574 = vsel %vm2628, %v3573, %v3569
    %v3575 = vlaneseq
    %v3576 = vshrl.u32 %v3575, 7
    %v3577 = vsub.s32 %v2618, %v3576
    %v3578 = vrot.slane %v1207, %v3577
    %v3579 = vlaneseq
    %v3580 = vshrl.u32 %v3579, 7
    %v3581 = vsub.s32 %v2623, %v3580
    %v3582 = vrot.slane %v1210, %v3581
    %v3583 = vsel %vm2628, %v3582, %v3578
    %v3584 = vlaneseq
    %v3585 = vshrl.u32 %v3584, 7
    %v3586 = vsub.s32 %v2618, %v3585
    %v3587 = vrot.slane %v1213, %v3586
    %v3588 = vlaneseq
    %v3589 = vshrl.u32 %v3588, 7
    %v3590 = vsub.s32 %v2623, %v3589
    %v3591 = vrot.slane %v1216, %v3590
    %v3592 = vsel %vm2628, %v3591, %v3587
    %v3593 = vlaneseq
    %v3594 = vshrl.u32 %v3593, 7
    %v3595 = vsub.s32 %v2618, %v3594
    %v3596 = vrot.slane %v1219, %v3595
    %v3597 = vlaneseq
    %v3598 = vshrl.u32 %v3597, 7
    %v3599 = vsub.s32 %v2623, %v3598
    %v3600 = vrot.slane %v1222, %v3599
    %v3601 = vsel %vm2628, %v3600, %v3596
    %v3602 = vlaneseq
    %v3603 = vshrl.u32 %v3602, 7
    %v3604 = vsub.s32 %v2618, %v3603
    %v3605 = vrot.slane %v1225, %v3604
    %v3606 = vlaneseq
    %v3607 = vshrl.u32 %v3606, 7
    %v3608 = vsub.s32 %v2623, %v3607
    %v3609 = vrot.slane %v1228, %v3608
    %v3610 = vsel %vm2628, %v3609, %v3605
    %v3611 = vlaneseq
    %v3612 = vshrl.u32 %v3611, 7
    %v3613 = vsub.s32 %v2618, %v3612
    %v3614 = vrot.slane %v1231, %v3613
    %v3615 = vlaneseq
    %v3616 = vshrl.u32 %v3615, 7
    %v3617 = vsub.s32 %v2623, %v3616
    %v3618 = vrot.slane %v1234, %v3617
    %v3619 = vsel %vm2628, %v3618, %v3614
    %v3620 = vlaneseq
    %v3621 = vshrl.u32 %v3620, 7
    %v3622 = vsub.s32 %v2618, %v3621
    %v3623 = vrot.slane %v1237, %v3622
    %v3624 = vlaneseq
    %v3625 = vshrl.u32 %v3624, 7
    %v3626 = vsub.s32 %v2623, %v3625
    %v3627 = vrot.slane %v1240, %v3626
    %v3628 = vsel %vm2628, %v3627, %v3623
    %v3629 = vlaneseq
    %v3630 = vshrl.u32 %v3629, 7
    %v3631 = vsub.s32 %v2618, %v3630
    %v3632 = vrot.slane %v1243, %v3631
    %v3633 = vlaneseq
    %v3634 = vshrl.u32 %v3633, 7
    %v3635 = vsub.s32 %v2623, %v3634
    %v3636 = vrot.slane %v1246, %v3635
    %v3637 = vsel %vm2628, %v3636, %v3632
    %v3638 = vlaneseq
    %v3639 = vshrl.u32 %v3638, 7
    %v3640 = vsub.s32 %v2618, %v3639
    %v3641 = vrot.slane %v1249, %v3640
    %v3642 = vlaneseq
    %v3643 = vshrl.u32 %v3642, 7
    %v3644 = vsub.s32 %v2623, %v3643
    %v3645 = vrot.slane %v1252, %v3644
    %v3646 = vsel %vm2628, %v3645, %v3641
    %v3647 = vlaneseq
    %v3648 = vshrl.u32 %v3647, 7
    %v3649 = vsub.s32 %v2618, %v3648
    %v3650 = vrot.slane %v1255, %v3649
    %v3651 = vlaneseq
    %v3652 = vshrl.u32 %v3651, 7
    %v3653 = vsub.s32 %v2623, %v3652
    %v3654 = vrot.slane %v1258, %v3653
    %v3655 = vsel %vm2628, %v3654, %v3650
    %v3656 = vlaneseq
    %v3657 = vshrl.u32 %v3656, 7
    %v3658 = vsub.s32 %v2618, %v3657
    %v3659 = vrot.slane %v1261, %v3658
    %v3660 = vlaneseq
    %v3661 = vshrl.u32 %v3660, 7
    %v3662 = vsub.s32 %v2623, %v3661
    %v3663 = vrot.slane %v1264, %v3662
    %v3664 = vsel %vm2628, %v3663, %v3659
    %v3665 = vlaneseq
    %v3666 = vshrl.u32 %v3665, 7
    %v3667 = vsub.s32 %v2618, %v3666
    %v3668 = vrot.slane %v1267, %v3667
    %v3669 = vlaneseq
    %v3670 = vshrl.u32 %v3669, 7
    %v3671 = vsub.s32 %v2623, %v3670
    %v3672 = vrot.slane %v1270, %v3671
    %v3673 = vsel %vm2628, %v3672, %v3668
    %v3674 = vlaneseq
    %v3675 = vshrl.u32 %v3674, 7
    %v3676 = vsub.s32 %v2618, %v3675
    %v3677 = vrot.slane %v1273, %v3676
    %v3678 = vlaneseq
    %v3679 = vshrl.u32 %v3678, 7
    %v3680 = vsub.s32 %v2623, %v3679
    %v3681 = vrot.slane %v1276, %v3680
    %v3682 = vsel %vm2628, %v3681, %v3677
    %v3683 = vlaneseq
    %v3684 = vshrl.u32 %v3683, 7
    %v3685 = vsub.s32 %v2618, %v3684
    %v3686 = vrot.slane %v1279, %v3685
    %v3687 = vlaneseq
    %v3688 = vshrl.u32 %v3687, 7
    %v3689 = vsub.s32 %v2623, %v3688
    %v3690 = vrot.slane %v1282, %v3689
    %v3691 = vsel %vm2628, %v3690, %v3686
    %v3692 = vlaneseq
    %v3693 = vshrl.u32 %v3692, 7
    %v3694 = vsub.s32 %v2618, %v3693
    %v3695 = vrot.slane %v1285, %v3694
    %v3696 = vlaneseq
    %v3697 = vshrl.u32 %v3696, 7
    %v3698 = vsub.s32 %v2623, %v3697
    %v3699 = vrot.slane %v1288, %v3698
    %v3700 = vsel %vm2628, %v3699, %v3695
    %v3701 = vlaneseq
    %v3702 = vshrl.u32 %v3701, 7
    %v3703 = vsub.s32 %v2618, %v3702
    %v3704 = vrot.slane %v1291, %v3703
    %v3705 = vlaneseq
    %v3706 = vshrl.u32 %v3705, 7
    %v3707 = vsub.s32 %v2623, %v3706
    %v3708 = vrot.slane %v1294, %v3707
    %v3709 = vsel %vm2628, %v3708, %v3704
    %v3710 = vlaneseq
    %v3711 = vshrl.u32 %v3710, 7
    %v3712 = vsub.s32 %v2618, %v3711
    %v3713 = vrot.slane %v1297, %v3712
    %v3714 = vlaneseq
    %v3715 = vshrl.u32 %v3714, 7
    %v3716 = vsub.s32 %v2623, %v3715
    %v3717 = vrot.slane %v1300, %v3716
    %v3718 = vsel %vm2628, %v3717, %v3713
    %v3719 = vlaneseq
    %v3720 = vshrl.u32 %v3719, 7
    %v3721 = vsub.s32 %v2618, %v3720
    %v3722 = vrot.slane %v1303, %v3721
    %v3723 = vlaneseq
    %v3724 = vshrl.u32 %v3723, 7
    %v3725 = vsub.s32 %v2623, %v3724
    %v3726 = vrot.slane %v1306, %v3725
    %v3727 = vsel %vm2628, %v3726, %v3722
    %v3728 = vlaneseq
    %v3729 = vshrl.u32 %v3728, 7
    %v3730 = vsub.s32 %v2618, %v3729
    %v3731 = vrot.slane %v1309, %v3730
    %v3732 = vlaneseq
    %v3733 = vshrl.u32 %v3732, 7
    %v3734 = vsub.s32 %v2623, %v3733
    %v3735 = vrot.slane %v1312, %v3734
    %v3736 = vsel %vm2628, %v3735, %v3731
    %v3737 = vlaneseq
    %v3738 = vshrl.u32 %v3737, 7
    %v3739 = vsub.s32 %v2618, %v3738
    %v3740 = vrot.slane %v1315, %v3739
    %v3741 = vlaneseq
    %v3742 = vshrl.u32 %v3741, 7
    %v3743 = vsub.s32 %v2623, %v3742
    %v3744 = vrot.slane %v1318, %v3743
    %v3745 = vsel %vm2628, %v3744, %v3740
    %v3746 = vlaneseq
    %v3747 = vshrl.u32 %v3746, 7
    %v3748 = vsub.s32 %v2618, %v3747
    %v3749 = vrot.slane %v1321, %v3748
    %v3750 = vlaneseq
    %v3751 = vshrl.u32 %v3750, 7
    %v3752 = vsub.s32 %v2623, %v3751
    %v3753 = vrot.slane %v1324, %v3752
    %v3754 = vsel %vm2628, %v3753, %v3749
    %v3755 = vlaneseq
    %v3756 = vshrl.u32 %v3755, 7
    %v3757 = vsub.s32 %v2618, %v3756
    %v3758 = vrot.slane %v1327, %v3757
    %v3759 = vlaneseq
    %v3760 = vshrl.u32 %v3759, 7
    %v3761 = vsub.s32 %v2623, %v3760
    %v3762 = vrot.slane %v1330, %v3761
    %v3763 = vsel %vm2628, %v3762, %v3758
    %v3764 = vlaneseq
    %v3765 = vshrl.u32 %v3764, 7
    %v3766 = vsub.s32 %v2618, %v3765
    %v3767 = vrot.slane %v1333, %v3766
    %v3768 = vlaneseq
    %v3769 = vshrl.u32 %v3768, 7
    %v3770 = vsub.s32 %v2623, %v3769
    %v3771 = vrot.slane %v1336, %v3770
    %v3772 = vsel %vm2628, %v3771, %v3767
    %v3773 = vlaneseq
    %v3774 = vshrl.u32 %v3773, 7
    %v3775 = vsub.s32 %v2618, %v3774
    %v3776 = vrot.slane %v1339, %v3775
    %v3777 = vlaneseq
    %v3778 = vshrl.u32 %v3777, 7
    %v3779 = vsub.s32 %v2623, %v3778
    %v3780 = vrot.slane %v1342, %v3779
    %v3781 = vsel %vm2628, %v3780, %v3776
    %v3782 = vlaneseq
    %v3783 = vshrl.u32 %v3782, 7
    %v3784 = vsub.s32 %v2618, %v3783
    %v3785 = vrot.slane %v1345, %v3784
    %v3786 = vlaneseq
    %v3787 = vshrl.u32 %v3786, 7
    %v3788 = vsub.s32 %v2623, %v3787
    %v3789 = vrot.slane %v1348, %v3788
    %v3790 = vsel %vm2628, %v3789, %v3785
    %v3791 = vlaneseq
    %v3792 = vshrl.u32 %v3791, 7
    %v3793 = vsub.s32 %v2618, %v3792
    %v3794 = vrot.slane %v1351, %v3793
    %v3795 = vlaneseq
    %v3796 = vshrl.u32 %v3795, 7
    %v3797 = vsub.s32 %v2623, %v3796
    %v3798 = vrot.slane %v1354, %v3797
    %v3799 = vsel %vm2628, %v3798, %v3794
    %v3800 = vlaneseq
    %v3801 = vshrl.u32 %v3800, 7
    %v3802 = vsub.s32 %v2618, %v3801
    %v3803 = vrot.slane %v1357, %v3802
    %v3804 = vlaneseq
    %v3805 = vshrl.u32 %v3804, 7
    %v3806 = vsub.s32 %v2623, %v3805
    %v3807 = vrot.slane %v1360, %v3806
    %v3808 = vsel %vm2628, %v3807, %v3803
    %v3809 = vlaneseq
    %v3810 = vshrl.u32 %v3809, 7
    %v3811 = vsub.s32 %v2618, %v3810
    %v3812 = vrot.slane %v1363, %v3811
    %v3813 = vlaneseq
    %v3814 = vshrl.u32 %v3813, 7
    %v3815 = vsub.s32 %v2623, %v3814
    %v3816 = vrot.slane %v1366, %v3815
    %v3817 = vsel %vm2628, %v3816, %v3812
    %v3818 = vlaneseq
    %v3819 = vshrl.u32 %v3818, 7
    %v3820 = vsub.s32 %v2618, %v3819
    %v3821 = vrot.slane %v1369, %v3820
    %v3822 = vlaneseq
    %v3823 = vshrl.u32 %v3822, 7
    %v3824 = vsub.s32 %v2623, %v3823
    %v3825 = vrot.slane %v1372, %v3824
    %v3826 = vsel %vm2628, %v3825, %v3821
    %v3827 = vlaneseq
    %v3828 = vshrl.u32 %v3827, 7
    %v3829 = vsub.s32 %v2618, %v3828
    %v3830 = vrot.slane %v1375, %v3829
    %v3831 = vlaneseq
    %v3832 = vshrl.u32 %v3831, 7
    %v3833 = vsub.s32 %v2623, %v3832
    %v3834 = vrot.slane %v1378, %v3833
    %v3835 = vsel %vm2628, %v3834, %v3830
    %v3836 = vlaneseq
    %v3837 = vshrl.u32 %v3836, 7
    %v3838 = vsub.s32 %v2618, %v3837
    %v3839 = vrot.slane %v1381, %v3838
    %v3840 = vlaneseq
    %v3841 = vshrl.u32 %v3840, 7
    %v3842 = vsub.s32 %v2623, %v3841
    %v3843 = vrot.slane %v1384, %v3842
    %v3844 = vsel %vm2628, %v3843, %v3839
    %v3845 = vlaneseq
    %v3846 = vshrl.u32 %v3845, 7
    %v3847 = vsub.s32 %v2618, %v3846
    %v3848 = vrot.slane %v1387, %v3847
    %v3849 = vlaneseq
    %v3850 = vshrl.u32 %v3849, 7
    %v3851 = vsub.s32 %v2623, %v3850
    %v3852 = vrot.slane %v1390, %v3851
    %v3853 = vsel %vm2628, %v3852, %v3848
    %v3854 = vlaneseq
    %v3855 = vshrl.u32 %v3854, 7
    %v3856 = vsub.s32 %v2618, %v3855
    %v3857 = vrot.slane %v1393, %v3856
    %v3858 = vlaneseq
    %v3859 = vshrl.u32 %v3858, 7
    %v3860 = vsub.s32 %v2623, %v3859
    %v3861 = vrot.slane %v1396, %v3860
    %v3862 = vsel %vm2628, %v3861, %v3857
    %v3863 = vlaneseq
    %v3864 = vshrl.u32 %v3863, 7
    %v3865 = vsub.s32 %v2618, %v3864
    %v3866 = vrot.slane %v1399, %v3865
    %v3867 = vlaneseq
    %v3868 = vshrl.u32 %v3867, 7
    %v3869 = vsub.s32 %v2623, %v3868
    %v3870 = vrot.slane %v1402, %v3869
    %v3871 = vsel %vm2628, %v3870, %v3866
    %v3872 = vlaneseq
    %v3873 = vshrl.u32 %v3872, 7
    %v3874 = vsub.s32 %v2618, %v3873
    %v3875 = vrot.slane %v1405, %v3874
    %v3876 = vlaneseq
    %v3877 = vshrl.u32 %v3876, 7
    %v3878 = vsub.s32 %v2623, %v3877
    %v3879 = vrot.slane %v1408, %v3878
    %v3880 = vsel %vm2628, %v3879, %v3875
    %v3881 = vlaneseq
    %v3882 = vshrl.u32 %v3881, 7
    %v3883 = vsub.s32 %v2618, %v3882
    %v3884 = vrot.slane %v1411, %v3883
    %v3885 = vlaneseq
    %v3886 = vshrl.u32 %v3885, 7
    %v3887 = vsub.s32 %v2623, %v3886
    %v3888 = vrot.slane %v1414, %v3887
    %v3889 = vsel %vm2628, %v3888, %v3884
    %v3890 = vlaneseq
    %v3891 = vshrl.u32 %v3890, 7
    %v3892 = vsub.s32 %v2618, %v3891
    %v3893 = vrot.slane %v1417, %v3892
    %v3894 = vlaneseq
    %v3895 = vshrl.u32 %v3894, 7
    %v3896 = vsub.s32 %v2623, %v3895
    %v3897 = vrot.slane %v1420, %v3896
    %v3898 = vsel %vm2628, %v3897, %v3893
    %v3899 = vlaneseq
    %v3900 = vshrl.u32 %v3899, 7
    %v3901 = vsub.s32 %v2618, %v3900
    %v3902 = vrot.slane %v1423, %v3901
    %v3903 = vlaneseq
    %v3904 = vshrl.u32 %v3903, 7
    %v3905 = vsub.s32 %v2623, %v3904
    %v3906 = vrot.slane %v1426, %v3905
    %v3907 = vsel %vm2628, %v3906, %v3902
    %v3908 = vlaneseq
    %v3909 = vshrl.u32 %v3908, 7
    %v3910 = vsub.s32 %v2618, %v3909
    %v3911 = vrot.slane %v1429, %v3910
    %v3912 = vlaneseq
    %v3913 = vshrl.u32 %v3912, 7
    %v3914 = vsub.s32 %v2623, %v3913
    %v3915 = vrot.slane %v1432, %v3914
    %v3916 = vsel %vm2628, %v3915, %v3911
    %v3917 = vlaneseq
    %v3918 = vshrl.u32 %v3917, 7
    %v3919 = vsub.s32 %v2618, %v3918
    %v3920 = vrot.slane %v1435, %v3919
    %v3921 = vlaneseq
    %v3922 = vshrl.u32 %v3921, 7
    %v3923 = vsub.s32 %v2623, %v3922
    %v3924 = vrot.slane %v1438, %v3923
    %v3925 = vsel %vm2628, %v3924, %v3920
    %v3926 = vlaneseq
    %v3927 = vshrl.u32 %v3926, 7
    %v3928 = vsub.s32 %v2618, %v3927
    %v3929 = vrot.slane %v1441, %v3928
    %v3930 = vlaneseq
    %v3931 = vshrl.u32 %v3930, 7
    %v3932 = vsub.s32 %v2623, %v3931
    %v3933 = vrot.slane %v1444, %v3932
    %v3934 = vsel %vm2628, %v3933, %v3929
    %v3935 = vlaneseq
    %v3936 = vshrl.u32 %v3935, 7
    %v3937 = vsub.s32 %v2618, %v3936
    %v3938 = vrot.slane %v1447, %v3937
    %v3939 = vlaneseq
    %v3940 = vshrl.u32 %v3939, 7
    %v3941 = vsub.s32 %v2623, %v3940
    %v3942 = vrot.slane %v1450, %v3941
    %v3943 = vsel %vm2628, %v3942, %v3938
    %v3944 = vlaneseq
    %v3945 = vshrl.u32 %v3944, 7
    %v3946 = vsub.s32 %v2618, %v3945
    %v3947 = vrot.slane %v1453, %v3946
    %v3948 = vlaneseq
    %v3949 = vshrl.u32 %v3948, 7
    %v3950 = vsub.s32 %v2623, %v3949
    %v3951 = vrot.slane %v1456, %v3950
    %v3952 = vsel %vm2628, %v3951, %v3947
    %v3953 = vlaneseq
    %v3954 = vshrl.u32 %v3953, 7
    %v3955 = vsub.s32 %v2618, %v3954
    %v3956 = vrot.slane %v1459, %v3955
    %v3957 = vlaneseq
    %v3958 = vshrl.u32 %v3957, 7
    %v3959 = vsub.s32 %v2623, %v3958
    %v3960 = vrot.slane %v1462, %v3959
    %v3961 = vsel %vm2628, %v3960, %v3956
    %v3962 = vlaneseq
    %v3963 = vshrl.u32 %v3962, 7
    %v3964 = vsub.s32 %v2618, %v3963
    %v3965 = vrot.slane %v1465, %v3964
    %v3966 = vlaneseq
    %v3967 = vshrl.u32 %v3966, 7
    %v3968 = vsub.s32 %v2623, %v3967
    %v3969 = vrot.slane %v1468, %v3968
    %v3970 = vsel %vm2628, %v3969, %v3965
    %v3971 = vlaneseq
    %v3972 = vshrl.u32 %v3971, 7
    %v3973 = vsub.s32 %v2618, %v3972
    %v3974 = vrot.slane %v1471, %v3973
    %v3975 = vlaneseq
    %v3976 = vshrl.u32 %v3975, 7
    %v3977 = vsub.s32 %v2623, %v3976
    %v3978 = vrot.slane %v1474, %v3977
    %v3979 = vsel %vm2628, %v3978, %v3974
    %v3980 = vlaneseq
    %v3981 = vshrl.u32 %v3980, 7
    %v3982 = vsub.s32 %v2618, %v3981
    %v3983 = vrot.slane %v1477, %v3982
    %v3984 = vlaneseq
    %v3985 = vshrl.u32 %v3984, 7
    %v3986 = vsub.s32 %v2623, %v3985
    %v3987 = vrot.slane %v1480, %v3986
    %v3988 = vsel %vm2628, %v3987, %v3983
    %v3989 = vlaneseq
    %v3990 = vshrl.u32 %v3989, 7
    %v3991 = vsub.s32 %v2618, %v3990
    %v3992 = vrot.slane %v1483, %v3991
    %v3993 = vlaneseq
    %v3994 = vshrl.u32 %v3993, 7
    %v3995 = vsub.s32 %v2623, %v3994
    %v3996 = vrot.slane %v1486, %v3995
    %v3997 = vsel %vm2628, %v3996, %v3992
    %v3998 = vlaneseq
    %v3999 = vshrl.u32 %v3998, 7
    %v4000 = vsub.s32 %v2618, %v3999
    %v4001 = vrot.slane %v1489, %v4000
    %v4002 = vlaneseq
    %v4003 = vshrl.u32 %v4002, 7
    %v4004 = vsub.s32 %v2623, %v4003
    %v4005 = vrot.slane %v1492, %v4004
    %v4006 = vsel %vm2628, %v4005, %v4001
    %v4007 = vlaneseq
    %v4008 = vshrl.u32 %v4007, 7
    %v4009 = vsub.s32 %v2618, %v4008
    %v4010 = vrot.slane %v1495, %v4009
    %v4011 = vlaneseq
    %v4012 = vshrl.u32 %v4011, 7
    %v4013 = vsub.s32 %v2623, %v4012
    %v4014 = vrot.slane %v1498, %v4013
    %v4015 = vsel %vm2628, %v4014, %v4010
    %v4016 = vlaneseq
    %v4017 = vshrl.u32 %v4016, 7
    %v4018 = vsub.s32 %v2618, %v4017
    %v4019 = vrot.slane %v1501, %v4018
    %v4020 = vlaneseq
    %v4021 = vshrl.u32 %v4020, 7
    %v4022 = vsub.s32 %v2623, %v4021
    %v4023 = vrot.slane %v1504, %v4022
    %v4024 = vsel %vm2628, %v4023, %v4019
    %v4025 = vlaneseq
    %v4026 = vshrl.u32 %v4025, 7
    %v4027 = vsub.s32 %v2618, %v4026
    %v4028 = vrot.slane %v1507, %v4027
    %v4029 = vlaneseq
    %v4030 = vshrl.u32 %v4029, 7
    %v4031 = vsub.s32 %v2623, %v4030
    %v4032 = vrot.slane %v1510, %v4031
    %v4033 = vsel %vm2628, %v4032, %v4028
    %v4034 = vlaneseq
    %v4035 = vshrl.u32 %v4034, 7
    %v4036 = vsub.s32 %v2618, %v4035
    %v4037 = vrot.slane %v1513, %v4036
    %v4038 = vlaneseq
    %v4039 = vshrl.u32 %v4038, 7
    %v4040 = vsub.s32 %v2623, %v4039
    %v4041 = vrot.slane %v1516, %v4040
    %v4042 = vsel %vm2628, %v4041, %v4037
    %v4043 = vlaneseq
    %v4044 = vshrl.u32 %v4043, 7
    %v4045 = vsub.s32 %v2618, %v4044
    %v4046 = vrot.slane %v1519, %v4045
    %v4047 = vlaneseq
    %v4048 = vshrl.u32 %v4047, 7
    %v4049 = vsub.s32 %v2623, %v4048
    %v4050 = vrot.slane %v1522, %v4049
    %v4051 = vsel %vm2628, %v4050, %v4046
    %v4052 = vlaneseq
    %v4053 = vshrl.u32 %v4052, 7
    %v4054 = vsub.s32 %v2618, %v4053
    %v4055 = vrot.slane %v1525, %v4054
    %v4056 = vlaneseq
    %v4057 = vshrl.u32 %v4056, 7
    %v4058 = vsub.s32 %v2623, %v4057
    %v4059 = vrot.slane %v1528, %v4058
    %v4060 = vsel %vm2628, %v4059, %v4055
    %v4061 = vlaneseq
    %v4062 = vshrl.u32 %v4061, 7
    %v4063 = vsub.s32 %v2618, %v4062
    %v4064 = vrot.slane %v1531, %v4063
    %v4065 = vlaneseq
    %v4066 = vshrl.u32 %v4065, 7
    %v4067 = vsub.s32 %v2623, %v4066
    %v4068 = vrot.slane %v1534, %v4067
    %v4069 = vsel %vm2628, %v4068, %v4064
    %v4070 = vlaneseq
    %v4071 = vshrl.u32 %v4070, 7
    %v4072 = vsub.s32 %v2618, %v4071
    %v4073 = vrot.slane %v1537, %v4072
    %v4074 = vlaneseq
    %v4075 = vshrl.u32 %v4074, 7
    %v4076 = vsub.s32 %v2623, %v4075
    %v4077 = vrot.slane %v1540, %v4076
    %v4078 = vsel %vm2628, %v4077, %v4073
    %v4079 = vlaneseq
    %v4080 = vshrl.u32 %v4079, 7
    %v4081 = vsub.s32 %v2618, %v4080
    %v4082 = vrot.slane %v1543, %v4081
    %v4083 = vlaneseq
    %v4084 = vshrl.u32 %v4083, 7
    %v4085 = vsub.s32 %v2623, %v4084
    %v4086 = vrot.slane %v1546, %v4085
    %v4087 = vsel %vm2628, %v4086, %v4082
    %v4088 = vlaneseq
    %v4089 = vshrl.u32 %v4088, 7
    %v4090 = vsub.s32 %v2618, %v4089
    %v4091 = vrot.slane %v1549, %v4090
    %v4092 = vlaneseq
    %v4093 = vshrl.u32 %v4092, 7
    %v4094 = vsub.s32 %v2623, %v4093
    %v4095 = vrot.slane %v1552, %v4094
    %v4096 = vsel %vm2628, %v4095, %v4091
    %v4097 = vlaneseq
    %v4098 = vshrl.u32 %v4097, 7
    %v4099 = vsub.s32 %v2618, %v4098
    %v4100 = vrot.slane %v1555, %v4099
    %v4101 = vlaneseq
    %v4102 = vshrl.u32 %v4101, 7
    %v4103 = vsub.s32 %v2623, %v4102
    %v4104 = vrot.slane %v1558, %v4103
    %v4105 = vsel %vm2628, %v4104, %v4100
    %v4106 = vlaneseq
    %v4107 = vshrl.u32 %v4106, 7
    %v4108 = vsub.s32 %v2618, %v4107
    %v4109 = vrot.slane %v1561, %v4108
    %v4110 = vlaneseq
    %v4111 = vshrl.u32 %v4110, 7
    %v4112 = vsub.s32 %v2623, %v4111
    %v4113 = vrot.slane %v1564, %v4112
    %v4114 = vsel %vm2628, %v4113, %v4109
    %v4115 = vlaneseq
    %v4116 = vshrl.u32 %v4115, 7
    %v4117 = vsub.s32 %v2618, %v4116
    %v4118 = vrot.slane %v1567, %v4117
    %v4119 = vlaneseq
    %v4120 = vshrl.u32 %v4119, 7
    %v4121 = vsub.s32 %v2623, %v4120
    %v4122 = vrot.slane %v1570, %v4121
    %v4123 = vsel %vm2628, %v4122, %v4118
    %v4124 = vlaneseq
    %v4125 = vshrl.u32 %v4124, 7
    %v4126 = vsub.s32 %v2618, %v4125
    %v4127 = vrot.slane %v1573, %v4126
    %v4128 = vlaneseq
    %v4129 = vshrl.u32 %v4128, 7
    %v4130 = vsub.s32 %v2623, %v4129
    %v4131 = vrot.slane %v1576, %v4130
    %v4132 = vsel %vm2628, %v4131, %v4127
    %v4133 = vlaneseq
    %v4134 = vshrl.u32 %v4133, 7
    %v4135 = vsub.s32 %v2618, %v4134
    %v4136 = vrot.slane %v1579, %v4135
    %v4137 = vlaneseq
    %v4138 = vshrl.u32 %v4137, 7
    %v4139 = vsub.s32 %v2623, %v4138
    %v4140 = vrot.slane %v1582, %v4139
    %v4141 = vsel %vm2628, %v4140, %v4136
    %v4142 = vlaneseq
    %v4143 = vshrl.u32 %v4142, 7
    %v4144 = vsub.s32 %v2618, %v4143
    %v4145 = vrot.slane %v1585, %v4144
    %v4146 = vlaneseq
    %v4147 = vshrl.u32 %v4146, 7
    %v4148 = vsub.s32 %v2623, %v4147
    %v4149 = vrot.slane %v1588, %v4148
    %v4150 = vsel %vm2628, %v4149, %v4145
    %v4151 = vlaneseq
    %v4152 = vshrl.u32 %v4151, 7
    %v4153 = vsub.s32 %v2618, %v4152
    %v4154 = vrot.slane %v1591, %v4153
    %v4155 = vlaneseq
    %v4156 = vshrl.u32 %v4155, 7
    %v4157 = vsub.s32 %v2623, %v4156
    %v4158 = vrot.slane %v1594, %v4157
    %v4159 = vsel %vm2628, %v4158, %v4154
    %v4160 = vlaneseq
    %v4161 = vshrl.u32 %v4160, 7
    %v4162 = vsub.s32 %v2618, %v4161
    %v4163 = vrot.slane %v1597, %v4162
    %v4164 = vlaneseq
    %v4165 = vshrl.u32 %v4164, 7
    %v4166 = vsub.s32 %v2623, %v4165
    %v4167 = vrot.slane %v1600, %v4166
    %v4168 = vsel %vm2628, %v4167, %v4163
    %v4169 = vlaneseq
    %v4170 = vshrl.u32 %v4169, 7
    %v4171 = vsub.s32 %v2618, %v4170
    %v4172 = vrot.slane %v1603, %v4171
    %v4173 = vlaneseq
    %v4174 = vshrl.u32 %v4173, 7
    %v4175 = vsub.s32 %v2623, %v4174
    %v4176 = vrot.slane %v1606, %v4175
    %v4177 = vsel %vm2628, %v4176, %v4172
    %v4178 = vlaneseq
    %v4179 = vshrl.u32 %v4178, 7
    %v4180 = vsub.s32 %v2618, %v4179
    %v4181 = vrot.slane %v1609, %v4180
    %v4182 = vlaneseq
    %v4183 = vshrl.u32 %v4182, 7
    %v4184 = vsub.s32 %v2623, %v4183
    %v4185 = vrot.slane %v1612, %v4184
    %v4186 = vsel %vm2628, %v4185, %v4181
    %v4187 = vlaneseq
    %v4188 = vshrl.u32 %v4187, 7
    %v4189 = vsub.s32 %v2618, %v4188
    %v4190 = vrot.slane %v1615, %v4189
    %v4191 = vlaneseq
    %v4192 = vshrl.u32 %v4191, 7
    %v4193 = vsub.s32 %v2623, %v4192
    %v4194 = vrot.slane %v1618, %v4193
    %v4195 = vsel %vm2628, %v4194, %v4190
    %v4196 = vlaneseq
    %v4197 = vshrl.u32 %v4196, 7
    %v4198 = vsub.s32 %v2618, %v4197
    %v4199 = vrot.slane %v1621, %v4198
    %v4200 = vlaneseq
    %v4201 = vshrl.u32 %v4200, 7
    %v4202 = vsub.s32 %v2623, %v4201
    %v4203 = vrot.slane %v1624, %v4202
    %v4204 = vsel %vm2628, %v4203, %v4199
    %v4205 = vlaneseq
    %v4206 = vshrl.u32 %v4205, 7
    %v4207 = vsub.s32 %v2618, %v4206
    %v4208 = vrot.slane %v1627, %v4207
    %v4209 = vlaneseq
    %v4210 = vshrl.u32 %v4209, 7
    %v4211 = vsub.s32 %v2623, %v4210
    %v4212 = vrot.slane %v1630, %v4211
    %v4213 = vsel %vm2628, %v4212, %v4208
    %v4214 = vlaneseq
    %v4215 = vshrl.u32 %v4214, 7
    %v4216 = vsub.s32 %v2618, %v4215
    %v4217 = vrot.slane %v1633, %v4216
    %v4218 = vlaneseq
    %v4219 = vshrl.u32 %v4218, 7
    %v4220 = vsub.s32 %v2623, %v4219
    %v4221 = vrot.slane %v1636, %v4220
    %v4222 = vsel %vm2628, %v4221, %v4217
    %v4223 = vlaneseq
    %v4224 = vshrl.u32 %v4223, 7
    %v4225 = vsub.s32 %v2618, %v4224
    %v4226 = vrot.slane %v1639, %v4225
    %v4227 = vlaneseq
    %v4228 = vshrl.u32 %v4227, 7
    %v4229 = vsub.s32 %v2623, %v4228
    %v4230 = vrot.slane %v1642, %v4229
    %v4231 = vsel %vm2628, %v4230, %v4226
    %v4232 = vlaneseq
    %v4233 = vshrl.u32 %v4232, 7
    %v4234 = vsub.s32 %v2618, %v4233
    %v4235 = vrot.slane %v1645, %v4234
    %v4236 = vlaneseq
    %v4237 = vshrl.u32 %v4236, 7
    %v4238 = vsub.s32 %v2623, %v4237
    %v4239 = vrot.slane %v1648, %v4238
    %v4240 = vsel %vm2628, %v4239, %v4235
    %v4241 = vlaneseq
    %v4242 = vshrl.u32 %v4241, 7
    %v4243 = vsub.s32 %v2618, %v4242
    %v4244 = vrot.slane %v1651, %v4243
    %v4245 = vlaneseq
    %v4246 = vshrl.u32 %v4245, 7
    %v4247 = vsub.s32 %v2623, %v4246
    %v4248 = vrot.slane %v1654, %v4247
    %v4249 = vsel %vm2628, %v4248, %v4244
    %v4250 = vlaneseq
    %v4251 = vshrl.u32 %v4250, 7
    %v4252 = vsub.s32 %v2618, %v4251
    %v4253 = vrot.slane %v1657, %v4252
    %v4254 = vlaneseq
    %v4255 = vshrl.u32 %v4254, 7
    %v4256 = vsub.s32 %v2623, %v4255
    %v4257 = vrot.slane %v1660, %v4256
    %v4258 = vsel %vm2628, %v4257, %v4253
    %v4259 = vlaneseq
    %v4260 = vshrl.u32 %v4259, 7
    %v4261 = vsub.s32 %v2618, %v4260
    %v4262 = vrot.slane %v1663, %v4261
    %v4263 = vlaneseq
    %v4264 = vshrl.u32 %v4263, 7
    %v4265 = vsub.s32 %v2623, %v4264
    %v4266 = vrot.slane %v1666, %v4265
    %v4267 = vsel %vm2628, %v4266, %v4262
    %v4268 = vlaneseq
    %v4269 = vshrl.u32 %v4268, 7
    %v4270 = vsub.s32 %v2618, %v4269
    %v4271 = vrot.slane %v1669, %v4270
    %v4272 = vlaneseq
    %v4273 = vshrl.u32 %v4272, 7
    %v4274 = vsub.s32 %v2623, %v4273
    %v4275 = vrot.slane %v1672, %v4274
    %v4276 = vsel %vm2628, %v4275, %v4271
    %v4277 = vlaneseq
    %v4278 = vshrl.u32 %v4277, 7
    %v4279 = vsub.s32 %v2618, %v4278
    %v4280 = vrot.slane %v1675, %v4279
    %v4281 = vlaneseq
    %v4282 = vshrl.u32 %v4281, 7
    %v4283 = vsub.s32 %v2623, %v4282
    %v4284 = vrot.slane %v1678, %v4283
    %v4285 = vsel %vm2628, %v4284, %v4280
    %v4286 = vlaneseq
    %v4287 = vshrl.u32 %v4286, 7
    %v4288 = vsub.s32 %v2618, %v4287
    %v4289 = vrot.slane %v1681, %v4288
    %v4290 = vlaneseq
    %v4291 = vshrl.u32 %v4290, 7
    %v4292 = vsub.s32 %v2623, %v4291
    %v4293 = vrot.slane %v1684, %v4292
    %v4294 = vsel %vm2628, %v4293, %v4289
    %v4295 = vlaneseq
    %v4296 = vshrl.u32 %v4295, 7
    %v4297 = vsub.s32 %v2618, %v4296
    %v4298 = vrot.slane %v1687, %v4297
    %v4299 = vlaneseq
    %v4300 = vshrl.u32 %v4299, 7
    %v4301 = vsub.s32 %v2623, %v4300
    %v4302 = vrot.slane %v1690, %v4301
    %v4303 = vsel %vm2628, %v4302, %v4298
    %v4304 = vlaneseq
    %v4305 = vshrl.u32 %v4304, 7
    %v4306 = vsub.s32 %v2618, %v4305
    %v4307 = vrot.slane %v1693, %v4306
    %v4308 = vlaneseq
    %v4309 = vshrl.u32 %v4308, 7
    %v4310 = vsub.s32 %v2623, %v4309
    %v4311 = vrot.slane %v1696, %v4310
    %v4312 = vsel %vm2628, %v4311, %v4307
    %v4313 = vlaneseq
    %v4314 = vshrl.u32 %v4313, 7
    %v4315 = vsub.s32 %v2618, %v4314
    %v4316 = vrot.slane %v1699, %v4315
    %v4317 = vlaneseq
    %v4318 = vshrl.u32 %v4317, 7
    %v4319 = vsub.s32 %v2623, %v4318
    %v4320 = vrot.slane %v1702, %v4319
    %v4321 = vsel %vm2628, %v4320, %v4316
    %v4322 = vlaneseq
    %v4323 = vshrl.u32 %v4322, 7
    %v4324 = vsub.s32 %v2618, %v4323
    %v4325 = vrot.slane %v1705, %v4324
    %v4326 = vlaneseq
    %v4327 = vshrl.u32 %v4326, 7
    %v4328 = vsub.s32 %v2623, %v4327
    %v4329 = vrot.slane %v1708, %v4328
    %v4330 = vsel %vm2628, %v4329, %v4325
    %v4331 = vlaneseq
    %v4332 = vshrl.u32 %v4331, 7
    %v4333 = vsub.s32 %v2618, %v4332
    %v4334 = vrot.slane %v1711, %v4333
    %v4335 = vlaneseq
    %v4336 = vshrl.u32 %v4335, 7
    %v4337 = vsub.s32 %v2623, %v4336
    %v4338 = vrot.slane %v1714, %v4337
    %v4339 = vsel %vm2628, %v4338, %v4334
    %v4340 = vlaneseq
    %v4341 = vshrl.u32 %v4340, 7
    %v4342 = vsub.s32 %v2618, %v4341
    %v4343 = vrot.slane %v1717, %v4342
    %v4344 = vlaneseq
    %v4345 = vshrl.u32 %v4344, 7
    %v4346 = vsub.s32 %v2623, %v4345
    %v4347 = vrot.slane %v1720, %v4346
    %v4348 = vsel %vm2628, %v4347, %v4343
    %v4349 = vlaneseq
    %v4350 = vshrl.u32 %v4349, 7
    %v4351 = vsub.s32 %v2618, %v4350
    %v4352 = vrot.slane %v1723, %v4351
    %v4353 = vlaneseq
    %v4354 = vshrl.u32 %v4353, 7
    %v4355 = vsub.s32 %v2623, %v4354
    %v4356 = vrot.slane %v1726, %v4355
    %v4357 = vsel %vm2628, %v4356, %v4352
    %v4358 = vlaneseq
    %v4359 = vshrl.u32 %v4358, 7
    %v4360 = vsub.s32 %v2618, %v4359
    %v4361 = vrot.slane %v1729, %v4360
    %v4362 = vlaneseq
    %v4363 = vshrl.u32 %v4362, 7
    %v4364 = vsub.s32 %v2623, %v4363
    %v4365 = vrot.slane %v1732, %v4364
    %v4366 = vsel %vm2628, %v4365, %v4361
    %v4367 = vlaneseq
    %v4368 = vshrl.u32 %v4367, 7
    %v4369 = vsub.s32 %v2618, %v4368
    %v4370 = vrot.slane %v1735, %v4369
    %v4371 = vlaneseq
    %v4372 = vshrl.u32 %v4371, 7
    %v4373 = vsub.s32 %v2623, %v4372
    %v4374 = vrot.slane %v1738, %v4373
    %v4375 = vsel %vm2628, %v4374, %v4370
    %v4376 = vlaneseq
    %v4377 = vshrl.u32 %v4376, 7
    %v4378 = vsub.s32 %v2618, %v4377
    %v4379 = vrot.slane %v1741, %v4378
    %v4380 = vlaneseq
    %v4381 = vshrl.u32 %v4380, 7
    %v4382 = vsub.s32 %v2623, %v4381
    %v4383 = vrot.slane %v1744, %v4382
    %v4384 = vsel %vm2628, %v4383, %v4379
    %v4385 = vlaneseq
    %v4386 = vshrl.u32 %v4385, 7
    %v4387 = vsub.s32 %v2618, %v4386
    %v4388 = vrot.slane %v1747, %v4387
    %v4389 = vlaneseq
    %v4390 = vshrl.u32 %v4389, 7
    %v4391 = vsub.s32 %v2623, %v4390
    %v4392 = vrot.slane %v1750, %v4391
    %v4393 = vsel %vm2628, %v4392, %v4388
    %v4394 = vlaneseq
    %v4395 = vshrl.u32 %v4394, 7
    %v4396 = vsub.s32 %v2618, %v4395
    %v4397 = vrot.slane %v1753, %v4396
    %v4398 = vlaneseq
    %v4399 = vshrl.u32 %v4398, 7
    %v4400 = vsub.s32 %v2623, %v4399
    %v4401 = vrot.slane %v1756, %v4400
    %v4402 = vsel %vm2628, %v4401, %v4397
    %v4403 = vlaneseq
    %v4404 = vshrl.u32 %v4403, 7
    %v4405 = vsub.s32 %v2618, %v4404
    %v4406 = vrot.slane %v1759, %v4405
    %v4407 = vlaneseq
    %v4408 = vshrl.u32 %v4407, 7
    %v4409 = vsub.s32 %v2623, %v4408
    %v4410 = vrot.slane %v1762, %v4409
    %v4411 = vsel %vm2628, %v4410, %v4406
    %v4412 = vlaneseq
    %v4413 = vshrl.u32 %v4412, 7
    %v4414 = vsub.s32 %v2618, %v4413
    %v4415 = vrot.slane %v1765, %v4414
    %v4416 = vlaneseq
    %v4417 = vshrl.u32 %v4416, 7
    %v4418 = vsub.s32 %v2623, %v4417
    %v4419 = vrot.slane %v1768, %v4418
    %v4420 = vsel %vm2628, %v4419, %v4415
    %v4421 = vlaneseq
    %v4422 = vshrl.u32 %v4421, 7
    %v4423 = vsub.s32 %v2618, %v4422
    %v4424 = vrot.slane %v1771, %v4423
    %v4425 = vlaneseq
    %v4426 = vshrl.u32 %v4425, 7
    %v4427 = vsub.s32 %v2623, %v4426
    %v4428 = vrot.slane %v1774, %v4427
    %v4429 = vsel %vm2628, %v4428, %v4424
    %v4430 = vlaneseq
    %v4431 = vshrl.u32 %v4430, 7
    %v4432 = vsub.s32 %v2618, %v4431
    %v4433 = vrot.slane %v1777, %v4432
    %v4434 = vlaneseq
    %v4435 = vshrl.u32 %v4434, 7
    %v4436 = vsub.s32 %v2623, %v4435
    %v4437 = vrot.slane %v1780, %v4436
    %v4438 = vsel %vm2628, %v4437, %v4433
    %v4439 = vlaneseq
    %v4440 = vshrl.u32 %v4439, 7
    %v4441 = vsub.s32 %v2618, %v4440
    %v4442 = vrot.slane %v1783, %v4441
    %v4443 = vlaneseq
    %v4444 = vshrl.u32 %v4443, 7
    %v4445 = vsub.s32 %v2623, %v4444
    %v4446 = vrot.slane %v1786, %v4445
    %v4447 = vsel %vm2628, %v4446, %v4442
    %v4448 = vlaneseq
    %v4449 = vshrl.u32 %v4448, 7
    %v4450 = vsub.s32 %v2618, %v4449
    %v4451 = vrot.slane %v1789, %v4450
    %v4452 = vlaneseq
    %v4453 = vshrl.u32 %v4452, 7
    %v4454 = vsub.s32 %v2623, %v4453
    %v4455 = vrot.slane %v1792, %v4454
    %v4456 = vsel %vm2628, %v4455, %v4451
    %v4457 = vlaneseq
    %v4458 = vshrl.u32 %v4457, 7
    %v4459 = vsub.s32 %v2618, %v4458
    %v4460 = vrot.slane %v1795, %v4459
    %v4461 = vlaneseq
    %v4462 = vshrl.u32 %v4461, 7
    %v4463 = vsub.s32 %v2623, %v4462
    %v4464 = vrot.slane %v1798, %v4463
    %v4465 = vsel %vm2628, %v4464, %v4460
    %v4466 = vlaneseq
    %v4467 = vshrl.u32 %v4466, 7
    %v4468 = vsub.s32 %v2618, %v4467
    %v4469 = vrot.slane %v1801, %v4468
    %v4470 = vlaneseq
    %v4471 = vshrl.u32 %v4470, 7
    %v4472 = vsub.s32 %v2623, %v4471
    %v4473 = vrot.slane %v1804, %v4472
    %v4474 = vsel %vm2628, %v4473, %v4469
    %v4475 = vlaneseq
    %v4476 = vshrl.u32 %v4475, 7
    %v4477 = vsub.s32 %v2618, %v4476
    %v4478 = vrot.slane %v1807, %v4477
    %v4479 = vlaneseq
    %v4480 = vshrl.u32 %v4479, 7
    %v4481 = vsub.s32 %v2623, %v4480
    %v4482 = vrot.slane %v1810, %v4481
    %v4483 = vsel %vm2628, %v4482, %v4478
    %v4484 = vlaneseq
    %v4485 = vshrl.u32 %v4484, 7
    %v4486 = vsub.s32 %v2618, %v4485
    %v4487 = vrot.slane %v1813, %v4486
    %v4488 = vlaneseq
    %v4489 = vshrl.u32 %v4488, 7
    %v4490 = vsub.s32 %v2623, %v4489
    %v4491 = vrot.slane %v1816, %v4490
    %v4492 = vsel %vm2628, %v4491, %v4487
    %v4493 = vlaneseq
    %v4494 = vshrl.u32 %v4493, 7
    %v4495 = vsub.s32 %v2618, %v4494
    %v4496 = vrot.slane %v1819, %v4495
    %v4497 = vlaneseq
    %v4498 = vshrl.u32 %v4497, 7
    %v4499 = vsub.s32 %v2623, %v4498
    %v4500 = vrot.slane %v1822, %v4499
    %v4501 = vsel %vm2628, %v4500, %v4496
    %v4502 = vlaneseq
    %v4503 = vshrl.u32 %v4502, 7
    %v4504 = vsub.s32 %v2618, %v4503
    %v4505 = vrot.slane %v1825, %v4504
    %v4506 = vlaneseq
    %v4507 = vshrl.u32 %v4506, 7
    %v4508 = vsub.s32 %v2623, %v4507
    %v4509 = vrot.slane %v1828, %v4508
    %v4510 = vsel %vm2628, %v4509, %v4505
    %v4511 = vlaneseq
    %v4512 = vshrl.u32 %v4511, 7
    %v4513 = vsub.s32 %v2618, %v4512
    %v4514 = vrot.slane %v1831, %v4513
    %v4515 = vlaneseq
    %v4516 = vshrl.u32 %v4515, 7
    %v4517 = vsub.s32 %v2623, %v4516
    %v4518 = vrot.slane %v1834, %v4517
    %v4519 = vsel %vm2628, %v4518, %v4514
    %v4520 = vlaneseq
    %v4521 = vshrl.u32 %v4520, 7
    %v4522 = vsub.s32 %v2618, %v4521
    %v4523 = vrot.slane %v1837, %v4522
    %v4524 = vlaneseq
    %v4525 = vshrl.u32 %v4524, 7
    %v4526 = vsub.s32 %v2623, %v4525
    %v4527 = vrot.slane %v1840, %v4526
    %v4528 = vsel %vm2628, %v4527, %v4523
    %v4529 = vlaneseq
    %v4530 = vshrl.u32 %v4529, 7
    %v4531 = vsub.s32 %v2618, %v4530
    %v4532 = vrot.slane %v1843, %v4531
    %v4533 = vlaneseq
    %v4534 = vshrl.u32 %v4533, 7
    %v4535 = vsub.s32 %v2623, %v4534
    %v4536 = vrot.slane %v1846, %v4535
    %v4537 = vsel %vm2628, %v4536, %v4532
    %v4538 = vlaneseq
    %v4539 = vshrl.u32 %v4538, 7
    %v4540 = vsub.s32 %v2618, %v4539
    %v4541 = vrot.slane %v1849, %v4540
    %v4542 = vlaneseq
    %v4543 = vshrl.u32 %v4542, 7
    %v4544 = vsub.s32 %v2623, %v4543
    %v4545 = vrot.slane %v1852, %v4544
    %v4546 = vsel %vm2628, %v4545, %v4541
    %v4547 = vlaneseq
    %v4548 = vshrl.u32 %v4547, 7
    %v4549 = vsub.s32 %v2618, %v4548
    %v4550 = vrot.slane %v1855, %v4549
    %v4551 = vlaneseq
    %v4552 = vshrl.u32 %v4551, 7
    %v4553 = vsub.s32 %v2623, %v4552
    %v4554 = vrot.slane %v1858, %v4553
    %v4555 = vsel %vm2628, %v4554, %v4550
    %v4556 = vlaneseq
    %v4557 = vshrl.u32 %v4556, 7
    %v4558 = vsub.s32 %v2618, %v4557
    %v4559 = vrot.slane %v1861, %v4558
    %v4560 = vlaneseq
    %v4561 = vshrl.u32 %v4560, 7
    %v4562 = vsub.s32 %v2623, %v4561
    %v4563 = vrot.slane %v1864, %v4562
    %v4564 = vsel %vm2628, %v4563, %v4559
    %v4565 = vlaneseq
    %v4566 = vshrl.u32 %v4565, 7
    %v4567 = vsub.s32 %v2618, %v4566
    %v4568 = vrot.slane %v1867, %v4567
    %v4569 = vlaneseq
    %v4570 = vshrl.u32 %v4569, 7
    %v4571 = vsub.s32 %v2623, %v4570
    %v4572 = vrot.slane %v1870, %v4571
    %v4573 = vsel %vm2628, %v4572, %v4568
    %v4574 = vlaneseq
    %v4575 = vshrl.u32 %v4574, 7
    %v4576 = vsub.s32 %v2618, %v4575
    %v4577 = vrot.slane %v1873, %v4576
    %v4578 = vlaneseq
    %v4579 = vshrl.u32 %v4578, 7
    %v4580 = vsub.s32 %v2623, %v4579
    %v4581 = vrot.slane %v1876, %v4580
    %v4582 = vsel %vm2628, %v4581, %v4577
    %v4583 = vlaneseq
    %v4584 = vshrl.u32 %v4583, 7
    %v4585 = vsub.s32 %v2618, %v4584
    %v4586 = vrot.slane %v1879, %v4585
    %v4587 = vlaneseq
    %v4588 = vshrl.u32 %v4587, 7
    %v4589 = vsub.s32 %v2623, %v4588
    %v4590 = vrot.slane %v1882, %v4589
    %v4591 = vsel %vm2628, %v4590, %v4586
    %v4592 = vlaneseq
    %v4593 = vshrl.u32 %v4592, 7
    %v4594 = vsub.s32 %v2618, %v4593
    %v4595 = vrot.slane %v1885, %v4594
    %v4596 = vlaneseq
    %v4597 = vshrl.u32 %v4596, 7
    %v4598 = vsub.s32 %v2623, %v4597
    %v4599 = vrot.slane %v1888, %v4598
    %v4600 = vsel %vm2628, %v4599, %v4595
    %v4601 = vlaneseq
    %v4602 = vshrl.u32 %v4601, 7
    %v4603 = vsub.s32 %v2618, %v4602
    %v4604 = vrot.slane %v1891, %v4603
    %v4605 = vlaneseq
    %v4606 = vshrl.u32 %v4605, 7
    %v4607 = vsub.s32 %v2623, %v4606
    %v4608 = vrot.slane %v1894, %v4607
    %v4609 = vsel %vm2628, %v4608, %v4604
    %v4610 = vlaneseq
    %v4611 = vshrl.u32 %v4610, 7
    %v4612 = vsub.s32 %v2618, %v4611
    %v4613 = vrot.slane %v1897, %v4612
    %v4614 = vlaneseq
    %v4615 = vshrl.u32 %v4614, 7
    %v4616 = vsub.s32 %v2623, %v4615
    %v4617 = vrot.slane %v1900, %v4616
    %v4618 = vsel %vm2628, %v4617, %v4613
    %v4619 = vlaneseq
    %v4620 = vshrl.u32 %v4619, 7
    %v4621 = vsub.s32 %v2618, %v4620
    %v4622 = vrot.slane %v1903, %v4621
    %v4623 = vlaneseq
    %v4624 = vshrl.u32 %v4623, 7
    %v4625 = vsub.s32 %v2623, %v4624
    %v4626 = vrot.slane %v1906, %v4625
    %v4627 = vsel %vm2628, %v4626, %v4622
    %v4628 = vlaneseq
    %v4629 = vshrl.u32 %v4628, 7
    %v4630 = vsub.s32 %v2618, %v4629
    %v4631 = vrot.slane %v1909, %v4630
    %v4632 = vlaneseq
    %v4633 = vshrl.u32 %v4632, 7
    %v4634 = vsub.s32 %v2623, %v4633
    %v4635 = vrot.slane %v1912, %v4634
    %v4636 = vsel %vm2628, %v4635, %v4631
    %v4637 = vlaneseq
    %v4638 = vshrl.u32 %v4637, 7
    %v4639 = vsub.s32 %v2618, %v4638
    %v4640 = vrot.slane %v1915, %v4639
    %v4641 = vlaneseq
    %v4642 = vshrl.u32 %v4641, 7
    %v4643 = vsub.s32 %v2623, %v4642
    %v4644 = vrot.slane %v1918, %v4643
    %v4645 = vsel %vm2628, %v4644, %v4640
    %v4646 = vlaneseq
    %v4647 = vshrl.u32 %v4646, 7
    %v4648 = vsub.s32 %v2618, %v4647
    %v4649 = vrot.slane %v1921, %v4648
    %v4650 = vlaneseq
    %v4651 = vshrl.u32 %v4650, 7
    %v4652 = vsub.s32 %v2623, %v4651
    %v4653 = vrot.slane %v1924, %v4652
    %v4654 = vsel %vm2628, %v4653, %v4649
    %v4655 = vlaneseq
    %v4656 = vshrl.u32 %v4655, 7
    %v4657 = vsub.s32 %v2618, %v4656
    %v4658 = vrot.slane %v1927, %v4657
    %v4659 = vlaneseq
    %v4660 = vshrl.u32 %v4659, 7
    %v4661 = vsub.s32 %v2623, %v4660
    %v4662 = vrot.slane %v1930, %v4661
    %v4663 = vsel %vm2628, %v4662, %v4658
    %v4664 = vlaneseq
    %v4665 = vshrl.u32 %v4664, 7
    %v4666 = vsub.s32 %v2618, %v4665
    %v4667 = vrot.slane %v1933, %v4666
    %v4668 = vlaneseq
    %v4669 = vshrl.u32 %v4668, 7
    %v4670 = vsub.s32 %v2623, %v4669
    %v4671 = vrot.slane %v1936, %v4670
    %v4672 = vsel %vm2628, %v4671, %v4667
    %v4673 = vlaneseq
    %v4674 = vshrl.u32 %v4673, 7
    %v4675 = vsub.s32 %v2618, %v4674
    %v4676 = vrot.slane %v1939, %v4675
    %v4677 = vlaneseq
    %v4678 = vshrl.u32 %v4677, 7
    %v4679 = vsub.s32 %v2623, %v4678
    %v4680 = vrot.slane %v1942, %v4679
    %v4681 = vsel %vm2628, %v4680, %v4676
    %v4682 = vlaneseq
    %v4683 = vshrl.u32 %v4682, 7
    %v4684 = vsub.s32 %v2618, %v4683
    %v4685 = vrot.slane %v1945, %v4684
    %v4686 = vlaneseq
    %v4687 = vshrl.u32 %v4686, 7
    %v4688 = vsub.s32 %v2623, %v4687
    %v4689 = vrot.slane %v1948, %v4688
    %v4690 = vsel %vm2628, %v4689, %v4685
    %v4691 = vlaneseq
    %v4692 = vshrl.u32 %v4691, 7
    %v4693 = vsub.s32 %v2618, %v4692
    %v4694 = vrot.slane %v1951, %v4693
    %v4695 = vlaneseq
    %v4696 = vshrl.u32 %v4695, 7
    %v4697 = vsub.s32 %v2623, %v4696
    %v4698 = vrot.slane %v1954, %v4697
    %v4699 = vsel %vm2628, %v4698, %v4694
    %v4700 = vlaneseq
    %v4701 = vshrl.u32 %v4700, 7
    %v4702 = vsub.s32 %v2618, %v4701
    %v4703 = vrot.slane %v1957, %v4702
    %v4704 = vlaneseq
    %v4705 = vshrl.u32 %v4704, 7
    %v4706 = vsub.s32 %v2623, %v4705
    %v4707 = vrot.slane %v1960, %v4706
    %v4708 = vsel %vm2628, %v4707, %v4703
    %v4709 = vlaneseq
    %v4710 = vshrl.u32 %v4709, 7
    %v4711 = vsub.s32 %v2618, %v4710
    %v4712 = vrot.slane %v1963, %v4711
    %v4713 = vlaneseq
    %v4714 = vshrl.u32 %v4713, 7
    %v4715 = vsub.s32 %v2623, %v4714
    %v4716 = vrot.slane %v1966, %v4715
    %v4717 = vsel %vm2628, %v4716, %v4712
    %v4718 = vlaneseq
    %v4719 = vshrl.u32 %v4718, 7
    %v4720 = vsub.s32 %v2618, %v4719
    %v4721 = vrot.slane %v1969, %v4720
    %v4722 = vlaneseq
    %v4723 = vshrl.u32 %v4722, 7
    %v4724 = vsub.s32 %v2623, %v4723
    %v4725 = vrot.slane %v1972, %v4724
    %v4726 = vsel %vm2628, %v4725, %v4721
    %v4727 = vlaneseq
    %v4728 = vshrl.u32 %v4727, 7
    %v4729 = vsub.s32 %v2618, %v4728
    %v4730 = vrot.slane %v1975, %v4729
    %v4731 = vlaneseq
    %v4732 = vshrl.u32 %v4731, 7
    %v4733 = vsub.s32 %v2623, %v4732
    %v4734 = vrot.slane %v1978, %v4733
    %v4735 = vsel %vm2628, %v4734, %v4730
    %v4736 = vlaneseq
    %v4737 = vshrl.u32 %v4736, 7
    %v4738 = vsub.s32 %v2618, %v4737
    %v4739 = vrot.slane %v1981, %v4738
    %v4740 = vlaneseq
    %v4741 = vshrl.u32 %v4740, 7
    %v4742 = vsub.s32 %v2623, %v4741
    %v4743 = vrot.slane %v1984, %v4742
    %v4744 = vsel %vm2628, %v4743, %v4739
    %v4745 = vlaneseq
    %v4746 = vshrl.u32 %v4745, 7
    %v4747 = vsub.s32 %v2618, %v4746
    %v4748 = vrot.slane %v1987, %v4747
    %v4749 = vlaneseq
    %v4750 = vshrl.u32 %v4749, 7
    %v4751 = vsub.s32 %v2623, %v4750
    %v4752 = vrot.slane %v1990, %v4751
    %v4753 = vsel %vm2628, %v4752, %v4748
    %v4754 = vlaneseq
    %v4755 = vshrl.u32 %v4754, 7
    %v4756 = vsub.s32 %v2618, %v4755
    %v4757 = vrot.slane %v1993, %v4756
    %v4758 = vlaneseq
    %v4759 = vshrl.u32 %v4758, 7
    %v4760 = vsub.s32 %v2623, %v4759
    %v4761 = vrot.slane %v1996, %v4760
    %v4762 = vsel %vm2628, %v4761, %v4757
    %v4763 = vlaneseq
    %v4764 = vshrl.u32 %v4763, 7
    %v4765 = vsub.s32 %v2618, %v4764
    %v4766 = vrot.slane %v1999, %v4765
    %v4767 = vlaneseq
    %v4768 = vshrl.u32 %v4767, 7
    %v4769 = vsub.s32 %v2623, %v4768
    %v4770 = vrot.slane %v2002, %v4769
    %v4771 = vsel %vm2628, %v4770, %v4766
    %v4772 = vlaneseq
    %v4773 = vshrl.u32 %v4772, 7
    %v4774 = vsub.s32 %v2618, %v4773
    %v4775 = vrot.slane %v2005, %v4774
    %v4776 = vlaneseq
    %v4777 = vshrl.u32 %v4776, 7
    %v4778 = vsub.s32 %v2623, %v4777
    %v4779 = vrot.slane %v2008, %v4778
    %v4780 = vsel %vm2628, %v4779, %v4775
    %v4781 = vlaneseq
    %v4782 = vshrl.u32 %v4781, 7
    %v4783 = vsub.s32 %v2618, %v4782
    %v4784 = vrot.slane %v2011, %v4783
    %v4785 = vlaneseq
    %v4786 = vshrl.u32 %v4785, 7
    %v4787 = vsub.s32 %v2623, %v4786
    %v4788 = vrot.slane %v2014, %v4787
    %v4789 = vsel %vm2628, %v4788, %v4784
    %v4790 = vlaneseq
    %v4791 = vshrl.u32 %v4790, 7
    %v4792 = vsub.s32 %v2618, %v4791
    %v4793 = vrot.slane %v2017, %v4792
    %v4794 = vlaneseq
    %v4795 = vshrl.u32 %v4794, 7
    %v4796 = vsub.s32 %v2623, %v4795
    %v4797 = vrot.slane %v2020, %v4796
    %v4798 = vsel %vm2628, %v4797, %v4793
    %v4799 = vlaneseq
    %v4800 = vshrl.u32 %v4799, 7
    %v4801 = vsub.s32 %v2618, %v4800
    %v4802 = vrot.slane %v2023, %v4801
    %v4803 = vlaneseq
    %v4804 = vshrl.u32 %v4803, 7
    %v4805 = vsub.s32 %v2623, %v4804
    %v4806 = vrot.slane %v2026, %v4805
    %v4807 = vsel %vm2628, %v4806, %v4802
    %v4808 = vlaneseq
    %v4809 = vshrl.u32 %v4808, 7
    %v4810 = vsub.s32 %v2618, %v4809
    %v4811 = vrot.slane %v2029, %v4810
    %v4812 = vlaneseq
    %v4813 = vshrl.u32 %v4812, 7
    %v4814 = vsub.s32 %v2623, %v4813
    %v4815 = vrot.slane %v2032, %v4814
    %v4816 = vsel %vm2628, %v4815, %v4811
    %v4817 = vlaneseq
    %v4818 = vshrl.u32 %v4817, 7
    %v4819 = vsub.s32 %v2618, %v4818
    %v4820 = vrot.slane %v2035, %v4819
    %v4821 = vlaneseq
    %v4822 = vshrl.u32 %v4821, 7
    %v4823 = vsub.s32 %v2623, %v4822
    %v4824 = vrot.slane %v2038, %v4823
    %v4825 = vsel %vm2628, %v4824, %v4820
    %v4826 = vlaneseq
    %v4827 = vshrl.u32 %v4826, 7
    %v4828 = vsub.s32 %v2618, %v4827
    %v4829 = vrot.slane %v2041, %v4828
    %v4830 = vlaneseq
    %v4831 = vshrl.u32 %v4830, 7
    %v4832 = vsub.s32 %v2623, %v4831
    %v4833 = vrot.slane %v2044, %v4832
    %v4834 = vsel %vm2628, %v4833, %v4829
    %v4835 = vlaneseq
    %v4836 = vshrl.u32 %v4835, 7
    %v4837 = vsub.s32 %v2618, %v4836
    %v4838 = vrot.slane %v2047, %v4837
    %v4839 = vlaneseq
    %v4840 = vshrl.u32 %v4839, 7
    %v4841 = vsub.s32 %v2623, %v4840
    %v4842 = vrot.slane %v2050, %v4841
    %v4843 = vsel %vm2628, %v4842, %v4838
    %v4844 = vlaneseq
    %v4845 = vshrl.u32 %v4844, 7
    %v4846 = vsub.s32 %v2618, %v4845
    %v4847 = vrot.slane %v2053, %v4846
    %v4848 = vlaneseq
    %v4849 = vshrl.u32 %v4848, 7
    %v4850 = vsub.s32 %v2623, %v4849
    %v4851 = vrot.slane %v2056, %v4850
    %v4852 = vsel %vm2628, %v4851, %v4847
    %v4853 = vlaneseq
    %v4854 = vshrl.u32 %v4853, 7
    %v4855 = vsub.s32 %v2618, %v4854
    %v4856 = vrot.slane %v2059, %v4855
    %v4857 = vlaneseq
    %v4858 = vshrl.u32 %v4857, 7
    %v4859 = vsub.s32 %v2623, %v4858
    %v4860 = vrot.slane %v2062, %v4859
    %v4861 = vsel %vm2628, %v4860, %v4856
    %v4862 = vlaneseq
    %v4863 = vshrl.u32 %v4862, 7
    %v4864 = vsub.s32 %v2618, %v4863
    %v4865 = vrot.slane %v2065, %v4864
    %v4866 = vlaneseq
    %v4867 = vshrl.u32 %v4866, 7
    %v4868 = vsub.s32 %v2623, %v4867
    %v4869 = vrot.slane %v2068, %v4868
    %v4870 = vsel %vm2628, %v4869, %v4865
    %v4871 = vlaneseq
    %v4872 = vshrl.u32 %v4871, 7
    %v4873 = vsub.s32 %v2618, %v4872
    %v4874 = vrot.slane %v2071, %v4873
    %v4875 = vlaneseq
    %v4876 = vshrl.u32 %v4875, 7
    %v4877 = vsub.s32 %v2623, %v4876
    %v4878 = vrot.slane %v2074, %v4877
    %v4879 = vsel %vm2628, %v4878, %v4874
    %v4880 = vlaneseq
    %v4881 = vshrl.u32 %v4880, 7
    %v4882 = vsub.s32 %v2618, %v4881
    %v4883 = vrot.slane %v2077, %v4882
    %v4884 = vlaneseq
    %v4885 = vshrl.u32 %v4884, 7
    %v4886 = vsub.s32 %v2623, %v4885
    %v4887 = vrot.slane %v2080, %v4886
    %v4888 = vsel %vm2628, %v4887, %v4883
    %v4889 = vlaneseq
    %v4890 = vshrl.u32 %v4889, 7
    %v4891 = vsub.s32 %v2618, %v4890
    %v4892 = vrot.slane %v2083, %v4891
    %v4893 = vlaneseq
    %v4894 = vshrl.u32 %v4893, 7
    %v4895 = vsub.s32 %v2623, %v4894
    %v4896 = vrot.slane %v2086, %v4895
    %v4897 = vsel %vm2628, %v4896, %v4892
    %v4898 = vlaneseq
    %v4899 = vshrl.u32 %v4898, 7
    %v4900 = vsub.s32 %v2618, %v4899
    %v4901 = vrot.slane %v2089, %v4900
    %v4902 = vlaneseq
    %v4903 = vshrl.u32 %v4902, 7
    %v4904 = vsub.s32 %v2623, %v4903
    %v4905 = vrot.slane %v2092, %v4904
    %v4906 = vsel %vm2628, %v4905, %v4901
    %v4907 = vlaneseq
    %v4908 = vshrl.u32 %v4907, 7
    %v4909 = vsub.s32 %v2618, %v4908
    %v4910 = vrot.slane %v2095, %v4909
    %v4911 = vlaneseq
    %v4912 = vshrl.u32 %v4911, 7
    %v4913 = vsub.s32 %v2623, %v4912
    %v4914 = vrot.slane %v2098, %v4913
    %v4915 = vsel %vm2628, %v4914, %v4910
    %v4916 = vlaneseq
    %v4917 = vshrl.u32 %v4916, 7
    %v4918 = vsub.s32 %v2618, %v4917
    %v4919 = vrot.slane %v2101, %v4918
    %v4920 = vlaneseq
    %v4921 = vshrl.u32 %v4920, 7
    %v4922 = vsub.s32 %v2623, %v4921
    %v4923 = vrot.slane %v2104, %v4922
    %v4924 = vsel %vm2628, %v4923, %v4919
    %vm4925 = vcmask 1041409
    %v4926 = vsel %vm4925, %v2638, %v2629
    %vm4927 = vcmask 1042434
    %v4928 = vsel %vm4927, %v2647, %v4926
    %vm4929 = vcmask 1043459
    %v4930 = vsel %vm4929, %v2656, %v4928
    %vm4931 = vcmask 1044484
    %v4932 = vsel %vm4931, %v2665, %v4930
    %vm4933 = vcmask 1045509
    %v4934 = vsel %vm4933, %v2674, %v4932
    %vm4935 = vcmask 1046534
    %v4936 = vsel %vm4935, %v2683, %v4934
    %vm4937 = vcmask 1047559
    %v4938 = vsel %vm4937, %v2692, %v4936
    %v4939 = vsel %vm4925, %v2710, %v2701
    %v4940 = vsel %vm4927, %v2719, %v4939
    %v4941 = vsel %vm4929, %v2728, %v4940
    %v4942 = vsel %vm4931, %v2737, %v4941
    %v4943 = vsel %vm4933, %v2746, %v4942
    %v4944 = vsel %vm4935, %v2755, %v4943
    %v4945 = vsel %vm4937, %v2764, %v4944
    %v4946 = vsel %vm4925, %v2782, %v2773
    %v4947 = vsel %vm4927, %v2791, %v4946
    %v4948 = vsel %vm4929, %v2800, %v4947
    %v4949 = vsel %vm4931, %v2809, %v4948
    %v4950 = vsel %vm4933, %v2818, %v4949
    %v4951 = vsel %vm4935, %v2827, %v4950
    %v4952 = vsel %vm4937, %v2836, %v4951
    %v4953 = vsel %vm4925, %v2854, %v2845
    %v4954 = vsel %vm4927, %v2863, %v4953
    %v4955 = vsel %vm4929, %v2872, %v4954
    %v4956 = vsel %vm4931, %v2881, %v4955
    %v4957 = vsel %vm4933, %v2890, %v4956
    %v4958 = vsel %vm4935, %v2899, %v4957
    %v4959 = vsel %vm4937, %v2908, %v4958
    %v4960 = vsel %vm4925, %v2926, %v2917
    %v4961 = vsel %vm4927, %v2935, %v4960
    %v4962 = vsel %vm4929, %v2944, %v4961
    %v4963 = vsel %vm4931, %v2953, %v4962
    %v4964 = vsel %vm4933, %v2962, %v4963
    %v4965 = vsel %vm4935, %v2971, %v4964
    %v4966 = vsel %vm4937, %v2980, %v4965
    %v4967 = vsel %vm4925, %v2998, %v2989
    %v4968 = vsel %vm4927, %v3007, %v4967
    %v4969 = vsel %vm4929, %v3016, %v4968
    %v4970 = vsel %vm4931, %v3025, %v4969
    %v4971 = vsel %vm4933, %v3034, %v4970
    %v4972 = vsel %vm4935, %v3043, %v4971
    %v4973 = vsel %vm4937, %v3052, %v4972
    %v4974 = vsel %vm4925, %v3070, %v3061
    %v4975 = vsel %vm4927, %v3079, %v4974
    %v4976 = vsel %vm4929, %v3088, %v4975
    %v4977 = vsel %vm4931, %v3097, %v4976
    %v4978 = vsel %vm4933, %v3106, %v4977
    %v4979 = vsel %vm4935, %v3115, %v4978
    %v4980 = vsel %vm4937, %v3124, %v4979
    %v4981 = vsel %vm4925, %v3142, %v3133
    %v4982 = vsel %vm4927, %v3151, %v4981
    %v4983 = vsel %vm4929, %v3160, %v4982
    %v4984 = vsel %vm4931, %v3169, %v4983
    %v4985 = vsel %vm4933, %v3178, %v4984
    %v4986 = vsel %vm4935, %v3187, %v4985
    %v4987 = vsel %vm4937, %v3196, %v4986
    %v4988 = vsel %vm4925, %v3214, %v3205
    %v4989 = vsel %vm4927, %v3223, %v4988
    %v4990 = vsel %vm4929, %v3232, %v4989
    %v4991 = vsel %vm4931, %v3241, %v4990
    %v4992 = vsel %vm4933, %v3250, %v4991
    %v4993 = vsel %vm4935, %v3259, %v4992
    %v4994 = vsel %vm4937, %v3268, %v4993
    %v4995 = vsel %vm4925, %v3286, %v3277
    %v4996 = vsel %vm4927, %v3295, %v4995
    %v4997 = vsel %vm4929, %v3304, %v4996
    %v4998 = vsel %vm4931, %v3313, %v4997
    %v4999 = vsel %vm4933, %v3322, %v4998
    %v5000 = vsel %vm4935, %v3331, %v4999
    %v5001 = vsel %vm4937, %v3340, %v5000
    %v5002 = vsel %vm4925, %v3358, %v3349
    %v5003 = vsel %vm4927, %v3367, %v5002
    %v5004 = vsel %vm4929, %v3376, %v5003
    %v5005 = vsel %vm4931, %v3385, %v5004
    %v5006 = vsel %vm4933, %v3394, %v5005
    %v5007 = vsel %vm4935, %v3403, %v5006
    %v5008 = vsel %vm4937, %v3412, %v5007
    %v5009 = vsel %vm4925, %v3430, %v3421
    %v5010 = vsel %vm4927, %v3439, %v5009
    %v5011 = vsel %vm4929, %v3448, %v5010
    %v5012 = vsel %vm4931, %v3457, %v5011
    %v5013 = vsel %vm4933, %v3466, %v5012
    %v5014 = vsel %vm4935, %v3475, %v5013
    %v5015 = vsel %vm4937, %v3484, %v5014
    %v5016 = vsel %vm4925, %v3502, %v3493
    %v5017 = vsel %vm4927, %v3511, %v5016
    %v5018 = vsel %vm4929, %v3520, %v5017
    %v5019 = vsel %vm4931, %v3529, %v5018
    %v5020 = vsel %vm4933, %v3538, %v5019
    %v5021 = vsel %vm4935, %v3547, %v5020
    %v5022 = vsel %vm4937, %v3556, %v5021
    %v5023 = vsel %vm4925, %v3574, %v3565
    %v5024 = vsel %vm4927, %v3583, %v5023
    %v5025 = vsel %vm4929, %v3592, %v5024
    %v5026 = vsel %vm4931, %v3601, %v5025
    %v5027 = vsel %vm4933, %v3610, %v5026
    %v5028 = vsel %vm4935, %v3619, %v5027
    %v5029 = vsel %vm4937, %v3628, %v5028
    %v5030 = vsel %vm4925, %v3646, %v3637
    %v5031 = vsel %vm4927, %v3655, %v5030
    %v5032 = vsel %vm4929, %v3664, %v5031
    %v5033 = vsel %vm4931, %v3673, %v5032
    %v5034 = vsel %vm4933, %v3682, %v5033
    %v5035 = vsel %vm4935, %v3691, %v5034
    %v5036 = vsel %vm4937, %v3700, %v5035
    %v5037 = vsel %vm4925, %v3718, %v3709
    %v5038 = vsel %vm4927, %v3727, %v5037
    %v5039 = vsel %vm4929, %v3736, %v5038
    %v5040 = vsel %vm4931, %v3745, %v5039
    %v5041 = vsel %vm4933, %v3754, %v5040
    %v5042 = vsel %vm4935, %v3763, %v5041
    %v5043 = vsel %vm4937, %v3772, %v5042
    %v5044 = vsel %vm4925, %v3790, %v3781
    %v5045 = vsel %vm4927, %v3799, %v5044
    %v5046 = vsel %vm4929, %v3808, %v5045
    %v5047 = vsel %vm4931, %v3817, %v5046
    %v5048 = vsel %vm4933, %v3826, %v5047
    %v5049 = vsel %vm4935, %v3835, %v5048
    %v5050 = vsel %vm4937, %v3844, %v5049
    %v5051 = vsel %vm4925, %v3862, %v3853
    %v5052 = vsel %vm4927, %v3871, %v5051
    %v5053 = vsel %vm4929, %v3880, %v5052
    %v5054 = vsel %vm4931, %v3889, %v5053
    %v5055 = vsel %vm4933, %v3898, %v5054
    %v5056 = vsel %vm4935, %v3907, %v5055
    %v5057 = vsel %vm4937, %v3916, %v5056
    %v5058 = vsel %vm4925, %v3934, %v3925
    %v5059 = vsel %vm4927, %v3943, %v5058
    %v5060 = vsel %vm4929, %v3952, %v5059
    %v5061 = vsel %vm4931, %v3961, %v5060
    %v5062 = vsel %vm4933, %v3970, %v5061
    %v5063 = vsel %vm4935, %v3979, %v5062
    %v5064 = vsel %vm4937, %v3988, %v5063
    %v5065 = vsel %vm4925, %v4006, %v3997
    %v5066 = vsel %vm4927, %v4015, %v5065
    %v5067 = vsel %vm4929, %v4024, %v5066
    %v5068 = vsel %vm4931, %v4033, %v5067
    %v5069 = vsel %vm4933, %v4042, %v5068
    %v5070 = vsel %vm4935, %v4051, %v5069
    %v5071 = vsel %vm4937, %v4060, %v5070
    %v5072 = vsel %vm4925, %v4078, %v4069
    %v5073 = vsel %vm4927, %v4087, %v5072
    %v5074 = vsel %vm4929, %v4096, %v5073
    %v5075 = vsel %vm4931, %v4105, %v5074
    %v5076 = vsel %vm4933, %v4114, %v5075
    %v5077 = vsel %vm4935, %v4123, %v5076
    %v5078 = vsel %vm4937, %v4132, %v5077
    %v5079 = vsel %vm4925, %v4150, %v4141
    %v5080 = vsel %vm4927, %v4159, %v5079
    %v5081 = vsel %vm4929, %v4168, %v5080
    %v5082 = vsel %vm4931, %v4177, %v5081
    %v5083 = vsel %vm4933, %v4186, %v5082
    %v5084 = vsel %vm4935, %v4195, %v5083
    %v5085 = vsel %vm4937, %v4204, %v5084
    %v5086 = vsel %vm4925, %v4222, %v4213
    %v5087 = vsel %vm4927, %v4231, %v5086
    %v5088 = vsel %vm4929, %v4240, %v5087
    %v5089 = vsel %vm4931, %v4249, %v5088
    %v5090 = vsel %vm4933, %v4258, %v5089
    %v5091 = vsel %vm4935, %v4267, %v5090
    %v5092 = vsel %vm4937, %v4276, %v5091
    %v5093 = vsel %vm4925, %v4294, %v4285
    %v5094 = vsel %vm4927, %v4303, %v5093
    %v5095 = vsel %vm4929, %v4312, %v5094
    %v5096 = vsel %vm4931, %v4321, %v5095
    %v5097 = vsel %vm4933, %v4330, %v5096
    %v5098 = vsel %vm4935, %v4339, %v5097
    %v5099 = vsel %vm4937, %v4348, %v5098
    %v5100 = vsel %vm4925, %v4366, %v4357
    %v5101 = vsel %vm4927, %v4375, %v5100
    %v5102 = vsel %vm4929, %v4384, %v5101
    %v5103 = vsel %vm4931, %v4393, %v5102
    %v5104 = vsel %vm4933, %v4402, %v5103
    %v5105 = vsel %vm4935, %v4411, %v5104
    %v5106 = vsel %vm4937, %v4420, %v5105
    %v5107 = vsel %vm4925, %v4438, %v4429
    %v5108 = vsel %vm4927, %v4447, %v5107
    %v5109 = vsel %vm4929, %v4456, %v5108
    %v5110 = vsel %vm4931, %v4465, %v5109
    %v5111 = vsel %vm4933, %v4474, %v5110
    %v5112 = vsel %vm4935, %v4483, %v5111
    %v5113 = vsel %vm4937, %v4492, %v5112
    %v5114 = vsel %vm4925, %v4510, %v4501
    %v5115 = vsel %vm4927, %v4519, %v5114
    %v5116 = vsel %vm4929, %v4528, %v5115
    %v5117 = vsel %vm4931, %v4537, %v5116
    %v5118 = vsel %vm4933, %v4546, %v5117
    %v5119 = vsel %vm4935, %v4555, %v5118
    %v5120 = vsel %vm4937, %v4564, %v5119
    %v5121 = vsel %vm4925, %v4582, %v4573
    %v5122 = vsel %vm4927, %v4591, %v5121
    %v5123 = vsel %vm4929, %v4600, %v5122
    %v5124 = vsel %vm4931, %v4609, %v5123
    %v5125 = vsel %vm4933, %v4618, %v5124
    %v5126 = vsel %vm4935, %v4627, %v5125
    %v5127 = vsel %vm4937, %v4636, %v5126
    %v5128 = vsel %vm4925, %v4654, %v4645
    %v5129 = vsel %vm4927, %v4663, %v5128
    %v5130 = vsel %vm4929, %v4672, %v5129
    %v5131 = vsel %vm4931, %v4681, %v5130
    %v5132 = vsel %vm4933, %v4690, %v5131
    %v5133 = vsel %vm4935, %v4699, %v5132
    %v5134 = vsel %vm4937, %v4708, %v5133
    %v5135 = vsel %vm4925, %v4726, %v4717
    %v5136 = vsel %vm4927, %v4735, %v5135
    %v5137 = vsel %vm4929, %v4744, %v5136
    %v5138 = vsel %vm4931, %v4753, %v5137
    %v5139 = vsel %vm4933, %v4762, %v5138
    %v5140 = vsel %vm4935, %v4771, %v5139
    %v5141 = vsel %vm4937, %v4780, %v5140
    %v5142 = vsel %vm4925, %v4798, %v4789
    %v5143 = vsel %vm4927, %v4807, %v5142
    %v5144 = vsel %vm4929, %v4816, %v5143
    %v5145 = vsel %vm4931, %v4825, %v5144
    %v5146 = vsel %vm4933, %v4834, %v5145
    %v5147 = vsel %vm4935, %v4843, %v5146
    %v5148 = vsel %vm4937, %v4852, %v5147
    %v5149 = vsel %vm4925, %v4870, %v4861
    %v5150 = vsel %vm4927, %v4879, %v5149
    %v5151 = vsel %vm4929, %v4888, %v5150
    %v5152 = vsel %vm4931, %v4897, %v5151
    %v5153 = vsel %vm4933, %v4906, %v5152
    %v5154 = vsel %vm4935, %v4915, %v5153
    %v5155 = vsel %vm4937, %v4924, %v5154
    %v5188 = vsel %vm568, %v4938, 0.0
    %5189 = vadd.xlane.f32.xlu0 %v5188
    %v5190 = vpop.xlane.xlu0 %5189
    %v5191 = vsel %vm568, %v4945, 0.0
    %5192 = vadd.xlane.f32.xlu0 %v5191
    %v5193 = vpop.xlane.xlu0 %5192
    %v5194 = vsel %vm568, %v4952, 0.0
    %5195 = vadd.xlane.f32.xlu0 %v5194
    %v5196 = vpop.xlane.xlu0 %5195
    %v5197 = vsel %vm568, %v4959, 0.0
    %5198 = vadd.xlane.f32.xlu0 %v5197
    %v5199 = vpop.xlane.xlu0 %5198
    %v5200 = vsel %vm568, %v4966, 0.0
    %5201 = vadd.xlane.f32.xlu0 %v5200
    %v5202 = vpop.xlane.xlu0 %5201
    %v5203 = vsel %vm568, %v4973, 0.0
    %5204 = vadd.xlane.f32.xlu0 %v5203
    %v5205 = vpop.xlane.xlu0 %5204
    %v5206 = vsel %vm568, %v4980, 0.0
    %5207 = vadd.xlane.f32.xlu0 %v5206
    %v5208 = vpop.xlane.xlu0 %5207
    %v5209 = vsel %vm568, %v4987, 0.0
    %5210 = vadd.xlane.f32.xlu0 %v5209
    %v5211 = vpop.xlane.xlu0 %5210
    %v5212 = vsel %vm568, %v4994, 0.0
    %5213 = vadd.xlane.f32.xlu0 %v5212
    %v5214 = vpop.xlane.xlu0 %5213
    %v5215 = vsel %vm568, %v5001, 0.0
    %5216 = vadd.xlane.f32.xlu0 %v5215
    %v5217 = vpop.xlane.xlu0 %5216
    %v5218 = vsel %vm568, %v5008, 0.0
    %5219 = vadd.xlane.f32.xlu0 %v5218
    %v5220 = vpop.xlane.xlu0 %5219
    %v5221 = vsel %vm568, %v5015, 0.0
    %5222 = vadd.xlane.f32.xlu0 %v5221
    %v5223 = vpop.xlane.xlu0 %5222
    %v5224 = vsel %vm568, %v5022, 0.0
    %5225 = vadd.xlane.f32.xlu0 %v5224
    %v5226 = vpop.xlane.xlu0 %5225
    %v5227 = vsel %vm568, %v5029, 0.0
    %5228 = vadd.xlane.f32.xlu0 %v5227
    %v5229 = vpop.xlane.xlu0 %5228
    %v5230 = vsel %vm568, %v5036, 0.0
    %5231 = vadd.xlane.f32.xlu0 %v5230
    %v5232 = vpop.xlane.xlu0 %5231
    %v5233 = vsel %vm568, %v5043, 0.0
    %5234 = vadd.xlane.f32.xlu0 %v5233
    %v5235 = vpop.xlane.xlu0 %5234
    %v5236 = vsel %vm568, %v5050, 0.0
    %5237 = vadd.xlane.f32.xlu0 %v5236
    %v5238 = vpop.xlane.xlu0 %5237
    %v5239 = vsel %vm568, %v5057, 0.0
    %5240 = vadd.xlane.f32.xlu0 %v5239
    %v5241 = vpop.xlane.xlu0 %5240
    %v5242 = vsel %vm568, %v5064, 0.0
    %5243 = vadd.xlane.f32.xlu0 %v5242
    %v5244 = vpop.xlane.xlu0 %5243
    %v5245 = vsel %vm568, %v5071, 0.0
    %5246 = vadd.xlane.f32.xlu0 %v5245
    %v5247 = vpop.xlane.xlu0 %5246
    %v5248 = vsel %vm568, %v5078, 0.0
    %5249 = vadd.xlane.f32.xlu0 %v5248
    %v5250 = vpop.xlane.xlu0 %5249
    %v5251 = vsel %vm568, %v5085, 0.0
    %5252 = vadd.xlane.f32.xlu0 %v5251
    %v5253 = vpop.xlane.xlu0 %5252
    %v5254 = vsel %vm568, %v5092, 0.0
    %5255 = vadd.xlane.f32.xlu0 %v5254
    %v5256 = vpop.xlane.xlu0 %5255
    %v5257 = vsel %vm568, %v5099, 0.0
    %5258 = vadd.xlane.f32.xlu0 %v5257
    %v5259 = vpop.xlane.xlu0 %5258
    %v5260 = vsel %vm568, %v5106, 0.0
    %5261 = vadd.xlane.f32.xlu0 %v5260
    %v5262 = vpop.xlane.xlu0 %5261
    %v5263 = vsel %vm568, %v5113, 0.0
    %5264 = vadd.xlane.f32.xlu0 %v5263
    %v5265 = vpop.xlane.xlu0 %5264
    %v5266 = vsel %vm568, %v5120, 0.0
    %5267 = vadd.xlane.f32.xlu0 %v5266
    %v5268 = vpop.xlane.xlu0 %5267
    %v5269 = vsel %vm568, %v5127, 0.0
    %5270 = vadd.xlane.f32.xlu0 %v5269
    %v5271 = vpop.xlane.xlu0 %5270
    %v5272 = vsel %vm568, %v5134, 0.0
    %5273 = vadd.xlane.f32.xlu0 %v5272
    %v5274 = vpop.xlane.xlu0 %5273
    %v5275 = vsel %vm568, %v5141, 0.0
    %5276 = vadd.xlane.f32.xlu0 %v5275
    %v5277 = vpop.xlane.xlu0 %5276
    %v5278 = vsel %vm568, %v5148, 0.0
    %5279 = vadd.xlane.f32.xlu0 %v5278
    %v5280 = vpop.xlane.xlu0 %5279
    %v5281 = vsel %vm568, %v5155, 0.0
    %5282 = vadd.xlane.f32.xlu0 %v5281
    %v5283 = vpop.xlane.xlu0 %5282
    %v5284 = vmul.f32 %v5190, 0.00390625
    %v5285 = vmul.f32 %v5193, 0.00390625
    %v5286 = vmul.f32 %v5196, 0.00390625
    %v5287 = vmul.f32 %v5199, 0.00390625
    %v5288 = vmul.f32 %v5202, 0.00390625
    %v5289 = vmul.f32 %v5205, 0.00390625
    %v5290 = vmul.f32 %v5208, 0.00390625
    %v5291 = vmul.f32 %v5211, 0.00390625
    %v5292 = vmul.f32 %v5214, 0.00390625
    %v5293 = vmul.f32 %v5217, 0.00390625
    %v5294 = vmul.f32 %v5220, 0.00390625
    %v5295 = vmul.f32 %v5223, 0.00390625
    %v5296 = vmul.f32 %v5226, 0.00390625
    %v5297 = vmul.f32 %v5229, 0.00390625
    %v5298 = vmul.f32 %v5232, 0.00390625
    %v5299 = vmul.f32 %v5235, 0.00390625
    %v5300 = vmul.f32 %v5238, 0.00390625
    %v5301 = vmul.f32 %v5241, 0.00390625
    %v5302 = vmul.f32 %v5244, 0.00390625
    %v5303 = vmul.f32 %v5247, 0.00390625
    %v5304 = vmul.f32 %v5250, 0.00390625
    %v5305 = vmul.f32 %v5253, 0.00390625
    %v5306 = vmul.f32 %v5256, 0.00390625
    %v5307 = vmul.f32 %v5259, 0.00390625
    %v5308 = vmul.f32 %v5262, 0.00390625
    %v5309 = vmul.f32 %v5265, 0.00390625
    %v5310 = vmul.f32 %v5268, 0.00390625
    %v5311 = vmul.f32 %v5271, 0.00390625
    %v5312 = vmul.f32 %v5274, 0.00390625
    %v5313 = vmul.f32 %v5277, 0.00390625
    %v5314 = vmul.f32 %v5280, 0.00390625
    %v5315 = vmul.f32 %v5283, 0.00390625
    %vm5316 = vcmask 179200
    %5317 = vst.msk [vmem:[#allocation2] sm:$0xff] %vm5316, 0.0
    %5318 = vst.msk [vmem:[#allocation2 + $0x8] sm:$0xff] %vm5316, 0.0
    %v5351 = vadd.s32 %v2618, 4294967293
    %v5352 = vlaneseq
    %v5353 = vshrl.u32 %v5352, 7
    %v5354 = vsub.s32 %v5351, %v5353
    %v5355 = vrot.slane %v5284, %v5354
    %v5356 = vadd.s32 %v2618, 4294967285
    %v5357 = vlaneseq
    %v5358 = vshrl.u32 %v5357, 7
    %v5359 = vsub.s32 %v5356, %v5358
    %v5360 = vrot.slane %v5285, %v5359
    %vm5361 = vcmask 154712
    %v5362 = vsel %vm5361, %v5360, %v5355
    %v5363 = vlaneseq
    %v5364 = vshrl.u32 %v5363, 7
    %v5365 = vsub.s32 %v5351, %v5364
    %v5366 = vrot.slane %v5286, %v5365
    %v5367 = vlaneseq
    %v5368 = vshrl.u32 %v5367, 7
    %v5369 = vsub.s32 %v5356, %v5368
    %v5370 = vrot.slane %v5287, %v5369
    %v5371 = vsel %vm5361, %v5370, %v5366
    %v5372 = vlaneseq
    %v5373 = vshrl.u32 %v5372, 7
    %v5374 = vsub.s32 %v5351, %v5373
    %v5375 = vrot.slane %v5288, %v5374
    %v5376 = vlaneseq
    %v5377 = vshrl.u32 %v5376, 7
    %v5378 = vsub.s32 %v5356, %v5377
    %v5379 = vrot.slane %v5289, %v5378
    %v5380 = vsel %vm5361, %v5379, %v5375
    %v5381 = vlaneseq
    %v5382 = vshrl.u32 %v5381, 7
    %v5383 = vsub.s32 %v5351, %v5382
    %v5384 = vrot.slane %v5290, %v5383
    %v5385 = vlaneseq
    %v5386 = vshrl.u32 %v5385, 7
    %v5387 = vsub.s32 %v5356, %v5386
    %v5388 = vrot.slane %v5291, %v5387
    %v5389 = vsel %vm5361, %v5388, %v5384
    %v5390 = vlaneseq
    %v5391 = vshrl.u32 %v5390, 7
    %v5392 = vsub.s32 %v5351, %v5391
    %v5393 = vrot.slane %v5292, %v5392
    %v5394 = vlaneseq
    %v5395 = vshrl.u32 %v5394, 7
    %v5396 = vsub.s32 %v5356, %v5395
    %v5397 = vrot.slane %v5293, %v5396
    %v5398 = vsel %vm5361, %v5397, %v5393
    %v5399 = vlaneseq
    %v5400 = vshrl.u32 %v5399, 7
    %v5401 = vsub.s32 %v5351, %v5400
    %v5402 = vrot.slane %v5294, %v5401
    %v5403 = vlaneseq
    %v5404 = vshrl.u32 %v5403, 7
    %v5405 = vsub.s32 %v5356, %v5404
    %v5406 = vrot.slane %v5295, %v5405
    %v5407 = vsel %vm5361, %v5406, %v5402
    %v5408 = vlaneseq
    %v5409 = vshrl.u32 %v5408, 7
    %v5410 = vsub.s32 %v5351, %v5409
    %v5411 = vrot.slane %v5296, %v5410
    %v5412 = vlaneseq
    %v5413 = vshrl.u32 %v5412, 7
    %v5414 = vsub.s32 %v5356, %v5413
    %v5415 = vrot.slane %v5297, %v5414
    %v5416 = vsel %vm5361, %v5415, %v5411
    %v5417 = vlaneseq
    %v5418 = vshrl.u32 %v5417, 7
    %v5419 = vsub.s32 %v5351, %v5418
    %v5420 = vrot.slane %v5298, %v5419
    %v5421 = vlaneseq
    %v5422 = vshrl.u32 %v5421, 7
    %v5423 = vsub.s32 %v5356, %v5422
    %v5424 = vrot.slane %v5299, %v5423
    %v5425 = vsel %vm5361, %v5424, %v5420
    %v5426 = vlaneseq
    %v5427 = vshrl.u32 %v5426, 7
    %v5428 = vsub.s32 %v5351, %v5427
    %v5429 = vrot.slane %v5300, %v5428
    %v5430 = vlaneseq
    %v5431 = vshrl.u32 %v5430, 7
    %v5432 = vsub.s32 %v5356, %v5431
    %v5433 = vrot.slane %v5301, %v5432
    %v5434 = vsel %vm5361, %v5433, %v5429
    %v5435 = vlaneseq
    %v5436 = vshrl.u32 %v5435, 7
    %v5437 = vsub.s32 %v5351, %v5436
    %v5438 = vrot.slane %v5302, %v5437
    %v5439 = vlaneseq
    %v5440 = vshrl.u32 %v5439, 7
    %v5441 = vsub.s32 %v5356, %v5440
    %v5442 = vrot.slane %v5303, %v5441
    %v5443 = vsel %vm5361, %v5442, %v5438
    %v5444 = vlaneseq
    %v5445 = vshrl.u32 %v5444, 7
    %v5446 = vsub.s32 %v5351, %v5445
    %v5447 = vrot.slane %v5304, %v5446
    %v5448 = vlaneseq
    %v5449 = vshrl.u32 %v5448, 7
    %v5450 = vsub.s32 %v5356, %v5449
    %v5451 = vrot.slane %v5305, %v5450
    %v5452 = vsel %vm5361, %v5451, %v5447
    %v5453 = vlaneseq
    %v5454 = vshrl.u32 %v5453, 7
    %v5455 = vsub.s32 %v5351, %v5454
    %v5456 = vrot.slane %v5306, %v5455
    %v5457 = vlaneseq
    %v5458 = vshrl.u32 %v5457, 7
    %v5459 = vsub.s32 %v5356, %v5458
    %v5460 = vrot.slane %v5307, %v5459
    %v5461 = vsel %vm5361, %v5460, %v5456
    %v5462 = vlaneseq
    %v5463 = vshrl.u32 %v5462, 7
    %v5464 = vsub.s32 %v5351, %v5463
    %v5465 = vrot.slane %v5308, %v5464
    %v5466 = vlaneseq
    %v5467 = vshrl.u32 %v5466, 7
    %v5468 = vsub.s32 %v5356, %v5467
    %v5469 = vrot.slane %v5309, %v5468
    %v5470 = vsel %vm5361, %v5469, %v5465
    %v5471 = vlaneseq
    %v5472 = vshrl.u32 %v5471, 7
    %v5473 = vsub.s32 %v5351, %v5472
    %v5474 = vrot.slane %v5310, %v5473
    %v5475 = vlaneseq
    %v5476 = vshrl.u32 %v5475, 7
    %v5477 = vsub.s32 %v5356, %v5476
    %v5478 = vrot.slane %v5311, %v5477
    %v5479 = vsel %vm5361, %v5478, %v5474
    %v5480 = vlaneseq
    %v5481 = vshrl.u32 %v5480, 7
    %v5482 = vsub.s32 %v5351, %v5481
    %v5483 = vrot.slane %v5312, %v5482
    %v5484 = vlaneseq
    %v5485 = vshrl.u32 %v5484, 7
    %v5486 = vsub.s32 %v5356, %v5485
    %v5487 = vrot.slane %v5313, %v5486
    %v5488 = vsel %vm5361, %v5487, %v5483
    %v5489 = vlaneseq
    %v5490 = vshrl.u32 %v5489, 7
    %v5491 = vsub.s32 %v5351, %v5490
    %v5492 = vrot.slane %v5314, %v5491
    %v5493 = vlaneseq
    %v5494 = vshrl.u32 %v5493, 7
    %v5495 = vsub.s32 %v5356, %v5494
    %v5496 = vrot.slane %v5315, %v5495
    %v5497 = vsel %vm5361, %v5496, %v5492
    %v5498 = vsel %vm4925, %v5371, %v5362
    %v5499 = vsel %vm4927, %v5380, %v5498
    %v5500 = vsel %vm4929, %v5389, %v5499
    %v5501 = vsel %vm4931, %v5398, %v5500
    %v5502 = vsel %vm4933, %v5407, %v5501
    %v5503 = vsel %vm4935, %v5416, %v5502
    %v5504 = vsel %vm4937, %v5425, %v5503
    %v5505 = vsel %vm4925, %v5443, %v5434
    %v5506 = vsel %vm4927, %v5452, %v5505
    %v5507 = vsel %vm4929, %v5461, %v5506
    %v5508 = vsel %vm4931, %v5470, %v5507
    %v5509 = vsel %vm4933, %v5479, %v5508
    %v5510 = vsel %vm4935, %v5488, %v5509
    %v5511 = vsel %vm4937, %v5497, %v5510
    %vm5514 = vcmask 154648
    %5515 = vst.msk [vmem:[#allocation2] sm:$0xff] %vm5514, %v5504
    %5516 = vst.msk [vmem:[#allocation2 + $0x8] sm:$0xff] %vm5514, %v5511
    %v5517 = vld [vmem:[#allocation2] sm:$0xff]
    %v5518 = vld [vmem:[#allocation2 + $0x8] sm:$0xff]
    %v5519 = vld [vmem:[#allocation6] sm:$0xff]
    %v5520 = vld [vmem:[#allocation6 + $0x8] sm:$0xff]
    %5522 = vset.pattern.permute.xlu0 0
    %5523 = vperm.xlu0 %5522, %v5519
    %v5524 = vpop.permute.xlu0 %5523
    %5527 = vset.pattern.permute.xlu0 0
    %5528 = vperm.xlu0 %5527, %v5520
    %v5529 = vpop.permute.xlu0 %5528
    %v5531 = vmul.f32 %v5524, %v5517
    %v5532 = vmul.f32 %v5529, %v5518
    %v5533 = vadd.f32 %v5531, 0.0
    %v5534 = vadd.f32 %v5532, 0.0
    %5535 = vset.pattern.permute.xlu0 1
    %5536 = vperm.xlu0 %5535, %v5519
    %v5537 = vpop.permute.xlu0 %5536
    %5539 = vset.pattern.permute.xlu0 1
    %5540 = vperm.xlu0 %5539, %v5520
    %v5541 = vpop.permute.xlu0 %5540
    %v5543 = vmul.f32 %v5537, %v5517
    %v5544 = vmul.f32 %v5541, %v5518
    %5547 = vrot.lane.b32.xlu0 %v5543, 127
    %v5548 = vpop.permute.xlu0 %5547
    %5549 = vrot.lane.b32.xlu0 %v5544, 127
    %v5550 = vpop.permute.xlu0 %5549
    %v5553 = vadd.f32 %v5533, %v5548
    %v5554 = vadd.f32 %v5534, %v5550
    %5555 = vset.pattern.permute.xlu0 2
    %5556 = vperm.xlu0 %5555, %v5519
    %v5557 = vpop.permute.xlu0 %5556
    %5559 = vset.pattern.permute.xlu0 2
    %5560 = vperm.xlu0 %5559, %v5520
    %v5561 = vpop.permute.xlu0 %5560
    %v5563 = vmul.f32 %v5557, %v5517
    %v5564 = vmul.f32 %v5561, %v5518
    %5567 = vrot.lane.b32.xlu0 %v5563, 126
    %v5568 = vpop.permute.xlu0 %5567
    %5569 = vrot.lane.b32.xlu0 %v5564, 126
    %v5570 = vpop.permute.xlu0 %5569
    %v5573 = vadd.f32 %v5553, %v5568
    %v5574 = vadd.f32 %v5554, %v5570
    %5575 = vset.pattern.permute.xlu0 3
    %5576 = vperm.xlu0 %5575, %v5519
    %v5577 = vpop.permute.xlu0 %5576
    %5579 = vset.pattern.permute.xlu0 3
    %5580 = vperm.xlu0 %5579, %v5520
    %v5581 = vpop.permute.xlu0 %5580
    %v5583 = vmul.f32 %v5577, %v5517
    %v5584 = vmul.f32 %v5581, %v5518
    %5587 = vrot.lane.b32.xlu0 %v5583, 125
    %v5588 = vpop.permute.xlu0 %5587
    %5589 = vrot.lane.b32.xlu0 %v5584, 125
    %v5590 = vpop.permute.xlu0 %5589
    %v5593 = vadd.f32 %v5573, %v5588
    %v5594 = vadd.f32 %v5574, %v5590
    %5595 = vset.pattern.permute.xlu0 4
    %5596 = vperm.xlu0 %5595, %v5519
    %v5597 = vpop.permute.xlu0 %5596
    %5599 = vset.pattern.permute.xlu0 4
    %5600 = vperm.xlu0 %5599, %v5520
    %v5601 = vpop.permute.xlu0 %5600
    %v5603 = vmul.f32 %v5597, %v5517
    %v5604 = vmul.f32 %v5601, %v5518
    %5607 = vrot.lane.b32.xlu0 %v5603, 124
    %v5608 = vpop.permute.xlu0 %5607
    %5609 = vrot.lane.b32.xlu0 %v5604, 124
    %v5610 = vpop.permute.xlu0 %5609
    %v5613 = vadd.f32 %v5593, %v5608
    %v5614 = vadd.f32 %v5594, %v5610
    %5615 = vset.pattern.permute.xlu0 5
    %5616 = vperm.xlu0 %5615, %v5519
    %v5617 = vpop.permute.xlu0 %5616
    %5619 = vset.pattern.permute.xlu0 5
    %5620 = vperm.xlu0 %5619, %v5520
    %v5621 = vpop.permute.xlu0 %5620
    %v5623 = vmul.f32 %v5617, %v5517
    %v5624 = vmul.f32 %v5621, %v5518
    %5627 = vrot.lane.b32.xlu0 %v5623, 123
    %v5628 = vpop.permute.xlu0 %5627
    %5629 = vrot.lane.b32.xlu0 %v5624, 123
    %v5630 = vpop.permute.xlu0 %5629
    %v5633 = vadd.f32 %v5613, %v5628
    %v5634 = vadd.f32 %v5614, %v5630
    %5635 = vset.pattern.permute.xlu0 6
    %5636 = vperm.xlu0 %5635, %v5519
    %v5637 = vpop.permute.xlu0 %5636
    %5639 = vset.pattern.permute.xlu0 6
    %5640 = vperm.xlu0 %5639, %v5520
    %v5641 = vpop.permute.xlu0 %5640
    %v5643 = vmul.f32 %v5637, %v5517
    %v5644 = vmul.f32 %v5641, %v5518
    %5647 = vrot.lane.b32.xlu0 %v5643, 122
    %v5648 = vpop.permute.xlu0 %5647
    %5649 = vrot.lane.b32.xlu0 %v5644, 122
    %v5650 = vpop.permute.xlu0 %5649
    %v5653 = vadd.f32 %v5633, %v5648
    %v5654 = vadd.f32 %v5634, %v5650
    %v5655 = vld [vmem:[#allocation8] sm:$0xff]
    %v5656 = vld [vmem:[#allocation8 + $0x8] sm:$0xff]
    %5658 = vset.pattern.permute.xlu0 0
    %5659 = vperm.xlu0 %5658, %v5655
    %v5660 = vpop.permute.xlu0 %5659
    %5663 = vset.pattern.permute.xlu0 0
    %5664 = vperm.xlu0 %5663, %v5656
    %v5665 = vpop.permute.xlu0 %5664
    %v5667 = vadd.f32 %v5653, %v5660
    %v5668 = vadd.f32 %v5654, %v5665
    %v5669 = vxor.u32 %v5667, 2147483648
    %v5670 = vxor.u32 %v5668, 2147483648
    %v5671 = vmul.f32 %v5669, 1.442695
    %v5672 = vpow.pop %v5671
    %v5673 = vmul.f32 %v5670, 1.442695
    %v5674 = vpow.pop %v5673
    %v5675 = vadd.f32 %v5672, 1.0
    %v5676 = vadd.f32 %v5674, 1.0
    %v5677 = vrcp.pop %v5675
    %v5678 = vmul.f32 1.0, %v5677
    %v5679 = vrcp.pop %v5676
    %v5680 = vmul.f32 1.0, %v5679
    %v5681 = vmul.f32 %v56, %v5678
    %v5682 = vmul.f32 %v57, %v5680
    %v5683 = vmul.f32 %v58, %v5678
    %v5684 = vmul.f32 %v59, %v5680
    %v5685 = vmul.f32 %v60, %v5678
    %v5686 = vmul.f32 %v61, %v5680
    %v5687 = vmul.f32 %v62, %v5678
    %v5688 = vmul.f32 %v63, %v5680
    %v5689 = vmul.f32 %v64, %v5678
    %v5690 = vmul.f32 %v65, %v5680
    %v5691 = vmul.f32 %v66, %v5678
    %v5692 = vmul.f32 %v67, %v5680
    %v5693 = vmul.f32 %v68, %v5678
    %v5694 = vmul.f32 %v69, %v5680
    %v5695 = vmul.f32 %v70, %v5678
    %v5696 = vmul.f32 %v71, %v5680
    %v5697 = vmul.f32 %v72, %v5678
    %v5698 = vmul.f32 %v73, %v5680
    %v5699 = vmul.f32 %v74, %v5678
    %v5700 = vmul.f32 %v75, %v5680
    %v5701 = vmul.f32 %v76, %v5678
    %v5702 = vmul.f32 %v77, %v5680
    %v5703 = vmul.f32 %v78, %v5678
    %v5704 = vmul.f32 %v79, %v5680
    %v5705 = vmul.f32 %v80, %v5678
    %v5706 = vmul.f32 %v81, %v5680
    %v5707 = vmul.f32 %v82, %v5678
    %v5708 = vmul.f32 %v83, %v5680
    %v5709 = vmul.f32 %v84, %v5678
    %v5710 = vmul.f32 %v85, %v5680
    %v5711 = vmul.f32 %v86, %v5678
    %v5712 = vmul.f32 %v87, %v5680
    %v5713 = vmul.f32 %v88, %v5678
    %v5714 = vmul.f32 %v89, %v5680
    %v5715 = vmul.f32 %v90, %v5678
    %v5716 = vmul.f32 %v91, %v5680
    %v5717 = vmul.f32 %v92, %v5678
    %v5718 = vmul.f32 %v93, %v5680
    %v5719 = vmul.f32 %v94, %v5678
    %v5720 = vmul.f32 %v95, %v5680
    %v5721 = vmul.f32 %v96, %v5678
    %v5722 = vmul.f32 %v97, %v5680
    %v5723 = vmul.f32 %v98, %v5678
    %v5724 = vmul.f32 %v99, %v5680
    %v5725 = vmul.f32 %v100, %v5678
    %v5726 = vmul.f32 %v101, %v5680
    %v5727 = vmul.f32 %v102, %v5678
    %v5728 = vmul.f32 %v103, %v5680
    %v5729 = vmul.f32 %v104, %v5678
    %v5730 = vmul.f32 %v105, %v5680
    %v5731 = vmul.f32 %v106, %v5678
    %v5732 = vmul.f32 %v107, %v5680
    %v5733 = vmul.f32 %v108, %v5678
    %v5734 = vmul.f32 %v109, %v5680
    %v5735 = vmul.f32 %v110, %v5678
    %v5736 = vmul.f32 %v111, %v5680
    %v5737 = vmul.f32 %v112, %v5678
    %v5738 = vmul.f32 %v113, %v5680
    %v5739 = vmul.f32 %v114, %v5678
    %v5740 = vmul.f32 %v115, %v5680
    %v5741 = vmul.f32 %v116, %v5678
    %v5742 = vmul.f32 %v117, %v5680
    %v5743 = vmul.f32 %v118, %v5678
    %v5744 = vmul.f32 %v119, %v5680
    %v5745 = vmul.f32 %v120, %v5678
    %v5746 = vmul.f32 %v121, %v5680
    %v5747 = vmul.f32 %v122, %v5678
    %v5748 = vmul.f32 %v123, %v5680
    %v5749 = vmul.f32 %v124, %v5678
    %v5750 = vmul.f32 %v125, %v5680
    %v5751 = vmul.f32 %v126, %v5678
    %v5752 = vmul.f32 %v127, %v5680
    %v5753 = vmul.f32 %v128, %v5678
    %v5754 = vmul.f32 %v129, %v5680
    %v5755 = vmul.f32 %v130, %v5678
    %v5756 = vmul.f32 %v131, %v5680
    %v5757 = vmul.f32 %v132, %v5678
    %v5758 = vmul.f32 %v133, %v5680
    %v5759 = vmul.f32 %v134, %v5678
    %v5760 = vmul.f32 %v135, %v5680
    %v5761 = vmul.f32 %v136, %v5678
    %v5762 = vmul.f32 %v137, %v5680
    %v5763 = vmul.f32 %v138, %v5678
    %v5764 = vmul.f32 %v139, %v5680
    %v5765 = vmul.f32 %v140, %v5678
    %v5766 = vmul.f32 %v141, %v5680
    %v5767 = vmul.f32 %v142, %v5678
    %v5768 = vmul.f32 %v143, %v5680
    %v5769 = vmul.f32 %v144, %v5678
    %v5770 = vmul.f32 %v145, %v5680
    %v5771 = vmul.f32 %v146, %v5678
    %v5772 = vmul.f32 %v147, %v5680
    %v5773 = vmul.f32 %v148, %v5678
    %v5774 = vmul.f32 %v149, %v5680
    %v5775 = vmul.f32 %v150, %v5678
    %v5776 = vmul.f32 %v151, %v5680
    %v5777 = vmul.f32 %v152, %v5678
    %v5778 = vmul.f32 %v153, %v5680
    %v5779 = vmul.f32 %v154, %v5678
    %v5780 = vmul.f32 %v155, %v5680
    %v5781 = vmul.f32 %v156, %v5678
    %v5782 = vmul.f32 %v157, %v5680
    %v5783 = vmul.f32 %v158, %v5678
    %v5784 = vmul.f32 %v159, %v5680
    %v5785 = vmul.f32 %v160, %v5678
    %v5786 = vmul.f32 %v161, %v5680
    %v5787 = vmul.f32 %v162, %v5678
    %v5788 = vmul.f32 %v163, %v5680
    %v5789 = vmul.f32 %v164, %v5678
    %v5790 = vmul.f32 %v165, %v5680
    %v5791 = vmul.f32 %v166, %v5678
    %v5792 = vmul.f32 %v167, %v5680
    %v5793 = vmul.f32 %v168, %v5678
    %v5794 = vmul.f32 %v169, %v5680
    %v5795 = vmul.f32 %v170, %v5678
    %v5796 = vmul.f32 %v171, %v5680
    %v5797 = vmul.f32 %v172, %v5678
    %v5798 = vmul.f32 %v173, %v5680
    %v5799 = vmul.f32 %v174, %v5678
    %v5800 = vmul.f32 %v175, %v5680
    %v5801 = vmul.f32 %v176, %v5678
    %v5802 = vmul.f32 %v177, %v5680
    %v5803 = vmul.f32 %v178, %v5678
    %v5804 = vmul.f32 %v179, %v5680
    %v5805 = vmul.f32 %v180, %v5678
    %v5806 = vmul.f32 %v181, %v5680
    %v5807 = vmul.f32 %v182, %v5678
    %v5808 = vmul.f32 %v183, %v5680
    %v5809 = vmul.f32 %v184, %v5678
    %v5810 = vmul.f32 %v185, %v5680
    %v5811 = vmul.f32 %v186, %v5678
    %v5812 = vmul.f32 %v187, %v5680
    %v5813 = vmul.f32 %v188, %v5678
    %v5814 = vmul.f32 %v189, %v5680
    %v5815 = vmul.f32 %v190, %v5678
    %v5816 = vmul.f32 %v191, %v5680
    %v5817 = vmul.f32 %v192, %v5678
    %v5818 = vmul.f32 %v193, %v5680
    %v5819 = vmul.f32 %v194, %v5678
    %v5820 = vmul.f32 %v195, %v5680
    %v5821 = vmul.f32 %v196, %v5678
    %v5822 = vmul.f32 %v197, %v5680
    %v5823 = vmul.f32 %v198, %v5678
    %v5824 = vmul.f32 %v199, %v5680
    %v5825 = vmul.f32 %v200, %v5678
    %v5826 = vmul.f32 %v201, %v5680
    %v5827 = vmul.f32 %v202, %v5678
    %v5828 = vmul.f32 %v203, %v5680
    %v5829 = vmul.f32 %v204, %v5678
    %v5830 = vmul.f32 %v205, %v5680
    %v5831 = vmul.f32 %v206, %v5678
    %v5832 = vmul.f32 %v207, %v5680
    %v5833 = vmul.f32 %v208, %v5678
    %v5834 = vmul.f32 %v209, %v5680
    %v5835 = vmul.f32 %v210, %v5678
    %v5836 = vmul.f32 %v211, %v5680
    %v5837 = vmul.f32 %v212, %v5678
    %v5838 = vmul.f32 %v213, %v5680
    %v5839 = vmul.f32 %v214, %v5678
    %v5840 = vmul.f32 %v215, %v5680
    %v5841 = vmul.f32 %v216, %v5678
    %v5842 = vmul.f32 %v217, %v5680
    %v5843 = vmul.f32 %v218, %v5678
    %v5844 = vmul.f32 %v219, %v5680
    %v5845 = vmul.f32 %v220, %v5678
    %v5846 = vmul.f32 %v221, %v5680
    %v5847 = vmul.f32 %v222, %v5678
    %v5848 = vmul.f32 %v223, %v5680
    %v5849 = vmul.f32 %v224, %v5678
    %v5850 = vmul.f32 %v225, %v5680
    %v5851 = vmul.f32 %v226, %v5678
    %v5852 = vmul.f32 %v227, %v5680
    %v5853 = vmul.f32 %v228, %v5678
    %v5854 = vmul.f32 %v229, %v5680
    %v5855 = vmul.f32 %v230, %v5678
    %v5856 = vmul.f32 %v231, %v5680
    %v5857 = vmul.f32 %v232, %v5678
    %v5858 = vmul.f32 %v233, %v5680
    %v5859 = vmul.f32 %v234, %v5678
    %v5860 = vmul.f32 %v235, %v5680
    %v5861 = vmul.f32 %v236, %v5678
    %v5862 = vmul.f32 %v237, %v5680
    %v5863 = vmul.f32 %v238, %v5678
    %v5864 = vmul.f32 %v239, %v5680
    %v5865 = vmul.f32 %v240, %v5678
    %v5866 = vmul.f32 %v241, %v5680
    %v5867 = vmul.f32 %v242, %v5678
    %v5868 = vmul.f32 %v243, %v5680
    %v5869 = vmul.f32 %v244, %v5678
    %v5870 = vmul.f32 %v245, %v5680
    %v5871 = vmul.f32 %v246, %v5678
    %v5872 = vmul.f32 %v247, %v5680
    %v5873 = vmul.f32 %v248, %v5678
    %v5874 = vmul.f32 %v249, %v5680
    %v5875 = vmul.f32 %v250, %v5678
    %v5876 = vmul.f32 %v251, %v5680
    %v5877 = vmul.f32 %v252, %v5678
    %v5878 = vmul.f32 %v253, %v5680
    %v5879 = vmul.f32 %v254, %v5678
    %v5880 = vmul.f32 %v255, %v5680
    %v5881 = vmul.f32 %v256, %v5678
    %v5882 = vmul.f32 %v257, %v5680
    %v5883 = vmul.f32 %v258, %v5678
    %v5884 = vmul.f32 %v259, %v5680
    %v5885 = vmul.f32 %v260, %v5678
    %v5886 = vmul.f32 %v261, %v5680
    %v5887 = vmul.f32 %v262, %v5678
    %v5888 = vmul.f32 %v263, %v5680
    %v5889 = vmul.f32 %v264, %v5678
    %v5890 = vmul.f32 %v265, %v5680
    %v5891 = vmul.f32 %v266, %v5678
    %v5892 = vmul.f32 %v267, %v5680
    %v5893 = vmul.f32 %v268, %v5678
    %v5894 = vmul.f32 %v269, %v5680
    %v5895 = vmul.f32 %v270, %v5678
    %v5896 = vmul.f32 %v271, %v5680
    %v5897 = vmul.f32 %v272, %v5678
    %v5898 = vmul.f32 %v273, %v5680
    %v5899 = vmul.f32 %v274, %v5678
    %v5900 = vmul.f32 %v275, %v5680
    %v5901 = vmul.f32 %v276, %v5678
    %v5902 = vmul.f32 %v277, %v5680
    %v5903 = vmul.f32 %v278, %v5678
    %v5904 = vmul.f32 %v279, %v5680
    %v5905 = vmul.f32 %v280, %v5678
    %v5906 = vmul.f32 %v281, %v5680
    %v5907 = vmul.f32 %v282, %v5678
    %v5908 = vmul.f32 %v283, %v5680
    %v5909 = vmul.f32 %v284, %v5678
    %v5910 = vmul.f32 %v285, %v5680
    %v5911 = vmul.f32 %v286, %v5678
    %v5912 = vmul.f32 %v287, %v5680
    %v5913 = vmul.f32 %v288, %v5678
    %v5914 = vmul.f32 %v289, %v5680
    %v5915 = vmul.f32 %v290, %v5678
    %v5916 = vmul.f32 %v291, %v5680
    %v5917 = vmul.f32 %v292, %v5678
    %v5918 = vmul.f32 %v293, %v5680
    %v5919 = vmul.f32 %v294, %v5678
    %v5920 = vmul.f32 %v295, %v5680
    %v5921 = vmul.f32 %v296, %v5678
    %v5922 = vmul.f32 %v297, %v5680
    %v5923 = vmul.f32 %v298, %v5678
    %v5924 = vmul.f32 %v299, %v5680
    %v5925 = vmul.f32 %v300, %v5678
    %v5926 = vmul.f32 %v301, %v5680
    %v5927 = vmul.f32 %v302, %v5678
    %v5928 = vmul.f32 %v303, %v5680
    %v5929 = vmul.f32 %v304, %v5678
    %v5930 = vmul.f32 %v305, %v5680
    %v5931 = vmul.f32 %v306, %v5678
    %v5932 = vmul.f32 %v307, %v5680
    %v5933 = vmul.f32 %v308, %v5678
    %v5934 = vmul.f32 %v309, %v5680
    %v5935 = vmul.f32 %v310, %v5678
    %v5936 = vmul.f32 %v311, %v5680
    %v5937 = vmul.f32 %v312, %v5678
    %v5938 = vmul.f32 %v313, %v5680
    %v5939 = vmul.f32 %v314, %v5678
    %v5940 = vmul.f32 %v315, %v5680
    %v5941 = vmul.f32 %v316, %v5678
    %v5942 = vmul.f32 %v317, %v5680
    %v5943 = vmul.f32 %v318, %v5678
    %v5944 = vmul.f32 %v319, %v5680
    %v5945 = vmul.f32 %v320, %v5678
    %v5946 = vmul.f32 %v321, %v5680
    %v5947 = vmul.f32 %v322, %v5678
    %v5948 = vmul.f32 %v323, %v5680
    %v5949 = vmul.f32 %v324, %v5678
    %v5950 = vmul.f32 %v325, %v5680
    %v5951 = vmul.f32 %v326, %v5678
    %v5952 = vmul.f32 %v327, %v5680
    %v5953 = vmul.f32 %v328, %v5678
    %v5954 = vmul.f32 %v329, %v5680
    %v5955 = vmul.f32 %v330, %v5678
    %v5956 = vmul.f32 %v331, %v5680
    %v5957 = vmul.f32 %v332, %v5678
    %v5958 = vmul.f32 %v333, %v5680
    %v5959 = vmul.f32 %v334, %v5678
    %v5960 = vmul.f32 %v335, %v5680
    %v5961 = vmul.f32 %v336, %v5678
    %v5962 = vmul.f32 %v337, %v5680
    %v5963 = vmul.f32 %v338, %v5678
    %v5964 = vmul.f32 %v339, %v5680
    %v5965 = vmul.f32 %v340, %v5678
    %v5966 = vmul.f32 %v341, %v5680
    %v5967 = vmul.f32 %v342, %v5678
    %v5968 = vmul.f32 %v343, %v5680
    %v5969 = vmul.f32 %v344, %v5678
    %v5970 = vmul.f32 %v345, %v5680
    %v5971 = vmul.f32 %v346, %v5678
    %v5972 = vmul.f32 %v347, %v5680
    %v5973 = vmul.f32 %v348, %v5678
    %v5974 = vmul.f32 %v349, %v5680
    %v5975 = vmul.f32 %v350, %v5678
    %v5976 = vmul.f32 %v351, %v5680
    %v5977 = vmul.f32 %v352, %v5678
    %v5978 = vmul.f32 %v353, %v5680
    %v5979 = vmul.f32 %v354, %v5678
    %v5980 = vmul.f32 %v355, %v5680
    %v5981 = vmul.f32 %v356, %v5678
    %v5982 = vmul.f32 %v357, %v5680
    %v5983 = vmul.f32 %v358, %v5678
    %v5984 = vmul.f32 %v359, %v5680
    %v5985 = vmul.f32 %v360, %v5678
    %v5986 = vmul.f32 %v361, %v5680
    %v5987 = vmul.f32 %v362, %v5678
    %v5988 = vmul.f32 %v363, %v5680
    %v5989 = vmul.f32 %v364, %v5678
    %v5990 = vmul.f32 %v365, %v5680
    %v5991 = vmul.f32 %v366, %v5678
    %v5992 = vmul.f32 %v367, %v5680
    %v5993 = vmul.f32 %v368, %v5678
    %v5994 = vmul.f32 %v369, %v5680
    %v5995 = vmul.f32 %v370, %v5678
    %v5996 = vmul.f32 %v371, %v5680
    %v5997 = vmul.f32 %v372, %v5678
    %v5998 = vmul.f32 %v373, %v5680
    %v5999 = vmul.f32 %v374, %v5678
    %v6000 = vmul.f32 %v375, %v5680
    %v6001 = vmul.f32 %v376, %v5678
    %v6002 = vmul.f32 %v377, %v5680
    %v6003 = vmul.f32 %v378, %v5678
    %v6004 = vmul.f32 %v379, %v5680
    %v6005 = vmul.f32 %v380, %v5678
    %v6006 = vmul.f32 %v381, %v5680
    %v6007 = vmul.f32 %v382, %v5678
    %v6008 = vmul.f32 %v383, %v5680
    %v6009 = vmul.f32 %v384, %v5678
    %v6010 = vmul.f32 %v385, %v5680
    %v6011 = vmul.f32 %v386, %v5678
    %v6012 = vmul.f32 %v387, %v5680
    %v6013 = vmul.f32 %v388, %v5678
    %v6014 = vmul.f32 %v389, %v5680
    %v6015 = vmul.f32 %v390, %v5678
    %v6016 = vmul.f32 %v391, %v5680
    %v6017 = vmul.f32 %v392, %v5678
    %v6018 = vmul.f32 %v393, %v5680
    %v6019 = vmul.f32 %v394, %v5678
    %v6020 = vmul.f32 %v395, %v5680
    %v6021 = vmul.f32 %v396, %v5678
    %v6022 = vmul.f32 %v397, %v5680
    %v6023 = vmul.f32 %v398, %v5678
    %v6024 = vmul.f32 %v399, %v5680
    %v6025 = vmul.f32 %v400, %v5678
    %v6026 = vmul.f32 %v401, %v5680
    %v6027 = vmul.f32 %v402, %v5678
    %v6028 = vmul.f32 %v403, %v5680
    %v6029 = vmul.f32 %v404, %v5678
    %v6030 = vmul.f32 %v405, %v5680
    %v6031 = vmul.f32 %v406, %v5678
    %v6032 = vmul.f32 %v407, %v5680
    %v6033 = vmul.f32 %v408, %v5678
    %v6034 = vmul.f32 %v409, %v5680
    %v6035 = vmul.f32 %v410, %v5678
    %v6036 = vmul.f32 %v411, %v5680
    %v6037 = vmul.f32 %v412, %v5678
    %v6038 = vmul.f32 %v413, %v5680
    %v6039 = vmul.f32 %v414, %v5678
    %v6040 = vmul.f32 %v415, %v5680
    %v6041 = vmul.f32 %v416, %v5678
    %v6042 = vmul.f32 %v417, %v5680
    %v6043 = vmul.f32 %v418, %v5678
    %v6044 = vmul.f32 %v419, %v5680
    %v6045 = vmul.f32 %v420, %v5678
    %v6046 = vmul.f32 %v421, %v5680
    %v6047 = vmul.f32 %v422, %v5678
    %v6048 = vmul.f32 %v423, %v5680
    %v6049 = vmul.f32 %v424, %v5678
    %v6050 = vmul.f32 %v425, %v5680
    %v6051 = vmul.f32 %v426, %v5678
    %v6052 = vmul.f32 %v427, %v5680
    %v6053 = vmul.f32 %v428, %v5678
    %v6054 = vmul.f32 %v429, %v5680
    %v6055 = vmul.f32 %v430, %v5678
    %v6056 = vmul.f32 %v431, %v5680
    %v6057 = vmul.f32 %v432, %v5678
    %v6058 = vmul.f32 %v433, %v5680
    %v6059 = vmul.f32 %v434, %v5678
    %v6060 = vmul.f32 %v435, %v5680
    %v6061 = vmul.f32 %v436, %v5678
    %v6062 = vmul.f32 %v437, %v5680
    %v6063 = vmul.f32 %v438, %v5678
    %v6064 = vmul.f32 %v439, %v5680
    %v6065 = vmul.f32 %v440, %v5678
    %v6066 = vmul.f32 %v441, %v5680
    %v6067 = vmul.f32 %v442, %v5678
    %v6068 = vmul.f32 %v443, %v5680
    %v6069 = vmul.f32 %v444, %v5678
    %v6070 = vmul.f32 %v445, %v5680
    %v6071 = vmul.f32 %v446, %v5678
    %v6072 = vmul.f32 %v447, %v5680
    %v6073 = vmul.f32 %v448, %v5678
    %v6074 = vmul.f32 %v449, %v5680
    %v6075 = vmul.f32 %v450, %v5678
    %v6076 = vmul.f32 %v451, %v5680
    %v6077 = vmul.f32 %v452, %v5678
    %v6078 = vmul.f32 %v453, %v5680
    %v6079 = vmul.f32 %v454, %v5678
    %v6080 = vmul.f32 %v455, %v5680
    %v6081 = vmul.f32 %v456, %v5678
    %v6082 = vmul.f32 %v457, %v5680
    %v6083 = vmul.f32 %v458, %v5678
    %v6084 = vmul.f32 %v459, %v5680
    %v6085 = vmul.f32 %v460, %v5678
    %v6086 = vmul.f32 %v461, %v5680
    %v6087 = vmul.f32 %v462, %v5678
    %v6088 = vmul.f32 %v463, %v5680
    %v6089 = vmul.f32 %v464, %v5678
    %v6090 = vmul.f32 %v465, %v5680
    %v6091 = vmul.f32 %v466, %v5678
    %v6092 = vmul.f32 %v467, %v5680
    %v6093 = vmul.f32 %v468, %v5678
    %v6094 = vmul.f32 %v469, %v5680
    %v6095 = vmul.f32 %v470, %v5678
    %v6096 = vmul.f32 %v471, %v5680
    %v6097 = vmul.f32 %v472, %v5678
    %v6098 = vmul.f32 %v473, %v5680
    %v6099 = vmul.f32 %v474, %v5678
    %v6100 = vmul.f32 %v475, %v5680
    %v6101 = vmul.f32 %v476, %v5678
    %v6102 = vmul.f32 %v477, %v5680
    %v6103 = vmul.f32 %v478, %v5678
    %v6104 = vmul.f32 %v479, %v5680
    %v6105 = vmul.f32 %v480, %v5678
    %v6106 = vmul.f32 %v481, %v5680
    %v6107 = vmul.f32 %v482, %v5678
    %v6108 = vmul.f32 %v483, %v5680
    %v6109 = vmul.f32 %v484, %v5678
    %v6110 = vmul.f32 %v485, %v5680
    %v6111 = vmul.f32 %v486, %v5678
    %v6112 = vmul.f32 %v487, %v5680
    %v6113 = vmul.f32 %v488, %v5678
    %v6114 = vmul.f32 %v489, %v5680
    %v6115 = vmul.f32 %v490, %v5678
    %v6116 = vmul.f32 %v491, %v5680
    %v6117 = vmul.f32 %v492, %v5678
    %v6118 = vmul.f32 %v493, %v5680
    %v6119 = vmul.f32 %v494, %v5678
    %v6120 = vmul.f32 %v495, %v5680
    %v6121 = vmul.f32 %v496, %v5678
    %v6122 = vmul.f32 %v497, %v5680
    %v6123 = vmul.f32 %v498, %v5678
    %v6124 = vmul.f32 %v499, %v5680
    %v6125 = vmul.f32 %v500, %v5678
    %v6126 = vmul.f32 %v501, %v5680
    %v6127 = vmul.f32 %v502, %v5678
    %v6128 = vmul.f32 %v503, %v5680
    %v6129 = vmul.f32 %v504, %v5678
    %v6130 = vmul.f32 %v505, %v5680
    %v6131 = vmul.f32 %v506, %v5678
    %v6132 = vmul.f32 %v507, %v5680
    %v6133 = vmul.f32 %v508, %v5678
    %v6134 = vmul.f32 %v509, %v5680
    %v6135 = vmul.f32 %v510, %v5678
    %v6136 = vmul.f32 %v511, %v5680
    %v6137 = vmul.f32 %v512, %v5678
    %v6138 = vmul.f32 %v513, %v5680
    %v6139 = vmul.f32 %v514, %v5678
    %v6140 = vmul.f32 %v515, %v5680
    %v6141 = vmul.f32 %v516, %v5678
    %v6142 = vmul.f32 %v517, %v5680
    %v6143 = vmul.f32 %v518, %v5678
    %v6144 = vmul.f32 %v519, %v5680
    %v6145 = vmul.f32 %v520, %v5678
    %v6146 = vmul.f32 %v521, %v5680
    %v6147 = vmul.f32 %v522, %v5678
    %v6148 = vmul.f32 %v523, %v5680
    %v6149 = vmul.f32 %v524, %v5678
    %v6150 = vmul.f32 %v525, %v5680
    %v6151 = vmul.f32 %v526, %v5678
    %v6152 = vmul.f32 %v527, %v5680
    %v6153 = vmul.f32 %v528, %v5678
    %v6154 = vmul.f32 %v529, %v5680
    %v6155 = vmul.f32 %v530, %v5678
    %v6156 = vmul.f32 %v531, %v5680
    %v6157 = vmul.f32 %v532, %v5678
    %v6158 = vmul.f32 %v533, %v5680
    %v6159 = vmul.f32 %v534, %v5678
    %v6160 = vmul.f32 %v535, %v5680
    %v6161 = vmul.f32 %v536, %v5678
    %v6162 = vmul.f32 %v537, %v5680
    %v6163 = vmul.f32 %v538, %v5678
    %v6164 = vmul.f32 %v539, %v5680
    %v6165 = vmul.f32 %v540, %v5678
    %v6166 = vmul.f32 %v541, %v5680
    %v6167 = vmul.f32 %v542, %v5678
    %v6168 = vmul.f32 %v543, %v5680
    %v6169 = vmul.f32 %v544, %v5678
    %v6170 = vmul.f32 %v545, %v5680
    %v6171 = vmul.f32 %v546, %v5678
    %v6172 = vmul.f32 %v547, %v5680
    %v6173 = vmul.f32 %v548, %v5678
    %v6174 = vmul.f32 %v549, %v5680
    %v6175 = vmul.f32 %v550, %v5678
    %v6176 = vmul.f32 %v551, %v5680
    %v6177 = vmul.f32 %v552, %v5678
    %v6178 = vmul.f32 %v553, %v5680
    %v6179 = vmul.f32 %v554, %v5678
    %v6180 = vmul.f32 %v555, %v5680
    %v6181 = vmul.f32 %v556, %v5678
    %v6182 = vmul.f32 %v557, %v5680
    %v6183 = vmul.f32 %v558, %v5678
    %v6184 = vmul.f32 %v559, %v5680
    %v6185 = vmul.f32 %v560, %v5678
    %v6186 = vmul.f32 %v561, %v5680
    %v6187 = vmul.f32 %v562, %v5678
    %v6188 = vmul.f32 %v563, %v5680
    %v6189 = vmul.f32 %v564, %v5678
    %v6190 = vmul.f32 %v565, %v5680
    %v6191 = vmul.f32 %v566, %v5678
    %v6192 = vmul.f32 %v567, %v5680
    %6193 = vst.msk [vmem:[#allocation9] sm:$0xff] %vm568, %v5681
    %6194 = vst.msk [vmem:[#allocation9 + $0x8] sm:$0xff] %vm568, %v5682
    %6195 = vst.msk [vmem:[#allocation9 + $0x10] sm:$0xff] %vm568, %v5683
    %6196 = vst.msk [vmem:[#allocation9 + $0x18] sm:$0xff] %vm568, %v5684
    %6197 = vst.msk [vmem:[#allocation9 + $0x20] sm:$0xff] %vm568, %v5685
    %6198 = vst.msk [vmem:[#allocation9 + $0x28] sm:$0xff] %vm568, %v5686
    %6199 = vst.msk [vmem:[#allocation9 + $0x30] sm:$0xff] %vm568, %v5687
    %6200 = vst.msk [vmem:[#allocation9 + $0x38] sm:$0xff] %vm568, %v5688
    %6201 = vst.msk [vmem:[#allocation9 + $0x40] sm:$0xff] %vm568, %v5689
    %6202 = vst.msk [vmem:[#allocation9 + $0x48] sm:$0xff] %vm568, %v5690
    %6203 = vst.msk [vmem:[#allocation9 + $0x50] sm:$0xff] %vm568, %v5691
    %6204 = vst.msk [vmem:[#allocation9 + $0x58] sm:$0xff] %vm568, %v5692
    %6205 = vst.msk [vmem:[#allocation9 + $0x60] sm:$0xff] %vm568, %v5693
    %6206 = vst.msk [vmem:[#allocation9 + $0x68] sm:$0xff] %vm568, %v5694
    %6207 = vst.msk [vmem:[#allocation9 + $0x70] sm:$0xff] %vm568, %v5695
    %6208 = vst.msk [vmem:[#allocation9 + $0x78] sm:$0xff] %vm568, %v5696
    %6209 = vst.msk [vmem:[#allocation9 + $0x80] sm:$0xff] %vm568, %v5697
    %6210 = vst.msk [vmem:[#allocation9 + $0x88] sm:$0xff] %vm568, %v5698
    %6211 = vst.msk [vmem:[#allocation9 + $0x90] sm:$0xff] %vm568, %v5699
    %6212 = vst.msk [vmem:[#allocation9 + $0x98] sm:$0xff] %vm568, %v5700
    %6213 = vst.msk [vmem:[#allocation9 + $0xa0] sm:$0xff] %vm568, %v5701
    %6214 = vst.msk [vmem:[#allocation9 + $0xa8] sm:$0xff] %vm568, %v5702
    %6215 = vst.msk [vmem:[#allocation9 + $0xb0] sm:$0xff] %vm568, %v5703
    %6216 = vst.msk [vmem:[#allocation9 + $0xb8] sm:$0xff] %vm568, %v5704
    %6217 = vst.msk [vmem:[#allocation9 + $0xc0] sm:$0xff] %vm568, %v5705
    %6218 = vst.msk [vmem:[#allocation9 + $0xc8] sm:$0xff] %vm568, %v5706
    %6219 = vst.msk [vmem:[#allocation9 + $0xd0] sm:$0xff] %vm568, %v5707
    %6220 = vst.msk [vmem:[#allocation9 + $0xd8] sm:$0xff] %vm568, %v5708
    %6221 = vst.msk [vmem:[#allocation9 + $0xe0] sm:$0xff] %vm568, %v5709
    %6222 = vst.msk [vmem:[#allocation9 + $0xe8] sm:$0xff] %vm568, %v5710
    %6223 = vst.msk [vmem:[#allocation9 + $0xf0] sm:$0xff] %vm568, %v5711
    %6224 = vst.msk [vmem:[#allocation9 + $0xf8] sm:$0xff] %vm568, %v5712
    %6225 = vst.msk [vmem:[#allocation9 + $0x100] sm:$0xff] %vm568, %v5713
    %6226 = vst.msk [vmem:[#allocation9 + $0x108] sm:$0xff] %vm568, %v5714
    %6227 = vst.msk [vmem:[#allocation9 + $0x110] sm:$0xff] %vm568, %v5715
    %6228 = vst.msk [vmem:[#allocation9 + $0x118] sm:$0xff] %vm568, %v5716
    %6229 = vst.msk [vmem:[#allocation9 + $0x120] sm:$0xff] %vm568, %v5717
    %6230 = vst.msk [vmem:[#allocation9 + $0x128] sm:$0xff] %vm568, %v5718
    %6231 = vst.msk [vmem:[#allocation9 + $0x130] sm:$0xff] %vm568, %v5719
    %6232 = vst.msk [vmem:[#allocation9 + $0x138] sm:$0xff] %vm568, %v5720
    %6233 = vst.msk [vmem:[#allocation9 + $0x140] sm:$0xff] %vm568, %v5721
    %6234 = vst.msk [vmem:[#allocation9 + $0x148] sm:$0xff] %vm568, %v5722
    %6235 = vst.msk [vmem:[#allocation9 + $0x150] sm:$0xff] %vm568, %v5723
    %6236 = vst.msk [vmem:[#allocation9 + $0x158] sm:$0xff] %vm568, %v5724
    %6237 = vst.msk [vmem:[#allocation9 + $0x160] sm:$0xff] %vm568, %v5725
    %6238 = vst.msk [vmem:[#allocation9 + $0x168] sm:$0xff] %vm568, %v5726
    %6239 = vst.msk [vmem:[#allocation9 + $0x170] sm:$0xff] %vm568, %v5727
    %6240 = vst.msk [vmem:[#allocation9 + $0x178] sm:$0xff] %vm568, %v5728
    %6241 = vst.msk [vmem:[#allocation9 + $0x180] sm:$0xff] %vm568, %v5729
    %6242 = vst.msk [vmem:[#allocation9 + $0x188] sm:$0xff] %vm568, %v5730
    %6243 = vst.msk [vmem:[#allocation9 + $0x190] sm:$0xff] %vm568, %v5731
    %6244 = vst.msk [vmem:[#allocation9 + $0x198] sm:$0xff] %vm568, %v5732
    %6245 = vst.msk [vmem:[#allocation9 + $0x1a0] sm:$0xff] %vm568, %v5733
    %6246 = vst.msk [vmem:[#allocation9 + $0x1a8] sm:$0xff] %vm568, %v5734
    %6247 = vst.msk [vmem:[#allocation9 + $0x1b0] sm:$0xff] %vm568, %v5735
    %6248 = vst.msk [vmem:[#allocation9 + $0x1b8] sm:$0xff] %vm568, %v5736
    %6249 = vst.msk [vmem:[#allocation9 + $0x1c0] sm:$0xff] %vm568, %v5737
    %6250 = vst.msk [vmem:[#allocation9 + $0x1c8] sm:$0xff] %vm568, %v5738
    %6251 = vst.msk [vmem:[#allocation9 + $0x1d0] sm:$0xff] %vm568, %v5739
    %6252 = vst.msk [vmem:[#allocation9 + $0x1d8] sm:$0xff] %vm568, %v5740
    %6253 = vst.msk [vmem:[#allocation9 + $0x1e0] sm:$0xff] %vm568, %v5741
    %6254 = vst.msk [vmem:[#allocation9 + $0x1e8] sm:$0xff] %vm568, %v5742
    %6255 = vst.msk [vmem:[#allocation9 + $0x1f0] sm:$0xff] %vm568, %v5743
    %6256 = vst.msk [vmem:[#allocation9 + $0x1f8] sm:$0xff] %vm568, %v5744
    %6257 = vst.msk [vmem:[#allocation9 + $0x200] sm:$0xff] %vm568, %v5745
    %6258 = vst.msk [vmem:[#allocation9 + $0x208] sm:$0xff] %vm568, %v5746
    %6259 = vst.msk [vmem:[#allocation9 + $0x210] sm:$0xff] %vm568, %v5747
    %6260 = vst.msk [vmem:[#allocation9 + $0x218] sm:$0xff] %vm568, %v5748
    %6261 = vst.msk [vmem:[#allocation9 + $0x220] sm:$0xff] %vm568, %v5749
    %6262 = vst.msk [vmem:[#allocation9 + $0x228] sm:$0xff] %vm568, %v5750
    %6263 = vst.msk [vmem:[#allocation9 + $0x230] sm:$0xff] %vm568, %v5751
    %6264 = vst.msk [vmem:[#allocation9 + $0x238] sm:$0xff] %vm568, %v5752
    %6265 = vst.msk [vmem:[#allocation9 + $0x240] sm:$0xff] %vm568, %v5753
    %6266 = vst.msk [vmem:[#allocation9 + $0x248] sm:$0xff] %vm568, %v5754
    %6267 = vst.msk [vmem:[#allocation9 + $0x250] sm:$0xff] %vm568, %v5755
    %6268 = vst.msk [vmem:[#allocation9 + $0x258] sm:$0xff] %vm568, %v5756
    %6269 = vst.msk [vmem:[#allocation9 + $0x260] sm:$0xff] %vm568, %v5757
    %6270 = vst.msk [vmem:[#allocation9 + $0x268] sm:$0xff] %vm568, %v5758
    %6271 = vst.msk [vmem:[#allocation9 + $0x270] sm:$0xff] %vm568, %v5759
    %6272 = vst.msk [vmem:[#allocation9 + $0x278] sm:$0xff] %vm568, %v5760
    %6273 = vst.msk [vmem:[#allocation9 + $0x280] sm:$0xff] %vm568, %v5761
    %6274 = vst.msk [vmem:[#allocation9 + $0x288] sm:$0xff] %vm568, %v5762
    %6275 = vst.msk [vmem:[#allocation9 + $0x290] sm:$0xff] %vm568, %v5763
    %6276 = vst.msk [vmem:[#allocation9 + $0x298] sm:$0xff] %vm568, %v5764
    %6277 = vst.msk [vmem:[#allocation9 + $0x2a0] sm:$0xff] %vm568, %v5765
    %6278 = vst.msk [vmem:[#allocation9 + $0x2a8] sm:$0xff] %vm568, %v5766
    %6279 = vst.msk [vmem:[#allocation9 + $0x2b0] sm:$0xff] %vm568, %v5767
    %6280 = vst.msk [vmem:[#allocation9 + $0x2b8] sm:$0xff] %vm568, %v5768
    %6281 = vst.msk [vmem:[#allocation9 + $0x2c0] sm:$0xff] %vm568, %v5769
    %6282 = vst.msk [vmem:[#allocation9 + $0x2c8] sm:$0xff] %vm568, %v5770
    %6283 = vst.msk [vmem:[#allocation9 + $0x2d0] sm:$0xff] %vm568, %v5771
    %6284 = vst.msk [vmem:[#allocation9 + $0x2d8] sm:$0xff] %vm568, %v5772
    %6285 = vst.msk [vmem:[#allocation9 + $0x2e0] sm:$0xff] %vm568, %v5773
    %6286 = vst.msk [vmem:[#allocation9 + $0x2e8] sm:$0xff] %vm568, %v5774
    %6287 = vst.msk [vmem:[#allocation9 + $0x2f0] sm:$0xff] %vm568, %v5775
    %6288 = vst.msk [vmem:[#allocation9 + $0x2f8] sm:$0xff] %vm568, %v5776
    %6289 = vst.msk [vmem:[#allocation9 + $0x300] sm:$0xff] %vm568, %v5777
    %6290 = vst.msk [vmem:[#allocation9 + $0x308] sm:$0xff] %vm568, %v5778
    %6291 = vst.msk [vmem:[#allocation9 + $0x310] sm:$0xff] %vm568, %v5779
    %6292 = vst.msk [vmem:[#allocation9 + $0x318] sm:$0xff] %vm568, %v5780
    %6293 = vst.msk [vmem:[#allocation9 + $0x320] sm:$0xff] %vm568, %v5781
    %6294 = vst.msk [vmem:[#allocation9 + $0x328] sm:$0xff] %vm568, %v5782
    %6295 = vst.msk [vmem:[#allocation9 + $0x330] sm:$0xff] %vm568, %v5783
    %6296 = vst.msk [vmem:[#allocation9 + $0x338] sm:$0xff] %vm568, %v5784
    %6297 = vst.msk [vmem:[#allocation9 + $0x340] sm:$0xff] %vm568, %v5785
    %6298 = vst.msk [vmem:[#allocation9 + $0x348] sm:$0xff] %vm568, %v5786
    %6299 = vst.msk [vmem:[#allocation9 + $0x350] sm:$0xff] %vm568, %v5787
    %6300 = vst.msk [vmem:[#allocation9 + $0x358] sm:$0xff] %vm568, %v5788
    %6301 = vst.msk [vmem:[#allocation9 + $0x360] sm:$0xff] %vm568, %v5789
    %6302 = vst.msk [vmem:[#allocation9 + $0x368] sm:$0xff] %vm568, %v5790
    %6303 = vst.msk [vmem:[#allocation9 + $0x370] sm:$0xff] %vm568, %v5791
    %6304 = vst.msk [vmem:[#allocation9 + $0x378] sm:$0xff] %vm568, %v5792
    %6305 = vst.msk [vmem:[#allocation9 + $0x380] sm:$0xff] %vm568, %v5793
    %6306 = vst.msk [vmem:[#allocation9 + $0x388] sm:$0xff] %vm568, %v5794
    %6307 = vst.msk [vmem:[#allocation9 + $0x390] sm:$0xff] %vm568, %v5795
    %6308 = vst.msk [vmem:[#allocation9 + $0x398] sm:$0xff] %vm568, %v5796
    %6309 = vst.msk [vmem:[#allocation9 + $0x3a0] sm:$0xff] %vm568, %v5797
    %6310 = vst.msk [vmem:[#allocation9 + $0x3a8] sm:$0xff] %vm568, %v5798
    %6311 = vst.msk [vmem:[#allocation9 + $0x3b0] sm:$0xff] %vm568, %v5799
    %6312 = vst.msk [vmem:[#allocation9 + $0x3b8] sm:$0xff] %vm568, %v5800
    %6313 = vst.msk [vmem:[#allocation9 + $0x3c0] sm:$0xff] %vm568, %v5801
    %6314 = vst.msk [vmem:[#allocation9 + $0x3c8] sm:$0xff] %vm568, %v5802
    %6315 = vst.msk [vmem:[#allocation9 + $0x3d0] sm:$0xff] %vm568, %v5803
    %6316 = vst.msk [vmem:[#allocation9 + $0x3d8] sm:$0xff] %vm568, %v5804
    %6317 = vst.msk [vmem:[#allocation9 + $0x3e0] sm:$0xff] %vm568, %v5805
    %6318 = vst.msk [vmem:[#allocation9 + $0x3e8] sm:$0xff] %vm568, %v5806
    %6319 = vst.msk [vmem:[#allocation9 + $0x3f0] sm:$0xff] %vm568, %v5807
    %6320 = vst.msk [vmem:[#allocation9 + $0x3f8] sm:$0xff] %vm568, %v5808
    %6321 = vst.msk [vmem:[#allocation9 + $0x400] sm:$0xff] %vm568, %v5809
    %6322 = vst.msk [vmem:[#allocation9 + $0x408] sm:$0xff] %vm568, %v5810
    %6323 = vst.msk [vmem:[#allocation9 + $0x410] sm:$0xff] %vm568, %v5811
    %6324 = vst.msk [vmem:[#allocation9 + $0x418] sm:$0xff] %vm568, %v5812
    %6325 = vst.msk [vmem:[#allocation9 + $0x420] sm:$0xff] %vm568, %v5813
    %6326 = vst.msk [vmem:[#allocation9 + $0x428] sm:$0xff] %vm568, %v5814
    %6327 = vst.msk [vmem:[#allocation9 + $0x430] sm:$0xff] %vm568, %v5815
    %6328 = vst.msk [vmem:[#allocation9 + $0x438] sm:$0xff] %vm568, %v5816
    %6329 = vst.msk [vmem:[#allocation9 + $0x440] sm:$0xff] %vm568, %v5817
    %6330 = vst.msk [vmem:[#allocation9 + $0x448] sm:$0xff] %vm568, %v5818
    %6331 = vst.msk [vmem:[#allocation9 + $0x450] sm:$0xff] %vm568, %v5819
    %6332 = vst.msk [vmem:[#allocation9 + $0x458] sm:$0xff] %vm568, %v5820
    %6333 = vst.msk [vmem:[#allocation9 + $0x460] sm:$0xff] %vm568, %v5821
    %6334 = vst.msk [vmem:[#allocation9 + $0x468] sm:$0xff] %vm568, %v5822
    %6335 = vst.msk [vmem:[#allocation9 + $0x470] sm:$0xff] %vm568, %v5823
    %6336 = vst.msk [vmem:[#allocation9 + $0x478] sm:$0xff] %vm568, %v5824
    %6337 = vst.msk [vmem:[#allocation9 + $0x480] sm:$0xff] %vm568, %v5825
    %6338 = vst.msk [vmem:[#allocation9 + $0x488] sm:$0xff] %vm568, %v5826
    %6339 = vst.msk [vmem:[#allocation9 + $0x490] sm:$0xff] %vm568, %v5827
    %6340 = vst.msk [vmem:[#allocation9 + $0x498] sm:$0xff] %vm568, %v5828
    %6341 = vst.msk [vmem:[#allocation9 + $0x4a0] sm:$0xff] %vm568, %v5829
    %6342 = vst.msk [vmem:[#allocation9 + $0x4a8] sm:$0xff] %vm568, %v5830
    %6343 = vst.msk [vmem:[#allocation9 + $0x4b0] sm:$0xff] %vm568, %v5831
    %6344 = vst.msk [vmem:[#allocation9 + $0x4b8] sm:$0xff] %vm568, %v5832
    %6345 = vst.msk [vmem:[#allocation9 + $0x4c0] sm:$0xff] %vm568, %v5833
    %6346 = vst.msk [vmem:[#allocation9 + $0x4c8] sm:$0xff] %vm568, %v5834
    %6347 = vst.msk [vmem:[#allocation9 + $0x4d0] sm:$0xff] %vm568, %v5835
    %6348 = vst.msk [vmem:[#allocation9 + $0x4d8] sm:$0xff] %vm568, %v5836
    %6349 = vst.msk [vmem:[#allocation9 + $0x4e0] sm:$0xff] %vm568, %v5837
    %6350 = vst.msk [vmem:[#allocation9 + $0x4e8] sm:$0xff] %vm568, %v5838
    %6351 = vst.msk [vmem:[#allocation9 + $0x4f0] sm:$0xff] %vm568, %v5839
    %6352 = vst.msk [vmem:[#allocation9 + $0x4f8] sm:$0xff] %vm568, %v5840
    %6353 = vst.msk [vmem:[#allocation9 + $0x500] sm:$0xff] %vm568, %v5841
    %6354 = vst.msk [vmem:[#allocation9 + $0x508] sm:$0xff] %vm568, %v5842
    %6355 = vst.msk [vmem:[#allocation9 + $0x510] sm:$0xff] %vm568, %v5843
    %6356 = vst.msk [vmem:[#allocation9 + $0x518] sm:$0xff] %vm568, %v5844
    %6357 = vst.msk [vmem:[#allocation9 + $0x520] sm:$0xff] %vm568, %v5845
    %6358 = vst.msk [vmem:[#allocation9 + $0x528] sm:$0xff] %vm568, %v5846
    %6359 = vst.msk [vmem:[#allocation9 + $0x530] sm:$0xff] %vm568, %v5847
    %6360 = vst.msk [vmem:[#allocation9 + $0x538] sm:$0xff] %vm568, %v5848
    %6361 = vst.msk [vmem:[#allocation9 + $0x540] sm:$0xff] %vm568, %v5849
    %6362 = vst.msk [vmem:[#allocation9 + $0x548] sm:$0xff] %vm568, %v5850
    %6363 = vst.msk [vmem:[#allocation9 + $0x550] sm:$0xff] %vm568, %v5851
    %6364 = vst.msk [vmem:[#allocation9 + $0x558] sm:$0xff] %vm568, %v5852
    %6365 = vst.msk [vmem:[#allocation9 + $0x560] sm:$0xff] %vm568, %v5853
    %6366 = vst.msk [vmem:[#allocation9 + $0x568] sm:$0xff] %vm568, %v5854
    %6367 = vst.msk [vmem:[#allocation9 + $0x570] sm:$0xff] %vm568, %v5855
    %6368 = vst.msk [vmem:[#allocation9 + $0x578] sm:$0xff] %vm568, %v5856
    %6369 = vst.msk [vmem:[#allocation9 + $0x580] sm:$0xff] %vm568, %v5857
    %6370 = vst.msk [vmem:[#allocation9 + $0x588] sm:$0xff] %vm568, %v5858
    %6371 = vst.msk [vmem:[#allocation9 + $0x590] sm:$0xff] %vm568, %v5859
    %6372 = vst.msk [vmem:[#allocation9 + $0x598] sm:$0xff] %vm568, %v5860
    %6373 = vst.msk [vmem:[#allocation9 + $0x5a0] sm:$0xff] %vm568, %v5861
    %6374 = vst.msk [vmem:[#allocation9 + $0x5a8] sm:$0xff] %vm568, %v5862
    %6375 = vst.msk [vmem:[#allocation9 + $0x5b0] sm:$0xff] %vm568, %v5863
    %6376 = vst.msk [vmem:[#allocation9 + $0x5b8] sm:$0xff] %vm568, %v5864
    %6377 = vst.msk [vmem:[#allocation9 + $0x5c0] sm:$0xff] %vm568, %v5865
    %6378 = vst.msk [vmem:[#allocation9 + $0x5c8] sm:$0xff] %vm568, %v5866
    %6379 = vst.msk [vmem:[#allocation9 + $0x5d0] sm:$0xff] %vm568, %v5867
    %6380 = vst.msk [vmem:[#allocation9 + $0x5d8] sm:$0xff] %vm568, %v5868
    %6381 = vst.msk [vmem:[#allocation9 + $0x5e0] sm:$0xff] %vm568, %v5869
    %6382 = vst.msk [vmem:[#allocation9 + $0x5e8] sm:$0xff] %vm568, %v5870
    %6383 = vst.msk [vmem:[#allocation9 + $0x5f0] sm:$0xff] %vm568, %v5871
    %6384 = vst.msk [vmem:[#allocation9 + $0x5f8] sm:$0xff] %vm568, %v5872
    %6385 = vst.msk [vmem:[#allocation9 + $0x600] sm:$0xff] %vm568, %v5873
    %6386 = vst.msk [vmem:[#allocation9 + $0x608] sm:$0xff] %vm568, %v5874
    %6387 = vst.msk [vmem:[#allocation9 + $0x610] sm:$0xff] %vm568, %v5875
    %6388 = vst.msk [vmem:[#allocation9 + $0x618] sm:$0xff] %vm568, %v5876
    %6389 = vst.msk [vmem:[#allocation9 + $0x620] sm:$0xff] %vm568, %v5877
    %6390 = vst.msk [vmem:[#allocation9 + $0x628] sm:$0xff] %vm568, %v5878
    %6391 = vst.msk [vmem:[#allocation9 + $0x630] sm:$0xff] %vm568, %v5879
    %6392 = vst.msk [vmem:[#allocation9 + $0x638] sm:$0xff] %vm568, %v5880
    %6393 = vst.msk [vmem:[#allocation9 + $0x640] sm:$0xff] %vm568, %v5881
    %6394 = vst.msk [vmem:[#allocation9 + $0x648] sm:$0xff] %vm568, %v5882
    %6395 = vst.msk [vmem:[#allocation9 + $0x650] sm:$0xff] %vm568, %v5883
    %6396 = vst.msk [vmem:[#allocation9 + $0x658] sm:$0xff] %vm568, %v5884
    %6397 = vst.msk [vmem:[#allocation9 + $0x660] sm:$0xff] %vm568, %v5885
    %6398 = vst.msk [vmem:[#allocation9 + $0x668] sm:$0xff] %vm568, %v5886
    %6399 = vst.msk [vmem:[#allocation9 + $0x670] sm:$0xff] %vm568, %v5887
    %6400 = vst.msk [vmem:[#allocation9 + $0x678] sm:$0xff] %vm568, %v5888
    %6401 = vst.msk [vmem:[#allocation9 + $0x680] sm:$0xff] %vm568, %v5889
    %6402 = vst.msk [vmem:[#allocation9 + $0x688] sm:$0xff] %vm568, %v5890
    %6403 = vst.msk [vmem:[#allocation9 + $0x690] sm:$0xff] %vm568, %v5891
    %6404 = vst.msk [vmem:[#allocation9 + $0x698] sm:$0xff] %vm568, %v5892
    %6405 = vst.msk [vmem:[#allocation9 + $0x6a0] sm:$0xff] %vm568, %v5893
    %6406 = vst.msk [vmem:[#allocation9 + $0x6a8] sm:$0xff] %vm568, %v5894
    %6407 = vst.msk [vmem:[#allocation9 + $0x6b0] sm:$0xff] %vm568, %v5895
    %6408 = vst.msk [vmem:[#allocation9 + $0x6b8] sm:$0xff] %vm568, %v5896
    %6409 = vst.msk [vmem:[#allocation9 + $0x6c0] sm:$0xff] %vm568, %v5897
    %6410 = vst.msk [vmem:[#allocation9 + $0x6c8] sm:$0xff] %vm568, %v5898
    %6411 = vst.msk [vmem:[#allocation9 + $0x6d0] sm:$0xff] %vm568, %v5899
    %6412 = vst.msk [vmem:[#allocation9 + $0x6d8] sm:$0xff] %vm568, %v5900
    %6413 = vst.msk [vmem:[#allocation9 + $0x6e0] sm:$0xff] %vm568, %v5901
    %6414 = vst.msk [vmem:[#allocation9 + $0x6e8] sm:$0xff] %vm568, %v5902
    %6415 = vst.msk [vmem:[#allocation9 + $0x6f0] sm:$0xff] %vm568, %v5903
    %6416 = vst.msk [vmem:[#allocation9 + $0x6f8] sm:$0xff] %vm568, %v5904
    %6417 = vst.msk [vmem:[#allocation9 + $0x700] sm:$0xff] %vm568, %v5905
    %6418 = vst.msk [vmem:[#allocation9 + $0x708] sm:$0xff] %vm568, %v5906
    %6419 = vst.msk [vmem:[#allocation9 + $0x710] sm:$0xff] %vm568, %v5907
    %6420 = vst.msk [vmem:[#allocation9 + $0x718] sm:$0xff] %vm568, %v5908
    %6421 = vst.msk [vmem:[#allocation9 + $0x720] sm:$0xff] %vm568, %v5909
    %6422 = vst.msk [vmem:[#allocation9 + $0x728] sm:$0xff] %vm568, %v5910
    %6423 = vst.msk [vmem:[#allocation9 + $0x730] sm:$0xff] %vm568, %v5911
    %6424 = vst.msk [vmem:[#allocation9 + $0x738] sm:$0xff] %vm568, %v5912
    %6425 = vst.msk [vmem:[#allocation9 + $0x740] sm:$0xff] %vm568, %v5913
    %6426 = vst.msk [vmem:[#allocation9 + $0x748] sm:$0xff] %vm568, %v5914
    %6427 = vst.msk [vmem:[#allocation9 + $0x750] sm:$0xff] %vm568, %v5915
    %6428 = vst.msk [vmem:[#allocation9 + $0x758] sm:$0xff] %vm568, %v5916
    %6429 = vst.msk [vmem:[#allocation9 + $0x760] sm:$0xff] %vm568, %v5917
    %6430 = vst.msk [vmem:[#allocation9 + $0x768] sm:$0xff] %vm568, %v5918
    %6431 = vst.msk [vmem:[#allocation9 + $0x770] sm:$0xff] %vm568, %v5919
    %6432 = vst.msk [vmem:[#allocation9 + $0x778] sm:$0xff] %vm568, %v5920
    %6433 = vst.msk [vmem:[#allocation9 + $0x780] sm:$0xff] %vm568, %v5921
    %6434 = vst.msk [vmem:[#allocation9 + $0x788] sm:$0xff] %vm568, %v5922
    %6435 = vst.msk [vmem:[#allocation9 + $0x790] sm:$0xff] %vm568, %v5923
    %6436 = vst.msk [vmem:[#allocation9 + $0x798] sm:$0xff] %vm568, %v5924
    %6437 = vst.msk [vmem:[#allocation9 + $0x7a0] sm:$0xff] %vm568, %v5925
    %6438 = vst.msk [vmem:[#allocation9 + $0x7a8] sm:$0xff] %vm568, %v5926
    %6439 = vst.msk [vmem:[#allocation9 + $0x7b0] sm:$0xff] %vm568, %v5927
    %6440 = vst.msk [vmem:[#allocation9 + $0x7b8] sm:$0xff] %vm568, %v5928
    %6441 = vst.msk [vmem:[#allocation9 + $0x7c0] sm:$0xff] %vm568, %v5929
    %6442 = vst.msk [vmem:[#allocation9 + $0x7c8] sm:$0xff] %vm568, %v5930
    %6443 = vst.msk [vmem:[#allocation9 + $0x7d0] sm:$0xff] %vm568, %v5931
    %6444 = vst.msk [vmem:[#allocation9 + $0x7d8] sm:$0xff] %vm568, %v5932
    %6445 = vst.msk [vmem:[#allocation9 + $0x7e0] sm:$0xff] %vm568, %v5933
    %6446 = vst.msk [vmem:[#allocation9 + $0x7e8] sm:$0xff] %vm568, %v5934
    %6447 = vst.msk [vmem:[#allocation9 + $0x7f0] sm:$0xff] %vm568, %v5935
    %6448 = vst.msk [vmem:[#allocation9 + $0x7f8] sm:$0xff] %vm568, %v5936
    %6449 = vst.msk [vmem:[#allocation9 + $0x800] sm:$0xff] %vm568, %v5937
    %6450 = vst.msk [vmem:[#allocation9 + $0x808] sm:$0xff] %vm568, %v5938
    %6451 = vst.msk [vmem:[#allocation9 + $0x810] sm:$0xff] %vm568, %v5939
    %6452 = vst.msk [vmem:[#allocation9 + $0x818] sm:$0xff] %vm568, %v5940
    %6453 = vst.msk [vmem:[#allocation9 + $0x820] sm:$0xff] %vm568, %v5941
    %6454 = vst.msk [vmem:[#allocation9 + $0x828] sm:$0xff] %vm568, %v5942
    %6455 = vst.msk [vmem:[#allocation9 + $0x830] sm:$0xff] %vm568, %v5943
    %6456 = vst.msk [vmem:[#allocation9 + $0x838] sm:$0xff] %vm568, %v5944
    %6457 = vst.msk [vmem:[#allocation9 + $0x840] sm:$0xff] %vm568, %v5945
    %6458 = vst.msk [vmem:[#allocation9 + $0x848] sm:$0xff] %vm568, %v5946
    %6459 = vst.msk [vmem:[#allocation9 + $0x850] sm:$0xff] %vm568, %v5947
    %6460 = vst.msk [vmem:[#allocation9 + $0x858] sm:$0xff] %vm568, %v5948
    %6461 = vst.msk [vmem:[#allocation9 + $0x860] sm:$0xff] %vm568, %v5949
    %6462 = vst.msk [vmem:[#allocation9 + $0x868] sm:$0xff] %vm568, %v5950
    %6463 = vst.msk [vmem:[#allocation9 + $0x870] sm:$0xff] %vm568, %v5951
    %6464 = vst.msk [vmem:[#allocation9 + $0x878] sm:$0xff] %vm568, %v5952
    %6465 = vst.msk [vmem:[#allocation9 + $0x880] sm:$0xff] %vm568, %v5953
    %6466 = vst.msk [vmem:[#allocation9 + $0x888] sm:$0xff] %vm568, %v5954
    %6467 = vst.msk [vmem:[#allocation9 + $0x890] sm:$0xff] %vm568, %v5955
    %6468 = vst.msk [vmem:[#allocation9 + $0x898] sm:$0xff] %vm568, %v5956
    %6469 = vst.msk [vmem:[#allocation9 + $0x8a0] sm:$0xff] %vm568, %v5957
    %6470 = vst.msk [vmem:[#allocation9 + $0x8a8] sm:$0xff] %vm568, %v5958
    %6471 = vst.msk [vmem:[#allocation9 + $0x8b0] sm:$0xff] %vm568, %v5959
    %6472 = vst.msk [vmem:[#allocation9 + $0x8b8] sm:$0xff] %vm568, %v5960
    %6473 = vst.msk [vmem:[#allocation9 + $0x8c0] sm:$0xff] %vm568, %v5961
    %6474 = vst.msk [vmem:[#allocation9 + $0x8c8] sm:$0xff] %vm568, %v5962
    %6475 = vst.msk [vmem:[#allocation9 + $0x8d0] sm:$0xff] %vm568, %v5963
    %6476 = vst.msk [vmem:[#allocation9 + $0x8d8] sm:$0xff] %vm568, %v5964
    %6477 = vst.msk [vmem:[#allocation9 + $0x8e0] sm:$0xff] %vm568, %v5965
    %6478 = vst.msk [vmem:[#allocation9 + $0x8e8] sm:$0xff] %vm568, %v5966
    %6479 = vst.msk [vmem:[#allocation9 + $0x8f0] sm:$0xff] %vm568, %v5967
    %6480 = vst.msk [vmem:[#allocation9 + $0x8f8] sm:$0xff] %vm568, %v5968
    %6481 = vst.msk [vmem:[#allocation9 + $0x900] sm:$0xff] %vm568, %v5969
    %6482 = vst.msk [vmem:[#allocation9 + $0x908] sm:$0xff] %vm568, %v5970
    %6483 = vst.msk [vmem:[#allocation9 + $0x910] sm:$0xff] %vm568, %v5971
    %6484 = vst.msk [vmem:[#allocation9 + $0x918] sm:$0xff] %vm568, %v5972
    %6485 = vst.msk [vmem:[#allocation9 + $0x920] sm:$0xff] %vm568, %v5973
    %6486 = vst.msk [vmem:[#allocation9 + $0x928] sm:$0xff] %vm568, %v5974
    %6487 = vst.msk [vmem:[#allocation9 + $0x930] sm:$0xff] %vm568, %v5975
    %6488 = vst.msk [vmem:[#allocation9 + $0x938] sm:$0xff] %vm568, %v5976
    %6489 = vst.msk [vmem:[#allocation9 + $0x940] sm:$0xff] %vm568, %v5977
    %6490 = vst.msk [vmem:[#allocation9 + $0x948] sm:$0xff] %vm568, %v5978
    %6491 = vst.msk [vmem:[#allocation9 + $0x950] sm:$0xff] %vm568, %v5979
    %6492 = vst.msk [vmem:[#allocation9 + $0x958] sm:$0xff] %vm568, %v5980
    %6493 = vst.msk [vmem:[#allocation9 + $0x960] sm:$0xff] %vm568, %v5981
    %6494 = vst.msk [vmem:[#allocation9 + $0x968] sm:$0xff] %vm568, %v5982
    %6495 = vst.msk [vmem:[#allocation9 + $0x970] sm:$0xff] %vm568, %v5983
    %6496 = vst.msk [vmem:[#allocation9 + $0x978] sm:$0xff] %vm568, %v5984
    %6497 = vst.msk [vmem:[#allocation9 + $0x980] sm:$0xff] %vm568, %v5985
    %6498 = vst.msk [vmem:[#allocation9 + $0x988] sm:$0xff] %vm568, %v5986
    %6499 = vst.msk [vmem:[#allocation9 + $0x990] sm:$0xff] %vm568, %v5987
    %6500 = vst.msk [vmem:[#allocation9 + $0x998] sm:$0xff] %vm568, %v5988
    %6501 = vst.msk [vmem:[#allocation9 + $0x9a0] sm:$0xff] %vm568, %v5989
    %6502 = vst.msk [vmem:[#allocation9 + $0x9a8] sm:$0xff] %vm568, %v5990
    %6503 = vst.msk [vmem:[#allocation9 + $0x9b0] sm:$0xff] %vm568, %v5991
    %6504 = vst.msk [vmem:[#allocation9 + $0x9b8] sm:$0xff] %vm568, %v5992
    %6505 = vst.msk [vmem:[#allocation9 + $0x9c0] sm:$0xff] %vm568, %v5993
    %6506 = vst.msk [vmem:[#allocation9 + $0x9c8] sm:$0xff] %vm568, %v5994
    %6507 = vst.msk [vmem:[#allocation9 + $0x9d0] sm:$0xff] %vm568, %v5995
    %6508 = vst.msk [vmem:[#allocation9 + $0x9d8] sm:$0xff] %vm568, %v5996
    %6509 = vst.msk [vmem:[#allocation9 + $0x9e0] sm:$0xff] %vm568, %v5997
    %6510 = vst.msk [vmem:[#allocation9 + $0x9e8] sm:$0xff] %vm568, %v5998
    %6511 = vst.msk [vmem:[#allocation9 + $0x9f0] sm:$0xff] %vm568, %v5999
    %6512 = vst.msk [vmem:[#allocation9 + $0x9f8] sm:$0xff] %vm568, %v6000
    %6513 = vst.msk [vmem:[#allocation9 + $0xa00] sm:$0xff] %vm568, %v6001
    %6514 = vst.msk [vmem:[#allocation9 + $0xa08] sm:$0xff] %vm568, %v6002
    %6515 = vst.msk [vmem:[#allocation9 + $0xa10] sm:$0xff] %vm568, %v6003
    %6516 = vst.msk [vmem:[#allocation9 + $0xa18] sm:$0xff] %vm568, %v6004
    %6517 = vst.msk [vmem:[#allocation9 + $0xa20] sm:$0xff] %vm568, %v6005
    %6518 = vst.msk [vmem:[#allocation9 + $0xa28] sm:$0xff] %vm568, %v6006
    %6519 = vst.msk [vmem:[#allocation9 + $0xa30] sm:$0xff] %vm568, %v6007
    %6520 = vst.msk [vmem:[#allocation9 + $0xa38] sm:$0xff] %vm568, %v6008
    %6521 = vst.msk [vmem:[#allocation9 + $0xa40] sm:$0xff] %vm568, %v6009
    %6522 = vst.msk [vmem:[#allocation9 + $0xa48] sm:$0xff] %vm568, %v6010
    %6523 = vst.msk [vmem:[#allocation9 + $0xa50] sm:$0xff] %vm568, %v6011
    %6524 = vst.msk [vmem:[#allocation9 + $0xa58] sm:$0xff] %vm568, %v6012
    %6525 = vst.msk [vmem:[#allocation9 + $0xa60] sm:$0xff] %vm568, %v6013
    %6526 = vst.msk [vmem:[#allocation9 + $0xa68] sm:$0xff] %vm568, %v6014
    %6527 = vst.msk [vmem:[#allocation9 + $0xa70] sm:$0xff] %vm568, %v6015
    %6528 = vst.msk [vmem:[#allocation9 + $0xa78] sm:$0xff] %vm568, %v6016
    %6529 = vst.msk [vmem:[#allocation9 + $0xa80] sm:$0xff] %vm568, %v6017
    %6530 = vst.msk [vmem:[#allocation9 + $0xa88] sm:$0xff] %vm568, %v6018
    %6531 = vst.msk [vmem:[#allocation9 + $0xa90] sm:$0xff] %vm568, %v6019
    %6532 = vst.msk [vmem:[#allocation9 + $0xa98] sm:$0xff] %vm568, %v6020
    %6533 = vst.msk [vmem:[#allocation9 + $0xaa0] sm:$0xff] %vm568, %v6021
    %6534 = vst.msk [vmem:[#allocation9 + $0xaa8] sm:$0xff] %vm568, %v6022
    %6535 = vst.msk [vmem:[#allocation9 + $0xab0] sm:$0xff] %vm568, %v6023
    %6536 = vst.msk [vmem:[#allocation9 + $0xab8] sm:$0xff] %vm568, %v6024
    %6537 = vst.msk [vmem:[#allocation9 + $0xac0] sm:$0xff] %vm568, %v6025
    %6538 = vst.msk [vmem:[#allocation9 + $0xac8] sm:$0xff] %vm568, %v6026
    %6539 = vst.msk [vmem:[#allocation9 + $0xad0] sm:$0xff] %vm568, %v6027
    %6540 = vst.msk [vmem:[#allocation9 + $0xad8] sm:$0xff] %vm568, %v6028
    %6541 = vst.msk [vmem:[#allocation9 + $0xae0] sm:$0xff] %vm568, %v6029
    %6542 = vst.msk [vmem:[#allocation9 + $0xae8] sm:$0xff] %vm568, %v6030
    %6543 = vst.msk [vmem:[#allocation9 + $0xaf0] sm:$0xff] %vm568, %v6031
    %6544 = vst.msk [vmem:[#allocation9 + $0xaf8] sm:$0xff] %vm568, %v6032
    %6545 = vst.msk [vmem:[#allocation9 + $0xb00] sm:$0xff] %vm568, %v6033
    %6546 = vst.msk [vmem:[#allocation9 + $0xb08] sm:$0xff] %vm568, %v6034
    %6547 = vst.msk [vmem:[#allocation9 + $0xb10] sm:$0xff] %vm568, %v6035
    %6548 = vst.msk [vmem:[#allocation9 + $0xb18] sm:$0xff] %vm568, %v6036
    %6549 = vst.msk [vmem:[#allocation9 + $0xb20] sm:$0xff] %vm568, %v6037
    %6550 = vst.msk [vmem:[#allocation9 + $0xb28] sm:$0xff] %vm568, %v6038
    %6551 = vst.msk [vmem:[#allocation9 + $0xb30] sm:$0xff] %vm568, %v6039
    %6552 = vst.msk [vmem:[#allocation9 + $0xb38] sm:$0xff] %vm568, %v6040
    %6553 = vst.msk [vmem:[#allocation9 + $0xb40] sm:$0xff] %vm568, %v6041
    %6554 = vst.msk [vmem:[#allocation9 + $0xb48] sm:$0xff] %vm568, %v6042
    %6555 = vst.msk [vmem:[#allocation9 + $0xb50] sm:$0xff] %vm568, %v6043
    %6556 = vst.msk [vmem:[#allocation9 + $0xb58] sm:$0xff] %vm568, %v6044
    %6557 = vst.msk [vmem:[#allocation9 + $0xb60] sm:$0xff] %vm568, %v6045
    %6558 = vst.msk [vmem:[#allocation9 + $0xb68] sm:$0xff] %vm568, %v6046
    %6559 = vst.msk [vmem:[#allocation9 + $0xb70] sm:$0xff] %vm568, %v6047
    %6560 = vst.msk [vmem:[#allocation9 + $0xb78] sm:$0xff] %vm568, %v6048
    %6561 = vst.msk [vmem:[#allocation9 + $0xb80] sm:$0xff] %vm568, %v6049
    %6562 = vst.msk [vmem:[#allocation9 + $0xb88] sm:$0xff] %vm568, %v6050
    %6563 = vst.msk [vmem:[#allocation9 + $0xb90] sm:$0xff] %vm568, %v6051
    %6564 = vst.msk [vmem:[#allocation9 + $0xb98] sm:$0xff] %vm568, %v6052
    %6565 = vst.msk [vmem:[#allocation9 + $0xba0] sm:$0xff] %vm568, %v6053
    %6566 = vst.msk [vmem:[#allocation9 + $0xba8] sm:$0xff] %vm568, %v6054
    %6567 = vst.msk [vmem:[#allocation9 + $0xbb0] sm:$0xff] %vm568, %v6055
    %6568 = vst.msk [vmem:[#allocation9 + $0xbb8] sm:$0xff] %vm568, %v6056
    %6569 = vst.msk [vmem:[#allocation9 + $0xbc0] sm:$0xff] %vm568, %v6057
    %6570 = vst.msk [vmem:[#allocation9 + $0xbc8] sm:$0xff] %vm568, %v6058
    %6571 = vst.msk [vmem:[#allocation9 + $0xbd0] sm:$0xff] %vm568, %v6059
    %6572 = vst.msk [vmem:[#allocation9 + $0xbd8] sm:$0xff] %vm568, %v6060
    %6573 = vst.msk [vmem:[#allocation9 + $0xbe0] sm:$0xff] %vm568, %v6061
    %6574 = vst.msk [vmem:[#allocation9 + $0xbe8] sm:$0xff] %vm568, %v6062
    %6575 = vst.msk [vmem:[#allocation9 + $0xbf0] sm:$0xff] %vm568, %v6063
    %6576 = vst.msk [vmem:[#allocation9 + $0xbf8] sm:$0xff] %vm568, %v6064
    %6577 = vst.msk [vmem:[#allocation9 + $0xc00] sm:$0xff] %vm568, %v6065
    %6578 = vst.msk [vmem:[#allocation9 + $0xc08] sm:$0xff] %vm568, %v6066
    %6579 = vst.msk [vmem:[#allocation9 + $0xc10] sm:$0xff] %vm568, %v6067
    %6580 = vst.msk [vmem:[#allocation9 + $0xc18] sm:$0xff] %vm568, %v6068
    %6581 = vst.msk [vmem:[#allocation9 + $0xc20] sm:$0xff] %vm568, %v6069
    %6582 = vst.msk [vmem:[#allocation9 + $0xc28] sm:$0xff] %vm568, %v6070
    %6583 = vst.msk [vmem:[#allocation9 + $0xc30] sm:$0xff] %vm568, %v6071
    %6584 = vst.msk [vmem:[#allocation9 + $0xc38] sm:$0xff] %vm568, %v6072
    %6585 = vst.msk [vmem:[#allocation9 + $0xc40] sm:$0xff] %vm568, %v6073
    %6586 = vst.msk [vmem:[#allocation9 + $0xc48] sm:$0xff] %vm568, %v6074
    %6587 = vst.msk [vmem:[#allocation9 + $0xc50] sm:$0xff] %vm568, %v6075
    %6588 = vst.msk [vmem:[#allocation9 + $0xc58] sm:$0xff] %vm568, %v6076
    %6589 = vst.msk [vmem:[#allocation9 + $0xc60] sm:$0xff] %vm568, %v6077
    %6590 = vst.msk [vmem:[#allocation9 + $0xc68] sm:$0xff] %vm568, %v6078
    %6591 = vst.msk [vmem:[#allocation9 + $0xc70] sm:$0xff] %vm568, %v6079
    %6592 = vst.msk [vmem:[#allocation9 + $0xc78] sm:$0xff] %vm568, %v6080
    %6593 = vst.msk [vmem:[#allocation9 + $0xc80] sm:$0xff] %vm568, %v6081
    %6594 = vst.msk [vmem:[#allocation9 + $0xc88] sm:$0xff] %vm568, %v6082
    %6595 = vst.msk [vmem:[#allocation9 + $0xc90] sm:$0xff] %vm568, %v6083
    %6596 = vst.msk [vmem:[#allocation9 + $0xc98] sm:$0xff] %vm568, %v6084
    %6597 = vst.msk [vmem:[#allocation9 + $0xca0] sm:$0xff] %vm568, %v6085
    %6598 = vst.msk [vmem:[#allocation9 + $0xca8] sm:$0xff] %vm568, %v6086
    %6599 = vst.msk [vmem:[#allocation9 + $0xcb0] sm:$0xff] %vm568, %v6087
    %6600 = vst.msk [vmem:[#allocation9 + $0xcb8] sm:$0xff] %vm568, %v6088
    %6601 = vst.msk [vmem:[#allocation9 + $0xcc0] sm:$0xff] %vm568, %v6089
    %6602 = vst.msk [vmem:[#allocation9 + $0xcc8] sm:$0xff] %vm568, %v6090
    %6603 = vst.msk [vmem:[#allocation9 + $0xcd0] sm:$0xff] %vm568, %v6091
    %6604 = vst.msk [vmem:[#allocation9 + $0xcd8] sm:$0xff] %vm568, %v6092
    %6605 = vst.msk [vmem:[#allocation9 + $0xce0] sm:$0xff] %vm568, %v6093
    %6606 = vst.msk [vmem:[#allocation9 + $0xce8] sm:$0xff] %vm568, %v6094
    %6607 = vst.msk [vmem:[#allocation9 + $0xcf0] sm:$0xff] %vm568, %v6095
    %6608 = vst.msk [vmem:[#allocation9 + $0xcf8] sm:$0xff] %vm568, %v6096
    %6609 = vst.msk [vmem:[#allocation9 + $0xd00] sm:$0xff] %vm568, %v6097
    %6610 = vst.msk [vmem:[#allocation9 + $0xd08] sm:$0xff] %vm568, %v6098
    %6611 = vst.msk [vmem:[#allocation9 + $0xd10] sm:$0xff] %vm568, %v6099
    %6612 = vst.msk [vmem:[#allocation9 + $0xd18] sm:$0xff] %vm568, %v6100
    %6613 = vst.msk [vmem:[#allocation9 + $0xd20] sm:$0xff] %vm568, %v6101
    %6614 = vst.msk [vmem:[#allocation9 + $0xd28] sm:$0xff] %vm568, %v6102
    %6615 = vst.msk [vmem:[#allocation9 + $0xd30] sm:$0xff] %vm568, %v6103
    %6616 = vst.msk [vmem:[#allocation9 + $0xd38] sm:$0xff] %vm568, %v6104
    %6617 = vst.msk [vmem:[#allocation9 + $0xd40] sm:$0xff] %vm568, %v6105
    %6618 = vst.msk [vmem:[#allocation9 + $0xd48] sm:$0xff] %vm568, %v6106
    %6619 = vst.msk [vmem:[#allocation9 + $0xd50] sm:$0xff] %vm568, %v6107
    %6620 = vst.msk [vmem:[#allocation9 + $0xd58] sm:$0xff] %vm568, %v6108
    %6621 = vst.msk [vmem:[#allocation9 + $0xd60] sm:$0xff] %vm568, %v6109
    %6622 = vst.msk [vmem:[#allocation9 + $0xd68] sm:$0xff] %vm568, %v6110
    %6623 = vst.msk [vmem:[#allocation9 + $0xd70] sm:$0xff] %vm568, %v6111
    %6624 = vst.msk [vmem:[#allocation9 + $0xd78] sm:$0xff] %vm568, %v6112
    %6625 = vst.msk [vmem:[#allocation9 + $0xd80] sm:$0xff] %vm568, %v6113
    %6626 = vst.msk [vmem:[#allocation9 + $0xd88] sm:$0xff] %vm568, %v6114
    %6627 = vst.msk [vmem:[#allocation9 + $0xd90] sm:$0xff] %vm568, %v6115
    %6628 = vst.msk [vmem:[#allocation9 + $0xd98] sm:$0xff] %vm568, %v6116
    %6629 = vst.msk [vmem:[#allocation9 + $0xda0] sm:$0xff] %vm568, %v6117
    %6630 = vst.msk [vmem:[#allocation9 + $0xda8] sm:$0xff] %vm568, %v6118
    %6631 = vst.msk [vmem:[#allocation9 + $0xdb0] sm:$0xff] %vm568, %v6119
    %6632 = vst.msk [vmem:[#allocation9 + $0xdb8] sm:$0xff] %vm568, %v6120
    %6633 = vst.msk [vmem:[#allocation9 + $0xdc0] sm:$0xff] %vm568, %v6121
    %6634 = vst.msk [vmem:[#allocation9 + $0xdc8] sm:$0xff] %vm568, %v6122
    %6635 = vst.msk [vmem:[#allocation9 + $0xdd0] sm:$0xff] %vm568, %v6123
    %6636 = vst.msk [vmem:[#allocation9 + $0xdd8] sm:$0xff] %vm568, %v6124
    %6637 = vst.msk [vmem:[#allocation9 + $0xde0] sm:$0xff] %vm568, %v6125
    %6638 = vst.msk [vmem:[#allocation9 + $0xde8] sm:$0xff] %vm568, %v6126
    %6639 = vst.msk [vmem:[#allocation9 + $0xdf0] sm:$0xff] %vm568, %v6127
    %6640 = vst.msk [vmem:[#allocation9 + $0xdf8] sm:$0xff] %vm568, %v6128
    %6641 = vst.msk [vmem:[#allocation9 + $0xe00] sm:$0xff] %vm568, %v6129
    %6642 = vst.msk [vmem:[#allocation9 + $0xe08] sm:$0xff] %vm568, %v6130
    %6643 = vst.msk [vmem:[#allocation9 + $0xe10] sm:$0xff] %vm568, %v6131
    %6644 = vst.msk [vmem:[#allocation9 + $0xe18] sm:$0xff] %vm568, %v6132
    %6645 = vst.msk [vmem:[#allocation9 + $0xe20] sm:$0xff] %vm568, %v6133
    %6646 = vst.msk [vmem:[#allocation9 + $0xe28] sm:$0xff] %vm568, %v6134
    %6647 = vst.msk [vmem:[#allocation9 + $0xe30] sm:$0xff] %vm568, %v6135
    %6648 = vst.msk [vmem:[#allocation9 + $0xe38] sm:$0xff] %vm568, %v6136
    %6649 = vst.msk [vmem:[#allocation9 + $0xe40] sm:$0xff] %vm568, %v6137
    %6650 = vst.msk [vmem:[#allocation9 + $0xe48] sm:$0xff] %vm568, %v6138
    %6651 = vst.msk [vmem:[#allocation9 + $0xe50] sm:$0xff] %vm568, %v6139
    %6652 = vst.msk [vmem:[#allocation9 + $0xe58] sm:$0xff] %vm568, %v6140
    %6653 = vst.msk [vmem:[#allocation9 + $0xe60] sm:$0xff] %vm568, %v6141
    %6654 = vst.msk [vmem:[#allocation9 + $0xe68] sm:$0xff] %vm568, %v6142
    %6655 = vst.msk [vmem:[#allocation9 + $0xe70] sm:$0xff] %vm568, %v6143
    %6656 = vst.msk [vmem:[#allocation9 + $0xe78] sm:$0xff] %vm568, %v6144
    %6657 = vst.msk [vmem:[#allocation9 + $0xe80] sm:$0xff] %vm568, %v6145
    %6658 = vst.msk [vmem:[#allocation9 + $0xe88] sm:$0xff] %vm568, %v6146
    %6659 = vst.msk [vmem:[#allocation9 + $0xe90] sm:$0xff] %vm568, %v6147
    %6660 = vst.msk [vmem:[#allocation9 + $0xe98] sm:$0xff] %vm568, %v6148
    %6661 = vst.msk [vmem:[#allocation9 + $0xea0] sm:$0xff] %vm568, %v6149
    %6662 = vst.msk [vmem:[#allocation9 + $0xea8] sm:$0xff] %vm568, %v6150
    %6663 = vst.msk [vmem:[#allocation9 + $0xeb0] sm:$0xff] %vm568, %v6151
    %6664 = vst.msk [vmem:[#allocation9 + $0xeb8] sm:$0xff] %vm568, %v6152
    %6665 = vst.msk [vmem:[#allocation9 + $0xec0] sm:$0xff] %vm568, %v6153
    %6666 = vst.msk [vmem:[#allocation9 + $0xec8] sm:$0xff] %vm568, %v6154
    %6667 = vst.msk [vmem:[#allocation9 + $0xed0] sm:$0xff] %vm568, %v6155
    %6668 = vst.msk [vmem:[#allocation9 + $0xed8] sm:$0xff] %vm568, %v6156
    %6669 = vst.msk [vmem:[#allocation9 + $0xee0] sm:$0xff] %vm568, %v6157
    %6670 = vst.msk [vmem:[#allocation9 + $0xee8] sm:$0xff] %vm568, %v6158
    %6671 = vst.msk [vmem:[#allocation9 + $0xef0] sm:$0xff] %vm568, %v6159
    %6672 = vst.msk [vmem:[#allocation9 + $0xef8] sm:$0xff] %vm568, %v6160
    %6673 = vst.msk [vmem:[#allocation9 + $0xf00] sm:$0xff] %vm568, %v6161
    %6674 = vst.msk [vmem:[#allocation9 + $0xf08] sm:$0xff] %vm568, %v6162
    %6675 = vst.msk [vmem:[#allocation9 + $0xf10] sm:$0xff] %vm568, %v6163
    %6676 = vst.msk [vmem:[#allocation9 + $0xf18] sm:$0xff] %vm568, %v6164
    %6677 = vst.msk [vmem:[#allocation9 + $0xf20] sm:$0xff] %vm568, %v6165
    %6678 = vst.msk [vmem:[#allocation9 + $0xf28] sm:$0xff] %vm568, %v6166
    %6679 = vst.msk [vmem:[#allocation9 + $0xf30] sm:$0xff] %vm568, %v6167
    %6680 = vst.msk [vmem:[#allocation9 + $0xf38] sm:$0xff] %vm568, %v6168
    %6681 = vst.msk [vmem:[#allocation9 + $0xf40] sm:$0xff] %vm568, %v6169
    %6682 = vst.msk [vmem:[#allocation9 + $0xf48] sm:$0xff] %vm568, %v6170
    %6683 = vst.msk [vmem:[#allocation9 + $0xf50] sm:$0xff] %vm568, %v6171
    %6684 = vst.msk [vmem:[#allocation9 + $0xf58] sm:$0xff] %vm568, %v6172
    %6685 = vst.msk [vmem:[#allocation9 + $0xf60] sm:$0xff] %vm568, %v6173
    %6686 = vst.msk [vmem:[#allocation9 + $0xf68] sm:$0xff] %vm568, %v6174
    %6687 = vst.msk [vmem:[#allocation9 + $0xf70] sm:$0xff] %vm568, %v6175
    %6688 = vst.msk [vmem:[#allocation9 + $0xf78] sm:$0xff] %vm568, %v6176
    %6689 = vst.msk [vmem:[#allocation9 + $0xf80] sm:$0xff] %vm568, %v6177
    %6690 = vst.msk [vmem:[#allocation9 + $0xf88] sm:$0xff] %vm568, %v6178
    %6691 = vst.msk [vmem:[#allocation9 + $0xf90] sm:$0xff] %vm568, %v6179
    %6692 = vst.msk [vmem:[#allocation9 + $0xf98] sm:$0xff] %vm568, %v6180
    %6693 = vst.msk [vmem:[#allocation9 + $0xfa0] sm:$0xff] %vm568, %v6181
    %6694 = vst.msk [vmem:[#allocation9 + $0xfa8] sm:$0xff] %vm568, %v6182
    %6695 = vst.msk [vmem:[#allocation9 + $0xfb0] sm:$0xff] %vm568, %v6183
    %6696 = vst.msk [vmem:[#allocation9 + $0xfb8] sm:$0xff] %vm568, %v6184
    %6697 = vst.msk [vmem:[#allocation9 + $0xfc0] sm:$0xff] %vm568, %v6185
    %6698 = vst.msk [vmem:[#allocation9 + $0xfc8] sm:$0xff] %vm568, %v6186
    %6699 = vst.msk [vmem:[#allocation9 + $0xfd0] sm:$0xff] %vm568, %v6187
    %6700 = vst.msk [vmem:[#allocation9 + $0xfd8] sm:$0xff] %vm568, %v6188
    %6701 = vst.msk [vmem:[#allocation9 + $0xfe0] sm:$0xff] %vm568, %v6189
    %6702 = vst.msk [vmem:[#allocation9 + $0xfe8] sm:$0xff] %vm568, %v6190
    %6703 = vst.msk [vmem:[#allocation9 + $0xff0] sm:$0xff] %vm568, %v6191
    %6704 = vst.msk [vmem:[#allocation9 + $0xff8] sm:$0xff] %vm568, %v6192
    // Predicated region
    $region26: #{eca_forward.1} parent=1 // pred_check
      _
    $region27: #{eca_forward.1} parent=1 // pred_check_branch
      %6706 = sbr.rel (0) target = $region29
    $region28: #{eca_forward.1} parent=1 // pred_region
      %s6708 = ssub.s32 65536, 65536
      %6709 = vsyncadd [#allocation5], %s6708
      %s6710 = sshll.u32 [#allocation9], 4
      %s6711 = int_to_ptr.vmem [resolvable:$true] %s6710
      %6716 = dma.vmem_to_hbm [thread:$0]  %s6711, 65536, %s3, [#allocation5], 128, 128, 8
    $region29: #{eca_forward.1} parent=1 // pred_fallthru
      _
    // Predicated region
    $region30: #{eca_forward.1} parent=1 // pred_check
      _
    $region31: #{eca_forward.1} parent=1 // pred_check_branch
      %6718 = sbr.rel (0) target = $region33
    $region32: #{eca_forward.1} parent=1 // pred_region
      %6719 = dma.done [#allocation5], 65536
    $region33: #{eca_forward.1} parent=1 // pred_fallthru
      _
    %6720 = vsyncpa [#allocation4], 1
    %6721 = vsyncpa [#allocation7], 1
    %6722 = vsyncpa [#allocation5], 1

</llo_original>
